<compile_context>
chip_gen: v7x
topology: tpu7x:2x2x1
jax: 0.10.0
libtpu: 0.0.40
codegen_flags: <defaults>
</compile_context>

<pallas_src>
import jax
import jax.numpy as jnp
from jax.experimental import pallas as pl
from jax.experimental.pallas import tpu as pltpu


N_OUT_PAD = 128  # lane-dense padded width for the final (batch, 3) output


def _fused_mlp_kernel(
    x_ref, w1_ref, b1_ref, w2_ref, b2_ref, w3_ref, b3_ref, w4_ref, b4_ref,
    o_ref, acc_ref,
):
    """Layer 1 is K-tiled into acc_ref; layers 2-4 run fused in the last step."""
    k = pl.program_id(0)

    @pl.when(k == 0)
    def _():
        # Seed the accumulator with the broadcast layer-1 bias: no extra
        # "+ b1" pass (and no zeros init) needed in the epilogue.
        acc_ref[...] = jnp.broadcast_to(b1_ref[...], acc_ref.shape)

    # Layer-1 partial product for this K tile: bf16 x bf16 -> fp32 on the MXU.
    acc_ref[...] += jnp.dot(
        x_ref[...].astype(jnp.bfloat16), w1_ref[...],
        preferred_element_type=jnp.float32,
    )

    @pl.when(k == pl.num_programs(0) - 1)
    def _():
        # Fused epilogue: layers 2-4 on VMEM-resident weights.
        h1 = jnp.maximum(acc_ref[...], 0.0).astype(jnp.bfloat16)        # (M, 1024)
        h2 = jnp.dot(h1, w2_ref[...], preferred_element_type=jnp.float32)
        h2 = jnp.maximum(h2 + b2_ref[...], 0.0).astype(jnp.bfloat16)    # (M, 256)
        h3 = jnp.dot(h2, w3_ref[...], preferred_element_type=jnp.float32)
        h3 = jnp.maximum(h3 + b3_ref[...], 0.0).astype(jnp.bfloat16)    # (M, 64)
        h4 = jnp.dot(h3, w4_ref[...], preferred_element_type=jnp.float32)
        o_ref[...] = (h4 + b4_ref[...]).astype(o_ref.dtype)             # (M, 128)


def mlp_forward_pallas(x, params, *, tk=2048):
    """Forward pass of the whole Net in one pallas_call; returns (M, 3) fp32."""
    (w1, b1), (w2, b2), (w3, b3), (w4, b4) = params
    M, K = x.shape
    N1, N2, N3, N4 = w1.shape[1], w2.shape[1], w3.shape[1], w4.shape[1]
    assert w1.shape[0] == K and w2.shape[0] == N1 and w3.shape[0] == N2
    assert w4.shape[0] == N3 and N4 <= N_OUT_PAD

    # K tile for layer 1: tk=2048 (bf16 tile = 4 MiB, double-buffered = 8 MiB)
    # keeps total VMEM < 10 MiB -> safely under default scoped VMEM on
    # v5e/v6e/v7x while cutting grid steps (and per-step overhead) to 2.
    tk = min(tk, K)
    while K % tk:
        tk //= 2
    nk = K // tk

    # Biases as (1, N) rows; pad the last layer to a lane-dense 128-wide slab
    # (unmasked vst instead of an 8x3 masked store); padding sliced off below.
    b1r = b1.reshape(1, N1).astype(jnp.float32)
    b2r = b2.reshape(1, N2).astype(jnp.float32)
    b3r = b3.reshape(1, N3).astype(jnp.float32)
    w4p = jnp.zeros((N3, N_OUT_PAD), w4.dtype).at[:, :N4].set(w4)
    b4p = jnp.zeros((1, N_OUT_PAD), jnp.float32).at[0, :N4].set(
        b4.astype(jnp.float32))

    out_padded = pl.pallas_call(
        _fused_mlp_kernel,
        out_shape=jax.ShapeDtypeStruct((M, N_OUT_PAD), jnp.float32),
        grid_spec=pltpu.PrefetchScalarGridSpec(
            num_scalar_prefetch=0,
            grid=(nk,),
            in_specs=[
                pl.BlockSpec((M, tk), lambda k: (0, k)),          # x  tile (streamed)
                pl.BlockSpec((tk, N1), lambda k: (k, 0)),         # W1 tile (streamed)
                pl.BlockSpec((1, N1), lambda k: (0, 0)),          # b1 (resident)
                pl.BlockSpec((N1, N2), lambda k: (0, 0)),         # W2 (resident)
                pl.BlockSpec((1, N2), lambda k: (0, 0)),          # b2 (resident)
                pl.BlockSpec((N2, N3), lambda k: (0, 0)),         # W3 (resident)
                pl.BlockSpec((1, N3), lambda k: (0, 0)),          # b3 (resident)
                pl.BlockSpec((N3, N_OUT_PAD), lambda k: (0, 0)),  # W4 padded (resident)
                pl.BlockSpec((1, N_OUT_PAD), lambda k: (0, 0)),   # b4 padded (resident)
            ],
            out_specs=pl.BlockSpec((M, N_OUT_PAD), lambda k: (0, 0)),
            scratch_shapes=[pltpu.VMEM((M, N1), jnp.float32)],
        ),
        compiler_params=pltpu.CompilerParams(
            # Single grid axis is the layer-1 reduction -> must stay sequential.
            # (A v7x dual-TC split over N1 conflicts with fusing layers 2-4,
            # which need all of h1; the fusion + bf16 wins dominate here.)
            dimension_semantics=("arbitrary",),
        ),
    )(x, w1, b1r, w2, b2r, w3, b3r, w4p, b4p)

    return out_padded[:, :N4]


def init_params(key):
    """Deterministic nn.Linear-style U(-1/sqrt(fan_in), +1/sqrt(fan_in)) init (fp32)."""
    dims = [(4096, 1024), (1024, 256), (256, 64), (64, 3)]
    params = []
    for i, (fan_in, fan_out) in enumerate(dims):
        kw, kb = jax.random.split(jax.random.fold_in(key, i))
        bound = 1.0 / jnp.sqrt(fan_in)
        w = jax.random.uniform(kw, (fan_in, fan_out), jnp.float32,
                               minval=-bound, maxval=bound)
        b = jax.random.uniform(kb, (fan_out,), jnp.float32,
                               minval=-bound, maxval=bound)
        params.append((w, b))
    return params


def cast_weights(params, dtype=jnp.bfloat16):
    """Weights -> bf16 for HBM bandwidth; biases stay fp32 (added to fp32 acc)."""
    return [(w.astype(dtype), b) for (w, b) in params]


@jax.jit
def net_forward(x, params):
    return mlp_forward_pallas(x, params)


if __name__ == "__main__":
    key = jax.random.PRNGKey(0)
    k_x, k_p = jax.random.split(key)

    batch = 8  # feature dims are fixed by the module: 4096 -> 1024 -> 256 -> 64 -> 3
    x = jax.random.normal(k_x, (batch, 4096), jnp.float32)

    params_f32 = init_params(k_p)
    params = cast_weights(params_f32, jnp.bfloat16)

    out = net_forward(x, params)
    out = jax.block_until_ready(out)
    assert out.shape == (batch, 3), out.shape

    # Reference 1: mirrors the kernel's bf16-weight / fp32-accumulate math.
    def lin_bf16(h, w, b):
        return jnp.dot(h.astype(jnp.bfloat16), w,
                       preferred_element_type=jnp.float32) + b

    def ref_bf16(xv, ps):
        (w1, b1), (w2, b2), (w3, b3), (w4, b4) = ps
        h = jnp.maximum(lin_bf16(xv, w1, b1), 0.0)
        h = jnp.maximum(lin_bf16(h, w2, b2), 0.0)
        h = jnp.maximum(lin_bf16(h, w3, b3), 0.0)
        return lin_bf16(h, w4, b4)

    expected = ref_bf16(x, params)
    assert jnp.allclose(out, expected, atol=5e-3, rtol=5e-3), (
        float(jnp.max(jnp.abs(out - expected))))

    # Reference 2: original fp32 module semantics (looser tolerance; the only
    # approximation is the bf16 weight/activation quantization).
    def ref_f32(xv, ps):
        (w1, b1), (w2, b2), (w3, b3), (w4, b4) = ps
        h = jnp.maximum(xv @ w1 + b1, 0.0)
        h = jnp.maximum(h @ w2 + b2, 0.0)
        h = jnp.maximum(h @ w3 + b3, 0.0)
        return h @ w4 + b4

    expected_f32 = ref_f32(x, params_f32)
    assert jnp.allclose(out, expected_f32, atol=5e-2, rtol=5e-2), (
        float(jnp.max(jnp.abs(out - expected_f32))))

    print("KERNEL_OK")
</pallas_src>

<mosaic_0001>
module attributes {stable_mosaic.version = 11 : i64} {
  func.func @_fused_mlp_kernel(%arg0: i32, %arg1: memref<8x2048xf32, #tpu.memory_space<vmem>>, %arg2: memref<2048x1024xbf16, #tpu.memory_space<vmem>>, %arg3: memref<1x1024xf32, #tpu.memory_space<vmem>>, %arg4: memref<1024x256xbf16, #tpu.memory_space<vmem>>, %arg5: memref<1x256xf32, #tpu.memory_space<vmem>>, %arg6: memref<256x64xbf16, #tpu.memory_space<vmem>>, %arg7: memref<1x64xf32, #tpu.memory_space<vmem>>, %arg8: memref<64x128xbf16, #tpu.memory_space<vmem>>, %arg9: memref<1x128xf32, #tpu.memory_space<vmem>>, %arg10: memref<8x128xf32, #tpu.memory_space<vmem>>, %arg11: memref<8x1024xf32, #tpu.memory_space<vmem>>) attributes {dimension_semantics = [#tpu.dimension_semantics<arbitrary>], iteration_bounds = array<i64: 2>, scalar_prefetch = 0 : i64, scratch_operands = 1 : i64, tpu.core_type = #tpu.core_type<tc>, window_params = [{transform_indices = @transform_0, window_bounds = array<i64: 8, 2048>}, {transform_indices = @transform_1, window_bounds = array<i64: 2048, 1024>}, {pipeline_mode = #tpu.pipeline_mode<synchronous>, transform_indices = @transform_2, window_bounds = array<i64: 1, 1024>}, {pipeline_mode = #tpu.pipeline_mode<synchronous>, transform_indices = @transform_3, window_bounds = array<i64: 1024, 256>}, {pipeline_mode = #tpu.pipeline_mode<synchronous>, transform_indices = @transform_4, window_bounds = array<i64: 1, 256>}, {pipeline_mode = #tpu.pipeline_mode<synchronous>, transform_indices = @transform_5, window_bounds = array<i64: 256, 64>}, {pipeline_mode = #tpu.pipeline_mode<synchronous>, transform_indices = @transform_6, window_bounds = array<i64: 1, 64>}, {pipeline_mode = #tpu.pipeline_mode<synchronous>, transform_indices = @transform_7, window_bounds = array<i64: 64, 128>}, {pipeline_mode = #tpu.pipeline_mode<synchronous>, transform_indices = @transform_8, window_bounds = array<i64: 1, 128>}, {pipeline_mode = #tpu.pipeline_mode<synchronous>, transform_indices = @transform_9, window_bounds = array<i64: 8, 128>}]} {
    %c0_i32 = arith.constant 0 : i32
    %0 = arith.cmpi eq, %arg0, %c0_i32 : i32
    %1 = arith.extui %0 : i1 to i32
    %c0_i32_0 = arith.constant 0 : i32
    %2 = arith.cmpi ne, %1, %c0_i32_0 : i32
    scf.if %2 {
      %c0_9 = arith.constant 0 : index
      %c0_10 = arith.constant 0 : index
      %13 = vector.load %arg3[%c0_9, %c0_10] : memref<1x1024xf32, #tpu.memory_space<vmem>>, vector<1x1024xf32>
      %14 = vector.shape_cast %13 : vector<1x1024xf32> to vector<1x1024xf32>
      %15 = vector.broadcast %14 : vector<1x1024xf32> to vector<8x1024xf32>
      %c0_11 = arith.constant 0 : index
      %c0_12 = arith.constant 0 : index
      %16 = vector.load %arg11[%c0_11, %c0_12] : memref<8x1024xf32, #tpu.memory_space<vmem>>, vector<8x1024xf32>
      tpu.vector_store %arg11[%c0_11, %c0_12], %15 {strides = array<i32>} : memref<8x1024xf32, #tpu.memory_space<vmem>>, vector<8x1024xf32>,
    } else {
    }
    %c0 = arith.constant 0 : index
    %c0_1 = arith.constant 0 : index
    %3 = vector.load %arg11[%c0, %c0_1] : memref<8x1024xf32, #tpu.memory_space<vmem>>, vector<8x1024xf32>
    %c0_2 = arith.constant 0 : index
    %c0_3 = arith.constant 0 : index
    %4 = vector.load %arg1[%c0_2, %c0_3] : memref<8x2048xf32, #tpu.memory_space<vmem>>, vector<8x2048xf32>
    %5 = arith.truncf %4 : vector<8x2048xf32> to vector<8x2048xbf16>
    %c0_4 = arith.constant 0 : index
    %c0_5 = arith.constant 0 : index
    %6 = vector.load %arg2[%c0_4, %c0_5] : memref<2048x1024xbf16, #tpu.memory_space<vmem>>, vector<2048x1024xbf16>
    %cst = arith.constant dense<0.000000e+00> : vector<8x1024xf32>
    %7 = tpu.matmul %5, %6, %cst {dimension_numbers = #tpu.dot_dimension_numbers<[1], [0], [0], [1], [0, 0, 1, 1], [], []>} : vector<8x2048xbf16>, vector<2048x1024xbf16>, vector<8x1024xf32> -> vector<8x1024xf32>
    %8 = arith.addf %3, %7 : vector<8x1024xf32>
    %c0_6 = arith.constant 0 : index
    %c0_7 = arith.constant 0 : index
    %9 = vector.load %arg11[%c0_6, %c0_7] : memref<8x1024xf32, #tpu.memory_space<vmem>>, vector<8x1024xf32>
    tpu.vector_store %arg11[%c0_6, %c0_7], %8 {strides = array<i32>} : memref<8x1024xf32, #tpu.memory_space<vmem>>, vector<8x1024xf32>,
    %c1_i32 = arith.constant 1 : i32
    %10 = arith.cmpi eq, %arg0, %c1_i32 : i32
    %11 = arith.extui %10 : i1 to i32
    %c0_i32_8 = arith.constant 0 : i32
    %12 = arith.cmpi ne, %11, %c0_i32_8 : i32
    scf.if %12 {
      %c0_9 = arith.constant 0 : index
      %c0_10 = arith.constant 0 : index
      %13 = vector.load %arg11[%c0_9, %c0_10] : memref<8x1024xf32, #tpu.memory_space<vmem>>, vector<8x1024xf32>
      %cst_11 = arith.constant 0.000000e+00 : f32
      %14 = vector.broadcast %cst_11 : f32 to vector<8x1024xf32>
      %15 = arith.maximumf %13, %14 : vector<8x1024xf32>
      %16 = arith.truncf %15 : vector<8x1024xf32> to vector<8x1024xbf16>
      %c0_12 = arith.constant 0 : index
      %c0_13 = arith.constant 0 : index
      %17 = vector.load %arg4[%c0_12, %c0_13] : memref<1024x256xbf16, #tpu.memory_space<vmem>>, vector<1024x256xbf16>
      %cst_14 = arith.constant dense<0.000000e+00> : vector<8x256xf32>
      %18 = tpu.matmul %16, %17, %cst_14 {dimension_numbers = #tpu.dot_dimension_numbers<[1], [0], [0], [1], [0, 0, 1, 1], [], []>} : vector<8x1024xbf16>, vector<1024x256xbf16>, vector<8x256xf32> -> vector<8x256xf32>
      %c0_15 = arith.constant 0 : index
      %c0_16 = arith.constant 0 : index
      %19 = vector.load %arg5[%c0_15, %c0_16] : memref<1x256xf32, #tpu.memory_space<vmem>>, vector<1x256xf32>
      %20 = vector.broadcast %19 : vector<1x256xf32> to vector<8x256xf32>
      %21 = arith.addf %18, %20 : vector<8x256xf32>
      %cst_17 = arith.constant 0.000000e+00 : f32
      %22 = vector.broadcast %cst_17 : f32 to vector<8x256xf32>
      %23 = arith.maximumf %21, %22 : vector<8x256xf32>
      %24 = arith.truncf %23 : vector<8x256xf32> to vector<8x256xbf16>
      %c0_18 = arith.constant 0 : index
      %c0_19 = arith.constant 0 : index
      %25 = vector.load %arg6[%c0_18, %c0_19] : memref<256x64xbf16, #tpu.memory_space<vmem>>, vector<256x64xbf16>
      %cst_20 = arith.constant dense<0.000000e+00> : vector<8x64xf32>
      %26 = tpu.matmul %24, %25, %cst_20 {dimension_numbers = #tpu.dot_dimension_numbers<[1], [0], [0], [1], [0, 0, 1, 1], [], []>} : vector<8x256xbf16>, vector<256x64xbf16>, vector<8x64xf32> -> vector<8x64xf32>
      %c0_21 = arith.constant 0 : index
      %c0_22 = arith.constant 0 : index
      %27 = vector.load %arg7[%c0_21, %c0_22] : memref<1x64xf32, #tpu.memory_space<vmem>>, vector<1x64xf32>
      %28 = vector.broadcast %27 : vector<1x64xf32> to vector<8x64xf32>
      %29 = arith.addf %26, %28 : vector<8x64xf32>
      %cst_23 = arith.constant 0.000000e+00 : f32
      %30 = vector.broadcast %cst_23 : f32 to vector<8x64xf32>
      %31 = arith.maximumf %29, %30 : vector<8x64xf32>
      %32 = arith.truncf %31 : vector<8x64xf32> to vector<8x64xbf16>
      %c0_24 = arith.constant 0 : index
      %c0_25 = arith.constant 0 : index
      %33 = vector.load %arg8[%c0_24, %c0_25] : memref<64x128xbf16, #tpu.memory_space<vmem>>, vector<64x128xbf16>
      %cst_26 = arith.constant dense<0.000000e+00> : vector<8x128xf32>
      %34 = tpu.matmul %32, %33, %cst_26 {dimension_numbers = #tpu.dot_dimension_numbers<[1], [0], [0], [1], [0, 0, 1, 1], [], []>} : vector<8x64xbf16>, vector<64x128xbf16>, vector<8x128xf32> -> vector<8x128xf32>
      %c0_27 = arith.constant 0 : index
      %c0_28 = arith.constant 0 : index
      %35 = vector.load %arg9[%c0_27, %c0_28] : memref<1x128xf32, #tpu.memory_space<vmem>>, vector<1x128xf32>
      %36 = vector.broadcast %35 : vector<1x128xf32> to vector<8x128xf32>
      %37 = arith.addf %34, %36 : vector<8x128xf32>
      %c0_29 = arith.constant 0 : index
      %c0_30 = arith.constant 0 : index
      %38 = vector.load %arg10[%c0_29, %c0_30] : memref<8x128xf32, #tpu.memory_space<vmem>>, vector<8x128xf32>
      tpu.vector_store %arg10[%c0_29, %c0_30], %37 {strides = array<i32>} : memref<8x128xf32, #tpu.memory_space<vmem>>, vector<8x128xf32>,
    } else {
    }
    return
  }
  func.func @transform_0(%arg0: i32) -> (i32, i32) {
    %c0_i32 = arith.constant 0 : i32
    %c0_i32_0 = arith.constant 0 : i32
    return %c0_i32, %arg0 : i32, i32
  }
  func.func @transform_1(%arg0: i32) -> (i32, i32) {
    %c0_i32 = arith.constant 0 : i32
    %c0_i32_0 = arith.constant 0 : i32
    return %arg0, %c0_i32 : i32, i32
  }
  func.func @transform_2(%arg0: i32) -> (i32, i32) {
    %c0_i32 = arith.constant 0 : i32
    %c0_i32_0 = arith.constant 0 : i32
    %c0_i32_1 = arith.constant 0 : i32
    return %c0_i32, %c0_i32_0 : i32, i32
  }
  func.func @transform_3(%arg0: i32) -> (i32, i32) {
    %c0_i32 = arith.constant 0 : i32
    %c0_i32_0 = arith.constant 0 : i32
    %c0_i32_1 = arith.constant 0 : i32
    return %c0_i32, %c0_i32_0 : i32, i32
  }
  func.func @transform_4(%arg0: i32) -> (i32, i32) {
    %c0_i32 = arith.constant 0 : i32
    %c0_i32_0 = arith.constant 0 : i32
    %c0_i32_1 = arith.constant 0 : i32
    return %c0_i32, %c0_i32_0 : i32, i32
  }
  func.func @transform_5(%arg0: i32) -> (i32, i32) {
    %c0_i32 = arith.constant 0 : i32
    %c0_i32_0 = arith.constant 0 : i32
    %c0_i32_1 = arith.constant 0 : i32
    return %c0_i32, %c0_i32_0 : i32, i32
  }
  func.func @transform_6(%arg0: i32) -> (i32, i32) {
    %c0_i32 = arith.constant 0 : i32
    %c0_i32_0 = arith.constant 0 : i32
    %c0_i32_1 = arith.constant 0 : i32
    return %c0_i32, %c0_i32_0 : i32, i32
  }
  func.func @transform_7(%arg0: i32) -> (i32, i32) {
    %c0_i32 = arith.constant 0 : i32
    %c0_i32_0 = arith.constant 0 : i32
    %c0_i32_1 = arith.constant 0 : i32
    return %c0_i32, %c0_i32_0 : i32, i32
  }
  func.func @transform_8(%arg0: i32) -> (i32, i32) {
    %c0_i32 = arith.constant 0 : i32
    %c0_i32_0 = arith.constant 0 : i32
    %c0_i32_1 = arith.constant 0 : i32
    return %c0_i32, %c0_i32_0 : i32, i32
  }
  func.func @transform_9(%arg0: i32) -> (i32, i32) {
    %c0_i32 = arith.constant 0 : i32
    %c0_i32_0 = arith.constant 0 : i32
    %c0_i32_1 = arith.constant 0 : i32
    return %c0_i32, %c0_i32_0 : i32, i32
  }
}

</mosaic_0001>

<llo_original>
// kernel: net_forward.1
$region0: #{net_forward.1}
  #allocation0 [shape = 'u32[]', space=smem, size = 0x4, offset = 0x4, fixed_abs, tag = 'smem constant byte address 0x4 - core index']
  #allocation1 [shape = 'u32[144,128]{1,0:T(1,128)}', space=vmem, size = 0x12000, scoped, tag = 'internal scratch']
  #allocation2 [shape = 'f32[8,1024]{1,0:T(8,128)}', space=vmem, size = 0x8000, scoped, tag = 'scratch operand']
  %s0 = inlined_call_operand.hbm [shape: f32[8,4096], index: 0, kind: input, shape index: {}]
  %s1 = inlined_call_operand.hbm [shape: bf16[4096,1024], index: 1, kind: input, shape index: {}]
  %s2 = inlined_call_operand.hbm [shape: f32[1,1024], index: 2, kind: input, shape index: {}]
  %s3 = inlined_call_operand.hbm [shape: bf16[1024,256], index: 3, kind: input, shape index: {}]
  %s4 = inlined_call_operand.hbm [shape: f32[1,256], index: 4, kind: input, shape index: {}]
  %s5 = inlined_call_operand.vmem [shape: bf16[256,64], index: 5, kind: input, shape index: {}]
  %s6 = inlined_call_operand.hbm [shape: f32[1,64], index: 6, kind: input, shape index: {}]
  %s7 = inlined_call_operand.vmem [shape: bf16[64,128], index: 7, kind: input, shape index: {}]
  %s8 = inlined_call_operand.vmem [shape: f32[1,128], index: 8, kind: input, shape index: {}]
  %s9 = inlined_call_operand.vmem [shape: f32[8,128], index: 9, kind: output, shape index: {}]
  %s10 = sld [smem:[#allocation0]]
  $region101: #{net_forward.1} parent=0
    _
  %s12 = ssub.s32 1, %s10
  %s13 = scalar_select 0, %s12, %s10
  $region1: #{net_forward.1} parent=0
    #allocation3 [shape = 'u8[131072]{0}', space=vmem, size = 0x20000, scoped, tag = 'input window, operand 0']
    #allocation4 [shape = 's32[2]{0}', space=sflag, size = 0x8, scoped, tag = 'scoped memory for net_forward.1']
    #allocation5 [shape = 'u8[8388608]{0}', space=vmem, size = 0x800000, scoped, tag = 'input window, operand 1']
    #allocation6 [shape = 's32[2]{0}', space=sflag, size = 0x8, scoped, tag = 'scoped memory for net_forward.1']
    #allocation7 [shape = 'u8[4096]{0}', space=vmem, size = 0x1000, scoped, tag = 'input window, operand 2, single buffered']
    #allocation8 [shape = 'u8[524288]{0}', space=vmem, size = 0x80000, scoped, tag = 'input window, operand 3, single buffered']
    #allocation9 [shape = 's32[1]{0}', space=sflag, size = 0x4, scoped, tag = 'scoped memory for net_forward.1']
    #allocation10 [shape = 'u8[1024]{0}', space=vmem, size = 0x400, scoped, tag = 'input window, operand 4, single buffered']
    #allocation11 [shape = 'u8[512]{0}', space=vmem, size = 0x400, scoped, tag = 'input window, operand 6, single buffered']
    #allocation12 [shape = 's32[1]{0}', space=sflag, size = 0x4, scoped, tag = 'scoped memory for net_forward.1']
    %14 = vsyncpa [#allocation4], 0
    %s15 = scalar_lea.sflag [#allocation4], 1
    %16 = vsyncpa %s15, 0
    %17 = vsyncpa [#allocation6], 0
    %s18 = scalar_lea.sflag [#allocation6], 1
    %19 = vsyncpa %s18, 0
    %20 = vsyncpa [#allocation9], 0
    %21 = vsyncpa [#allocation12], 0
    loop: start=0, step=1, limit=4
    $region2: #{net_forward.1} parent=1 // loop_pre_header
      _
    $region3: #{net_forward.1} parent=1 // loop_header
      %s23 = sphi 0, %s27
      %p24 = scmp.ge.s32.totalorder %s23, 4
      %s33 = sphi 0, %s35
      %s36 = sphi 0, %s33
      %s37 = sphi 0, %s36
      %s53 = sphi 0, %s37
      %s59 = sphi 0, %s61
      %s62 = sphi 0, %s59
      %s63 = sphi 0, %s62
      %s79 = sphi 0, %s63
      %s83 = sphi 0, %s83
      %s85 = sphi 0, %s83
      %s86 = sphi 0, %s85
      %s100 = sphi 0, %s86
      %s104 = sphi 0, %s104
      %s106 = sphi 0, %s104
      %s107 = sphi 0, %s106
      %s121 = sphi 0, %s107
      %s125 = sphi 0, %s125
      %s127 = sphi 0, %s125
      %s128 = sphi 0, %s127
      %s142 = sphi 0, %s128
      %s146 = sphi 0, %s146
      %s148 = sphi 0, %s146
      %s149 = sphi 0, %s148
      %s163 = sphi 0, %s149
      %s167 = sphi 0, %s167
      %s169 = sphi 0, %s167
      %s170 = sphi 0, %s169
      %s184 = sphi 0, %s170
      %s188 = sphi 0, %s188
      %s190 = sphi 0, %s188
      %s191 = sphi 0, %s190
      %s205 = sphi 0, %s191
      %s209 = sphi 0, %s209
      %s211 = sphi 0, %s209
      %s212 = sphi 0, %s211
      %s226 = sphi 0, %s212
      %s230 = sphi 0, %s230
      %s232 = sphi 0, %s230
      %s233 = sphi 0, %s232
      %s247 = sphi 0, %s233
    $region4: #{net_forward.1} parent=1 // loop_header_branch
      %26 = sbr.rel (%p24) target = $region8
    $region5: #{net_forward.1} parent=1 // loop_body
      %s28 = ssub.s32 %s23, 1
      %s29 = ssub.s32 %s23, 2
      %s30 = sadd.s32 %s23, 1
      %s31 = ssub.s32 %s23, %s30
      %p32 = scmp.eq.s32.totalorder %s31, 0
      %s34 = sadd.s32 %s33, 1
      %s35 = scalar_select %p32, %s33, %s34
      %p38 = pneg %p32
      %p39 = scmp.eq.s32.totalorder %s23, 1
      %p40 = por %p38, %p39
      %p41 = scmp.ne.s32.totalorder %s33, %s36
      %p42 = scmp.eq.s32.totalorder %s23, 0
      %p43 = por %p41, %p42
      %p44 = scmp.ne.s32.totalorder %s33, %s36
      %p45 = scmp.eq.s32.totalorder %s28, 1
      %p46 = por %p44, %p45
      %p47 = scmp.ne.s32.totalorder %s36, %s37
      %p48 = scmp.eq.s32.totalorder %s28, 0
      %p49 = por %p47, %p48
      %p50 = scmp.ne.s32.totalorder %s36, %s37
      %p51 = scmp.eq.s32.totalorder %s29, 1
      %p52 = por %p50, %p51
      %p54 = scmp.ne.s32.totalorder %s37, %s53
      %p55 = scmp.eq.s32.totalorder %s29, 0
      %p56 = por %p54, %p55
      %s57 = ssub.s32 %s23, %s30
      %p58 = scmp.eq.s32.totalorder %s57, 0
      %s60 = sadd.s32 %s59, 1
      %s61 = scalar_select %p58, %s59, %s60
      %p64 = pneg %p58
      %p65 = scmp.eq.s32.totalorder %s23, 1
      %p66 = por %p64, %p65
      %p67 = scmp.ne.s32.totalorder %s59, %s62
      %p68 = scmp.eq.s32.totalorder %s23, 0
      %p69 = por %p67, %p68
      %p70 = scmp.ne.s32.totalorder %s59, %s62
      %p71 = scmp.eq.s32.totalorder %s28, 1
      %p72 = por %p70, %p71
      %p73 = scmp.ne.s32.totalorder %s62, %s63
      %p74 = scmp.eq.s32.totalorder %s28, 0
      %p75 = por %p73, %p74
      %p76 = scmp.ne.s32.totalorder %s62, %s63
      %p77 = scmp.eq.s32.totalorder %s29, 1
      %p78 = por %p76, %p77
      %p80 = scmp.ne.s32.totalorder %s63, %s79
      %p81 = scmp.eq.s32.totalorder %s29, 0
      %p82 = por %p80, %p81
      %s84 = sadd.s32 %s83, 1
      %p87 = scmp.eq.s32.totalorder %s23, 1
      %p88 = scmp.ne.s32.totalorder %s83, %s85
      %p89 = scmp.eq.s32.totalorder %s23, 0
      %p90 = por %p88, %p89
      %p91 = scmp.ne.s32.totalorder %s83, %s85
      %p92 = scmp.eq.s32.totalorder %s28, 1
      %p93 = por %p91, %p92
      %p94 = scmp.ne.s32.totalorder %s85, %s86
      %p95 = scmp.eq.s32.totalorder %s28, 0
      %p96 = por %p94, %p95
      %p97 = scmp.ne.s32.totalorder %s85, %s86
      %p98 = scmp.eq.s32.totalorder %s29, 1
      %p99 = por %p97, %p98
      %p101 = scmp.ne.s32.totalorder %s86, %s100
      %p102 = scmp.eq.s32.totalorder %s29, 0
      %p103 = por %p101, %p102
      %s105 = sadd.s32 %s104, 1
      %p108 = scmp.eq.s32.totalorder %s23, 1
      %p109 = scmp.ne.s32.totalorder %s104, %s106
      %p110 = scmp.eq.s32.totalorder %s23, 0
      %p111 = por %p109, %p110
      %p112 = scmp.ne.s32.totalorder %s104, %s106
      %p113 = scmp.eq.s32.totalorder %s28, 1
      %p114 = por %p112, %p113
      %p115 = scmp.ne.s32.totalorder %s106, %s107
      %p116 = scmp.eq.s32.totalorder %s28, 0
      %p117 = por %p115, %p116
      %p118 = scmp.ne.s32.totalorder %s106, %s107
      %p119 = scmp.eq.s32.totalorder %s29, 1
      %p120 = por %p118, %p119
      %p122 = scmp.ne.s32.totalorder %s107, %s121
      %p123 = scmp.eq.s32.totalorder %s29, 0
      %p124 = por %p122, %p123
      %s126 = sadd.s32 %s125, 1
      %p129 = scmp.eq.s32.totalorder %s23, 1
      %p130 = scmp.ne.s32.totalorder %s125, %s127
      %p131 = scmp.eq.s32.totalorder %s23, 0
      %p132 = por %p130, %p131
      %p133 = scmp.ne.s32.totalorder %s125, %s127
      %p134 = scmp.eq.s32.totalorder %s28, 1
      %p135 = por %p133, %p134
      %p136 = scmp.ne.s32.totalorder %s127, %s128
      %p137 = scmp.eq.s32.totalorder %s28, 0
      %p138 = por %p136, %p137
      %p139 = scmp.ne.s32.totalorder %s127, %s128
      %p140 = scmp.eq.s32.totalorder %s29, 1
      %p141 = por %p139, %p140
      %p143 = scmp.ne.s32.totalorder %s128, %s142
      %p144 = scmp.eq.s32.totalorder %s29, 0
      %p145 = por %p143, %p144
      %s147 = sadd.s32 %s146, 1
      %p150 = scmp.eq.s32.totalorder %s23, 1
      %p151 = scmp.ne.s32.totalorder %s146, %s148
      %p152 = scmp.eq.s32.totalorder %s23, 0
      %p153 = por %p151, %p152
      %p154 = scmp.ne.s32.totalorder %s146, %s148
      %p155 = scmp.eq.s32.totalorder %s28, 1
      %p156 = por %p154, %p155
      %p157 = scmp.ne.s32.totalorder %s148, %s149
      %p158 = scmp.eq.s32.totalorder %s28, 0
      %p159 = por %p157, %p158
      %p160 = scmp.ne.s32.totalorder %s148, %s149
      %p161 = scmp.eq.s32.totalorder %s29, 1
      %p162 = por %p160, %p161
      %p164 = scmp.ne.s32.totalorder %s149, %s163
      %p165 = scmp.eq.s32.totalorder %s29, 0
      %p166 = por %p164, %p165
      %s168 = sadd.s32 %s167, 1
      %p171 = scmp.eq.s32.totalorder %s23, 1
      %p172 = scmp.ne.s32.totalorder %s167, %s169
      %p173 = scmp.eq.s32.totalorder %s23, 0
      %p174 = por %p172, %p173
      %p175 = scmp.ne.s32.totalorder %s167, %s169
      %p176 = scmp.eq.s32.totalorder %s28, 1
      %p177 = por %p175, %p176
      %p178 = scmp.ne.s32.totalorder %s169, %s170
      %p179 = scmp.eq.s32.totalorder %s28, 0
      %p180 = por %p178, %p179
      %p181 = scmp.ne.s32.totalorder %s169, %s170
      %p182 = scmp.eq.s32.totalorder %s29, 1
      %p183 = por %p181, %p182
      %p185 = scmp.ne.s32.totalorder %s170, %s184
      %p186 = scmp.eq.s32.totalorder %s29, 0
      %p187 = por %p185, %p186
      %s189 = sadd.s32 %s188, 1
      %p192 = scmp.eq.s32.totalorder %s23, 1
      %p193 = scmp.ne.s32.totalorder %s188, %s190
      %p194 = scmp.eq.s32.totalorder %s23, 0
      %p195 = por %p193, %p194
      %p196 = scmp.ne.s32.totalorder %s188, %s190
      %p197 = scmp.eq.s32.totalorder %s28, 1
      %p198 = por %p196, %p197
      %p199 = scmp.ne.s32.totalorder %s190, %s191
      %p200 = scmp.eq.s32.totalorder %s28, 0
      %p201 = por %p199, %p200
      %p202 = scmp.ne.s32.totalorder %s190, %s191
      %p203 = scmp.eq.s32.totalorder %s29, 1
      %p204 = por %p202, %p203
      %p206 = scmp.ne.s32.totalorder %s191, %s205
      %p207 = scmp.eq.s32.totalorder %s29, 0
      %p208 = por %p206, %p207
      %s210 = sadd.s32 %s209, 1
      %p213 = scmp.eq.s32.totalorder %s23, 1
      %p214 = scmp.ne.s32.totalorder %s209, %s211
      %p215 = scmp.eq.s32.totalorder %s23, 0
      %p216 = por %p214, %p215
      %p217 = scmp.ne.s32.totalorder %s209, %s211
      %p218 = scmp.eq.s32.totalorder %s28, 1
      %p219 = por %p217, %p218
      %p220 = scmp.ne.s32.totalorder %s211, %s212
      %p221 = scmp.eq.s32.totalorder %s28, 0
      %p222 = por %p220, %p221
      %p223 = scmp.ne.s32.totalorder %s211, %s212
      %p224 = scmp.eq.s32.totalorder %s29, 1
      %p225 = por %p223, %p224
      %p227 = scmp.ne.s32.totalorder %s212, %s226
      %p228 = scmp.eq.s32.totalorder %s29, 0
      %p229 = por %p227, %p228
      %s231 = sadd.s32 %s230, 1
      %p234 = scmp.eq.s32.totalorder %s23, 1
      %p235 = scmp.ne.s32.totalorder %s230, %s232
      %p236 = scmp.eq.s32.totalorder %s23, 0
      %p237 = por %p235, %p236
      %p238 = scmp.ne.s32.totalorder %s230, %s232
      %p239 = scmp.eq.s32.totalorder %s28, 1
      %p240 = por %p238, %p239
      %p241 = scmp.ne.s32.totalorder %s232, %s233
      %p242 = scmp.eq.s32.totalorder %s28, 0
      %p243 = por %p241, %p242
      %p244 = scmp.ne.s32.totalorder %s232, %s233
      %p245 = scmp.eq.s32.totalorder %s29, 1
      %p246 = por %p244, %p245
      %p248 = scmp.ne.s32.totalorder %s233, %s247
      %p249 = scmp.eq.s32.totalorder %s29, 0
      %p250 = por %p248, %p249
      %p251 = scmp.le.s32.totalorder 1, %s23
      %p252 = scmp.lt.s32.totalorder %s23, 3
      %p253 = pnand %p251, %p252
      %p254 = pneg %p253
      // Predicated region
      $region9: #{net_forward.1} parent=5 // pred_check
        _
      $region10: #{net_forward.1} parent=5 // pred_check_branch
        %256 = sbr.rel (%p253) target = $region12
      $region11: #{net_forward.1} parent=5 // pred_region
        %s257 = ssub.s32 %s23, 1
        // Predicated region
        $region13: #{net_forward.1} parent=11 // pred_check
          %p258 = pneg %p96
        $region14: #{net_forward.1} parent=11 // pred_check_branch
          %260 = sbr.rel (%p258) target = $region16
        $region15: #{net_forward.1} parent=11 // pred_region
          %s262 = ssub.s32 128, 128
          %263 = vsyncadd [#allocation6], %s262
          %s265 = sshll.u32 [#allocation7], 4
          %s266 = int_to_ptr.vmem [resolvable:$true] %s265
          %268 = dma.hbm_to_vmem [thread:$0]  %s2, 128, %s266, [#allocation6]
        $region16: #{net_forward.1} parent=11 // pred_fallthru
          _
        // Predicated region
        $region17: #{net_forward.1} parent=11 // pred_check
          %p269 = pneg %p117
        $region18: #{net_forward.1} parent=11 // pred_check_branch
          %271 = sbr.rel (%p269) target = $region20
        $region19: #{net_forward.1} parent=11 // pred_region
          %s273 = ssub.s32 16384, 16384
          %274 = vsyncadd [#allocation9], %s273
          %s275 = sshll.u32 [#allocation8], 4
          %s276 = int_to_ptr.vmem [resolvable:$true] %s275
          %281 = dma.hbm_to_vmem [thread:$0]  %s3, 16384, %s276, [#allocation9], 128, 128, 8
        $region20: #{net_forward.1} parent=11 // pred_fallthru
          _
        // Predicated region
        $region21: #{net_forward.1} parent=11 // pred_check
          %p282 = pneg %p138
        $region22: #{net_forward.1} parent=11 // pred_check_branch
          %284 = sbr.rel (%p282) target = $region24
        $region23: #{net_forward.1} parent=11 // pred_region
          %s286 = ssub.s32 32, 32
          %287 = vsyncadd [#allocation9], %s286
          %s289 = sshll.u32 [#allocation10], 4
          %s290 = int_to_ptr.vmem [resolvable:$true] %s289
          %292 = dma.hbm_to_vmem [thread:$0]  %s4, 32, %s290, [#allocation9]
        $region24: #{net_forward.1} parent=11 // pred_fallthru
          _
        // Predicated region
        $region25: #{net_forward.1} parent=11 // pred_check
          %p293 = pneg %p159
        $region26: #{net_forward.1} parent=11 // pred_check_branch
          %295 = sbr.rel (%p293) target = $region28
        $region27: #{net_forward.1} parent=11 // pred_region
          _
        $region28: #{net_forward.1} parent=11 // pred_fallthru
          _
        // Predicated region
        $region29: #{net_forward.1} parent=11 // pred_check
          %p296 = pneg %p180
        $region30: #{net_forward.1} parent=11 // pred_check_branch
          %298 = sbr.rel (%p296) target = $region32
        $region31: #{net_forward.1} parent=11 // pred_region
          %s300 = ssub.s32 16, 16
          %301 = vsyncadd [#allocation12], %s300
          %s303 = sshll.u32 [#allocation11], 4
          %s304 = int_to_ptr.vmem [resolvable:$true] %s303
          %306 = dma.hbm_to_vmem [thread:$0]  %s6, 16, %s304, [#allocation12]
        $region32: #{net_forward.1} parent=11 // pred_fallthru
          _
        // Predicated region
        $region33: #{net_forward.1} parent=11 // pred_check
          %p307 = pneg %p201
        $region34: #{net_forward.1} parent=11 // pred_check_branch
          %309 = sbr.rel (%p307) target = $region36
        $region35: #{net_forward.1} parent=11 // pred_region
          _
        $region36: #{net_forward.1} parent=11 // pred_fallthru
          _
        // Predicated region
        $region37: #{net_forward.1} parent=11 // pred_check
          %p310 = pneg %p222
        $region38: #{net_forward.1} parent=11 // pred_check_branch
          %312 = sbr.rel (%p310) target = $region40
        $region39: #{net_forward.1} parent=11 // pred_region
          _
        $region40: #{net_forward.1} parent=11 // pred_fallthru
          _
      $region12: #{net_forward.1} parent=5 // pred_fallthru
        _
      %p313 = scmp.lt.s32.totalorder %s23, 2
      // Predicated region
      $region41: #{net_forward.1} parent=5 // pred_check
        %p314 = pneg %p313
      $region42: #{net_forward.1} parent=5 // pred_check_branch
        %316 = sbr.rel (%p314) target = $region44
      $region43: #{net_forward.1} parent=5 // pred_region
        // Predicated region
        $region45: #{net_forward.1} parent=43 // pred_check
          %p317 = pneg %p43
        $region46: #{net_forward.1} parent=43 // pred_check_branch
          %319 = sbr.rel (%p317) target = $region48
        $region47: #{net_forward.1} parent=43 // pred_region
          %s320 = sand.u32 %s33, 1
          %s321 = scalar_lea.sflag [#allocation4], %s320
          %s322 = sand.u32 %s33, 1
          %s323 = smul.addr %s322, 128
          %s324 = scalar_lea.vmem [#allocation3], %s323
          %s325 = smul.u32 16, %s23
          %s327 = ssub.s32 2048, 2048
          %328 = vsyncadd %s321, %s327
          %s329 = smul.addr %s325, 128
          %s330 = scalar_lea.hbm %s0, %s329
          %s332 = sshll.u32 %s324, 4
          %s333 = int_to_ptr.vmem [resolvable:$true] %s332
          %335 = dma.hbm_to_vmem [thread:$0]  %s330, 2048, %s333, %s321
        $region48: #{net_forward.1} parent=43 // pred_fallthru
          _
        // Predicated region
        $region49: #{net_forward.1} parent=43 // pred_check
          %p336 = pneg %p69
        $region50: #{net_forward.1} parent=43 // pred_check_branch
          %338 = sbr.rel (%p336) target = $region52
        $region51: #{net_forward.1} parent=43 // pred_region
          %s339 = sand.u32 %s23, 1
          %s340 = scalar_lea.sflag [#allocation6], %s339
          %s341 = sand.u32 %s59, 1
          %s342 = smul.addr %s341, 8192
          %s343 = scalar_lea.vmem [#allocation5], %s342
          %s344 = smul.u32 256, %s23
          %s346 = ssub.s32 131072, 131072
          %347 = vsyncadd %s340, %s346
          %s348 = smul.addr %s344, 8
          %s349 = smul.addr %s348, 64
          %s350 = scalar_lea.hbm %s1, %s349
          %s351 = sshll.u32 %s343, 4
          %s352 = int_to_ptr.vmem [resolvable:$true] %s351
          %357 = dma.hbm_to_vmem [thread:$0]  %s350, 131072, %s352, %s340, 512, 512, 32
        $region52: #{net_forward.1} parent=43 // pred_fallthru
          _
      $region44: #{net_forward.1} parent=5 // pred_fallthru
        _
      %p358 = scmp.le.s32.totalorder 1, %s23
      %p359 = scmp.lt.s32.totalorder %s23, 3
      %p360 = pnand %p358, %p359
      %p361 = pneg %p360
      // Predicated region
      $region53: #{net_forward.1} parent=5 // pred_check
        _
      $region54: #{net_forward.1} parent=5 // pred_check_branch
        %363 = sbr.rel (%p360) target = $region56
      $region55: #{net_forward.1} parent=5 // pred_region
        %s364 = ssub.s32 %s23, 1
        %s365 = sand.u32 %s36, 1
        %s366 = scalar_lea.sflag [#allocation4], %s365
        %s367 = sand.u32 %s36, 1
        %s368 = smul.addr %s367, 128
        %s369 = scalar_lea.vmem [#allocation3], %s368
        // Predicated region
        $region57: #{net_forward.1} parent=55 // pred_check
          %p370 = pneg %p49
        $region58: #{net_forward.1} parent=55 // pred_check_branch
          %372 = sbr.rel (%p370) target = $region60
        $region59: #{net_forward.1} parent=55 // pred_region
          %373 = dma.done %s366, 2048
        $region60: #{net_forward.1} parent=55 // pred_fallthru
          _
        %s374 = sand.u32 %s28, 1
        %s375 = scalar_lea.sflag [#allocation6], %s374
        %s376 = sand.u32 %s62, 1
        %s377 = smul.addr %s376, 8192
        %s378 = scalar_lea.vmem [#allocation5], %s377
        // Predicated region
        $region61: #{net_forward.1} parent=55 // pred_check
          %p379 = pneg %p75
        $region62: #{net_forward.1} parent=55 // pred_check_branch
          %381 = sbr.rel (%p379) target = $region64
        $region63: #{net_forward.1} parent=55 // pred_region
          %382 = dma.done %s375, 131072
        $region64: #{net_forward.1} parent=55 // pred_fallthru
          _
        // Predicated region
        $region65: #{net_forward.1} parent=55 // pred_check
          %p383 = pneg %p96
        $region66: #{net_forward.1} parent=55 // pred_check_branch
          %385 = sbr.rel (%p383) target = $region68
        $region67: #{net_forward.1} parent=55 // pred_region
          %386 = dma.done [#allocation6], 128
        $region68: #{net_forward.1} parent=55 // pred_fallthru
          _
        // Predicated region
        $region69: #{net_forward.1} parent=55 // pred_check
          %p387 = pneg %p117
        $region70: #{net_forward.1} parent=55 // pred_check_branch
          %389 = sbr.rel (%p387) target = $region72
        $region71: #{net_forward.1} parent=55 // pred_region
          %390 = dma.done [#allocation9], 16384
        $region72: #{net_forward.1} parent=55 // pred_fallthru
          _
        // Predicated region
        $region73: #{net_forward.1} parent=55 // pred_check
          %p391 = pneg %p138
        $region74: #{net_forward.1} parent=55 // pred_check_branch
          %393 = sbr.rel (%p391) target = $region76
        $region75: #{net_forward.1} parent=55 // pred_region
          %394 = dma.done [#allocation9], 32
        $region76: #{net_forward.1} parent=55 // pred_fallthru
          _
        // Predicated region
        $region77: #{net_forward.1} parent=55 // pred_check
          %p395 = pneg %p180
        $region78: #{net_forward.1} parent=55 // pred_check_branch
          %397 = sbr.rel (%p395) target = $region80
        $region79: #{net_forward.1} parent=55 // pred_region
          %398 = dma.done [#allocation12], 16
        $region80: #{net_forward.1} parent=55 // pred_fallthru
          _
        %s399 = sand.u32 %s36, 1
        %s400 = scalar_lea.sflag [#allocation4], %s399
        %s401 = sand.u32 %s36, 1
        %s402 = smul.addr %s401, 128
        %s403 = scalar_lea.vmem [#allocation3], %s402
        %p404 = pneg %p49
        %p405 = pneg %p46
        %s406 = sand.u32 %s28, 1
        %s407 = scalar_lea.sflag [#allocation6], %s406
        %s408 = sand.u32 %s62, 1
        %s409 = smul.addr %s408, 8192
        %s410 = scalar_lea.vmem [#allocation5], %s409
        %p411 = pneg %p75
        %p412 = pneg %p72
        %p413 = pneg %p96
        %p414 = pneg %p93
        %p415 = pneg %p117
        %p416 = pneg %p114
        %p417 = pneg %p138
        %p418 = pneg %p135
        %p419 = pneg %p159
        %p420 = pneg %p156
        %p421 = pneg %p180
        %p422 = pneg %p177
        %p423 = pneg %p201
        %p424 = pneg %p198
        %p425 = pneg %p222
        %p426 = pneg %p219
        %p427 = pneg %p243
        %p428 = pneg %p240
        %s429 = smul.u32 16, %s28
        %s430 = smul.u32 256, %s28
        %p432 = scmp.eq.s32.totalorder %s28, 0
        // Predicated region
        $region81: #{net_forward.1} parent=55 // pred_check
          %p433 = pneg %p432
        $region82: #{net_forward.1} parent=55 // pred_check_branch
          %435 = sbr.rel (%p433) target = $region84
        $region83: #{net_forward.1} parent=55 // pred_region
          %v436 = vld [vmem:[#allocation7] sm:$0xff]
          %v438 = vlaneseq
          %v439 = vshrl.u32 %v438, 7
          %v440 = vsub.s32 0, %v439
          %v441 = vrot.slane %v436, %v440
          %v442 = vlaneseq
          %v443 = vshrl.u32 %v442, 7
          %v444 = vsub.s32 1, %v443
          %v445 = vrot.slane %v436, %v444
          %v446 = vlaneseq
          %v447 = vshrl.u32 %v446, 7
          %v448 = vsub.s32 2, %v447
          %v449 = vrot.slane %v436, %v448
          %v450 = vlaneseq
          %v451 = vshrl.u32 %v450, 7
          %v452 = vsub.s32 3, %v451
          %v453 = vrot.slane %v436, %v452
          %v454 = vlaneseq
          %v455 = vshrl.u32 %v454, 7
          %v456 = vsub.s32 4, %v455
          %v457 = vrot.slane %v436, %v456
          %v458 = vlaneseq
          %v459 = vshrl.u32 %v458, 7
          %v460 = vsub.s32 5, %v459
          %v461 = vrot.slane %v436, %v460
          %v462 = vlaneseq
          %v463 = vshrl.u32 %v462, 7
          %v464 = vsub.s32 6, %v463
          %v465 = vrot.slane %v436, %v464
          %v466 = vlaneseq
          %v467 = vshrl.u32 %v466, 7
          %v468 = vsub.s32 7, %v467
          %v469 = vrot.slane %v436, %v468
          %478 = vst [vmem:[#allocation2] sm:$0xff] %v441
          %479 = vst [vmem:[#allocation2 + $0x8] sm:$0xff] %v445
          %480 = vst [vmem:[#allocation2 + $0x10] sm:$0xff] %v449
          %481 = vst [vmem:[#allocation2 + $0x18] sm:$0xff] %v453
          %482 = vst [vmem:[#allocation2 + $0x20] sm:$0xff] %v457
          %483 = vst [vmem:[#allocation2 + $0x28] sm:$0xff] %v461
          %484 = vst [vmem:[#allocation2 + $0x30] sm:$0xff] %v465
          %485 = vst [vmem:[#allocation2 + $0x38] sm:$0xff] %v469
        $region84: #{net_forward.1} parent=55 // pred_fallthru
          _
        %v486 = vld [vmem:[#allocation2] sm:$0xff]
        %v487 = vld [vmem:[#allocation2 + $0x8] sm:$0xff]
        %v488 = vld [vmem:[#allocation2 + $0x10] sm:$0xff]
        %v489 = vld [vmem:[#allocation2 + $0x18] sm:$0xff]
        %v490 = vld [vmem:[#allocation2 + $0x20] sm:$0xff]
        %v491 = vld [vmem:[#allocation2 + $0x28] sm:$0xff]
        %v492 = vld [vmem:[#allocation2 + $0x30] sm:$0xff]
        %v493 = vld [vmem:[#allocation2 + $0x38] sm:$0xff]
        %v494 = vld [vmem:[%s369] sm:$0xff]
        %v495 = vld [vmem:[%s369 + $0x8] sm:$0xff]
        %v496 = vld [vmem:[%s369 + $0x10] sm:$0xff]
        %v497 = vld [vmem:[%s369 + $0x18] sm:$0xff]
        %v498 = vld [vmem:[%s369 + $0x20] sm:$0xff]
        %v499 = vld [vmem:[%s369 + $0x28] sm:$0xff]
        %v500 = vld [vmem:[%s369 + $0x30] sm:$0xff]
        %v501 = vld [vmem:[%s369 + $0x38] sm:$0xff]
        %v502 = vld [vmem:[%s369 + $0x40] sm:$0xff]
        %v503 = vld [vmem:[%s369 + $0x48] sm:$0xff]
        %v504 = vld [vmem:[%s369 + $0x50] sm:$0xff]
        %v505 = vld [vmem:[%s369 + $0x58] sm:$0xff]
        %v506 = vld [vmem:[%s369 + $0x60] sm:$0xff]
        %v507 = vld [vmem:[%s369 + $0x68] sm:$0xff]
        %v508 = vld [vmem:[%s369 + $0x70] sm:$0xff]
        %v509 = vld [vmem:[%s369 + $0x78] sm:$0xff]
        %v510 = vpack.c.bf16 %v494, %v494
        %v511 = vpack.c.bf16 %v495, %v495
        %v512 = vpack.c.bf16 %v496, %v496
        %v513 = vpack.c.bf16 %v497, %v497
        %v514 = vpack.c.bf16 %v498, %v498
        %v515 = vpack.c.bf16 %v499, %v499
        %v516 = vpack.c.bf16 %v500, %v500
        %v517 = vpack.c.bf16 %v501, %v501
        %v518 = vpack.c.bf16 %v502, %v502
        %v519 = vpack.c.bf16 %v503, %v503
        %v520 = vpack.c.bf16 %v504, %v504
        %v521 = vpack.c.bf16 %v505, %v505
        %v522 = vpack.c.bf16 %v506, %v506
        %v523 = vpack.c.bf16 %v507, %v507
        %v524 = vpack.c.bf16 %v508, %v508
        %v525 = vpack.c.bf16 %v509, %v509
        %v526 = vld [vmem:[%s378] sm:$0xff]
        %v527 = vld [vmem:[%s378 + $0x8] sm:$0xff]
        %v528 = vld [vmem:[%s378 + $0x10] sm:$0xff]
        %v529 = vld [vmem:[%s378 + $0x18] sm:$0xff]
        %v530 = vld [vmem:[%s378 + $0x20] sm:$0xff]
        %v531 = vld [vmem:[%s378 + $0x28] sm:$0xff]
        %v532 = vld [vmem:[%s378 + $0x30] sm:$0xff]
        %v533 = vld [vmem:[%s378 + $0x38] sm:$0xff]
        %v534 = vld [vmem:[%s378 + $0x40] sm:$0xff]
        %v535 = vld [vmem:[%s378 + $0x48] sm:$0xff]
        %v536 = vld [vmem:[%s378 + $0x50] sm:$0xff]
        %v537 = vld [vmem:[%s378 + $0x58] sm:$0xff]
        %v538 = vld [vmem:[%s378 + $0x60] sm:$0xff]
        %v539 = vld [vmem:[%s378 + $0x68] sm:$0xff]
        %v540 = vld [vmem:[%s378 + $0x70] sm:$0xff]
        %v541 = vld [vmem:[%s378 + $0x78] sm:$0xff]
        %v542 = vld [vmem:[%s378 + $0x80] sm:$0xff]
        %v543 = vld [vmem:[%s378 + $0x88] sm:$0xff]
        %v544 = vld [vmem:[%s378 + $0x90] sm:$0xff]
        %v545 = vld [vmem:[%s378 + $0x98] sm:$0xff]
        %v546 = vld [vmem:[%s378 + $0xa0] sm:$0xff]
        %v547 = vld [vmem:[%s378 + $0xa8] sm:$0xff]
        %v548 = vld [vmem:[%s378 + $0xb0] sm:$0xff]
        %v549 = vld [vmem:[%s378 + $0xb8] sm:$0xff]
        %v550 = vld [vmem:[%s378 + $0xc0] sm:$0xff]
        %v551 = vld [vmem:[%s378 + $0xc8] sm:$0xff]
        %v552 = vld [vmem:[%s378 + $0xd0] sm:$0xff]
        %v553 = vld [vmem:[%s378 + $0xd8] sm:$0xff]
        %v554 = vld [vmem:[%s378 + $0xe0] sm:$0xff]
        %v555 = vld [vmem:[%s378 + $0xe8] sm:$0xff]
        %v556 = vld [vmem:[%s378 + $0xf0] sm:$0xff]
        %v557 = vld [vmem:[%s378 + $0xf8] sm:$0xff]
        %v558 = vld [vmem:[%s378 + $0x100] sm:$0xff]
        %v559 = vld [vmem:[%s378 + $0x108] sm:$0xff]
        %v560 = vld [vmem:[%s378 + $0x110] sm:$0xff]
        %v561 = vld [vmem:[%s378 + $0x118] sm:$0xff]
        %v562 = vld [vmem:[%s378 + $0x120] sm:$0xff]
        %v563 = vld [vmem:[%s378 + $0x128] sm:$0xff]
        %v564 = vld [vmem:[%s378 + $0x130] sm:$0xff]
        %v565 = vld [vmem:[%s378 + $0x138] sm:$0xff]
        %v566 = vld [vmem:[%s378 + $0x140] sm:$0xff]
        %v567 = vld [vmem:[%s378 + $0x148] sm:$0xff]
        %v568 = vld [vmem:[%s378 + $0x150] sm:$0xff]
        %v569 = vld [vmem:[%s378 + $0x158] sm:$0xff]
        %v570 = vld [vmem:[%s378 + $0x160] sm:$0xff]
        %v571 = vld [vmem:[%s378 + $0x168] sm:$0xff]
        %v572 = vld [vmem:[%s378 + $0x170] sm:$0xff]
        %v573 = vld [vmem:[%s378 + $0x178] sm:$0xff]
        %v574 = vld [vmem:[%s378 + $0x180] sm:$0xff]
        %v575 = vld [vmem:[%s378 + $0x188] sm:$0xff]
        %v576 = vld [vmem:[%s378 + $0x190] sm:$0xff]
        %v577 = vld [vmem:[%s378 + $0x198] sm:$0xff]
        %v578 = vld [vmem:[%s378 + $0x1a0] sm:$0xff]
        %v579 = vld [vmem:[%s378 + $0x1a8] sm:$0xff]
        %v580 = vld [vmem:[%s378 + $0x1b0] sm:$0xff]
        %v581 = vld [vmem:[%s378 + $0x1b8] sm:$0xff]
        %v582 = vld [vmem:[%s378 + $0x1c0] sm:$0xff]
        %v583 = vld [vmem:[%s378 + $0x1c8] sm:$0xff]
        %v584 = vld [vmem:[%s378 + $0x1d0] sm:$0xff]
        %v585 = vld [vmem:[%s378 + $0x1d8] sm:$0xff]
        %v586 = vld [vmem:[%s378 + $0x1e0] sm:$0xff]
        %v587 = vld [vmem:[%s378 + $0x1e8] sm:$0xff]
        %v588 = vld [vmem:[%s378 + $0x1f0] sm:$0xff]
        %v589 = vld [vmem:[%s378 + $0x1f8] sm:$0xff]
        %v590 = vld [vmem:[%s378 + $0x200] sm:$0xff]
        %v591 = vld [vmem:[%s378 + $0x208] sm:$0xff]
        %v592 = vld [vmem:[%s378 + $0x210] sm:$0xff]
        %v593 = vld [vmem:[%s378 + $0x218] sm:$0xff]
        %v594 = vld [vmem:[%s378 + $0x220] sm:$0xff]
        %v595 = vld [vmem:[%s378 + $0x228] sm:$0xff]
        %v596 = vld [vmem:[%s378 + $0x230] sm:$0xff]
        %v597 = vld [vmem:[%s378 + $0x238] sm:$0xff]
        %v598 = vld [vmem:[%s378 + $0x240] sm:$0xff]
        %v599 = vld [vmem:[%s378 + $0x248] sm:$0xff]
        %v600 = vld [vmem:[%s378 + $0x250] sm:$0xff]
        %v601 = vld [vmem:[%s378 + $0x258] sm:$0xff]
        %v602 = vld [vmem:[%s378 + $0x260] sm:$0xff]
        %v603 = vld [vmem:[%s378 + $0x268] sm:$0xff]
        %v604 = vld [vmem:[%s378 + $0x270] sm:$0xff]
        %v605 = vld [vmem:[%s378 + $0x278] sm:$0xff]
        %v606 = vld [vmem:[%s378 + $0x280] sm:$0xff]
        %v607 = vld [vmem:[%s378 + $0x288] sm:$0xff]
        %v608 = vld [vmem:[%s378 + $0x290] sm:$0xff]
        %v609 = vld [vmem:[%s378 + $0x298] sm:$0xff]
        %v610 = vld [vmem:[%s378 + $0x2a0] sm:$0xff]
        %v611 = vld [vmem:[%s378 + $0x2a8] sm:$0xff]
        %v612 = vld [vmem:[%s378 + $0x2b0] sm:$0xff]
        %v613 = vld [vmem:[%s378 + $0x2b8] sm:$0xff]
        %v614 = vld [vmem:[%s378 + $0x2c0] sm:$0xff]
        %v615 = vld [vmem:[%s378 + $0x2c8] sm:$0xff]
        %v616 = vld [vmem:[%s378 + $0x2d0] sm:$0xff]
        %v617 = vld [vmem:[%s378 + $0x2d8] sm:$0xff]
        %v618 = vld [vmem:[%s378 + $0x2e0] sm:$0xff]
        %v619 = vld [vmem:[%s378 + $0x2e8] sm:$0xff]
        %v620 = vld [vmem:[%s378 + $0x2f0] sm:$0xff]
        %v621 = vld [vmem:[%s378 + $0x2f8] sm:$0xff]
        %v622 = vld [vmem:[%s378 + $0x300] sm:$0xff]
        %v623 = vld [vmem:[%s378 + $0x308] sm:$0xff]
        %v624 = vld [vmem:[%s378 + $0x310] sm:$0xff]
        %v625 = vld [vmem:[%s378 + $0x318] sm:$0xff]
        %v626 = vld [vmem:[%s378 + $0x320] sm:$0xff]
        %v627 = vld [vmem:[%s378 + $0x328] sm:$0xff]
        %v628 = vld [vmem:[%s378 + $0x330] sm:$0xff]
        %v629 = vld [vmem:[%s378 + $0x338] sm:$0xff]
        %v630 = vld [vmem:[%s378 + $0x340] sm:$0xff]
        %v631 = vld [vmem:[%s378 + $0x348] sm:$0xff]
        %v632 = vld [vmem:[%s378 + $0x350] sm:$0xff]
        %v633 = vld [vmem:[%s378 + $0x358] sm:$0xff]
        %v634 = vld [vmem:[%s378 + $0x360] sm:$0xff]
        %v635 = vld [vmem:[%s378 + $0x368] sm:$0xff]
        %v636 = vld [vmem:[%s378 + $0x370] sm:$0xff]
        %v637 = vld [vmem:[%s378 + $0x378] sm:$0xff]
        %v638 = vld [vmem:[%s378 + $0x380] sm:$0xff]
        %v639 = vld [vmem:[%s378 + $0x388] sm:$0xff]
        %v640 = vld [vmem:[%s378 + $0x390] sm:$0xff]
        %v641 = vld [vmem:[%s378 + $0x398] sm:$0xff]
        %v642 = vld [vmem:[%s378 + $0x3a0] sm:$0xff]
        %v643 = vld [vmem:[%s378 + $0x3a8] sm:$0xff]
        %v644 = vld [vmem:[%s378 + $0x3b0] sm:$0xff]
        %v645 = vld [vmem:[%s378 + $0x3b8] sm:$0xff]
        %v646 = vld [vmem:[%s378 + $0x3c0] sm:$0xff]
        %v647 = vld [vmem:[%s378 + $0x3c8] sm:$0xff]
        %v648 = vld [vmem:[%s378 + $0x3d0] sm:$0xff]
        %v649 = vld [vmem:[%s378 + $0x3d8] sm:$0xff]
        %v650 = vld [vmem:[%s378 + $0x3e0] sm:$0xff]
        %v651 = vld [vmem:[%s378 + $0x3e8] sm:$0xff]
        %v652 = vld [vmem:[%s378 + $0x3f0] sm:$0xff]
        %v653 = vld [vmem:[%s378 + $0x3f8] sm:$0xff]
        %v654 = vld [vmem:[%s378 + $0x400] sm:$0xff]
        %v655 = vld [vmem:[%s378 + $0x408] sm:$0xff]
        %v656 = vld [vmem:[%s378 + $0x410] sm:$0xff]
        %v657 = vld [vmem:[%s378 + $0x418] sm:$0xff]
        %v658 = vld [vmem:[%s378 + $0x420] sm:$0xff]
        %v659 = vld [vmem:[%s378 + $0x428] sm:$0xff]
        %v660 = vld [vmem:[%s378 + $0x430] sm:$0xff]
        %v661 = vld [vmem:[%s378 + $0x438] sm:$0xff]
        %v662 = vld [vmem:[%s378 + $0x440] sm:$0xff]
        %v663 = vld [vmem:[%s378 + $0x448] sm:$0xff]
        %v664 = vld [vmem:[%s378 + $0x450] sm:$0xff]
        %v665 = vld [vmem:[%s378 + $0x458] sm:$0xff]
        %v666 = vld [vmem:[%s378 + $0x460] sm:$0xff]
        %v667 = vld [vmem:[%s378 + $0x468] sm:$0xff]
        %v668 = vld [vmem:[%s378 + $0x470] sm:$0xff]
        %v669 = vld [vmem:[%s378 + $0x478] sm:$0xff]
        %v670 = vld [vmem:[%s378 + $0x480] sm:$0xff]
        %v671 = vld [vmem:[%s378 + $0x488] sm:$0xff]
        %v672 = vld [vmem:[%s378 + $0x490] sm:$0xff]
        %v673 = vld [vmem:[%s378 + $0x498] sm:$0xff]
        %v674 = vld [vmem:[%s378 + $0x4a0] sm:$0xff]
        %v675 = vld [vmem:[%s378 + $0x4a8] sm:$0xff]
        %v676 = vld [vmem:[%s378 + $0x4b0] sm:$0xff]
        %v677 = vld [vmem:[%s378 + $0x4b8] sm:$0xff]
        %v678 = vld [vmem:[%s378 + $0x4c0] sm:$0xff]
        %v679 = vld [vmem:[%s378 + $0x4c8] sm:$0xff]
        %v680 = vld [vmem:[%s378 + $0x4d0] sm:$0xff]
        %v681 = vld [vmem:[%s378 + $0x4d8] sm:$0xff]
        %v682 = vld [vmem:[%s378 + $0x4e0] sm:$0xff]
        %v683 = vld [vmem:[%s378 + $0x4e8] sm:$0xff]
        %v684 = vld [vmem:[%s378 + $0x4f0] sm:$0xff]
        %v685 = vld [vmem:[%s378 + $0x4f8] sm:$0xff]
        %v686 = vld [vmem:[%s378 + $0x500] sm:$0xff]
        %v687 = vld [vmem:[%s378 + $0x508] sm:$0xff]
        %v688 = vld [vmem:[%s378 + $0x510] sm:$0xff]
        %v689 = vld [vmem:[%s378 + $0x518] sm:$0xff]
        %v690 = vld [vmem:[%s378 + $0x520] sm:$0xff]
        %v691 = vld [vmem:[%s378 + $0x528] sm:$0xff]
        %v692 = vld [vmem:[%s378 + $0x530] sm:$0xff]
        %v693 = vld [vmem:[%s378 + $0x538] sm:$0xff]
        %v694 = vld [vmem:[%s378 + $0x540] sm:$0xff]
        %v695 = vld [vmem:[%s378 + $0x548] sm:$0xff]
        %v696 = vld [vmem:[%s378 + $0x550] sm:$0xff]
        %v697 = vld [vmem:[%s378 + $0x558] sm:$0xff]
        %v698 = vld [vmem:[%s378 + $0x560] sm:$0xff]
        %v699 = vld [vmem:[%s378 + $0x568] sm:$0xff]
        %v700 = vld [vmem:[%s378 + $0x570] sm:$0xff]
        %v701 = vld [vmem:[%s378 + $0x578] sm:$0xff]
        %v702 = vld [vmem:[%s378 + $0x580] sm:$0xff]
        %v703 = vld [vmem:[%s378 + $0x588] sm:$0xff]
        %v704 = vld [vmem:[%s378 + $0x590] sm:$0xff]
        %v705 = vld [vmem:[%s378 + $0x598] sm:$0xff]
        %v706 = vld [vmem:[%s378 + $0x5a0] sm:$0xff]
        %v707 = vld [vmem:[%s378 + $0x5a8] sm:$0xff]
        %v708 = vld [vmem:[%s378 + $0x5b0] sm:$0xff]
        %v709 = vld [vmem:[%s378 + $0x5b8] sm:$0xff]
        %v710 = vld [vmem:[%s378 + $0x5c0] sm:$0xff]
        %v711 = vld [vmem:[%s378 + $0x5c8] sm:$0xff]
        %v712 = vld [vmem:[%s378 + $0x5d0] sm:$0xff]
        %v713 = vld [vmem:[%s378 + $0x5d8] sm:$0xff]
        %v714 = vld [vmem:[%s378 + $0x5e0] sm:$0xff]
        %v715 = vld [vmem:[%s378 + $0x5e8] sm:$0xff]
        %v716 = vld [vmem:[%s378 + $0x5f0] sm:$0xff]
        %v717 = vld [vmem:[%s378 + $0x5f8] sm:$0xff]
        %v718 = vld [vmem:[%s378 + $0x600] sm:$0xff]
        %v719 = vld [vmem:[%s378 + $0x608] sm:$0xff]
        %v720 = vld [vmem:[%s378 + $0x610] sm:$0xff]
        %v721 = vld [vmem:[%s378 + $0x618] sm:$0xff]
        %v722 = vld [vmem:[%s378 + $0x620] sm:$0xff]
        %v723 = vld [vmem:[%s378 + $0x628] sm:$0xff]
        %v724 = vld [vmem:[%s378 + $0x630] sm:$0xff]
        %v725 = vld [vmem:[%s378 + $0x638] sm:$0xff]
        %v726 = vld [vmem:[%s378 + $0x640] sm:$0xff]
        %v727 = vld [vmem:[%s378 + $0x648] sm:$0xff]
        %v728 = vld [vmem:[%s378 + $0x650] sm:$0xff]
        %v729 = vld [vmem:[%s378 + $0x658] sm:$0xff]
        %v730 = vld [vmem:[%s378 + $0x660] sm:$0xff]
        %v731 = vld [vmem:[%s378 + $0x668] sm:$0xff]
        %v732 = vld [vmem:[%s378 + $0x670] sm:$0xff]
        %v733 = vld [vmem:[%s378 + $0x678] sm:$0xff]
        %v734 = vld [vmem:[%s378 + $0x680] sm:$0xff]
        %v735 = vld [vmem:[%s378 + $0x688] sm:$0xff]
        %v736 = vld [vmem:[%s378 + $0x690] sm:$0xff]
        %v737 = vld [vmem:[%s378 + $0x698] sm:$0xff]
        %v738 = vld [vmem:[%s378 + $0x6a0] sm:$0xff]
        %v739 = vld [vmem:[%s378 + $0x6a8] sm:$0xff]
        %v740 = vld [vmem:[%s378 + $0x6b0] sm:$0xff]
        %v741 = vld [vmem:[%s378 + $0x6b8] sm:$0xff]
        %v742 = vld [vmem:[%s378 + $0x6c0] sm:$0xff]
        %v743 = vld [vmem:[%s378 + $0x6c8] sm:$0xff]
        %v744 = vld [vmem:[%s378 + $0x6d0] sm:$0xff]
        %v745 = vld [vmem:[%s378 + $0x6d8] sm:$0xff]
        %v746 = vld [vmem:[%s378 + $0x6e0] sm:$0xff]
        %v747 = vld [vmem:[%s378 + $0x6e8] sm:$0xff]
        %v748 = vld [vmem:[%s378 + $0x6f0] sm:$0xff]
        %v749 = vld [vmem:[%s378 + $0x6f8] sm:$0xff]
        %v750 = vld [vmem:[%s378 + $0x700] sm:$0xff]
        %v751 = vld [vmem:[%s378 + $0x708] sm:$0xff]
        %v752 = vld [vmem:[%s378 + $0x710] sm:$0xff]
        %v753 = vld [vmem:[%s378 + $0x718] sm:$0xff]
        %v754 = vld [vmem:[%s378 + $0x720] sm:$0xff]
        %v755 = vld [vmem:[%s378 + $0x728] sm:$0xff]
        %v756 = vld [vmem:[%s378 + $0x730] sm:$0xff]
        %v757 = vld [vmem:[%s378 + $0x738] sm:$0xff]
        %v758 = vld [vmem:[%s378 + $0x740] sm:$0xff]
        %v759 = vld [vmem:[%s378 + $0x748] sm:$0xff]
        %v760 = vld [vmem:[%s378 + $0x750] sm:$0xff]
        %v761 = vld [vmem:[%s378 + $0x758] sm:$0xff]
        %v762 = vld [vmem:[%s378 + $0x760] sm:$0xff]
        %v763 = vld [vmem:[%s378 + $0x768] sm:$0xff]
        %v764 = vld [vmem:[%s378 + $0x770] sm:$0xff]
        %v765 = vld [vmem:[%s378 + $0x778] sm:$0xff]
        %v766 = vld [vmem:[%s378 + $0x780] sm:$0xff]
        %v767 = vld [vmem:[%s378 + $0x788] sm:$0xff]
        %v768 = vld [vmem:[%s378 + $0x790] sm:$0xff]
        %v769 = vld [vmem:[%s378 + $0x798] sm:$0xff]
        %v770 = vld [vmem:[%s378 + $0x7a0] sm:$0xff]
        %v771 = vld [vmem:[%s378 + $0x7a8] sm:$0xff]
        %v772 = vld [vmem:[%s378 + $0x7b0] sm:$0xff]
        %v773 = vld [vmem:[%s378 + $0x7b8] sm:$0xff]
        %v774 = vld [vmem:[%s378 + $0x7c0] sm:$0xff]
        %v775 = vld [vmem:[%s378 + $0x7c8] sm:$0xff]
        %v776 = vld [vmem:[%s378 + $0x7d0] sm:$0xff]
        %v777 = vld [vmem:[%s378 + $0x7d8] sm:$0xff]
        %v778 = vld [vmem:[%s378 + $0x7e0] sm:$0xff]
        %v779 = vld [vmem:[%s378 + $0x7e8] sm:$0xff]
        %v780 = vld [vmem:[%s378 + $0x7f0] sm:$0xff]
        %v781 = vld [vmem:[%s378 + $0x7f8] sm:$0xff]
        %v782 = vld [vmem:[%s378 + $0x800] sm:$0xff]
        %v783 = vld [vmem:[%s378 + $0x808] sm:$0xff]
        %v784 = vld [vmem:[%s378 + $0x810] sm:$0xff]
        %v785 = vld [vmem:[%s378 + $0x818] sm:$0xff]
        %v786 = vld [vmem:[%s378 + $0x820] sm:$0xff]
        %v787 = vld [vmem:[%s378 + $0x828] sm:$0xff]
        %v788 = vld [vmem:[%s378 + $0x830] sm:$0xff]
        %v789 = vld [vmem:[%s378 + $0x838] sm:$0xff]
        %v790 = vld [vmem:[%s378 + $0x840] sm:$0xff]
        %v791 = vld [vmem:[%s378 + $0x848] sm:$0xff]
        %v792 = vld [vmem:[%s378 + $0x850] sm:$0xff]
        %v793 = vld [vmem:[%s378 + $0x858] sm:$0xff]
        %v794 = vld [vmem:[%s378 + $0x860] sm:$0xff]
        %v795 = vld [vmem:[%s378 + $0x868] sm:$0xff]
        %v796 = vld [vmem:[%s378 + $0x870] sm:$0xff]
        %v797 = vld [vmem:[%s378 + $0x878] sm:$0xff]
        %v798 = vld [vmem:[%s378 + $0x880] sm:$0xff]
        %v799 = vld [vmem:[%s378 + $0x888] sm:$0xff]
        %v800 = vld [vmem:[%s378 + $0x890] sm:$0xff]
        %v801 = vld [vmem:[%s378 + $0x898] sm:$0xff]
        %v802 = vld [vmem:[%s378 + $0x8a0] sm:$0xff]
        %v803 = vld [vmem:[%s378 + $0x8a8] sm:$0xff]
        %v804 = vld [vmem:[%s378 + $0x8b0] sm:$0xff]
        %v805 = vld [vmem:[%s378 + $0x8b8] sm:$0xff]
        %v806 = vld [vmem:[%s378 + $0x8c0] sm:$0xff]
        %v807 = vld [vmem:[%s378 + $0x8c8] sm:$0xff]
        %v808 = vld [vmem:[%s378 + $0x8d0] sm:$0xff]
        %v809 = vld [vmem:[%s378 + $0x8d8] sm:$0xff]
        %v810 = vld [vmem:[%s378 + $0x8e0] sm:$0xff]
        %v811 = vld [vmem:[%s378 + $0x8e8] sm:$0xff]
        %v812 = vld [vmem:[%s378 + $0x8f0] sm:$0xff]
        %v813 = vld [vmem:[%s378 + $0x8f8] sm:$0xff]
        %v814 = vld [vmem:[%s378 + $0x900] sm:$0xff]
        %v815 = vld [vmem:[%s378 + $0x908] sm:$0xff]
        %v816 = vld [vmem:[%s378 + $0x910] sm:$0xff]
        %v817 = vld [vmem:[%s378 + $0x918] sm:$0xff]
        %v818 = vld [vmem:[%s378 + $0x920] sm:$0xff]
        %v819 = vld [vmem:[%s378 + $0x928] sm:$0xff]
        %v820 = vld [vmem:[%s378 + $0x930] sm:$0xff]
        %v821 = vld [vmem:[%s378 + $0x938] sm:$0xff]
        %v822 = vld [vmem:[%s378 + $0x940] sm:$0xff]
        %v823 = vld [vmem:[%s378 + $0x948] sm:$0xff]
        %v824 = vld [vmem:[%s378 + $0x950] sm:$0xff]
        %v825 = vld [vmem:[%s378 + $0x958] sm:$0xff]
        %v826 = vld [vmem:[%s378 + $0x960] sm:$0xff]
        %v827 = vld [vmem:[%s378 + $0x968] sm:$0xff]
        %v828 = vld [vmem:[%s378 + $0x970] sm:$0xff]
        %v829 = vld [vmem:[%s378 + $0x978] sm:$0xff]
        %v830 = vld [vmem:[%s378 + $0x980] sm:$0xff]
        %v831 = vld [vmem:[%s378 + $0x988] sm:$0xff]
        %v832 = vld [vmem:[%s378 + $0x990] sm:$0xff]
        %v833 = vld [vmem:[%s378 + $0x998] sm:$0xff]
        %v834 = vld [vmem:[%s378 + $0x9a0] sm:$0xff]
        %v835 = vld [vmem:[%s378 + $0x9a8] sm:$0xff]
        %v836 = vld [vmem:[%s378 + $0x9b0] sm:$0xff]
        %v837 = vld [vmem:[%s378 + $0x9b8] sm:$0xff]
        %v838 = vld [vmem:[%s378 + $0x9c0] sm:$0xff]
        %v839 = vld [vmem:[%s378 + $0x9c8] sm:$0xff]
        %v840 = vld [vmem:[%s378 + $0x9d0] sm:$0xff]
        %v841 = vld [vmem:[%s378 + $0x9d8] sm:$0xff]
        %v842 = vld [vmem:[%s378 + $0x9e0] sm:$0xff]
        %v843 = vld [vmem:[%s378 + $0x9e8] sm:$0xff]
        %v844 = vld [vmem:[%s378 + $0x9f0] sm:$0xff]
        %v845 = vld [vmem:[%s378 + $0x9f8] sm:$0xff]
        %v846 = vld [vmem:[%s378 + $0xa00] sm:$0xff]
        %v847 = vld [vmem:[%s378 + $0xa08] sm:$0xff]
        %v848 = vld [vmem:[%s378 + $0xa10] sm:$0xff]
        %v849 = vld [vmem:[%s378 + $0xa18] sm:$0xff]
        %v850 = vld [vmem:[%s378 + $0xa20] sm:$0xff]
        %v851 = vld [vmem:[%s378 + $0xa28] sm:$0xff]
        %v852 = vld [vmem:[%s378 + $0xa30] sm:$0xff]
        %v853 = vld [vmem:[%s378 + $0xa38] sm:$0xff]
        %v854 = vld [vmem:[%s378 + $0xa40] sm:$0xff]
        %v855 = vld [vmem:[%s378 + $0xa48] sm:$0xff]
        %v856 = vld [vmem:[%s378 + $0xa50] sm:$0xff]
        %v857 = vld [vmem:[%s378 + $0xa58] sm:$0xff]
        %v858 = vld [vmem:[%s378 + $0xa60] sm:$0xff]
        %v859 = vld [vmem:[%s378 + $0xa68] sm:$0xff]
        %v860 = vld [vmem:[%s378 + $0xa70] sm:$0xff]
        %v861 = vld [vmem:[%s378 + $0xa78] sm:$0xff]
        %v862 = vld [vmem:[%s378 + $0xa80] sm:$0xff]
        %v863 = vld [vmem:[%s378 + $0xa88] sm:$0xff]
        %v864 = vld [vmem:[%s378 + $0xa90] sm:$0xff]
        %v865 = vld [vmem:[%s378 + $0xa98] sm:$0xff]
        %v866 = vld [vmem:[%s378 + $0xaa0] sm:$0xff]
        %v867 = vld [vmem:[%s378 + $0xaa8] sm:$0xff]
        %v868 = vld [vmem:[%s378 + $0xab0] sm:$0xff]
        %v869 = vld [vmem:[%s378 + $0xab8] sm:$0xff]
        %v870 = vld [vmem:[%s378 + $0xac0] sm:$0xff]
        %v871 = vld [vmem:[%s378 + $0xac8] sm:$0xff]
        %v872 = vld [vmem:[%s378 + $0xad0] sm:$0xff]
        %v873 = vld [vmem:[%s378 + $0xad8] sm:$0xff]
        %v874 = vld [vmem:[%s378 + $0xae0] sm:$0xff]
        %v875 = vld [vmem:[%s378 + $0xae8] sm:$0xff]
        %v876 = vld [vmem:[%s378 + $0xaf0] sm:$0xff]
        %v877 = vld [vmem:[%s378 + $0xaf8] sm:$0xff]
        %v878 = vld [vmem:[%s378 + $0xb00] sm:$0xff]
        %v879 = vld [vmem:[%s378 + $0xb08] sm:$0xff]
        %v880 = vld [vmem:[%s378 + $0xb10] sm:$0xff]
        %v881 = vld [vmem:[%s378 + $0xb18] sm:$0xff]
        %v882 = vld [vmem:[%s378 + $0xb20] sm:$0xff]
        %v883 = vld [vmem:[%s378 + $0xb28] sm:$0xff]
        %v884 = vld [vmem:[%s378 + $0xb30] sm:$0xff]
        %v885 = vld [vmem:[%s378 + $0xb38] sm:$0xff]
        %v886 = vld [vmem:[%s378 + $0xb40] sm:$0xff]
        %v887 = vld [vmem:[%s378 + $0xb48] sm:$0xff]
        %v888 = vld [vmem:[%s378 + $0xb50] sm:$0xff]
        %v889 = vld [vmem:[%s378 + $0xb58] sm:$0xff]
        %v890 = vld [vmem:[%s378 + $0xb60] sm:$0xff]
        %v891 = vld [vmem:[%s378 + $0xb68] sm:$0xff]
        %v892 = vld [vmem:[%s378 + $0xb70] sm:$0xff]
        %v893 = vld [vmem:[%s378 + $0xb78] sm:$0xff]
        %v894 = vld [vmem:[%s378 + $0xb80] sm:$0xff]
        %v895 = vld [vmem:[%s378 + $0xb88] sm:$0xff]
        %v896 = vld [vmem:[%s378 + $0xb90] sm:$0xff]
        %v897 = vld [vmem:[%s378 + $0xb98] sm:$0xff]
        %v898 = vld [vmem:[%s378 + $0xba0] sm:$0xff]
        %v899 = vld [vmem:[%s378 + $0xba8] sm:$0xff]
        %v900 = vld [vmem:[%s378 + $0xbb0] sm:$0xff]
        %v901 = vld [vmem:[%s378 + $0xbb8] sm:$0xff]
        %v902 = vld [vmem:[%s378 + $0xbc0] sm:$0xff]
        %v903 = vld [vmem:[%s378 + $0xbc8] sm:$0xff]
        %v904 = vld [vmem:[%s378 + $0xbd0] sm:$0xff]
        %v905 = vld [vmem:[%s378 + $0xbd8] sm:$0xff]
        %v906 = vld [vmem:[%s378 + $0xbe0] sm:$0xff]
        %v907 = vld [vmem:[%s378 + $0xbe8] sm:$0xff]
        %v908 = vld [vmem:[%s378 + $0xbf0] sm:$0xff]
        %v909 = vld [vmem:[%s378 + $0xbf8] sm:$0xff]
        %v910 = vld [vmem:[%s378 + $0xc00] sm:$0xff]
        %v911 = vld [vmem:[%s378 + $0xc08] sm:$0xff]
        %v912 = vld [vmem:[%s378 + $0xc10] sm:$0xff]
        %v913 = vld [vmem:[%s378 + $0xc18] sm:$0xff]
        %v914 = vld [vmem:[%s378 + $0xc20] sm:$0xff]
        %v915 = vld [vmem:[%s378 + $0xc28] sm:$0xff]
        %v916 = vld [vmem:[%s378 + $0xc30] sm:$0xff]
        %v917 = vld [vmem:[%s378 + $0xc38] sm:$0xff]
        %v918 = vld [vmem:[%s378 + $0xc40] sm:$0xff]
        %v919 = vld [vmem:[%s378 + $0xc48] sm:$0xff]
        %v920 = vld [vmem:[%s378 + $0xc50] sm:$0xff]
        %v921 = vld [vmem:[%s378 + $0xc58] sm:$0xff]
        %v922 = vld [vmem:[%s378 + $0xc60] sm:$0xff]
        %v923 = vld [vmem:[%s378 + $0xc68] sm:$0xff]
        %v924 = vld [vmem:[%s378 + $0xc70] sm:$0xff]
        %v925 = vld [vmem:[%s378 + $0xc78] sm:$0xff]
        %v926 = vld [vmem:[%s378 + $0xc80] sm:$0xff]
        %v927 = vld [vmem:[%s378 + $0xc88] sm:$0xff]
        %v928 = vld [vmem:[%s378 + $0xc90] sm:$0xff]
        %v929 = vld [vmem:[%s378 + $0xc98] sm:$0xff]
        %v930 = vld [vmem:[%s378 + $0xca0] sm:$0xff]
        %v931 = vld [vmem:[%s378 + $0xca8] sm:$0xff]
        %v932 = vld [vmem:[%s378 + $0xcb0] sm:$0xff]
        %v933 = vld [vmem:[%s378 + $0xcb8] sm:$0xff]
        %v934 = vld [vmem:[%s378 + $0xcc0] sm:$0xff]
        %v935 = vld [vmem:[%s378 + $0xcc8] sm:$0xff]
        %v936 = vld [vmem:[%s378 + $0xcd0] sm:$0xff]
        %v937 = vld [vmem:[%s378 + $0xcd8] sm:$0xff]
        %v938 = vld [vmem:[%s378 + $0xce0] sm:$0xff]
        %v939 = vld [vmem:[%s378 + $0xce8] sm:$0xff]
        %v940 = vld [vmem:[%s378 + $0xcf0] sm:$0xff]
        %v941 = vld [vmem:[%s378 + $0xcf8] sm:$0xff]
        %v942 = vld [vmem:[%s378 + $0xd00] sm:$0xff]
        %v943 = vld [vmem:[%s378 + $0xd08] sm:$0xff]
        %v944 = vld [vmem:[%s378 + $0xd10] sm:$0xff]
        %v945 = vld [vmem:[%s378 + $0xd18] sm:$0xff]
        %v946 = vld [vmem:[%s378 + $0xd20] sm:$0xff]
        %v947 = vld [vmem:[%s378 + $0xd28] sm:$0xff]
        %v948 = vld [vmem:[%s378 + $0xd30] sm:$0xff]
        %v949 = vld [vmem:[%s378 + $0xd38] sm:$0xff]
        %v950 = vld [vmem:[%s378 + $0xd40] sm:$0xff]
        %v951 = vld [vmem:[%s378 + $0xd48] sm:$0xff]
        %v952 = vld [vmem:[%s378 + $0xd50] sm:$0xff]
        %v953 = vld [vmem:[%s378 + $0xd58] sm:$0xff]
        %v954 = vld [vmem:[%s378 + $0xd60] sm:$0xff]
        %v955 = vld [vmem:[%s378 + $0xd68] sm:$0xff]
        %v956 = vld [vmem:[%s378 + $0xd70] sm:$0xff]
        %v957 = vld [vmem:[%s378 + $0xd78] sm:$0xff]
        %v958 = vld [vmem:[%s378 + $0xd80] sm:$0xff]
        %v959 = vld [vmem:[%s378 + $0xd88] sm:$0xff]
        %v960 = vld [vmem:[%s378 + $0xd90] sm:$0xff]
        %v961 = vld [vmem:[%s378 + $0xd98] sm:$0xff]
        %v962 = vld [vmem:[%s378 + $0xda0] sm:$0xff]
        %v963 = vld [vmem:[%s378 + $0xda8] sm:$0xff]
        %v964 = vld [vmem:[%s378 + $0xdb0] sm:$0xff]
        %v965 = vld [vmem:[%s378 + $0xdb8] sm:$0xff]
        %v966 = vld [vmem:[%s378 + $0xdc0] sm:$0xff]
        %v967 = vld [vmem:[%s378 + $0xdc8] sm:$0xff]
        %v968 = vld [vmem:[%s378 + $0xdd0] sm:$0xff]
        %v969 = vld [vmem:[%s378 + $0xdd8] sm:$0xff]
        %v970 = vld [vmem:[%s378 + $0xde0] sm:$0xff]
        %v971 = vld [vmem:[%s378 + $0xde8] sm:$0xff]
        %v972 = vld [vmem:[%s378 + $0xdf0] sm:$0xff]
        %v973 = vld [vmem:[%s378 + $0xdf8] sm:$0xff]
        %v974 = vld [vmem:[%s378 + $0xe00] sm:$0xff]
        %v975 = vld [vmem:[%s378 + $0xe08] sm:$0xff]
        %v976 = vld [vmem:[%s378 + $0xe10] sm:$0xff]
        %v977 = vld [vmem:[%s378 + $0xe18] sm:$0xff]
        %v978 = vld [vmem:[%s378 + $0xe20] sm:$0xff]
        %v979 = vld [vmem:[%s378 + $0xe28] sm:$0xff]
        %v980 = vld [vmem:[%s378 + $0xe30] sm:$0xff]
        %v981 = vld [vmem:[%s378 + $0xe38] sm:$0xff]
        %v982 = vld [vmem:[%s378 + $0xe40] sm:$0xff]
        %v983 = vld [vmem:[%s378 + $0xe48] sm:$0xff]
        %v984 = vld [vmem:[%s378 + $0xe50] sm:$0xff]
        %v985 = vld [vmem:[%s378 + $0xe58] sm:$0xff]
        %v986 = vld [vmem:[%s378 + $0xe60] sm:$0xff]
        %v987 = vld [vmem:[%s378 + $0xe68] sm:$0xff]
        %v988 = vld [vmem:[%s378 + $0xe70] sm:$0xff]
        %v989 = vld [vmem:[%s378 + $0xe78] sm:$0xff]
        %v990 = vld [vmem:[%s378 + $0xe80] sm:$0xff]
        %v991 = vld [vmem:[%s378 + $0xe88] sm:$0xff]
        %v992 = vld [vmem:[%s378 + $0xe90] sm:$0xff]
        %v993 = vld [vmem:[%s378 + $0xe98] sm:$0xff]
        %v994 = vld [vmem:[%s378 + $0xea0] sm:$0xff]
        %v995 = vld [vmem:[%s378 + $0xea8] sm:$0xff]
        %v996 = vld [vmem:[%s378 + $0xeb0] sm:$0xff]
        %v997 = vld [vmem:[%s378 + $0xeb8] sm:$0xff]
        %v998 = vld [vmem:[%s378 + $0xec0] sm:$0xff]
        %v999 = vld [vmem:[%s378 + $0xec8] sm:$0xff]
        %v1000 = vld [vmem:[%s378 + $0xed0] sm:$0xff]
        %v1001 = vld [vmem:[%s378 + $0xed8] sm:$0xff]
        %v1002 = vld [vmem:[%s378 + $0xee0] sm:$0xff]
        %v1003 = vld [vmem:[%s378 + $0xee8] sm:$0xff]
        %v1004 = vld [vmem:[%s378 + $0xef0] sm:$0xff]
        %v1005 = vld [vmem:[%s378 + $0xef8] sm:$0xff]
        %v1006 = vld [vmem:[%s378 + $0xf00] sm:$0xff]
        %v1007 = vld [vmem:[%s378 + $0xf08] sm:$0xff]
        %v1008 = vld [vmem:[%s378 + $0xf10] sm:$0xff]
        %v1009 = vld [vmem:[%s378 + $0xf18] sm:$0xff]
        %v1010 = vld [vmem:[%s378 + $0xf20] sm:$0xff]
        %v1011 = vld [vmem:[%s378 + $0xf28] sm:$0xff]
        %v1012 = vld [vmem:[%s378 + $0xf30] sm:$0xff]
        %v1013 = vld [vmem:[%s378 + $0xf38] sm:$0xff]
        %v1014 = vld [vmem:[%s378 + $0xf40] sm:$0xff]
        %v1015 = vld [vmem:[%s378 + $0xf48] sm:$0xff]
        %v1016 = vld [vmem:[%s378 + $0xf50] sm:$0xff]
        %v1017 = vld [vmem:[%s378 + $0xf58] sm:$0xff]
        %v1018 = vld [vmem:[%s378 + $0xf60] sm:$0xff]
        %v1019 = vld [vmem:[%s378 + $0xf68] sm:$0xff]
        %v1020 = vld [vmem:[%s378 + $0xf70] sm:$0xff]
        %v1021 = vld [vmem:[%s378 + $0xf78] sm:$0xff]
        %v1022 = vld [vmem:[%s378 + $0xf80] sm:$0xff]
        %v1023 = vld [vmem:[%s378 + $0xf88] sm:$0xff]
        %v1024 = vld [vmem:[%s378 + $0xf90] sm:$0xff]
        %v1025 = vld [vmem:[%s378 + $0xf98] sm:$0xff]
        %v1026 = vld [vmem:[%s378 + $0xfa0] sm:$0xff]
        %v1027 = vld [vmem:[%s378 + $0xfa8] sm:$0xff]
        %v1028 = vld [vmem:[%s378 + $0xfb0] sm:$0xff]
        %v1029 = vld [vmem:[%s378 + $0xfb8] sm:$0xff]
        %v1030 = vld [vmem:[%s378 + $0xfc0] sm:$0xff]
        %v1031 = vld [vmem:[%s378 + $0xfc8] sm:$0xff]
        %v1032 = vld [vmem:[%s378 + $0xfd0] sm:$0xff]
        %v1033 = vld [vmem:[%s378 + $0xfd8] sm:$0xff]
        %v1034 = vld [vmem:[%s378 + $0xfe0] sm:$0xff]
        %v1035 = vld [vmem:[%s378 + $0xfe8] sm:$0xff]
        %v1036 = vld [vmem:[%s378 + $0xff0] sm:$0xff]
        %v1037 = vld [vmem:[%s378 + $0xff8] sm:$0xff]
        %v1038 = vld [vmem:[%s378 + $0x1000] sm:$0xff]
        %v1039 = vld [vmem:[%s378 + $0x1008] sm:$0xff]
        %v1040 = vld [vmem:[%s378 + $0x1010] sm:$0xff]
        %v1041 = vld [vmem:[%s378 + $0x1018] sm:$0xff]
        %v1042 = vld [vmem:[%s378 + $0x1020] sm:$0xff]
        %v1043 = vld [vmem:[%s378 + $0x1028] sm:$0xff]
        %v1044 = vld [vmem:[%s378 + $0x1030] sm:$0xff]
        %v1045 = vld [vmem:[%s378 + $0x1038] sm:$0xff]
        %v1046 = vld [vmem:[%s378 + $0x1040] sm:$0xff]
        %v1047 = vld [vmem:[%s378 + $0x1048] sm:$0xff]
        %v1048 = vld [vmem:[%s378 + $0x1050] sm:$0xff]
        %v1049 = vld [vmem:[%s378 + $0x1058] sm:$0xff]
        %v1050 = vld [vmem:[%s378 + $0x1060] sm:$0xff]
        %v1051 = vld [vmem:[%s378 + $0x1068] sm:$0xff]
        %v1052 = vld [vmem:[%s378 + $0x1070] sm:$0xff]
        %v1053 = vld [vmem:[%s378 + $0x1078] sm:$0xff]
        %v1054 = vld [vmem:[%s378 + $0x1080] sm:$0xff]
        %v1055 = vld [vmem:[%s378 + $0x1088] sm:$0xff]
        %v1056 = vld [vmem:[%s378 + $0x1090] sm:$0xff]
        %v1057 = vld [vmem:[%s378 + $0x1098] sm:$0xff]
        %v1058 = vld [vmem:[%s378 + $0x10a0] sm:$0xff]
        %v1059 = vld [vmem:[%s378 + $0x10a8] sm:$0xff]
        %v1060 = vld [vmem:[%s378 + $0x10b0] sm:$0xff]
        %v1061 = vld [vmem:[%s378 + $0x10b8] sm:$0xff]
        %v1062 = vld [vmem:[%s378 + $0x10c0] sm:$0xff]
        %v1063 = vld [vmem:[%s378 + $0x10c8] sm:$0xff]
        %v1064 = vld [vmem:[%s378 + $0x10d0] sm:$0xff]
        %v1065 = vld [vmem:[%s378 + $0x10d8] sm:$0xff]
        %v1066 = vld [vmem:[%s378 + $0x10e0] sm:$0xff]
        %v1067 = vld [vmem:[%s378 + $0x10e8] sm:$0xff]
        %v1068 = vld [vmem:[%s378 + $0x10f0] sm:$0xff]
        %v1069 = vld [vmem:[%s378 + $0x10f8] sm:$0xff]
        %v1070 = vld [vmem:[%s378 + $0x1100] sm:$0xff]
        %v1071 = vld [vmem:[%s378 + $0x1108] sm:$0xff]
        %v1072 = vld [vmem:[%s378 + $0x1110] sm:$0xff]
        %v1073 = vld [vmem:[%s378 + $0x1118] sm:$0xff]
        %v1074 = vld [vmem:[%s378 + $0x1120] sm:$0xff]
        %v1075 = vld [vmem:[%s378 + $0x1128] sm:$0xff]
        %v1076 = vld [vmem:[%s378 + $0x1130] sm:$0xff]
        %v1077 = vld [vmem:[%s378 + $0x1138] sm:$0xff]
        %v1078 = vld [vmem:[%s378 + $0x1140] sm:$0xff]
        %v1079 = vld [vmem:[%s378 + $0x1148] sm:$0xff]
        %v1080 = vld [vmem:[%s378 + $0x1150] sm:$0xff]
        %v1081 = vld [vmem:[%s378 + $0x1158] sm:$0xff]
        %v1082 = vld [vmem:[%s378 + $0x1160] sm:$0xff]
        %v1083 = vld [vmem:[%s378 + $0x1168] sm:$0xff]
        %v1084 = vld [vmem:[%s378 + $0x1170] sm:$0xff]
        %v1085 = vld [vmem:[%s378 + $0x1178] sm:$0xff]
        %v1086 = vld [vmem:[%s378 + $0x1180] sm:$0xff]
        %v1087 = vld [vmem:[%s378 + $0x1188] sm:$0xff]
        %v1088 = vld [vmem:[%s378 + $0x1190] sm:$0xff]
        %v1089 = vld [vmem:[%s378 + $0x1198] sm:$0xff]
        %v1090 = vld [vmem:[%s378 + $0x11a0] sm:$0xff]
        %v1091 = vld [vmem:[%s378 + $0x11a8] sm:$0xff]
        %v1092 = vld [vmem:[%s378 + $0x11b0] sm:$0xff]
        %v1093 = vld [vmem:[%s378 + $0x11b8] sm:$0xff]
        %v1094 = vld [vmem:[%s378 + $0x11c0] sm:$0xff]
        %v1095 = vld [vmem:[%s378 + $0x11c8] sm:$0xff]
        %v1096 = vld [vmem:[%s378 + $0x11d0] sm:$0xff]
        %v1097 = vld [vmem:[%s378 + $0x11d8] sm:$0xff]
        %v1098 = vld [vmem:[%s378 + $0x11e0] sm:$0xff]
        %v1099 = vld [vmem:[%s378 + $0x11e8] sm:$0xff]
        %v1100 = vld [vmem:[%s378 + $0x11f0] sm:$0xff]
        %v1101 = vld [vmem:[%s378 + $0x11f8] sm:$0xff]
        %v1102 = vld [vmem:[%s378 + $0x1200] sm:$0xff]
        %v1103 = vld [vmem:[%s378 + $0x1208] sm:$0xff]
        %v1104 = vld [vmem:[%s378 + $0x1210] sm:$0xff]
        %v1105 = vld [vmem:[%s378 + $0x1218] sm:$0xff]
        %v1106 = vld [vmem:[%s378 + $0x1220] sm:$0xff]
        %v1107 = vld [vmem:[%s378 + $0x1228] sm:$0xff]
        %v1108 = vld [vmem:[%s378 + $0x1230] sm:$0xff]
        %v1109 = vld [vmem:[%s378 + $0x1238] sm:$0xff]
        %v1110 = vld [vmem:[%s378 + $0x1240] sm:$0xff]
        %v1111 = vld [vmem:[%s378 + $0x1248] sm:$0xff]
        %v1112 = vld [vmem:[%s378 + $0x1250] sm:$0xff]
        %v1113 = vld [vmem:[%s378 + $0x1258] sm:$0xff]
        %v1114 = vld [vmem:[%s378 + $0x1260] sm:$0xff]
        %v1115 = vld [vmem:[%s378 + $0x1268] sm:$0xff]
        %v1116 = vld [vmem:[%s378 + $0x1270] sm:$0xff]
        %v1117 = vld [vmem:[%s378 + $0x1278] sm:$0xff]
        %v1118 = vld [vmem:[%s378 + $0x1280] sm:$0xff]
        %v1119 = vld [vmem:[%s378 + $0x1288] sm:$0xff]
        %v1120 = vld [vmem:[%s378 + $0x1290] sm:$0xff]
        %v1121 = vld [vmem:[%s378 + $0x1298] sm:$0xff]
        %v1122 = vld [vmem:[%s378 + $0x12a0] sm:$0xff]
        %v1123 = vld [vmem:[%s378 + $0x12a8] sm:$0xff]
        %v1124 = vld [vmem:[%s378 + $0x12b0] sm:$0xff]
        %v1125 = vld [vmem:[%s378 + $0x12b8] sm:$0xff]
        %v1126 = vld [vmem:[%s378 + $0x12c0] sm:$0xff]
        %v1127 = vld [vmem:[%s378 + $0x12c8] sm:$0xff]
        %v1128 = vld [vmem:[%s378 + $0x12d0] sm:$0xff]
        %v1129 = vld [vmem:[%s378 + $0x12d8] sm:$0xff]
        %v1130 = vld [vmem:[%s378 + $0x12e0] sm:$0xff]
        %v1131 = vld [vmem:[%s378 + $0x12e8] sm:$0xff]
        %v1132 = vld [vmem:[%s378 + $0x12f0] sm:$0xff]
        %v1133 = vld [vmem:[%s378 + $0x12f8] sm:$0xff]
        %v1134 = vld [vmem:[%s378 + $0x1300] sm:$0xff]
        %v1135 = vld [vmem:[%s378 + $0x1308] sm:$0xff]
        %v1136 = vld [vmem:[%s378 + $0x1310] sm:$0xff]
        %v1137 = vld [vmem:[%s378 + $0x1318] sm:$0xff]
        %v1138 = vld [vmem:[%s378 + $0x1320] sm:$0xff]
        %v1139 = vld [vmem:[%s378 + $0x1328] sm:$0xff]
        %v1140 = vld [vmem:[%s378 + $0x1330] sm:$0xff]
        %v1141 = vld [vmem:[%s378 + $0x1338] sm:$0xff]
        %v1142 = vld [vmem:[%s378 + $0x1340] sm:$0xff]
        %v1143 = vld [vmem:[%s378 + $0x1348] sm:$0xff]
        %v1144 = vld [vmem:[%s378 + $0x1350] sm:$0xff]
        %v1145 = vld [vmem:[%s378 + $0x1358] sm:$0xff]
        %v1146 = vld [vmem:[%s378 + $0x1360] sm:$0xff]
        %v1147 = vld [vmem:[%s378 + $0x1368] sm:$0xff]
        %v1148 = vld [vmem:[%s378 + $0x1370] sm:$0xff]
        %v1149 = vld [vmem:[%s378 + $0x1378] sm:$0xff]
        %v1150 = vld [vmem:[%s378 + $0x1380] sm:$0xff]
        %v1151 = vld [vmem:[%s378 + $0x1388] sm:$0xff]
        %v1152 = vld [vmem:[%s378 + $0x1390] sm:$0xff]
        %v1153 = vld [vmem:[%s378 + $0x1398] sm:$0xff]
        %v1154 = vld [vmem:[%s378 + $0x13a0] sm:$0xff]
        %v1155 = vld [vmem:[%s378 + $0x13a8] sm:$0xff]
        %v1156 = vld [vmem:[%s378 + $0x13b0] sm:$0xff]
        %v1157 = vld [vmem:[%s378 + $0x13b8] sm:$0xff]
        %v1158 = vld [vmem:[%s378 + $0x13c0] sm:$0xff]
        %v1159 = vld [vmem:[%s378 + $0x13c8] sm:$0xff]
        %v1160 = vld [vmem:[%s378 + $0x13d0] sm:$0xff]
        %v1161 = vld [vmem:[%s378 + $0x13d8] sm:$0xff]
        %v1162 = vld [vmem:[%s378 + $0x13e0] sm:$0xff]
        %v1163 = vld [vmem:[%s378 + $0x13e8] sm:$0xff]
        %v1164 = vld [vmem:[%s378 + $0x13f0] sm:$0xff]
        %v1165 = vld [vmem:[%s378 + $0x13f8] sm:$0xff]
        %v1166 = vld [vmem:[%s378 + $0x1400] sm:$0xff]
        %v1167 = vld [vmem:[%s378 + $0x1408] sm:$0xff]
        %v1168 = vld [vmem:[%s378 + $0x1410] sm:$0xff]
        %v1169 = vld [vmem:[%s378 + $0x1418] sm:$0xff]
        %v1170 = vld [vmem:[%s378 + $0x1420] sm:$0xff]
        %v1171 = vld [vmem:[%s378 + $0x1428] sm:$0xff]
        %v1172 = vld [vmem:[%s378 + $0x1430] sm:$0xff]
        %v1173 = vld [vmem:[%s378 + $0x1438] sm:$0xff]
        %v1174 = vld [vmem:[%s378 + $0x1440] sm:$0xff]
        %v1175 = vld [vmem:[%s378 + $0x1448] sm:$0xff]
        %v1176 = vld [vmem:[%s378 + $0x1450] sm:$0xff]
        %v1177 = vld [vmem:[%s378 + $0x1458] sm:$0xff]
        %v1178 = vld [vmem:[%s378 + $0x1460] sm:$0xff]
        %v1179 = vld [vmem:[%s378 + $0x1468] sm:$0xff]
        %v1180 = vld [vmem:[%s378 + $0x1470] sm:$0xff]
        %v1181 = vld [vmem:[%s378 + $0x1478] sm:$0xff]
        %v1182 = vld [vmem:[%s378 + $0x1480] sm:$0xff]
        %v1183 = vld [vmem:[%s378 + $0x1488] sm:$0xff]
        %v1184 = vld [vmem:[%s378 + $0x1490] sm:$0xff]
        %v1185 = vld [vmem:[%s378 + $0x1498] sm:$0xff]
        %v1186 = vld [vmem:[%s378 + $0x14a0] sm:$0xff]
        %v1187 = vld [vmem:[%s378 + $0x14a8] sm:$0xff]
        %v1188 = vld [vmem:[%s378 + $0x14b0] sm:$0xff]
        %v1189 = vld [vmem:[%s378 + $0x14b8] sm:$0xff]
        %v1190 = vld [vmem:[%s378 + $0x14c0] sm:$0xff]
        %v1191 = vld [vmem:[%s378 + $0x14c8] sm:$0xff]
        %v1192 = vld [vmem:[%s378 + $0x14d0] sm:$0xff]
        %v1193 = vld [vmem:[%s378 + $0x14d8] sm:$0xff]
        %v1194 = vld [vmem:[%s378 + $0x14e0] sm:$0xff]
        %v1195 = vld [vmem:[%s378 + $0x14e8] sm:$0xff]
        %v1196 = vld [vmem:[%s378 + $0x14f0] sm:$0xff]
        %v1197 = vld [vmem:[%s378 + $0x14f8] sm:$0xff]
        %v1198 = vld [vmem:[%s378 + $0x1500] sm:$0xff]
        %v1199 = vld [vmem:[%s378 + $0x1508] sm:$0xff]
        %v1200 = vld [vmem:[%s378 + $0x1510] sm:$0xff]
        %v1201 = vld [vmem:[%s378 + $0x1518] sm:$0xff]
        %v1202 = vld [vmem:[%s378 + $0x1520] sm:$0xff]
        %v1203 = vld [vmem:[%s378 + $0x1528] sm:$0xff]
        %v1204 = vld [vmem:[%s378 + $0x1530] sm:$0xff]
        %v1205 = vld [vmem:[%s378 + $0x1538] sm:$0xff]
        %v1206 = vld [vmem:[%s378 + $0x1540] sm:$0xff]
        %v1207 = vld [vmem:[%s378 + $0x1548] sm:$0xff]
        %v1208 = vld [vmem:[%s378 + $0x1550] sm:$0xff]
        %v1209 = vld [vmem:[%s378 + $0x1558] sm:$0xff]
        %v1210 = vld [vmem:[%s378 + $0x1560] sm:$0xff]
        %v1211 = vld [vmem:[%s378 + $0x1568] sm:$0xff]
        %v1212 = vld [vmem:[%s378 + $0x1570] sm:$0xff]
        %v1213 = vld [vmem:[%s378 + $0x1578] sm:$0xff]
        %v1214 = vld [vmem:[%s378 + $0x1580] sm:$0xff]
        %v1215 = vld [vmem:[%s378 + $0x1588] sm:$0xff]
        %v1216 = vld [vmem:[%s378 + $0x1590] sm:$0xff]
        %v1217 = vld [vmem:[%s378 + $0x1598] sm:$0xff]
        %v1218 = vld [vmem:[%s378 + $0x15a0] sm:$0xff]
        %v1219 = vld [vmem:[%s378 + $0x15a8] sm:$0xff]
        %v1220 = vld [vmem:[%s378 + $0x15b0] sm:$0xff]
        %v1221 = vld [vmem:[%s378 + $0x15b8] sm:$0xff]
        %v1222 = vld [vmem:[%s378 + $0x15c0] sm:$0xff]
        %v1223 = vld [vmem:[%s378 + $0x15c8] sm:$0xff]
        %v1224 = vld [vmem:[%s378 + $0x15d0] sm:$0xff]
        %v1225 = vld [vmem:[%s378 + $0x15d8] sm:$0xff]
        %v1226 = vld [vmem:[%s378 + $0x15e0] sm:$0xff]
        %v1227 = vld [vmem:[%s378 + $0x15e8] sm:$0xff]
        %v1228 = vld [vmem:[%s378 + $0x15f0] sm:$0xff]
        %v1229 = vld [vmem:[%s378 + $0x15f8] sm:$0xff]
        %v1230 = vld [vmem:[%s378 + $0x1600] sm:$0xff]
        %v1231 = vld [vmem:[%s378 + $0x1608] sm:$0xff]
        %v1232 = vld [vmem:[%s378 + $0x1610] sm:$0xff]
        %v1233 = vld [vmem:[%s378 + $0x1618] sm:$0xff]
        %v1234 = vld [vmem:[%s378 + $0x1620] sm:$0xff]
        %v1235 = vld [vmem:[%s378 + $0x1628] sm:$0xff]
        %v1236 = vld [vmem:[%s378 + $0x1630] sm:$0xff]
        %v1237 = vld [vmem:[%s378 + $0x1638] sm:$0xff]
        %v1238 = vld [vmem:[%s378 + $0x1640] sm:$0xff]
        %v1239 = vld [vmem:[%s378 + $0x1648] sm:$0xff]
        %v1240 = vld [vmem:[%s378 + $0x1650] sm:$0xff]
        %v1241 = vld [vmem:[%s378 + $0x1658] sm:$0xff]
        %v1242 = vld [vmem:[%s378 + $0x1660] sm:$0xff]
        %v1243 = vld [vmem:[%s378 + $0x1668] sm:$0xff]
        %v1244 = vld [vmem:[%s378 + $0x1670] sm:$0xff]
        %v1245 = vld [vmem:[%s378 + $0x1678] sm:$0xff]
        %v1246 = vld [vmem:[%s378 + $0x1680] sm:$0xff]
        %v1247 = vld [vmem:[%s378 + $0x1688] sm:$0xff]
        %v1248 = vld [vmem:[%s378 + $0x1690] sm:$0xff]
        %v1249 = vld [vmem:[%s378 + $0x1698] sm:$0xff]
        %v1250 = vld [vmem:[%s378 + $0x16a0] sm:$0xff]
        %v1251 = vld [vmem:[%s378 + $0x16a8] sm:$0xff]
        %v1252 = vld [vmem:[%s378 + $0x16b0] sm:$0xff]
        %v1253 = vld [vmem:[%s378 + $0x16b8] sm:$0xff]
        %v1254 = vld [vmem:[%s378 + $0x16c0] sm:$0xff]
        %v1255 = vld [vmem:[%s378 + $0x16c8] sm:$0xff]
        %v1256 = vld [vmem:[%s378 + $0x16d0] sm:$0xff]
        %v1257 = vld [vmem:[%s378 + $0x16d8] sm:$0xff]
        %v1258 = vld [vmem:[%s378 + $0x16e0] sm:$0xff]
        %v1259 = vld [vmem:[%s378 + $0x16e8] sm:$0xff]
        %v1260 = vld [vmem:[%s378 + $0x16f0] sm:$0xff]
        %v1261 = vld [vmem:[%s378 + $0x16f8] sm:$0xff]
        %v1262 = vld [vmem:[%s378 + $0x1700] sm:$0xff]
        %v1263 = vld [vmem:[%s378 + $0x1708] sm:$0xff]
        %v1264 = vld [vmem:[%s378 + $0x1710] sm:$0xff]
        %v1265 = vld [vmem:[%s378 + $0x1718] sm:$0xff]
        %v1266 = vld [vmem:[%s378 + $0x1720] sm:$0xff]
        %v1267 = vld [vmem:[%s378 + $0x1728] sm:$0xff]
        %v1268 = vld [vmem:[%s378 + $0x1730] sm:$0xff]
        %v1269 = vld [vmem:[%s378 + $0x1738] sm:$0xff]
        %v1270 = vld [vmem:[%s378 + $0x1740] sm:$0xff]
        %v1271 = vld [vmem:[%s378 + $0x1748] sm:$0xff]
        %v1272 = vld [vmem:[%s378 + $0x1750] sm:$0xff]
        %v1273 = vld [vmem:[%s378 + $0x1758] sm:$0xff]
        %v1274 = vld [vmem:[%s378 + $0x1760] sm:$0xff]
        %v1275 = vld [vmem:[%s378 + $0x1768] sm:$0xff]
        %v1276 = vld [vmem:[%s378 + $0x1770] sm:$0xff]
        %v1277 = vld [vmem:[%s378 + $0x1778] sm:$0xff]
        %v1278 = vld [vmem:[%s378 + $0x1780] sm:$0xff]
        %v1279 = vld [vmem:[%s378 + $0x1788] sm:$0xff]
        %v1280 = vld [vmem:[%s378 + $0x1790] sm:$0xff]
        %v1281 = vld [vmem:[%s378 + $0x1798] sm:$0xff]
        %v1282 = vld [vmem:[%s378 + $0x17a0] sm:$0xff]
        %v1283 = vld [vmem:[%s378 + $0x17a8] sm:$0xff]
        %v1284 = vld [vmem:[%s378 + $0x17b0] sm:$0xff]
        %v1285 = vld [vmem:[%s378 + $0x17b8] sm:$0xff]
        %v1286 = vld [vmem:[%s378 + $0x17c0] sm:$0xff]
        %v1287 = vld [vmem:[%s378 + $0x17c8] sm:$0xff]
        %v1288 = vld [vmem:[%s378 + $0x17d0] sm:$0xff]
        %v1289 = vld [vmem:[%s378 + $0x17d8] sm:$0xff]
        %v1290 = vld [vmem:[%s378 + $0x17e0] sm:$0xff]
        %v1291 = vld [vmem:[%s378 + $0x17e8] sm:$0xff]
        %v1292 = vld [vmem:[%s378 + $0x17f0] sm:$0xff]
        %v1293 = vld [vmem:[%s378 + $0x17f8] sm:$0xff]
        %v1294 = vld [vmem:[%s378 + $0x1800] sm:$0xff]
        %v1295 = vld [vmem:[%s378 + $0x1808] sm:$0xff]
        %v1296 = vld [vmem:[%s378 + $0x1810] sm:$0xff]
        %v1297 = vld [vmem:[%s378 + $0x1818] sm:$0xff]
        %v1298 = vld [vmem:[%s378 + $0x1820] sm:$0xff]
        %v1299 = vld [vmem:[%s378 + $0x1828] sm:$0xff]
        %v1300 = vld [vmem:[%s378 + $0x1830] sm:$0xff]
        %v1301 = vld [vmem:[%s378 + $0x1838] sm:$0xff]
        %v1302 = vld [vmem:[%s378 + $0x1840] sm:$0xff]
        %v1303 = vld [vmem:[%s378 + $0x1848] sm:$0xff]
        %v1304 = vld [vmem:[%s378 + $0x1850] sm:$0xff]
        %v1305 = vld [vmem:[%s378 + $0x1858] sm:$0xff]
        %v1306 = vld [vmem:[%s378 + $0x1860] sm:$0xff]
        %v1307 = vld [vmem:[%s378 + $0x1868] sm:$0xff]
        %v1308 = vld [vmem:[%s378 + $0x1870] sm:$0xff]
        %v1309 = vld [vmem:[%s378 + $0x1878] sm:$0xff]
        %v1310 = vld [vmem:[%s378 + $0x1880] sm:$0xff]
        %v1311 = vld [vmem:[%s378 + $0x1888] sm:$0xff]
        %v1312 = vld [vmem:[%s378 + $0x1890] sm:$0xff]
        %v1313 = vld [vmem:[%s378 + $0x1898] sm:$0xff]
        %v1314 = vld [vmem:[%s378 + $0x18a0] sm:$0xff]
        %v1315 = vld [vmem:[%s378 + $0x18a8] sm:$0xff]
        %v1316 = vld [vmem:[%s378 + $0x18b0] sm:$0xff]
        %v1317 = vld [vmem:[%s378 + $0x18b8] sm:$0xff]
        %v1318 = vld [vmem:[%s378 + $0x18c0] sm:$0xff]
        %v1319 = vld [vmem:[%s378 + $0x18c8] sm:$0xff]
        %v1320 = vld [vmem:[%s378 + $0x18d0] sm:$0xff]
        %v1321 = vld [vmem:[%s378 + $0x18d8] sm:$0xff]
        %v1322 = vld [vmem:[%s378 + $0x18e0] sm:$0xff]
        %v1323 = vld [vmem:[%s378 + $0x18e8] sm:$0xff]
        %v1324 = vld [vmem:[%s378 + $0x18f0] sm:$0xff]
        %v1325 = vld [vmem:[%s378 + $0x18f8] sm:$0xff]
        %v1326 = vld [vmem:[%s378 + $0x1900] sm:$0xff]
        %v1327 = vld [vmem:[%s378 + $0x1908] sm:$0xff]
        %v1328 = vld [vmem:[%s378 + $0x1910] sm:$0xff]
        %v1329 = vld [vmem:[%s378 + $0x1918] sm:$0xff]
        %v1330 = vld [vmem:[%s378 + $0x1920] sm:$0xff]
        %v1331 = vld [vmem:[%s378 + $0x1928] sm:$0xff]
        %v1332 = vld [vmem:[%s378 + $0x1930] sm:$0xff]
        %v1333 = vld [vmem:[%s378 + $0x1938] sm:$0xff]
        %v1334 = vld [vmem:[%s378 + $0x1940] sm:$0xff]
        %v1335 = vld [vmem:[%s378 + $0x1948] sm:$0xff]
        %v1336 = vld [vmem:[%s378 + $0x1950] sm:$0xff]
        %v1337 = vld [vmem:[%s378 + $0x1958] sm:$0xff]
        %v1338 = vld [vmem:[%s378 + $0x1960] sm:$0xff]
        %v1339 = vld [vmem:[%s378 + $0x1968] sm:$0xff]
        %v1340 = vld [vmem:[%s378 + $0x1970] sm:$0xff]
        %v1341 = vld [vmem:[%s378 + $0x1978] sm:$0xff]
        %v1342 = vld [vmem:[%s378 + $0x1980] sm:$0xff]
        %v1343 = vld [vmem:[%s378 + $0x1988] sm:$0xff]
        %v1344 = vld [vmem:[%s378 + $0x1990] sm:$0xff]
        %v1345 = vld [vmem:[%s378 + $0x1998] sm:$0xff]
        %v1346 = vld [vmem:[%s378 + $0x19a0] sm:$0xff]
        %v1347 = vld [vmem:[%s378 + $0x19a8] sm:$0xff]
        %v1348 = vld [vmem:[%s378 + $0x19b0] sm:$0xff]
        %v1349 = vld [vmem:[%s378 + $0x19b8] sm:$0xff]
        %v1350 = vld [vmem:[%s378 + $0x19c0] sm:$0xff]
        %v1351 = vld [vmem:[%s378 + $0x19c8] sm:$0xff]
        %v1352 = vld [vmem:[%s378 + $0x19d0] sm:$0xff]
        %v1353 = vld [vmem:[%s378 + $0x19d8] sm:$0xff]
        %v1354 = vld [vmem:[%s378 + $0x19e0] sm:$0xff]
        %v1355 = vld [vmem:[%s378 + $0x19e8] sm:$0xff]
        %v1356 = vld [vmem:[%s378 + $0x19f0] sm:$0xff]
        %v1357 = vld [vmem:[%s378 + $0x19f8] sm:$0xff]
        %v1358 = vld [vmem:[%s378 + $0x1a00] sm:$0xff]
        %v1359 = vld [vmem:[%s378 + $0x1a08] sm:$0xff]
        %v1360 = vld [vmem:[%s378 + $0x1a10] sm:$0xff]
        %v1361 = vld [vmem:[%s378 + $0x1a18] sm:$0xff]
        %v1362 = vld [vmem:[%s378 + $0x1a20] sm:$0xff]
        %v1363 = vld [vmem:[%s378 + $0x1a28] sm:$0xff]
        %v1364 = vld [vmem:[%s378 + $0x1a30] sm:$0xff]
        %v1365 = vld [vmem:[%s378 + $0x1a38] sm:$0xff]
        %v1366 = vld [vmem:[%s378 + $0x1a40] sm:$0xff]
        %v1367 = vld [vmem:[%s378 + $0x1a48] sm:$0xff]
        %v1368 = vld [vmem:[%s378 + $0x1a50] sm:$0xff]
        %v1369 = vld [vmem:[%s378 + $0x1a58] sm:$0xff]
        %v1370 = vld [vmem:[%s378 + $0x1a60] sm:$0xff]
        %v1371 = vld [vmem:[%s378 + $0x1a68] sm:$0xff]
        %v1372 = vld [vmem:[%s378 + $0x1a70] sm:$0xff]
        %v1373 = vld [vmem:[%s378 + $0x1a78] sm:$0xff]
        %v1374 = vld [vmem:[%s378 + $0x1a80] sm:$0xff]
        %v1375 = vld [vmem:[%s378 + $0x1a88] sm:$0xff]
        %v1376 = vld [vmem:[%s378 + $0x1a90] sm:$0xff]
        %v1377 = vld [vmem:[%s378 + $0x1a98] sm:$0xff]
        %v1378 = vld [vmem:[%s378 + $0x1aa0] sm:$0xff]
        %v1379 = vld [vmem:[%s378 + $0x1aa8] sm:$0xff]
        %v1380 = vld [vmem:[%s378 + $0x1ab0] sm:$0xff]
        %v1381 = vld [vmem:[%s378 + $0x1ab8] sm:$0xff]
        %v1382 = vld [vmem:[%s378 + $0x1ac0] sm:$0xff]
        %v1383 = vld [vmem:[%s378 + $0x1ac8] sm:$0xff]
        %v1384 = vld [vmem:[%s378 + $0x1ad0] sm:$0xff]
        %v1385 = vld [vmem:[%s378 + $0x1ad8] sm:$0xff]
        %v1386 = vld [vmem:[%s378 + $0x1ae0] sm:$0xff]
        %v1387 = vld [vmem:[%s378 + $0x1ae8] sm:$0xff]
        %v1388 = vld [vmem:[%s378 + $0x1af0] sm:$0xff]
        %v1389 = vld [vmem:[%s378 + $0x1af8] sm:$0xff]
        %v1390 = vld [vmem:[%s378 + $0x1b00] sm:$0xff]
        %v1391 = vld [vmem:[%s378 + $0x1b08] sm:$0xff]
        %v1392 = vld [vmem:[%s378 + $0x1b10] sm:$0xff]
        %v1393 = vld [vmem:[%s378 + $0x1b18] sm:$0xff]
        %v1394 = vld [vmem:[%s378 + $0x1b20] sm:$0xff]
        %v1395 = vld [vmem:[%s378 + $0x1b28] sm:$0xff]
        %v1396 = vld [vmem:[%s378 + $0x1b30] sm:$0xff]
        %v1397 = vld [vmem:[%s378 + $0x1b38] sm:$0xff]
        %v1398 = vld [vmem:[%s378 + $0x1b40] sm:$0xff]
        %v1399 = vld [vmem:[%s378 + $0x1b48] sm:$0xff]
        %v1400 = vld [vmem:[%s378 + $0x1b50] sm:$0xff]
        %v1401 = vld [vmem:[%s378 + $0x1b58] sm:$0xff]
        %v1402 = vld [vmem:[%s378 + $0x1b60] sm:$0xff]
        %v1403 = vld [vmem:[%s378 + $0x1b68] sm:$0xff]
        %v1404 = vld [vmem:[%s378 + $0x1b70] sm:$0xff]
        %v1405 = vld [vmem:[%s378 + $0x1b78] sm:$0xff]
        %v1406 = vld [vmem:[%s378 + $0x1b80] sm:$0xff]
        %v1407 = vld [vmem:[%s378 + $0x1b88] sm:$0xff]
        %v1408 = vld [vmem:[%s378 + $0x1b90] sm:$0xff]
        %v1409 = vld [vmem:[%s378 + $0x1b98] sm:$0xff]
        %v1410 = vld [vmem:[%s378 + $0x1ba0] sm:$0xff]
        %v1411 = vld [vmem:[%s378 + $0x1ba8] sm:$0xff]
        %v1412 = vld [vmem:[%s378 + $0x1bb0] sm:$0xff]
        %v1413 = vld [vmem:[%s378 + $0x1bb8] sm:$0xff]
        %v1414 = vld [vmem:[%s378 + $0x1bc0] sm:$0xff]
        %v1415 = vld [vmem:[%s378 + $0x1bc8] sm:$0xff]
        %v1416 = vld [vmem:[%s378 + $0x1bd0] sm:$0xff]
        %v1417 = vld [vmem:[%s378 + $0x1bd8] sm:$0xff]
        %v1418 = vld [vmem:[%s378 + $0x1be0] sm:$0xff]
        %v1419 = vld [vmem:[%s378 + $0x1be8] sm:$0xff]
        %v1420 = vld [vmem:[%s378 + $0x1bf0] sm:$0xff]
        %v1421 = vld [vmem:[%s378 + $0x1bf8] sm:$0xff]
        %v1422 = vld [vmem:[%s378 + $0x1c00] sm:$0xff]
        %v1423 = vld [vmem:[%s378 + $0x1c08] sm:$0xff]
        %v1424 = vld [vmem:[%s378 + $0x1c10] sm:$0xff]
        %v1425 = vld [vmem:[%s378 + $0x1c18] sm:$0xff]
        %v1426 = vld [vmem:[%s378 + $0x1c20] sm:$0xff]
        %v1427 = vld [vmem:[%s378 + $0x1c28] sm:$0xff]
        %v1428 = vld [vmem:[%s378 + $0x1c30] sm:$0xff]
        %v1429 = vld [vmem:[%s378 + $0x1c38] sm:$0xff]
        %v1430 = vld [vmem:[%s378 + $0x1c40] sm:$0xff]
        %v1431 = vld [vmem:[%s378 + $0x1c48] sm:$0xff]
        %v1432 = vld [vmem:[%s378 + $0x1c50] sm:$0xff]
        %v1433 = vld [vmem:[%s378 + $0x1c58] sm:$0xff]
        %v1434 = vld [vmem:[%s378 + $0x1c60] sm:$0xff]
        %v1435 = vld [vmem:[%s378 + $0x1c68] sm:$0xff]
        %v1436 = vld [vmem:[%s378 + $0x1c70] sm:$0xff]
        %v1437 = vld [vmem:[%s378 + $0x1c78] sm:$0xff]
        %v1438 = vld [vmem:[%s378 + $0x1c80] sm:$0xff]
        %v1439 = vld [vmem:[%s378 + $0x1c88] sm:$0xff]
        %v1440 = vld [vmem:[%s378 + $0x1c90] sm:$0xff]
        %v1441 = vld [vmem:[%s378 + $0x1c98] sm:$0xff]
        %v1442 = vld [vmem:[%s378 + $0x1ca0] sm:$0xff]
        %v1443 = vld [vmem:[%s378 + $0x1ca8] sm:$0xff]
        %v1444 = vld [vmem:[%s378 + $0x1cb0] sm:$0xff]
        %v1445 = vld [vmem:[%s378 + $0x1cb8] sm:$0xff]
        %v1446 = vld [vmem:[%s378 + $0x1cc0] sm:$0xff]
        %v1447 = vld [vmem:[%s378 + $0x1cc8] sm:$0xff]
        %v1448 = vld [vmem:[%s378 + $0x1cd0] sm:$0xff]
        %v1449 = vld [vmem:[%s378 + $0x1cd8] sm:$0xff]
        %v1450 = vld [vmem:[%s378 + $0x1ce0] sm:$0xff]
        %v1451 = vld [vmem:[%s378 + $0x1ce8] sm:$0xff]
        %v1452 = vld [vmem:[%s378 + $0x1cf0] sm:$0xff]
        %v1453 = vld [vmem:[%s378 + $0x1cf8] sm:$0xff]
        %v1454 = vld [vmem:[%s378 + $0x1d00] sm:$0xff]
        %v1455 = vld [vmem:[%s378 + $0x1d08] sm:$0xff]
        %v1456 = vld [vmem:[%s378 + $0x1d10] sm:$0xff]
        %v1457 = vld [vmem:[%s378 + $0x1d18] sm:$0xff]
        %v1458 = vld [vmem:[%s378 + $0x1d20] sm:$0xff]
        %v1459 = vld [vmem:[%s378 + $0x1d28] sm:$0xff]
        %v1460 = vld [vmem:[%s378 + $0x1d30] sm:$0xff]
        %v1461 = vld [vmem:[%s378 + $0x1d38] sm:$0xff]
        %v1462 = vld [vmem:[%s378 + $0x1d40] sm:$0xff]
        %v1463 = vld [vmem:[%s378 + $0x1d48] sm:$0xff]
        %v1464 = vld [vmem:[%s378 + $0x1d50] sm:$0xff]
        %v1465 = vld [vmem:[%s378 + $0x1d58] sm:$0xff]
        %v1466 = vld [vmem:[%s378 + $0x1d60] sm:$0xff]
        %v1467 = vld [vmem:[%s378 + $0x1d68] sm:$0xff]
        %v1468 = vld [vmem:[%s378 + $0x1d70] sm:$0xff]
        %v1469 = vld [vmem:[%s378 + $0x1d78] sm:$0xff]
        %v1470 = vld [vmem:[%s378 + $0x1d80] sm:$0xff]
        %v1471 = vld [vmem:[%s378 + $0x1d88] sm:$0xff]
        %v1472 = vld [vmem:[%s378 + $0x1d90] sm:$0xff]
        %v1473 = vld [vmem:[%s378 + $0x1d98] sm:$0xff]
        %v1474 = vld [vmem:[%s378 + $0x1da0] sm:$0xff]
        %v1475 = vld [vmem:[%s378 + $0x1da8] sm:$0xff]
        %v1476 = vld [vmem:[%s378 + $0x1db0] sm:$0xff]
        %v1477 = vld [vmem:[%s378 + $0x1db8] sm:$0xff]
        %v1478 = vld [vmem:[%s378 + $0x1dc0] sm:$0xff]
        %v1479 = vld [vmem:[%s378 + $0x1dc8] sm:$0xff]
        %v1480 = vld [vmem:[%s378 + $0x1dd0] sm:$0xff]
        %v1481 = vld [vmem:[%s378 + $0x1dd8] sm:$0xff]
        %v1482 = vld [vmem:[%s378 + $0x1de0] sm:$0xff]
        %v1483 = vld [vmem:[%s378 + $0x1de8] sm:$0xff]
        %v1484 = vld [vmem:[%s378 + $0x1df0] sm:$0xff]
        %v1485 = vld [vmem:[%s378 + $0x1df8] sm:$0xff]
        %v1486 = vld [vmem:[%s378 + $0x1e00] sm:$0xff]
        %v1487 = vld [vmem:[%s378 + $0x1e08] sm:$0xff]
        %v1488 = vld [vmem:[%s378 + $0x1e10] sm:$0xff]
        %v1489 = vld [vmem:[%s378 + $0x1e18] sm:$0xff]
        %v1490 = vld [vmem:[%s378 + $0x1e20] sm:$0xff]
        %v1491 = vld [vmem:[%s378 + $0x1e28] sm:$0xff]
        %v1492 = vld [vmem:[%s378 + $0x1e30] sm:$0xff]
        %v1493 = vld [vmem:[%s378 + $0x1e38] sm:$0xff]
        %v1494 = vld [vmem:[%s378 + $0x1e40] sm:$0xff]
        %v1495 = vld [vmem:[%s378 + $0x1e48] sm:$0xff]
        %v1496 = vld [vmem:[%s378 + $0x1e50] sm:$0xff]
        %v1497 = vld [vmem:[%s378 + $0x1e58] sm:$0xff]
        %v1498 = vld [vmem:[%s378 + $0x1e60] sm:$0xff]
        %v1499 = vld [vmem:[%s378 + $0x1e68] sm:$0xff]
        %v1500 = vld [vmem:[%s378 + $0x1e70] sm:$0xff]
        %v1501 = vld [vmem:[%s378 + $0x1e78] sm:$0xff]
        %v1502 = vld [vmem:[%s378 + $0x1e80] sm:$0xff]
        %v1503 = vld [vmem:[%s378 + $0x1e88] sm:$0xff]
        %v1504 = vld [vmem:[%s378 + $0x1e90] sm:$0xff]
        %v1505 = vld [vmem:[%s378 + $0x1e98] sm:$0xff]
        %v1506 = vld [vmem:[%s378 + $0x1ea0] sm:$0xff]
        %v1507 = vld [vmem:[%s378 + $0x1ea8] sm:$0xff]
        %v1508 = vld [vmem:[%s378 + $0x1eb0] sm:$0xff]
        %v1509 = vld [vmem:[%s378 + $0x1eb8] sm:$0xff]
        %v1510 = vld [vmem:[%s378 + $0x1ec0] sm:$0xff]
        %v1511 = vld [vmem:[%s378 + $0x1ec8] sm:$0xff]
        %v1512 = vld [vmem:[%s378 + $0x1ed0] sm:$0xff]
        %v1513 = vld [vmem:[%s378 + $0x1ed8] sm:$0xff]
        %v1514 = vld [vmem:[%s378 + $0x1ee0] sm:$0xff]
        %v1515 = vld [vmem:[%s378 + $0x1ee8] sm:$0xff]
        %v1516 = vld [vmem:[%s378 + $0x1ef0] sm:$0xff]
        %v1517 = vld [vmem:[%s378 + $0x1ef8] sm:$0xff]
        %v1518 = vld [vmem:[%s378 + $0x1f00] sm:$0xff]
        %v1519 = vld [vmem:[%s378 + $0x1f08] sm:$0xff]
        %v1520 = vld [vmem:[%s378 + $0x1f10] sm:$0xff]
        %v1521 = vld [vmem:[%s378 + $0x1f18] sm:$0xff]
        %v1522 = vld [vmem:[%s378 + $0x1f20] sm:$0xff]
        %v1523 = vld [vmem:[%s378 + $0x1f28] sm:$0xff]
        %v1524 = vld [vmem:[%s378 + $0x1f30] sm:$0xff]
        %v1525 = vld [vmem:[%s378 + $0x1f38] sm:$0xff]
        %v1526 = vld [vmem:[%s378 + $0x1f40] sm:$0xff]
        %v1527 = vld [vmem:[%s378 + $0x1f48] sm:$0xff]
        %v1528 = vld [vmem:[%s378 + $0x1f50] sm:$0xff]
        %v1529 = vld [vmem:[%s378 + $0x1f58] sm:$0xff]
        %v1530 = vld [vmem:[%s378 + $0x1f60] sm:$0xff]
        %v1531 = vld [vmem:[%s378 + $0x1f68] sm:$0xff]
        %v1532 = vld [vmem:[%s378 + $0x1f70] sm:$0xff]
        %v1533 = vld [vmem:[%s378 + $0x1f78] sm:$0xff]
        %v1534 = vld [vmem:[%s378 + $0x1f80] sm:$0xff]
        %v1535 = vld [vmem:[%s378 + $0x1f88] sm:$0xff]
        %v1536 = vld [vmem:[%s378 + $0x1f90] sm:$0xff]
        %v1537 = vld [vmem:[%s378 + $0x1f98] sm:$0xff]
        %v1538 = vld [vmem:[%s378 + $0x1fa0] sm:$0xff]
        %v1539 = vld [vmem:[%s378 + $0x1fa8] sm:$0xff]
        %v1540 = vld [vmem:[%s378 + $0x1fb0] sm:$0xff]
        %v1541 = vld [vmem:[%s378 + $0x1fb8] sm:$0xff]
        %v1542 = vld [vmem:[%s378 + $0x1fc0] sm:$0xff]
        %v1543 = vld [vmem:[%s378 + $0x1fc8] sm:$0xff]
        %v1544 = vld [vmem:[%s378 + $0x1fd0] sm:$0xff]
        %v1545 = vld [vmem:[%s378 + $0x1fd8] sm:$0xff]
        %v1546 = vld [vmem:[%s378 + $0x1fe0] sm:$0xff]
        %v1547 = vld [vmem:[%s378 + $0x1fe8] sm:$0xff]
        %v1548 = vld [vmem:[%s378 + $0x1ff0] sm:$0xff]
        %v1549 = vld [vmem:[%s378 + $0x1ff8] sm:$0xff]
        %v2574 = vunpack.c.l.b16 %v526
        %v2575 = vunpack.c.h.b16 %v526
        %v2576 = vunpack.c.l.b16 %v527
        %v2577 = vunpack.c.h.b16 %v527
        %v2578 = vunpack.c.l.b16 %v528
        %v2579 = vunpack.c.h.b16 %v528
        %v2580 = vunpack.c.l.b16 %v529
        %v2581 = vunpack.c.h.b16 %v529
        %v2582 = vunpack.c.l.b16 %v530
        %v2583 = vunpack.c.h.b16 %v530
        %v2584 = vunpack.c.l.b16 %v531
        %v2585 = vunpack.c.h.b16 %v531
        %v2586 = vunpack.c.l.b16 %v532
        %v2587 = vunpack.c.h.b16 %v532
        %v2588 = vunpack.c.l.b16 %v533
        %v2589 = vunpack.c.h.b16 %v533
        %v2590 = vunpack.c.l.b16 %v534
        %v2591 = vunpack.c.h.b16 %v534
        %v2592 = vunpack.c.l.b16 %v535
        %v2593 = vunpack.c.h.b16 %v535
        %v2594 = vunpack.c.l.b16 %v536
        %v2595 = vunpack.c.h.b16 %v536
        %v2596 = vunpack.c.l.b16 %v537
        %v2597 = vunpack.c.h.b16 %v537
        %v2598 = vunpack.c.l.b16 %v538
        %v2599 = vunpack.c.h.b16 %v538
        %v2600 = vunpack.c.l.b16 %v539
        %v2601 = vunpack.c.h.b16 %v539
        %v2602 = vunpack.c.l.b16 %v540
        %v2603 = vunpack.c.h.b16 %v540
        %v2604 = vunpack.c.l.b16 %v541
        %v2605 = vunpack.c.h.b16 %v541
        %v2606 = vunpack.c.l.b16 %v542
        %v2607 = vunpack.c.h.b16 %v542
        %v2608 = vunpack.c.l.b16 %v543
        %v2609 = vunpack.c.h.b16 %v543
        %v2610 = vunpack.c.l.b16 %v544
        %v2611 = vunpack.c.h.b16 %v544
        %v2612 = vunpack.c.l.b16 %v545
        %v2613 = vunpack.c.h.b16 %v545
        %v2614 = vunpack.c.l.b16 %v546
        %v2615 = vunpack.c.h.b16 %v546
        %v2616 = vunpack.c.l.b16 %v547
        %v2617 = vunpack.c.h.b16 %v547
        %v2618 = vunpack.c.l.b16 %v548
        %v2619 = vunpack.c.h.b16 %v548
        %v2620 = vunpack.c.l.b16 %v549
        %v2621 = vunpack.c.h.b16 %v549
        %v2622 = vunpack.c.l.b16 %v550
        %v2623 = vunpack.c.h.b16 %v550
        %v2624 = vunpack.c.l.b16 %v551
        %v2625 = vunpack.c.h.b16 %v551
        %v2626 = vunpack.c.l.b16 %v552
        %v2627 = vunpack.c.h.b16 %v552
        %v2628 = vunpack.c.l.b16 %v553
        %v2629 = vunpack.c.h.b16 %v553
        %v2630 = vunpack.c.l.b16 %v554
        %v2631 = vunpack.c.h.b16 %v554
        %v2632 = vunpack.c.l.b16 %v555
        %v2633 = vunpack.c.h.b16 %v555
        %v2634 = vunpack.c.l.b16 %v556
        %v2635 = vunpack.c.h.b16 %v556
        %v2636 = vunpack.c.l.b16 %v557
        %v2637 = vunpack.c.h.b16 %v557
        %v2638 = vunpack.c.l.b16 %v558
        %v2639 = vunpack.c.h.b16 %v558
        %v2640 = vunpack.c.l.b16 %v559
        %v2641 = vunpack.c.h.b16 %v559
        %v2642 = vunpack.c.l.b16 %v560
        %v2643 = vunpack.c.h.b16 %v560
        %v2644 = vunpack.c.l.b16 %v561
        %v2645 = vunpack.c.h.b16 %v561
        %v2646 = vunpack.c.l.b16 %v562
        %v2647 = vunpack.c.h.b16 %v562
        %v2648 = vunpack.c.l.b16 %v563
        %v2649 = vunpack.c.h.b16 %v563
        %v2650 = vunpack.c.l.b16 %v564
        %v2651 = vunpack.c.h.b16 %v564
        %v2652 = vunpack.c.l.b16 %v565
        %v2653 = vunpack.c.h.b16 %v565
        %v2654 = vunpack.c.l.b16 %v566
        %v2655 = vunpack.c.h.b16 %v566
        %v2656 = vunpack.c.l.b16 %v567
        %v2657 = vunpack.c.h.b16 %v567
        %v2658 = vunpack.c.l.b16 %v568
        %v2659 = vunpack.c.h.b16 %v568
        %v2660 = vunpack.c.l.b16 %v569
        %v2661 = vunpack.c.h.b16 %v569
        %v2662 = vunpack.c.l.b16 %v570
        %v2663 = vunpack.c.h.b16 %v570
        %v2664 = vunpack.c.l.b16 %v571
        %v2665 = vunpack.c.h.b16 %v571
        %v2666 = vunpack.c.l.b16 %v572
        %v2667 = vunpack.c.h.b16 %v572
        %v2668 = vunpack.c.l.b16 %v573
        %v2669 = vunpack.c.h.b16 %v573
        %v2670 = vunpack.c.l.b16 %v574
        %v2671 = vunpack.c.h.b16 %v574
        %v2672 = vunpack.c.l.b16 %v575
        %v2673 = vunpack.c.h.b16 %v575
        %v2674 = vunpack.c.l.b16 %v576
        %v2675 = vunpack.c.h.b16 %v576
        %v2676 = vunpack.c.l.b16 %v577
        %v2677 = vunpack.c.h.b16 %v577
        %v2678 = vunpack.c.l.b16 %v578
        %v2679 = vunpack.c.h.b16 %v578
        %v2680 = vunpack.c.l.b16 %v579
        %v2681 = vunpack.c.h.b16 %v579
        %v2682 = vunpack.c.l.b16 %v580
        %v2683 = vunpack.c.h.b16 %v580
        %v2684 = vunpack.c.l.b16 %v581
        %v2685 = vunpack.c.h.b16 %v581
        %v2686 = vunpack.c.l.b16 %v582
        %v2687 = vunpack.c.h.b16 %v582
        %v2688 = vunpack.c.l.b16 %v583
        %v2689 = vunpack.c.h.b16 %v583
        %v2690 = vunpack.c.l.b16 %v584
        %v2691 = vunpack.c.h.b16 %v584
        %v2692 = vunpack.c.l.b16 %v585
        %v2693 = vunpack.c.h.b16 %v585
        %v2694 = vunpack.c.l.b16 %v586
        %v2695 = vunpack.c.h.b16 %v586
        %v2696 = vunpack.c.l.b16 %v587
        %v2697 = vunpack.c.h.b16 %v587
        %v2698 = vunpack.c.l.b16 %v588
        %v2699 = vunpack.c.h.b16 %v588
        %v2700 = vunpack.c.l.b16 %v589
        %v2701 = vunpack.c.h.b16 %v589
        %v2702 = vunpack.c.l.b16 %v590
        %v2703 = vunpack.c.h.b16 %v590
        %v2704 = vunpack.c.l.b16 %v591
        %v2705 = vunpack.c.h.b16 %v591
        %v2706 = vunpack.c.l.b16 %v592
        %v2707 = vunpack.c.h.b16 %v592
        %v2708 = vunpack.c.l.b16 %v593
        %v2709 = vunpack.c.h.b16 %v593
        %v2710 = vunpack.c.l.b16 %v594
        %v2711 = vunpack.c.h.b16 %v594
        %v2712 = vunpack.c.l.b16 %v595
        %v2713 = vunpack.c.h.b16 %v595
        %v2714 = vunpack.c.l.b16 %v596
        %v2715 = vunpack.c.h.b16 %v596
        %v2716 = vunpack.c.l.b16 %v597
        %v2717 = vunpack.c.h.b16 %v597
        %v2718 = vunpack.c.l.b16 %v598
        %v2719 = vunpack.c.h.b16 %v598
        %v2720 = vunpack.c.l.b16 %v599
        %v2721 = vunpack.c.h.b16 %v599
        %v2722 = vunpack.c.l.b16 %v600
        %v2723 = vunpack.c.h.b16 %v600
        %v2724 = vunpack.c.l.b16 %v601
        %v2725 = vunpack.c.h.b16 %v601
        %v2726 = vunpack.c.l.b16 %v602
        %v2727 = vunpack.c.h.b16 %v602
        %v2728 = vunpack.c.l.b16 %v603
        %v2729 = vunpack.c.h.b16 %v603
        %v2730 = vunpack.c.l.b16 %v604
        %v2731 = vunpack.c.h.b16 %v604
        %v2732 = vunpack.c.l.b16 %v605
        %v2733 = vunpack.c.h.b16 %v605
        %v2734 = vunpack.c.l.b16 %v606
        %v2735 = vunpack.c.h.b16 %v606
        %v2736 = vunpack.c.l.b16 %v607
        %v2737 = vunpack.c.h.b16 %v607
        %v2738 = vunpack.c.l.b16 %v608
        %v2739 = vunpack.c.h.b16 %v608
        %v2740 = vunpack.c.l.b16 %v609
        %v2741 = vunpack.c.h.b16 %v609
        %v2742 = vunpack.c.l.b16 %v610
        %v2743 = vunpack.c.h.b16 %v610
        %v2744 = vunpack.c.l.b16 %v611
        %v2745 = vunpack.c.h.b16 %v611
        %v2746 = vunpack.c.l.b16 %v612
        %v2747 = vunpack.c.h.b16 %v612
        %v2748 = vunpack.c.l.b16 %v613
        %v2749 = vunpack.c.h.b16 %v613
        %v2750 = vunpack.c.l.b16 %v614
        %v2751 = vunpack.c.h.b16 %v614
        %v2752 = vunpack.c.l.b16 %v615
        %v2753 = vunpack.c.h.b16 %v615
        %v2754 = vunpack.c.l.b16 %v616
        %v2755 = vunpack.c.h.b16 %v616
        %v2756 = vunpack.c.l.b16 %v617
        %v2757 = vunpack.c.h.b16 %v617
        %v2758 = vunpack.c.l.b16 %v618
        %v2759 = vunpack.c.h.b16 %v618
        %v2760 = vunpack.c.l.b16 %v619
        %v2761 = vunpack.c.h.b16 %v619
        %v2762 = vunpack.c.l.b16 %v620
        %v2763 = vunpack.c.h.b16 %v620
        %v2764 = vunpack.c.l.b16 %v621
        %v2765 = vunpack.c.h.b16 %v621
        %v2766 = vunpack.c.l.b16 %v622
        %v2767 = vunpack.c.h.b16 %v622
        %v2768 = vunpack.c.l.b16 %v623
        %v2769 = vunpack.c.h.b16 %v623
        %v2770 = vunpack.c.l.b16 %v624
        %v2771 = vunpack.c.h.b16 %v624
        %v2772 = vunpack.c.l.b16 %v625
        %v2773 = vunpack.c.h.b16 %v625
        %v2774 = vunpack.c.l.b16 %v626
        %v2775 = vunpack.c.h.b16 %v626
        %v2776 = vunpack.c.l.b16 %v627
        %v2777 = vunpack.c.h.b16 %v627
        %v2778 = vunpack.c.l.b16 %v628
        %v2779 = vunpack.c.h.b16 %v628
        %v2780 = vunpack.c.l.b16 %v629
        %v2781 = vunpack.c.h.b16 %v629
        %v2782 = vunpack.c.l.b16 %v630
        %v2783 = vunpack.c.h.b16 %v630
        %v2784 = vunpack.c.l.b16 %v631
        %v2785 = vunpack.c.h.b16 %v631
        %v2786 = vunpack.c.l.b16 %v632
        %v2787 = vunpack.c.h.b16 %v632
        %v2788 = vunpack.c.l.b16 %v633
        %v2789 = vunpack.c.h.b16 %v633
        %v2790 = vunpack.c.l.b16 %v634
        %v2791 = vunpack.c.h.b16 %v634
        %v2792 = vunpack.c.l.b16 %v635
        %v2793 = vunpack.c.h.b16 %v635
        %v2794 = vunpack.c.l.b16 %v636
        %v2795 = vunpack.c.h.b16 %v636
        %v2796 = vunpack.c.l.b16 %v637
        %v2797 = vunpack.c.h.b16 %v637
        %v2798 = vunpack.c.l.b16 %v638
        %v2799 = vunpack.c.h.b16 %v638
        %v2800 = vunpack.c.l.b16 %v639
        %v2801 = vunpack.c.h.b16 %v639
        %v2802 = vunpack.c.l.b16 %v640
        %v2803 = vunpack.c.h.b16 %v640
        %v2804 = vunpack.c.l.b16 %v641
        %v2805 = vunpack.c.h.b16 %v641
        %v2806 = vunpack.c.l.b16 %v642
        %v2807 = vunpack.c.h.b16 %v642
        %v2808 = vunpack.c.l.b16 %v643
        %v2809 = vunpack.c.h.b16 %v643
        %v2810 = vunpack.c.l.b16 %v644
        %v2811 = vunpack.c.h.b16 %v644
        %v2812 = vunpack.c.l.b16 %v645
        %v2813 = vunpack.c.h.b16 %v645
        %v2814 = vunpack.c.l.b16 %v646
        %v2815 = vunpack.c.h.b16 %v646
        %v2816 = vunpack.c.l.b16 %v647
        %v2817 = vunpack.c.h.b16 %v647
        %v2818 = vunpack.c.l.b16 %v648
        %v2819 = vunpack.c.h.b16 %v648
        %v2820 = vunpack.c.l.b16 %v649
        %v2821 = vunpack.c.h.b16 %v649
        %v2822 = vunpack.c.l.b16 %v650
        %v2823 = vunpack.c.h.b16 %v650
        %v2824 = vunpack.c.l.b16 %v651
        %v2825 = vunpack.c.h.b16 %v651
        %v2826 = vunpack.c.l.b16 %v652
        %v2827 = vunpack.c.h.b16 %v652
        %v2828 = vunpack.c.l.b16 %v653
        %v2829 = vunpack.c.h.b16 %v653
        %v2830 = vunpack.c.l.b16 %v654
        %v2831 = vunpack.c.h.b16 %v654
        %v2832 = vunpack.c.l.b16 %v655
        %v2833 = vunpack.c.h.b16 %v655
        %v2834 = vunpack.c.l.b16 %v656
        %v2835 = vunpack.c.h.b16 %v656
        %v2836 = vunpack.c.l.b16 %v657
        %v2837 = vunpack.c.h.b16 %v657
        %v2838 = vunpack.c.l.b16 %v658
        %v2839 = vunpack.c.h.b16 %v658
        %v2840 = vunpack.c.l.b16 %v659
        %v2841 = vunpack.c.h.b16 %v659
        %v2842 = vunpack.c.l.b16 %v660
        %v2843 = vunpack.c.h.b16 %v660
        %v2844 = vunpack.c.l.b16 %v661
        %v2845 = vunpack.c.h.b16 %v661
        %v2846 = vunpack.c.l.b16 %v662
        %v2847 = vunpack.c.h.b16 %v662
        %v2848 = vunpack.c.l.b16 %v663
        %v2849 = vunpack.c.h.b16 %v663
        %v2850 = vunpack.c.l.b16 %v664
        %v2851 = vunpack.c.h.b16 %v664
        %v2852 = vunpack.c.l.b16 %v665
        %v2853 = vunpack.c.h.b16 %v665
        %v2854 = vunpack.c.l.b16 %v666
        %v2855 = vunpack.c.h.b16 %v666
        %v2856 = vunpack.c.l.b16 %v667
        %v2857 = vunpack.c.h.b16 %v667
        %v2858 = vunpack.c.l.b16 %v668
        %v2859 = vunpack.c.h.b16 %v668
        %v2860 = vunpack.c.l.b16 %v669
        %v2861 = vunpack.c.h.b16 %v669
        %v2862 = vunpack.c.l.b16 %v670
        %v2863 = vunpack.c.h.b16 %v670
        %v2864 = vunpack.c.l.b16 %v671
        %v2865 = vunpack.c.h.b16 %v671
        %v2866 = vunpack.c.l.b16 %v672
        %v2867 = vunpack.c.h.b16 %v672
        %v2868 = vunpack.c.l.b16 %v673
        %v2869 = vunpack.c.h.b16 %v673
        %v2870 = vunpack.c.l.b16 %v674
        %v2871 = vunpack.c.h.b16 %v674
        %v2872 = vunpack.c.l.b16 %v675
        %v2873 = vunpack.c.h.b16 %v675
        %v2874 = vunpack.c.l.b16 %v676
        %v2875 = vunpack.c.h.b16 %v676
        %v2876 = vunpack.c.l.b16 %v677
        %v2877 = vunpack.c.h.b16 %v677
        %v2878 = vunpack.c.l.b16 %v678
        %v2879 = vunpack.c.h.b16 %v678
        %v2880 = vunpack.c.l.b16 %v679
        %v2881 = vunpack.c.h.b16 %v679
        %v2882 = vunpack.c.l.b16 %v680
        %v2883 = vunpack.c.h.b16 %v680
        %v2884 = vunpack.c.l.b16 %v681
        %v2885 = vunpack.c.h.b16 %v681
        %v2886 = vunpack.c.l.b16 %v682
        %v2887 = vunpack.c.h.b16 %v682
        %v2888 = vunpack.c.l.b16 %v683
        %v2889 = vunpack.c.h.b16 %v683
        %v2890 = vunpack.c.l.b16 %v684
        %v2891 = vunpack.c.h.b16 %v684
        %v2892 = vunpack.c.l.b16 %v685
        %v2893 = vunpack.c.h.b16 %v685
        %v2894 = vunpack.c.l.b16 %v686
        %v2895 = vunpack.c.h.b16 %v686
        %v2896 = vunpack.c.l.b16 %v687
        %v2897 = vunpack.c.h.b16 %v687
        %v2898 = vunpack.c.l.b16 %v688
        %v2899 = vunpack.c.h.b16 %v688
        %v2900 = vunpack.c.l.b16 %v689
        %v2901 = vunpack.c.h.b16 %v689
        %v2902 = vunpack.c.l.b16 %v690
        %v2903 = vunpack.c.h.b16 %v690
        %v2904 = vunpack.c.l.b16 %v691
        %v2905 = vunpack.c.h.b16 %v691
        %v2906 = vunpack.c.l.b16 %v692
        %v2907 = vunpack.c.h.b16 %v692
        %v2908 = vunpack.c.l.b16 %v693
        %v2909 = vunpack.c.h.b16 %v693
        %v2910 = vunpack.c.l.b16 %v694
        %v2911 = vunpack.c.h.b16 %v694
        %v2912 = vunpack.c.l.b16 %v695
        %v2913 = vunpack.c.h.b16 %v695
        %v2914 = vunpack.c.l.b16 %v696
        %v2915 = vunpack.c.h.b16 %v696
        %v2916 = vunpack.c.l.b16 %v697
        %v2917 = vunpack.c.h.b16 %v697
        %v2918 = vunpack.c.l.b16 %v698
        %v2919 = vunpack.c.h.b16 %v698
        %v2920 = vunpack.c.l.b16 %v699
        %v2921 = vunpack.c.h.b16 %v699
        %v2922 = vunpack.c.l.b16 %v700
        %v2923 = vunpack.c.h.b16 %v700
        %v2924 = vunpack.c.l.b16 %v701
        %v2925 = vunpack.c.h.b16 %v701
        %v2926 = vunpack.c.l.b16 %v702
        %v2927 = vunpack.c.h.b16 %v702
        %v2928 = vunpack.c.l.b16 %v703
        %v2929 = vunpack.c.h.b16 %v703
        %v2930 = vunpack.c.l.b16 %v704
        %v2931 = vunpack.c.h.b16 %v704
        %v2932 = vunpack.c.l.b16 %v705
        %v2933 = vunpack.c.h.b16 %v705
        %v2934 = vunpack.c.l.b16 %v706
        %v2935 = vunpack.c.h.b16 %v706
        %v2936 = vunpack.c.l.b16 %v707
        %v2937 = vunpack.c.h.b16 %v707
        %v2938 = vunpack.c.l.b16 %v708
        %v2939 = vunpack.c.h.b16 %v708
        %v2940 = vunpack.c.l.b16 %v709
        %v2941 = vunpack.c.h.b16 %v709
        %v2942 = vunpack.c.l.b16 %v710
        %v2943 = vunpack.c.h.b16 %v710
        %v2944 = vunpack.c.l.b16 %v711
        %v2945 = vunpack.c.h.b16 %v711
        %v2946 = vunpack.c.l.b16 %v712
        %v2947 = vunpack.c.h.b16 %v712
        %v2948 = vunpack.c.l.b16 %v713
        %v2949 = vunpack.c.h.b16 %v713
        %v2950 = vunpack.c.l.b16 %v714
        %v2951 = vunpack.c.h.b16 %v714
        %v2952 = vunpack.c.l.b16 %v715
        %v2953 = vunpack.c.h.b16 %v715
        %v2954 = vunpack.c.l.b16 %v716
        %v2955 = vunpack.c.h.b16 %v716
        %v2956 = vunpack.c.l.b16 %v717
        %v2957 = vunpack.c.h.b16 %v717
        %v2958 = vunpack.c.l.b16 %v718
        %v2959 = vunpack.c.h.b16 %v718
        %v2960 = vunpack.c.l.b16 %v719
        %v2961 = vunpack.c.h.b16 %v719
        %v2962 = vunpack.c.l.b16 %v720
        %v2963 = vunpack.c.h.b16 %v720
        %v2964 = vunpack.c.l.b16 %v721
        %v2965 = vunpack.c.h.b16 %v721
        %v2966 = vunpack.c.l.b16 %v722
        %v2967 = vunpack.c.h.b16 %v722
        %v2968 = vunpack.c.l.b16 %v723
        %v2969 = vunpack.c.h.b16 %v723
        %v2970 = vunpack.c.l.b16 %v724
        %v2971 = vunpack.c.h.b16 %v724
        %v2972 = vunpack.c.l.b16 %v725
        %v2973 = vunpack.c.h.b16 %v725
        %v2974 = vunpack.c.l.b16 %v726
        %v2975 = vunpack.c.h.b16 %v726
        %v2976 = vunpack.c.l.b16 %v727
        %v2977 = vunpack.c.h.b16 %v727
        %v2978 = vunpack.c.l.b16 %v728
        %v2979 = vunpack.c.h.b16 %v728
        %v2980 = vunpack.c.l.b16 %v729
        %v2981 = vunpack.c.h.b16 %v729
        %v2982 = vunpack.c.l.b16 %v730
        %v2983 = vunpack.c.h.b16 %v730
        %v2984 = vunpack.c.l.b16 %v731
        %v2985 = vunpack.c.h.b16 %v731
        %v2986 = vunpack.c.l.b16 %v732
        %v2987 = vunpack.c.h.b16 %v732
        %v2988 = vunpack.c.l.b16 %v733
        %v2989 = vunpack.c.h.b16 %v733
        %v2990 = vunpack.c.l.b16 %v734
        %v2991 = vunpack.c.h.b16 %v734
        %v2992 = vunpack.c.l.b16 %v735
        %v2993 = vunpack.c.h.b16 %v735
        %v2994 = vunpack.c.l.b16 %v736
        %v2995 = vunpack.c.h.b16 %v736
        %v2996 = vunpack.c.l.b16 %v737
        %v2997 = vunpack.c.h.b16 %v737
        %v2998 = vunpack.c.l.b16 %v738
        %v2999 = vunpack.c.h.b16 %v738
        %v3000 = vunpack.c.l.b16 %v739
        %v3001 = vunpack.c.h.b16 %v739
        %v3002 = vunpack.c.l.b16 %v740
        %v3003 = vunpack.c.h.b16 %v740
        %v3004 = vunpack.c.l.b16 %v741
        %v3005 = vunpack.c.h.b16 %v741
        %v3006 = vunpack.c.l.b16 %v742
        %v3007 = vunpack.c.h.b16 %v742
        %v3008 = vunpack.c.l.b16 %v743
        %v3009 = vunpack.c.h.b16 %v743
        %v3010 = vunpack.c.l.b16 %v744
        %v3011 = vunpack.c.h.b16 %v744
        %v3012 = vunpack.c.l.b16 %v745
        %v3013 = vunpack.c.h.b16 %v745
        %v3014 = vunpack.c.l.b16 %v746
        %v3015 = vunpack.c.h.b16 %v746
        %v3016 = vunpack.c.l.b16 %v747
        %v3017 = vunpack.c.h.b16 %v747
        %v3018 = vunpack.c.l.b16 %v748
        %v3019 = vunpack.c.h.b16 %v748
        %v3020 = vunpack.c.l.b16 %v749
        %v3021 = vunpack.c.h.b16 %v749
        %v3022 = vunpack.c.l.b16 %v750
        %v3023 = vunpack.c.h.b16 %v750
        %v3024 = vunpack.c.l.b16 %v751
        %v3025 = vunpack.c.h.b16 %v751
        %v3026 = vunpack.c.l.b16 %v752
        %v3027 = vunpack.c.h.b16 %v752
        %v3028 = vunpack.c.l.b16 %v753
        %v3029 = vunpack.c.h.b16 %v753
        %v3030 = vunpack.c.l.b16 %v754
        %v3031 = vunpack.c.h.b16 %v754
        %v3032 = vunpack.c.l.b16 %v755
        %v3033 = vunpack.c.h.b16 %v755
        %v3034 = vunpack.c.l.b16 %v756
        %v3035 = vunpack.c.h.b16 %v756
        %v3036 = vunpack.c.l.b16 %v757
        %v3037 = vunpack.c.h.b16 %v757
        %v3038 = vunpack.c.l.b16 %v758
        %v3039 = vunpack.c.h.b16 %v758
        %v3040 = vunpack.c.l.b16 %v759
        %v3041 = vunpack.c.h.b16 %v759
        %v3042 = vunpack.c.l.b16 %v760
        %v3043 = vunpack.c.h.b16 %v760
        %v3044 = vunpack.c.l.b16 %v761
        %v3045 = vunpack.c.h.b16 %v761
        %v3046 = vunpack.c.l.b16 %v762
        %v3047 = vunpack.c.h.b16 %v762
        %v3048 = vunpack.c.l.b16 %v763
        %v3049 = vunpack.c.h.b16 %v763
        %v3050 = vunpack.c.l.b16 %v764
        %v3051 = vunpack.c.h.b16 %v764
        %v3052 = vunpack.c.l.b16 %v765
        %v3053 = vunpack.c.h.b16 %v765
        %v3054 = vunpack.c.l.b16 %v766
        %v3055 = vunpack.c.h.b16 %v766
        %v3056 = vunpack.c.l.b16 %v767
        %v3057 = vunpack.c.h.b16 %v767
        %v3058 = vunpack.c.l.b16 %v768
        %v3059 = vunpack.c.h.b16 %v768
        %v3060 = vunpack.c.l.b16 %v769
        %v3061 = vunpack.c.h.b16 %v769
        %v3062 = vunpack.c.l.b16 %v770
        %v3063 = vunpack.c.h.b16 %v770
        %v3064 = vunpack.c.l.b16 %v771
        %v3065 = vunpack.c.h.b16 %v771
        %v3066 = vunpack.c.l.b16 %v772
        %v3067 = vunpack.c.h.b16 %v772
        %v3068 = vunpack.c.l.b16 %v773
        %v3069 = vunpack.c.h.b16 %v773
        %v3070 = vunpack.c.l.b16 %v774
        %v3071 = vunpack.c.h.b16 %v774
        %v3072 = vunpack.c.l.b16 %v775
        %v3073 = vunpack.c.h.b16 %v775
        %v3074 = vunpack.c.l.b16 %v776
        %v3075 = vunpack.c.h.b16 %v776
        %v3076 = vunpack.c.l.b16 %v777
        %v3077 = vunpack.c.h.b16 %v777
        %v3078 = vunpack.c.l.b16 %v778
        %v3079 = vunpack.c.h.b16 %v778
        %v3080 = vunpack.c.l.b16 %v779
        %v3081 = vunpack.c.h.b16 %v779
        %v3082 = vunpack.c.l.b16 %v780
        %v3083 = vunpack.c.h.b16 %v780
        %v3084 = vunpack.c.l.b16 %v781
        %v3085 = vunpack.c.h.b16 %v781
        %v3086 = vunpack.c.l.b16 %v782
        %v3087 = vunpack.c.h.b16 %v782
        %v3088 = vunpack.c.l.b16 %v783
        %v3089 = vunpack.c.h.b16 %v783
        %v3090 = vunpack.c.l.b16 %v784
        %v3091 = vunpack.c.h.b16 %v784
        %v3092 = vunpack.c.l.b16 %v785
        %v3093 = vunpack.c.h.b16 %v785
        %v3094 = vunpack.c.l.b16 %v786
        %v3095 = vunpack.c.h.b16 %v786
        %v3096 = vunpack.c.l.b16 %v787
        %v3097 = vunpack.c.h.b16 %v787
        %v3098 = vunpack.c.l.b16 %v788
        %v3099 = vunpack.c.h.b16 %v788
        %v3100 = vunpack.c.l.b16 %v789
        %v3101 = vunpack.c.h.b16 %v789
        %v3102 = vunpack.c.l.b16 %v790
        %v3103 = vunpack.c.h.b16 %v790
        %v3104 = vunpack.c.l.b16 %v791
        %v3105 = vunpack.c.h.b16 %v791
        %v3106 = vunpack.c.l.b16 %v792
        %v3107 = vunpack.c.h.b16 %v792
        %v3108 = vunpack.c.l.b16 %v793
        %v3109 = vunpack.c.h.b16 %v793
        %v3110 = vunpack.c.l.b16 %v794
        %v3111 = vunpack.c.h.b16 %v794
        %v3112 = vunpack.c.l.b16 %v795
        %v3113 = vunpack.c.h.b16 %v795
        %v3114 = vunpack.c.l.b16 %v796
        %v3115 = vunpack.c.h.b16 %v796
        %v3116 = vunpack.c.l.b16 %v797
        %v3117 = vunpack.c.h.b16 %v797
        %v3118 = vunpack.c.l.b16 %v798
        %v3119 = vunpack.c.h.b16 %v798
        %v3120 = vunpack.c.l.b16 %v799
        %v3121 = vunpack.c.h.b16 %v799
        %v3122 = vunpack.c.l.b16 %v800
        %v3123 = vunpack.c.h.b16 %v800
        %v3124 = vunpack.c.l.b16 %v801
        %v3125 = vunpack.c.h.b16 %v801
        %v3126 = vunpack.c.l.b16 %v802
        %v3127 = vunpack.c.h.b16 %v802
        %v3128 = vunpack.c.l.b16 %v803
        %v3129 = vunpack.c.h.b16 %v803
        %v3130 = vunpack.c.l.b16 %v804
        %v3131 = vunpack.c.h.b16 %v804
        %v3132 = vunpack.c.l.b16 %v805
        %v3133 = vunpack.c.h.b16 %v805
        %v3134 = vunpack.c.l.b16 %v806
        %v3135 = vunpack.c.h.b16 %v806
        %v3136 = vunpack.c.l.b16 %v807
        %v3137 = vunpack.c.h.b16 %v807
        %v3138 = vunpack.c.l.b16 %v808
        %v3139 = vunpack.c.h.b16 %v808
        %v3140 = vunpack.c.l.b16 %v809
        %v3141 = vunpack.c.h.b16 %v809
        %v3142 = vunpack.c.l.b16 %v810
        %v3143 = vunpack.c.h.b16 %v810
        %v3144 = vunpack.c.l.b16 %v811
        %v3145 = vunpack.c.h.b16 %v811
        %v3146 = vunpack.c.l.b16 %v812
        %v3147 = vunpack.c.h.b16 %v812
        %v3148 = vunpack.c.l.b16 %v813
        %v3149 = vunpack.c.h.b16 %v813
        %v3150 = vunpack.c.l.b16 %v814
        %v3151 = vunpack.c.h.b16 %v814
        %v3152 = vunpack.c.l.b16 %v815
        %v3153 = vunpack.c.h.b16 %v815
        %v3154 = vunpack.c.l.b16 %v816
        %v3155 = vunpack.c.h.b16 %v816
        %v3156 = vunpack.c.l.b16 %v817
        %v3157 = vunpack.c.h.b16 %v817
        %v3158 = vunpack.c.l.b16 %v818
        %v3159 = vunpack.c.h.b16 %v818
        %v3160 = vunpack.c.l.b16 %v819
        %v3161 = vunpack.c.h.b16 %v819
        %v3162 = vunpack.c.l.b16 %v820
        %v3163 = vunpack.c.h.b16 %v820
        %v3164 = vunpack.c.l.b16 %v821
        %v3165 = vunpack.c.h.b16 %v821
        %v3166 = vunpack.c.l.b16 %v822
        %v3167 = vunpack.c.h.b16 %v822
        %v3168 = vunpack.c.l.b16 %v823
        %v3169 = vunpack.c.h.b16 %v823
        %v3170 = vunpack.c.l.b16 %v824
        %v3171 = vunpack.c.h.b16 %v824
        %v3172 = vunpack.c.l.b16 %v825
        %v3173 = vunpack.c.h.b16 %v825
        %v3174 = vunpack.c.l.b16 %v826
        %v3175 = vunpack.c.h.b16 %v826
        %v3176 = vunpack.c.l.b16 %v827
        %v3177 = vunpack.c.h.b16 %v827
        %v3178 = vunpack.c.l.b16 %v828
        %v3179 = vunpack.c.h.b16 %v828
        %v3180 = vunpack.c.l.b16 %v829
        %v3181 = vunpack.c.h.b16 %v829
        %v3182 = vunpack.c.l.b16 %v830
        %v3183 = vunpack.c.h.b16 %v830
        %v3184 = vunpack.c.l.b16 %v831
        %v3185 = vunpack.c.h.b16 %v831
        %v3186 = vunpack.c.l.b16 %v832
        %v3187 = vunpack.c.h.b16 %v832
        %v3188 = vunpack.c.l.b16 %v833
        %v3189 = vunpack.c.h.b16 %v833
        %v3190 = vunpack.c.l.b16 %v834
        %v3191 = vunpack.c.h.b16 %v834
        %v3192 = vunpack.c.l.b16 %v835
        %v3193 = vunpack.c.h.b16 %v835
        %v3194 = vunpack.c.l.b16 %v836
        %v3195 = vunpack.c.h.b16 %v836
        %v3196 = vunpack.c.l.b16 %v837
        %v3197 = vunpack.c.h.b16 %v837
        %v3198 = vunpack.c.l.b16 %v838
        %v3199 = vunpack.c.h.b16 %v838
        %v3200 = vunpack.c.l.b16 %v839
        %v3201 = vunpack.c.h.b16 %v839
        %v3202 = vunpack.c.l.b16 %v840
        %v3203 = vunpack.c.h.b16 %v840
        %v3204 = vunpack.c.l.b16 %v841
        %v3205 = vunpack.c.h.b16 %v841
        %v3206 = vunpack.c.l.b16 %v842
        %v3207 = vunpack.c.h.b16 %v842
        %v3208 = vunpack.c.l.b16 %v843
        %v3209 = vunpack.c.h.b16 %v843
        %v3210 = vunpack.c.l.b16 %v844
        %v3211 = vunpack.c.h.b16 %v844
        %v3212 = vunpack.c.l.b16 %v845
        %v3213 = vunpack.c.h.b16 %v845
        %v3214 = vunpack.c.l.b16 %v846
        %v3215 = vunpack.c.h.b16 %v846
        %v3216 = vunpack.c.l.b16 %v847
        %v3217 = vunpack.c.h.b16 %v847
        %v3218 = vunpack.c.l.b16 %v848
        %v3219 = vunpack.c.h.b16 %v848
        %v3220 = vunpack.c.l.b16 %v849
        %v3221 = vunpack.c.h.b16 %v849
        %v3222 = vunpack.c.l.b16 %v850
        %v3223 = vunpack.c.h.b16 %v850
        %v3224 = vunpack.c.l.b16 %v851
        %v3225 = vunpack.c.h.b16 %v851
        %v3226 = vunpack.c.l.b16 %v852
        %v3227 = vunpack.c.h.b16 %v852
        %v3228 = vunpack.c.l.b16 %v853
        %v3229 = vunpack.c.h.b16 %v853
        %v3230 = vunpack.c.l.b16 %v854
        %v3231 = vunpack.c.h.b16 %v854
        %v3232 = vunpack.c.l.b16 %v855
        %v3233 = vunpack.c.h.b16 %v855
        %v3234 = vunpack.c.l.b16 %v856
        %v3235 = vunpack.c.h.b16 %v856
        %v3236 = vunpack.c.l.b16 %v857
        %v3237 = vunpack.c.h.b16 %v857
        %v3238 = vunpack.c.l.b16 %v858
        %v3239 = vunpack.c.h.b16 %v858
        %v3240 = vunpack.c.l.b16 %v859
        %v3241 = vunpack.c.h.b16 %v859
        %v3242 = vunpack.c.l.b16 %v860
        %v3243 = vunpack.c.h.b16 %v860
        %v3244 = vunpack.c.l.b16 %v861
        %v3245 = vunpack.c.h.b16 %v861
        %v3246 = vunpack.c.l.b16 %v862
        %v3247 = vunpack.c.h.b16 %v862
        %v3248 = vunpack.c.l.b16 %v863
        %v3249 = vunpack.c.h.b16 %v863
        %v3250 = vunpack.c.l.b16 %v864
        %v3251 = vunpack.c.h.b16 %v864
        %v3252 = vunpack.c.l.b16 %v865
        %v3253 = vunpack.c.h.b16 %v865
        %v3254 = vunpack.c.l.b16 %v866
        %v3255 = vunpack.c.h.b16 %v866
        %v3256 = vunpack.c.l.b16 %v867
        %v3257 = vunpack.c.h.b16 %v867
        %v3258 = vunpack.c.l.b16 %v868
        %v3259 = vunpack.c.h.b16 %v868
        %v3260 = vunpack.c.l.b16 %v869
        %v3261 = vunpack.c.h.b16 %v869
        %v3262 = vunpack.c.l.b16 %v870
        %v3263 = vunpack.c.h.b16 %v870
        %v3264 = vunpack.c.l.b16 %v871
        %v3265 = vunpack.c.h.b16 %v871
        %v3266 = vunpack.c.l.b16 %v872
        %v3267 = vunpack.c.h.b16 %v872
        %v3268 = vunpack.c.l.b16 %v873
        %v3269 = vunpack.c.h.b16 %v873
        %v3270 = vunpack.c.l.b16 %v874
        %v3271 = vunpack.c.h.b16 %v874
        %v3272 = vunpack.c.l.b16 %v875
        %v3273 = vunpack.c.h.b16 %v875
        %v3274 = vunpack.c.l.b16 %v876
        %v3275 = vunpack.c.h.b16 %v876
        %v3276 = vunpack.c.l.b16 %v877
        %v3277 = vunpack.c.h.b16 %v877
        %v3278 = vunpack.c.l.b16 %v878
        %v3279 = vunpack.c.h.b16 %v878
        %v3280 = vunpack.c.l.b16 %v879
        %v3281 = vunpack.c.h.b16 %v879
        %v3282 = vunpack.c.l.b16 %v880
        %v3283 = vunpack.c.h.b16 %v880
        %v3284 = vunpack.c.l.b16 %v881
        %v3285 = vunpack.c.h.b16 %v881
        %v3286 = vunpack.c.l.b16 %v882
        %v3287 = vunpack.c.h.b16 %v882
        %v3288 = vunpack.c.l.b16 %v883
        %v3289 = vunpack.c.h.b16 %v883
        %v3290 = vunpack.c.l.b16 %v884
        %v3291 = vunpack.c.h.b16 %v884
        %v3292 = vunpack.c.l.b16 %v885
        %v3293 = vunpack.c.h.b16 %v885
        %v3294 = vunpack.c.l.b16 %v886
        %v3295 = vunpack.c.h.b16 %v886
        %v3296 = vunpack.c.l.b16 %v887
        %v3297 = vunpack.c.h.b16 %v887
        %v3298 = vunpack.c.l.b16 %v888
        %v3299 = vunpack.c.h.b16 %v888
        %v3300 = vunpack.c.l.b16 %v889
        %v3301 = vunpack.c.h.b16 %v889
        %v3302 = vunpack.c.l.b16 %v890
        %v3303 = vunpack.c.h.b16 %v890
        %v3304 = vunpack.c.l.b16 %v891
        %v3305 = vunpack.c.h.b16 %v891
        %v3306 = vunpack.c.l.b16 %v892
        %v3307 = vunpack.c.h.b16 %v892
        %v3308 = vunpack.c.l.b16 %v893
        %v3309 = vunpack.c.h.b16 %v893
        %v3310 = vunpack.c.l.b16 %v894
        %v3311 = vunpack.c.h.b16 %v894
        %v3312 = vunpack.c.l.b16 %v895
        %v3313 = vunpack.c.h.b16 %v895
        %v3314 = vunpack.c.l.b16 %v896
        %v3315 = vunpack.c.h.b16 %v896
        %v3316 = vunpack.c.l.b16 %v897
        %v3317 = vunpack.c.h.b16 %v897
        %v3318 = vunpack.c.l.b16 %v898
        %v3319 = vunpack.c.h.b16 %v898
        %v3320 = vunpack.c.l.b16 %v899
        %v3321 = vunpack.c.h.b16 %v899
        %v3322 = vunpack.c.l.b16 %v900
        %v3323 = vunpack.c.h.b16 %v900
        %v3324 = vunpack.c.l.b16 %v901
        %v3325 = vunpack.c.h.b16 %v901
        %v3326 = vunpack.c.l.b16 %v902
        %v3327 = vunpack.c.h.b16 %v902
        %v3328 = vunpack.c.l.b16 %v903
        %v3329 = vunpack.c.h.b16 %v903
        %v3330 = vunpack.c.l.b16 %v904
        %v3331 = vunpack.c.h.b16 %v904
        %v3332 = vunpack.c.l.b16 %v905
        %v3333 = vunpack.c.h.b16 %v905
        %v3334 = vunpack.c.l.b16 %v906
        %v3335 = vunpack.c.h.b16 %v906
        %v3336 = vunpack.c.l.b16 %v907
        %v3337 = vunpack.c.h.b16 %v907
        %v3338 = vunpack.c.l.b16 %v908
        %v3339 = vunpack.c.h.b16 %v908
        %v3340 = vunpack.c.l.b16 %v909
        %v3341 = vunpack.c.h.b16 %v909
        %v3342 = vunpack.c.l.b16 %v910
        %v3343 = vunpack.c.h.b16 %v910
        %v3344 = vunpack.c.l.b16 %v911
        %v3345 = vunpack.c.h.b16 %v911
        %v3346 = vunpack.c.l.b16 %v912
        %v3347 = vunpack.c.h.b16 %v912
        %v3348 = vunpack.c.l.b16 %v913
        %v3349 = vunpack.c.h.b16 %v913
        %v3350 = vunpack.c.l.b16 %v914
        %v3351 = vunpack.c.h.b16 %v914
        %v3352 = vunpack.c.l.b16 %v915
        %v3353 = vunpack.c.h.b16 %v915
        %v3354 = vunpack.c.l.b16 %v916
        %v3355 = vunpack.c.h.b16 %v916
        %v3356 = vunpack.c.l.b16 %v917
        %v3357 = vunpack.c.h.b16 %v917
        %v3358 = vunpack.c.l.b16 %v918
        %v3359 = vunpack.c.h.b16 %v918
        %v3360 = vunpack.c.l.b16 %v919
        %v3361 = vunpack.c.h.b16 %v919
        %v3362 = vunpack.c.l.b16 %v920
        %v3363 = vunpack.c.h.b16 %v920
        %v3364 = vunpack.c.l.b16 %v921
        %v3365 = vunpack.c.h.b16 %v921
        %v3366 = vunpack.c.l.b16 %v922
        %v3367 = vunpack.c.h.b16 %v922
        %v3368 = vunpack.c.l.b16 %v923
        %v3369 = vunpack.c.h.b16 %v923
        %v3370 = vunpack.c.l.b16 %v924
        %v3371 = vunpack.c.h.b16 %v924
        %v3372 = vunpack.c.l.b16 %v925
        %v3373 = vunpack.c.h.b16 %v925
        %v3374 = vunpack.c.l.b16 %v926
        %v3375 = vunpack.c.h.b16 %v926
        %v3376 = vunpack.c.l.b16 %v927
        %v3377 = vunpack.c.h.b16 %v927
        %v3378 = vunpack.c.l.b16 %v928
        %v3379 = vunpack.c.h.b16 %v928
        %v3380 = vunpack.c.l.b16 %v929
        %v3381 = vunpack.c.h.b16 %v929
        %v3382 = vunpack.c.l.b16 %v930
        %v3383 = vunpack.c.h.b16 %v930
        %v3384 = vunpack.c.l.b16 %v931
        %v3385 = vunpack.c.h.b16 %v931
        %v3386 = vunpack.c.l.b16 %v932
        %v3387 = vunpack.c.h.b16 %v932
        %v3388 = vunpack.c.l.b16 %v933
        %v3389 = vunpack.c.h.b16 %v933
        %v3390 = vunpack.c.l.b16 %v934
        %v3391 = vunpack.c.h.b16 %v934
        %v3392 = vunpack.c.l.b16 %v935
        %v3393 = vunpack.c.h.b16 %v935
        %v3394 = vunpack.c.l.b16 %v936
        %v3395 = vunpack.c.h.b16 %v936
        %v3396 = vunpack.c.l.b16 %v937
        %v3397 = vunpack.c.h.b16 %v937
        %v3398 = vunpack.c.l.b16 %v938
        %v3399 = vunpack.c.h.b16 %v938
        %v3400 = vunpack.c.l.b16 %v939
        %v3401 = vunpack.c.h.b16 %v939
        %v3402 = vunpack.c.l.b16 %v940
        %v3403 = vunpack.c.h.b16 %v940
        %v3404 = vunpack.c.l.b16 %v941
        %v3405 = vunpack.c.h.b16 %v941
        %v3406 = vunpack.c.l.b16 %v942
        %v3407 = vunpack.c.h.b16 %v942
        %v3408 = vunpack.c.l.b16 %v943
        %v3409 = vunpack.c.h.b16 %v943
        %v3410 = vunpack.c.l.b16 %v944
        %v3411 = vunpack.c.h.b16 %v944
        %v3412 = vunpack.c.l.b16 %v945
        %v3413 = vunpack.c.h.b16 %v945
        %v3414 = vunpack.c.l.b16 %v946
        %v3415 = vunpack.c.h.b16 %v946
        %v3416 = vunpack.c.l.b16 %v947
        %v3417 = vunpack.c.h.b16 %v947
        %v3418 = vunpack.c.l.b16 %v948
        %v3419 = vunpack.c.h.b16 %v948
        %v3420 = vunpack.c.l.b16 %v949
        %v3421 = vunpack.c.h.b16 %v949
        %v3422 = vunpack.c.l.b16 %v950
        %v3423 = vunpack.c.h.b16 %v950
        %v3424 = vunpack.c.l.b16 %v951
        %v3425 = vunpack.c.h.b16 %v951
        %v3426 = vunpack.c.l.b16 %v952
        %v3427 = vunpack.c.h.b16 %v952
        %v3428 = vunpack.c.l.b16 %v953
        %v3429 = vunpack.c.h.b16 %v953
        %v3430 = vunpack.c.l.b16 %v954
        %v3431 = vunpack.c.h.b16 %v954
        %v3432 = vunpack.c.l.b16 %v955
        %v3433 = vunpack.c.h.b16 %v955
        %v3434 = vunpack.c.l.b16 %v956
        %v3435 = vunpack.c.h.b16 %v956
        %v3436 = vunpack.c.l.b16 %v957
        %v3437 = vunpack.c.h.b16 %v957
        %v3438 = vunpack.c.l.b16 %v958
        %v3439 = vunpack.c.h.b16 %v958
        %v3440 = vunpack.c.l.b16 %v959
        %v3441 = vunpack.c.h.b16 %v959
        %v3442 = vunpack.c.l.b16 %v960
        %v3443 = vunpack.c.h.b16 %v960
        %v3444 = vunpack.c.l.b16 %v961
        %v3445 = vunpack.c.h.b16 %v961
        %v3446 = vunpack.c.l.b16 %v962
        %v3447 = vunpack.c.h.b16 %v962
        %v3448 = vunpack.c.l.b16 %v963
        %v3449 = vunpack.c.h.b16 %v963
        %v3450 = vunpack.c.l.b16 %v964
        %v3451 = vunpack.c.h.b16 %v964
        %v3452 = vunpack.c.l.b16 %v965
        %v3453 = vunpack.c.h.b16 %v965
        %v3454 = vunpack.c.l.b16 %v966
        %v3455 = vunpack.c.h.b16 %v966
        %v3456 = vunpack.c.l.b16 %v967
        %v3457 = vunpack.c.h.b16 %v967
        %v3458 = vunpack.c.l.b16 %v968
        %v3459 = vunpack.c.h.b16 %v968
        %v3460 = vunpack.c.l.b16 %v969
        %v3461 = vunpack.c.h.b16 %v969
        %v3462 = vunpack.c.l.b16 %v970
        %v3463 = vunpack.c.h.b16 %v970
        %v3464 = vunpack.c.l.b16 %v971
        %v3465 = vunpack.c.h.b16 %v971
        %v3466 = vunpack.c.l.b16 %v972
        %v3467 = vunpack.c.h.b16 %v972
        %v3468 = vunpack.c.l.b16 %v973
        %v3469 = vunpack.c.h.b16 %v973
        %v3470 = vunpack.c.l.b16 %v974
        %v3471 = vunpack.c.h.b16 %v974
        %v3472 = vunpack.c.l.b16 %v975
        %v3473 = vunpack.c.h.b16 %v975
        %v3474 = vunpack.c.l.b16 %v976
        %v3475 = vunpack.c.h.b16 %v976
        %v3476 = vunpack.c.l.b16 %v977
        %v3477 = vunpack.c.h.b16 %v977
        %v3478 = vunpack.c.l.b16 %v978
        %v3479 = vunpack.c.h.b16 %v978
        %v3480 = vunpack.c.l.b16 %v979
        %v3481 = vunpack.c.h.b16 %v979
        %v3482 = vunpack.c.l.b16 %v980
        %v3483 = vunpack.c.h.b16 %v980
        %v3484 = vunpack.c.l.b16 %v981
        %v3485 = vunpack.c.h.b16 %v981
        %v3486 = vunpack.c.l.b16 %v982
        %v3487 = vunpack.c.h.b16 %v982
        %v3488 = vunpack.c.l.b16 %v983
        %v3489 = vunpack.c.h.b16 %v983
        %v3490 = vunpack.c.l.b16 %v984
        %v3491 = vunpack.c.h.b16 %v984
        %v3492 = vunpack.c.l.b16 %v985
        %v3493 = vunpack.c.h.b16 %v985
        %v3494 = vunpack.c.l.b16 %v986
        %v3495 = vunpack.c.h.b16 %v986
        %v3496 = vunpack.c.l.b16 %v987
        %v3497 = vunpack.c.h.b16 %v987
        %v3498 = vunpack.c.l.b16 %v988
        %v3499 = vunpack.c.h.b16 %v988
        %v3500 = vunpack.c.l.b16 %v989
        %v3501 = vunpack.c.h.b16 %v989
        %v3502 = vunpack.c.l.b16 %v990
        %v3503 = vunpack.c.h.b16 %v990
        %v3504 = vunpack.c.l.b16 %v991
        %v3505 = vunpack.c.h.b16 %v991
        %v3506 = vunpack.c.l.b16 %v992
        %v3507 = vunpack.c.h.b16 %v992
        %v3508 = vunpack.c.l.b16 %v993
        %v3509 = vunpack.c.h.b16 %v993
        %v3510 = vunpack.c.l.b16 %v994
        %v3511 = vunpack.c.h.b16 %v994
        %v3512 = vunpack.c.l.b16 %v995
        %v3513 = vunpack.c.h.b16 %v995
        %v3514 = vunpack.c.l.b16 %v996
        %v3515 = vunpack.c.h.b16 %v996
        %v3516 = vunpack.c.l.b16 %v997
        %v3517 = vunpack.c.h.b16 %v997
        %v3518 = vunpack.c.l.b16 %v998
        %v3519 = vunpack.c.h.b16 %v998
        %v3520 = vunpack.c.l.b16 %v999
        %v3521 = vunpack.c.h.b16 %v999
        %v3522 = vunpack.c.l.b16 %v1000
        %v3523 = vunpack.c.h.b16 %v1000
        %v3524 = vunpack.c.l.b16 %v1001
        %v3525 = vunpack.c.h.b16 %v1001
        %v3526 = vunpack.c.l.b16 %v1002
        %v3527 = vunpack.c.h.b16 %v1002
        %v3528 = vunpack.c.l.b16 %v1003
        %v3529 = vunpack.c.h.b16 %v1003
        %v3530 = vunpack.c.l.b16 %v1004
        %v3531 = vunpack.c.h.b16 %v1004
        %v3532 = vunpack.c.l.b16 %v1005
        %v3533 = vunpack.c.h.b16 %v1005
        %v3534 = vunpack.c.l.b16 %v1006
        %v3535 = vunpack.c.h.b16 %v1006
        %v3536 = vunpack.c.l.b16 %v1007
        %v3537 = vunpack.c.h.b16 %v1007
        %v3538 = vunpack.c.l.b16 %v1008
        %v3539 = vunpack.c.h.b16 %v1008
        %v3540 = vunpack.c.l.b16 %v1009
        %v3541 = vunpack.c.h.b16 %v1009
        %v3542 = vunpack.c.l.b16 %v1010
        %v3543 = vunpack.c.h.b16 %v1010
        %v3544 = vunpack.c.l.b16 %v1011
        %v3545 = vunpack.c.h.b16 %v1011
        %v3546 = vunpack.c.l.b16 %v1012
        %v3547 = vunpack.c.h.b16 %v1012
        %v3548 = vunpack.c.l.b16 %v1013
        %v3549 = vunpack.c.h.b16 %v1013
        %v3550 = vunpack.c.l.b16 %v1014
        %v3551 = vunpack.c.h.b16 %v1014
        %v3552 = vunpack.c.l.b16 %v1015
        %v3553 = vunpack.c.h.b16 %v1015
        %v3554 = vunpack.c.l.b16 %v1016
        %v3555 = vunpack.c.h.b16 %v1016
        %v3556 = vunpack.c.l.b16 %v1017
        %v3557 = vunpack.c.h.b16 %v1017
        %v3558 = vunpack.c.l.b16 %v1018
        %v3559 = vunpack.c.h.b16 %v1018
        %v3560 = vunpack.c.l.b16 %v1019
        %v3561 = vunpack.c.h.b16 %v1019
        %v3562 = vunpack.c.l.b16 %v1020
        %v3563 = vunpack.c.h.b16 %v1020
        %v3564 = vunpack.c.l.b16 %v1021
        %v3565 = vunpack.c.h.b16 %v1021
        %v3566 = vunpack.c.l.b16 %v1022
        %v3567 = vunpack.c.h.b16 %v1022
        %v3568 = vunpack.c.l.b16 %v1023
        %v3569 = vunpack.c.h.b16 %v1023
        %v3570 = vunpack.c.l.b16 %v1024
        %v3571 = vunpack.c.h.b16 %v1024
        %v3572 = vunpack.c.l.b16 %v1025
        %v3573 = vunpack.c.h.b16 %v1025
        %v3574 = vunpack.c.l.b16 %v1026
        %v3575 = vunpack.c.h.b16 %v1026
        %v3576 = vunpack.c.l.b16 %v1027
        %v3577 = vunpack.c.h.b16 %v1027
        %v3578 = vunpack.c.l.b16 %v1028
        %v3579 = vunpack.c.h.b16 %v1028
        %v3580 = vunpack.c.l.b16 %v1029
        %v3581 = vunpack.c.h.b16 %v1029
        %v3582 = vunpack.c.l.b16 %v1030
        %v3583 = vunpack.c.h.b16 %v1030
        %v3584 = vunpack.c.l.b16 %v1031
        %v3585 = vunpack.c.h.b16 %v1031
        %v3586 = vunpack.c.l.b16 %v1032
        %v3587 = vunpack.c.h.b16 %v1032
        %v3588 = vunpack.c.l.b16 %v1033
        %v3589 = vunpack.c.h.b16 %v1033
        %v3590 = vunpack.c.l.b16 %v1034
        %v3591 = vunpack.c.h.b16 %v1034
        %v3592 = vunpack.c.l.b16 %v1035
        %v3593 = vunpack.c.h.b16 %v1035
        %v3594 = vunpack.c.l.b16 %v1036
        %v3595 = vunpack.c.h.b16 %v1036
        %v3596 = vunpack.c.l.b16 %v1037
        %v3597 = vunpack.c.h.b16 %v1037
        %v3598 = vunpack.c.l.b16 %v1038
        %v3599 = vunpack.c.h.b16 %v1038
        %v3600 = vunpack.c.l.b16 %v1039
        %v3601 = vunpack.c.h.b16 %v1039
        %v3602 = vunpack.c.l.b16 %v1040
        %v3603 = vunpack.c.h.b16 %v1040
        %v3604 = vunpack.c.l.b16 %v1041
        %v3605 = vunpack.c.h.b16 %v1041
        %v3606 = vunpack.c.l.b16 %v1042
        %v3607 = vunpack.c.h.b16 %v1042
        %v3608 = vunpack.c.l.b16 %v1043
        %v3609 = vunpack.c.h.b16 %v1043
        %v3610 = vunpack.c.l.b16 %v1044
        %v3611 = vunpack.c.h.b16 %v1044
        %v3612 = vunpack.c.l.b16 %v1045
        %v3613 = vunpack.c.h.b16 %v1045
        %v3614 = vunpack.c.l.b16 %v1046
        %v3615 = vunpack.c.h.b16 %v1046
        %v3616 = vunpack.c.l.b16 %v1047
        %v3617 = vunpack.c.h.b16 %v1047
        %v3618 = vunpack.c.l.b16 %v1048
        %v3619 = vunpack.c.h.b16 %v1048
        %v3620 = vunpack.c.l.b16 %v1049
        %v3621 = vunpack.c.h.b16 %v1049
        %v3622 = vunpack.c.l.b16 %v1050
        %v3623 = vunpack.c.h.b16 %v1050
        %v3624 = vunpack.c.l.b16 %v1051
        %v3625 = vunpack.c.h.b16 %v1051
        %v3626 = vunpack.c.l.b16 %v1052
        %v3627 = vunpack.c.h.b16 %v1052
        %v3628 = vunpack.c.l.b16 %v1053
        %v3629 = vunpack.c.h.b16 %v1053
        %v3630 = vunpack.c.l.b16 %v1054
        %v3631 = vunpack.c.h.b16 %v1054
        %v3632 = vunpack.c.l.b16 %v1055
        %v3633 = vunpack.c.h.b16 %v1055
        %v3634 = vunpack.c.l.b16 %v1056
        %v3635 = vunpack.c.h.b16 %v1056
        %v3636 = vunpack.c.l.b16 %v1057
        %v3637 = vunpack.c.h.b16 %v1057
        %v3638 = vunpack.c.l.b16 %v1058
        %v3639 = vunpack.c.h.b16 %v1058
        %v3640 = vunpack.c.l.b16 %v1059
        %v3641 = vunpack.c.h.b16 %v1059
        %v3642 = vunpack.c.l.b16 %v1060
        %v3643 = vunpack.c.h.b16 %v1060
        %v3644 = vunpack.c.l.b16 %v1061
        %v3645 = vunpack.c.h.b16 %v1061
        %v3646 = vunpack.c.l.b16 %v1062
        %v3647 = vunpack.c.h.b16 %v1062
        %v3648 = vunpack.c.l.b16 %v1063
        %v3649 = vunpack.c.h.b16 %v1063
        %v3650 = vunpack.c.l.b16 %v1064
        %v3651 = vunpack.c.h.b16 %v1064
        %v3652 = vunpack.c.l.b16 %v1065
        %v3653 = vunpack.c.h.b16 %v1065
        %v3654 = vunpack.c.l.b16 %v1066
        %v3655 = vunpack.c.h.b16 %v1066
        %v3656 = vunpack.c.l.b16 %v1067
        %v3657 = vunpack.c.h.b16 %v1067
        %v3658 = vunpack.c.l.b16 %v1068
        %v3659 = vunpack.c.h.b16 %v1068
        %v3660 = vunpack.c.l.b16 %v1069
        %v3661 = vunpack.c.h.b16 %v1069
        %v3662 = vunpack.c.l.b16 %v1070
        %v3663 = vunpack.c.h.b16 %v1070
        %v3664 = vunpack.c.l.b16 %v1071
        %v3665 = vunpack.c.h.b16 %v1071
        %v3666 = vunpack.c.l.b16 %v1072
        %v3667 = vunpack.c.h.b16 %v1072
        %v3668 = vunpack.c.l.b16 %v1073
        %v3669 = vunpack.c.h.b16 %v1073
        %v3670 = vunpack.c.l.b16 %v1074
        %v3671 = vunpack.c.h.b16 %v1074
        %v3672 = vunpack.c.l.b16 %v1075
        %v3673 = vunpack.c.h.b16 %v1075
        %v3674 = vunpack.c.l.b16 %v1076
        %v3675 = vunpack.c.h.b16 %v1076
        %v3676 = vunpack.c.l.b16 %v1077
        %v3677 = vunpack.c.h.b16 %v1077
        %v3678 = vunpack.c.l.b16 %v1078
        %v3679 = vunpack.c.h.b16 %v1078
        %v3680 = vunpack.c.l.b16 %v1079
        %v3681 = vunpack.c.h.b16 %v1079
        %v3682 = vunpack.c.l.b16 %v1080
        %v3683 = vunpack.c.h.b16 %v1080
        %v3684 = vunpack.c.l.b16 %v1081
        %v3685 = vunpack.c.h.b16 %v1081
        %v3686 = vunpack.c.l.b16 %v1082
        %v3687 = vunpack.c.h.b16 %v1082
        %v3688 = vunpack.c.l.b16 %v1083
        %v3689 = vunpack.c.h.b16 %v1083
        %v3690 = vunpack.c.l.b16 %v1084
        %v3691 = vunpack.c.h.b16 %v1084
        %v3692 = vunpack.c.l.b16 %v1085
        %v3693 = vunpack.c.h.b16 %v1085
        %v3694 = vunpack.c.l.b16 %v1086
        %v3695 = vunpack.c.h.b16 %v1086
        %v3696 = vunpack.c.l.b16 %v1087
        %v3697 = vunpack.c.h.b16 %v1087
        %v3698 = vunpack.c.l.b16 %v1088
        %v3699 = vunpack.c.h.b16 %v1088
        %v3700 = vunpack.c.l.b16 %v1089
        %v3701 = vunpack.c.h.b16 %v1089
        %v3702 = vunpack.c.l.b16 %v1090
        %v3703 = vunpack.c.h.b16 %v1090
        %v3704 = vunpack.c.l.b16 %v1091
        %v3705 = vunpack.c.h.b16 %v1091
        %v3706 = vunpack.c.l.b16 %v1092
        %v3707 = vunpack.c.h.b16 %v1092
        %v3708 = vunpack.c.l.b16 %v1093
        %v3709 = vunpack.c.h.b16 %v1093
        %v3710 = vunpack.c.l.b16 %v1094
        %v3711 = vunpack.c.h.b16 %v1094
        %v3712 = vunpack.c.l.b16 %v1095
        %v3713 = vunpack.c.h.b16 %v1095
        %v3714 = vunpack.c.l.b16 %v1096
        %v3715 = vunpack.c.h.b16 %v1096
        %v3716 = vunpack.c.l.b16 %v1097
        %v3717 = vunpack.c.h.b16 %v1097
        %v3718 = vunpack.c.l.b16 %v1098
        %v3719 = vunpack.c.h.b16 %v1098
        %v3720 = vunpack.c.l.b16 %v1099
        %v3721 = vunpack.c.h.b16 %v1099
        %v3722 = vunpack.c.l.b16 %v1100
        %v3723 = vunpack.c.h.b16 %v1100
        %v3724 = vunpack.c.l.b16 %v1101
        %v3725 = vunpack.c.h.b16 %v1101
        %v3726 = vunpack.c.l.b16 %v1102
        %v3727 = vunpack.c.h.b16 %v1102
        %v3728 = vunpack.c.l.b16 %v1103
        %v3729 = vunpack.c.h.b16 %v1103
        %v3730 = vunpack.c.l.b16 %v1104
        %v3731 = vunpack.c.h.b16 %v1104
        %v3732 = vunpack.c.l.b16 %v1105
        %v3733 = vunpack.c.h.b16 %v1105
        %v3734 = vunpack.c.l.b16 %v1106
        %v3735 = vunpack.c.h.b16 %v1106
        %v3736 = vunpack.c.l.b16 %v1107
        %v3737 = vunpack.c.h.b16 %v1107
        %v3738 = vunpack.c.l.b16 %v1108
        %v3739 = vunpack.c.h.b16 %v1108
        %v3740 = vunpack.c.l.b16 %v1109
        %v3741 = vunpack.c.h.b16 %v1109
        %v3742 = vunpack.c.l.b16 %v1110
        %v3743 = vunpack.c.h.b16 %v1110
        %v3744 = vunpack.c.l.b16 %v1111
        %v3745 = vunpack.c.h.b16 %v1111
        %v3746 = vunpack.c.l.b16 %v1112
        %v3747 = vunpack.c.h.b16 %v1112
        %v3748 = vunpack.c.l.b16 %v1113
        %v3749 = vunpack.c.h.b16 %v1113
        %v3750 = vunpack.c.l.b16 %v1114
        %v3751 = vunpack.c.h.b16 %v1114
        %v3752 = vunpack.c.l.b16 %v1115
        %v3753 = vunpack.c.h.b16 %v1115
        %v3754 = vunpack.c.l.b16 %v1116
        %v3755 = vunpack.c.h.b16 %v1116
        %v3756 = vunpack.c.l.b16 %v1117
        %v3757 = vunpack.c.h.b16 %v1117
        %v3758 = vunpack.c.l.b16 %v1118
        %v3759 = vunpack.c.h.b16 %v1118
        %v3760 = vunpack.c.l.b16 %v1119
        %v3761 = vunpack.c.h.b16 %v1119
        %v3762 = vunpack.c.l.b16 %v1120
        %v3763 = vunpack.c.h.b16 %v1120
        %v3764 = vunpack.c.l.b16 %v1121
        %v3765 = vunpack.c.h.b16 %v1121
        %v3766 = vunpack.c.l.b16 %v1122
        %v3767 = vunpack.c.h.b16 %v1122
        %v3768 = vunpack.c.l.b16 %v1123
        %v3769 = vunpack.c.h.b16 %v1123
        %v3770 = vunpack.c.l.b16 %v1124
        %v3771 = vunpack.c.h.b16 %v1124
        %v3772 = vunpack.c.l.b16 %v1125
        %v3773 = vunpack.c.h.b16 %v1125
        %v3774 = vunpack.c.l.b16 %v1126
        %v3775 = vunpack.c.h.b16 %v1126
        %v3776 = vunpack.c.l.b16 %v1127
        %v3777 = vunpack.c.h.b16 %v1127
        %v3778 = vunpack.c.l.b16 %v1128
        %v3779 = vunpack.c.h.b16 %v1128
        %v3780 = vunpack.c.l.b16 %v1129
        %v3781 = vunpack.c.h.b16 %v1129
        %v3782 = vunpack.c.l.b16 %v1130
        %v3783 = vunpack.c.h.b16 %v1130
        %v3784 = vunpack.c.l.b16 %v1131
        %v3785 = vunpack.c.h.b16 %v1131
        %v3786 = vunpack.c.l.b16 %v1132
        %v3787 = vunpack.c.h.b16 %v1132
        %v3788 = vunpack.c.l.b16 %v1133
        %v3789 = vunpack.c.h.b16 %v1133
        %v3790 = vunpack.c.l.b16 %v1134
        %v3791 = vunpack.c.h.b16 %v1134
        %v3792 = vunpack.c.l.b16 %v1135
        %v3793 = vunpack.c.h.b16 %v1135
        %v3794 = vunpack.c.l.b16 %v1136
        %v3795 = vunpack.c.h.b16 %v1136
        %v3796 = vunpack.c.l.b16 %v1137
        %v3797 = vunpack.c.h.b16 %v1137
        %v3798 = vunpack.c.l.b16 %v1138
        %v3799 = vunpack.c.h.b16 %v1138
        %v3800 = vunpack.c.l.b16 %v1139
        %v3801 = vunpack.c.h.b16 %v1139
        %v3802 = vunpack.c.l.b16 %v1140
        %v3803 = vunpack.c.h.b16 %v1140
        %v3804 = vunpack.c.l.b16 %v1141
        %v3805 = vunpack.c.h.b16 %v1141
        %v3806 = vunpack.c.l.b16 %v1142
        %v3807 = vunpack.c.h.b16 %v1142
        %v3808 = vunpack.c.l.b16 %v1143
        %v3809 = vunpack.c.h.b16 %v1143
        %v3810 = vunpack.c.l.b16 %v1144
        %v3811 = vunpack.c.h.b16 %v1144
        %v3812 = vunpack.c.l.b16 %v1145
        %v3813 = vunpack.c.h.b16 %v1145
        %v3814 = vunpack.c.l.b16 %v1146
        %v3815 = vunpack.c.h.b16 %v1146
        %v3816 = vunpack.c.l.b16 %v1147
        %v3817 = vunpack.c.h.b16 %v1147
        %v3818 = vunpack.c.l.b16 %v1148
        %v3819 = vunpack.c.h.b16 %v1148
        %v3820 = vunpack.c.l.b16 %v1149
        %v3821 = vunpack.c.h.b16 %v1149
        %v3822 = vunpack.c.l.b16 %v1150
        %v3823 = vunpack.c.h.b16 %v1150
        %v3824 = vunpack.c.l.b16 %v1151
        %v3825 = vunpack.c.h.b16 %v1151
        %v3826 = vunpack.c.l.b16 %v1152
        %v3827 = vunpack.c.h.b16 %v1152
        %v3828 = vunpack.c.l.b16 %v1153
        %v3829 = vunpack.c.h.b16 %v1153
        %v3830 = vunpack.c.l.b16 %v1154
        %v3831 = vunpack.c.h.b16 %v1154
        %v3832 = vunpack.c.l.b16 %v1155
        %v3833 = vunpack.c.h.b16 %v1155
        %v3834 = vunpack.c.l.b16 %v1156
        %v3835 = vunpack.c.h.b16 %v1156
        %v3836 = vunpack.c.l.b16 %v1157
        %v3837 = vunpack.c.h.b16 %v1157
        %v3838 = vunpack.c.l.b16 %v1158
        %v3839 = vunpack.c.h.b16 %v1158
        %v3840 = vunpack.c.l.b16 %v1159
        %v3841 = vunpack.c.h.b16 %v1159
        %v3842 = vunpack.c.l.b16 %v1160
        %v3843 = vunpack.c.h.b16 %v1160
        %v3844 = vunpack.c.l.b16 %v1161
        %v3845 = vunpack.c.h.b16 %v1161
        %v3846 = vunpack.c.l.b16 %v1162
        %v3847 = vunpack.c.h.b16 %v1162
        %v3848 = vunpack.c.l.b16 %v1163
        %v3849 = vunpack.c.h.b16 %v1163
        %v3850 = vunpack.c.l.b16 %v1164
        %v3851 = vunpack.c.h.b16 %v1164
        %v3852 = vunpack.c.l.b16 %v1165
        %v3853 = vunpack.c.h.b16 %v1165
        %v3854 = vunpack.c.l.b16 %v1166
        %v3855 = vunpack.c.h.b16 %v1166
        %v3856 = vunpack.c.l.b16 %v1167
        %v3857 = vunpack.c.h.b16 %v1167
        %v3858 = vunpack.c.l.b16 %v1168
        %v3859 = vunpack.c.h.b16 %v1168
        %v3860 = vunpack.c.l.b16 %v1169
        %v3861 = vunpack.c.h.b16 %v1169
        %v3862 = vunpack.c.l.b16 %v1170
        %v3863 = vunpack.c.h.b16 %v1170
        %v3864 = vunpack.c.l.b16 %v1171
        %v3865 = vunpack.c.h.b16 %v1171
        %v3866 = vunpack.c.l.b16 %v1172
        %v3867 = vunpack.c.h.b16 %v1172
        %v3868 = vunpack.c.l.b16 %v1173
        %v3869 = vunpack.c.h.b16 %v1173
        %v3870 = vunpack.c.l.b16 %v1174
        %v3871 = vunpack.c.h.b16 %v1174
        %v3872 = vunpack.c.l.b16 %v1175
        %v3873 = vunpack.c.h.b16 %v1175
        %v3874 = vunpack.c.l.b16 %v1176
        %v3875 = vunpack.c.h.b16 %v1176
        %v3876 = vunpack.c.l.b16 %v1177
        %v3877 = vunpack.c.h.b16 %v1177
        %v3878 = vunpack.c.l.b16 %v1178
        %v3879 = vunpack.c.h.b16 %v1178
        %v3880 = vunpack.c.l.b16 %v1179
        %v3881 = vunpack.c.h.b16 %v1179
        %v3882 = vunpack.c.l.b16 %v1180
        %v3883 = vunpack.c.h.b16 %v1180
        %v3884 = vunpack.c.l.b16 %v1181
        %v3885 = vunpack.c.h.b16 %v1181
        %v3886 = vunpack.c.l.b16 %v1182
        %v3887 = vunpack.c.h.b16 %v1182
        %v3888 = vunpack.c.l.b16 %v1183
        %v3889 = vunpack.c.h.b16 %v1183
        %v3890 = vunpack.c.l.b16 %v1184
        %v3891 = vunpack.c.h.b16 %v1184
        %v3892 = vunpack.c.l.b16 %v1185
        %v3893 = vunpack.c.h.b16 %v1185
        %v3894 = vunpack.c.l.b16 %v1186
        %v3895 = vunpack.c.h.b16 %v1186
        %v3896 = vunpack.c.l.b16 %v1187
        %v3897 = vunpack.c.h.b16 %v1187
        %v3898 = vunpack.c.l.b16 %v1188
        %v3899 = vunpack.c.h.b16 %v1188
        %v3900 = vunpack.c.l.b16 %v1189
        %v3901 = vunpack.c.h.b16 %v1189
        %v3902 = vunpack.c.l.b16 %v1190
        %v3903 = vunpack.c.h.b16 %v1190
        %v3904 = vunpack.c.l.b16 %v1191
        %v3905 = vunpack.c.h.b16 %v1191
        %v3906 = vunpack.c.l.b16 %v1192
        %v3907 = vunpack.c.h.b16 %v1192
        %v3908 = vunpack.c.l.b16 %v1193
        %v3909 = vunpack.c.h.b16 %v1193
        %v3910 = vunpack.c.l.b16 %v1194
        %v3911 = vunpack.c.h.b16 %v1194
        %v3912 = vunpack.c.l.b16 %v1195
        %v3913 = vunpack.c.h.b16 %v1195
        %v3914 = vunpack.c.l.b16 %v1196
        %v3915 = vunpack.c.h.b16 %v1196
        %v3916 = vunpack.c.l.b16 %v1197
        %v3917 = vunpack.c.h.b16 %v1197
        %v3918 = vunpack.c.l.b16 %v1198
        %v3919 = vunpack.c.h.b16 %v1198
        %v3920 = vunpack.c.l.b16 %v1199
        %v3921 = vunpack.c.h.b16 %v1199
        %v3922 = vunpack.c.l.b16 %v1200
        %v3923 = vunpack.c.h.b16 %v1200
        %v3924 = vunpack.c.l.b16 %v1201
        %v3925 = vunpack.c.h.b16 %v1201
        %v3926 = vunpack.c.l.b16 %v1202
        %v3927 = vunpack.c.h.b16 %v1202
        %v3928 = vunpack.c.l.b16 %v1203
        %v3929 = vunpack.c.h.b16 %v1203
        %v3930 = vunpack.c.l.b16 %v1204
        %v3931 = vunpack.c.h.b16 %v1204
        %v3932 = vunpack.c.l.b16 %v1205
        %v3933 = vunpack.c.h.b16 %v1205
        %v3934 = vunpack.c.l.b16 %v1206
        %v3935 = vunpack.c.h.b16 %v1206
        %v3936 = vunpack.c.l.b16 %v1207
        %v3937 = vunpack.c.h.b16 %v1207
        %v3938 = vunpack.c.l.b16 %v1208
        %v3939 = vunpack.c.h.b16 %v1208
        %v3940 = vunpack.c.l.b16 %v1209
        %v3941 = vunpack.c.h.b16 %v1209
        %v3942 = vunpack.c.l.b16 %v1210
        %v3943 = vunpack.c.h.b16 %v1210
        %v3944 = vunpack.c.l.b16 %v1211
        %v3945 = vunpack.c.h.b16 %v1211
        %v3946 = vunpack.c.l.b16 %v1212
        %v3947 = vunpack.c.h.b16 %v1212
        %v3948 = vunpack.c.l.b16 %v1213
        %v3949 = vunpack.c.h.b16 %v1213
        %v3950 = vunpack.c.l.b16 %v1214
        %v3951 = vunpack.c.h.b16 %v1214
        %v3952 = vunpack.c.l.b16 %v1215
        %v3953 = vunpack.c.h.b16 %v1215
        %v3954 = vunpack.c.l.b16 %v1216
        %v3955 = vunpack.c.h.b16 %v1216
        %v3956 = vunpack.c.l.b16 %v1217
        %v3957 = vunpack.c.h.b16 %v1217
        %v3958 = vunpack.c.l.b16 %v1218
        %v3959 = vunpack.c.h.b16 %v1218
        %v3960 = vunpack.c.l.b16 %v1219
        %v3961 = vunpack.c.h.b16 %v1219
        %v3962 = vunpack.c.l.b16 %v1220
        %v3963 = vunpack.c.h.b16 %v1220
        %v3964 = vunpack.c.l.b16 %v1221
        %v3965 = vunpack.c.h.b16 %v1221
        %v3966 = vunpack.c.l.b16 %v1222
        %v3967 = vunpack.c.h.b16 %v1222
        %v3968 = vunpack.c.l.b16 %v1223
        %v3969 = vunpack.c.h.b16 %v1223
        %v3970 = vunpack.c.l.b16 %v1224
        %v3971 = vunpack.c.h.b16 %v1224
        %v3972 = vunpack.c.l.b16 %v1225
        %v3973 = vunpack.c.h.b16 %v1225
        %v3974 = vunpack.c.l.b16 %v1226
        %v3975 = vunpack.c.h.b16 %v1226
        %v3976 = vunpack.c.l.b16 %v1227
        %v3977 = vunpack.c.h.b16 %v1227
        %v3978 = vunpack.c.l.b16 %v1228
        %v3979 = vunpack.c.h.b16 %v1228
        %v3980 = vunpack.c.l.b16 %v1229
        %v3981 = vunpack.c.h.b16 %v1229
        %v3982 = vunpack.c.l.b16 %v1230
        %v3983 = vunpack.c.h.b16 %v1230
        %v3984 = vunpack.c.l.b16 %v1231
        %v3985 = vunpack.c.h.b16 %v1231
        %v3986 = vunpack.c.l.b16 %v1232
        %v3987 = vunpack.c.h.b16 %v1232
        %v3988 = vunpack.c.l.b16 %v1233
        %v3989 = vunpack.c.h.b16 %v1233
        %v3990 = vunpack.c.l.b16 %v1234
        %v3991 = vunpack.c.h.b16 %v1234
        %v3992 = vunpack.c.l.b16 %v1235
        %v3993 = vunpack.c.h.b16 %v1235
        %v3994 = vunpack.c.l.b16 %v1236
        %v3995 = vunpack.c.h.b16 %v1236
        %v3996 = vunpack.c.l.b16 %v1237
        %v3997 = vunpack.c.h.b16 %v1237
        %v3998 = vunpack.c.l.b16 %v1238
        %v3999 = vunpack.c.h.b16 %v1238
        %v4000 = vunpack.c.l.b16 %v1239
        %v4001 = vunpack.c.h.b16 %v1239
        %v4002 = vunpack.c.l.b16 %v1240
        %v4003 = vunpack.c.h.b16 %v1240
        %v4004 = vunpack.c.l.b16 %v1241
        %v4005 = vunpack.c.h.b16 %v1241
        %v4006 = vunpack.c.l.b16 %v1242
        %v4007 = vunpack.c.h.b16 %v1242
        %v4008 = vunpack.c.l.b16 %v1243
        %v4009 = vunpack.c.h.b16 %v1243
        %v4010 = vunpack.c.l.b16 %v1244
        %v4011 = vunpack.c.h.b16 %v1244
        %v4012 = vunpack.c.l.b16 %v1245
        %v4013 = vunpack.c.h.b16 %v1245
        %v4014 = vunpack.c.l.b16 %v1246
        %v4015 = vunpack.c.h.b16 %v1246
        %v4016 = vunpack.c.l.b16 %v1247
        %v4017 = vunpack.c.h.b16 %v1247
        %v4018 = vunpack.c.l.b16 %v1248
        %v4019 = vunpack.c.h.b16 %v1248
        %v4020 = vunpack.c.l.b16 %v1249
        %v4021 = vunpack.c.h.b16 %v1249
        %v4022 = vunpack.c.l.b16 %v1250
        %v4023 = vunpack.c.h.b16 %v1250
        %v4024 = vunpack.c.l.b16 %v1251
        %v4025 = vunpack.c.h.b16 %v1251
        %v4026 = vunpack.c.l.b16 %v1252
        %v4027 = vunpack.c.h.b16 %v1252
        %v4028 = vunpack.c.l.b16 %v1253
        %v4029 = vunpack.c.h.b16 %v1253
        %v4030 = vunpack.c.l.b16 %v1254
        %v4031 = vunpack.c.h.b16 %v1254
        %v4032 = vunpack.c.l.b16 %v1255
        %v4033 = vunpack.c.h.b16 %v1255
        %v4034 = vunpack.c.l.b16 %v1256
        %v4035 = vunpack.c.h.b16 %v1256
        %v4036 = vunpack.c.l.b16 %v1257
        %v4037 = vunpack.c.h.b16 %v1257
        %v4038 = vunpack.c.l.b16 %v1258
        %v4039 = vunpack.c.h.b16 %v1258
        %v4040 = vunpack.c.l.b16 %v1259
        %v4041 = vunpack.c.h.b16 %v1259
        %v4042 = vunpack.c.l.b16 %v1260
        %v4043 = vunpack.c.h.b16 %v1260
        %v4044 = vunpack.c.l.b16 %v1261
        %v4045 = vunpack.c.h.b16 %v1261
        %v4046 = vunpack.c.l.b16 %v1262
        %v4047 = vunpack.c.h.b16 %v1262
        %v4048 = vunpack.c.l.b16 %v1263
        %v4049 = vunpack.c.h.b16 %v1263
        %v4050 = vunpack.c.l.b16 %v1264
        %v4051 = vunpack.c.h.b16 %v1264
        %v4052 = vunpack.c.l.b16 %v1265
        %v4053 = vunpack.c.h.b16 %v1265
        %v4054 = vunpack.c.l.b16 %v1266
        %v4055 = vunpack.c.h.b16 %v1266
        %v4056 = vunpack.c.l.b16 %v1267
        %v4057 = vunpack.c.h.b16 %v1267
        %v4058 = vunpack.c.l.b16 %v1268
        %v4059 = vunpack.c.h.b16 %v1268
        %v4060 = vunpack.c.l.b16 %v1269
        %v4061 = vunpack.c.h.b16 %v1269
        %v4062 = vunpack.c.l.b16 %v1270
        %v4063 = vunpack.c.h.b16 %v1270
        %v4064 = vunpack.c.l.b16 %v1271
        %v4065 = vunpack.c.h.b16 %v1271
        %v4066 = vunpack.c.l.b16 %v1272
        %v4067 = vunpack.c.h.b16 %v1272
        %v4068 = vunpack.c.l.b16 %v1273
        %v4069 = vunpack.c.h.b16 %v1273
        %v4070 = vunpack.c.l.b16 %v1274
        %v4071 = vunpack.c.h.b16 %v1274
        %v4072 = vunpack.c.l.b16 %v1275
        %v4073 = vunpack.c.h.b16 %v1275
        %v4074 = vunpack.c.l.b16 %v1276
        %v4075 = vunpack.c.h.b16 %v1276
        %v4076 = vunpack.c.l.b16 %v1277
        %v4077 = vunpack.c.h.b16 %v1277
        %v4078 = vunpack.c.l.b16 %v1278
        %v4079 = vunpack.c.h.b16 %v1278
        %v4080 = vunpack.c.l.b16 %v1279
        %v4081 = vunpack.c.h.b16 %v1279
        %v4082 = vunpack.c.l.b16 %v1280
        %v4083 = vunpack.c.h.b16 %v1280
        %v4084 = vunpack.c.l.b16 %v1281
        %v4085 = vunpack.c.h.b16 %v1281
        %v4086 = vunpack.c.l.b16 %v1282
        %v4087 = vunpack.c.h.b16 %v1282
        %v4088 = vunpack.c.l.b16 %v1283
        %v4089 = vunpack.c.h.b16 %v1283
        %v4090 = vunpack.c.l.b16 %v1284
        %v4091 = vunpack.c.h.b16 %v1284
        %v4092 = vunpack.c.l.b16 %v1285
        %v4093 = vunpack.c.h.b16 %v1285
        %v4094 = vunpack.c.l.b16 %v1286
        %v4095 = vunpack.c.h.b16 %v1286
        %v4096 = vunpack.c.l.b16 %v1287
        %v4097 = vunpack.c.h.b16 %v1287
        %v4098 = vunpack.c.l.b16 %v1288
        %v4099 = vunpack.c.h.b16 %v1288
        %v4100 = vunpack.c.l.b16 %v1289
        %v4101 = vunpack.c.h.b16 %v1289
        %v4102 = vunpack.c.l.b16 %v1290
        %v4103 = vunpack.c.h.b16 %v1290
        %v4104 = vunpack.c.l.b16 %v1291
        %v4105 = vunpack.c.h.b16 %v1291
        %v4106 = vunpack.c.l.b16 %v1292
        %v4107 = vunpack.c.h.b16 %v1292
        %v4108 = vunpack.c.l.b16 %v1293
        %v4109 = vunpack.c.h.b16 %v1293
        %v4110 = vunpack.c.l.b16 %v1294
        %v4111 = vunpack.c.h.b16 %v1294
        %v4112 = vunpack.c.l.b16 %v1295
        %v4113 = vunpack.c.h.b16 %v1295
        %v4114 = vunpack.c.l.b16 %v1296
        %v4115 = vunpack.c.h.b16 %v1296
        %v4116 = vunpack.c.l.b16 %v1297
        %v4117 = vunpack.c.h.b16 %v1297
        %v4118 = vunpack.c.l.b16 %v1298
        %v4119 = vunpack.c.h.b16 %v1298
        %v4120 = vunpack.c.l.b16 %v1299
        %v4121 = vunpack.c.h.b16 %v1299
        %v4122 = vunpack.c.l.b16 %v1300
        %v4123 = vunpack.c.h.b16 %v1300
        %v4124 = vunpack.c.l.b16 %v1301
        %v4125 = vunpack.c.h.b16 %v1301
        %v4126 = vunpack.c.l.b16 %v1302
        %v4127 = vunpack.c.h.b16 %v1302
        %v4128 = vunpack.c.l.b16 %v1303
        %v4129 = vunpack.c.h.b16 %v1303
        %v4130 = vunpack.c.l.b16 %v1304
        %v4131 = vunpack.c.h.b16 %v1304
        %v4132 = vunpack.c.l.b16 %v1305
        %v4133 = vunpack.c.h.b16 %v1305
        %v4134 = vunpack.c.l.b16 %v1306
        %v4135 = vunpack.c.h.b16 %v1306
        %v4136 = vunpack.c.l.b16 %v1307
        %v4137 = vunpack.c.h.b16 %v1307
        %v4138 = vunpack.c.l.b16 %v1308
        %v4139 = vunpack.c.h.b16 %v1308
        %v4140 = vunpack.c.l.b16 %v1309
        %v4141 = vunpack.c.h.b16 %v1309
        %v4142 = vunpack.c.l.b16 %v1310
        %v4143 = vunpack.c.h.b16 %v1310
        %v4144 = vunpack.c.l.b16 %v1311
        %v4145 = vunpack.c.h.b16 %v1311
        %v4146 = vunpack.c.l.b16 %v1312
        %v4147 = vunpack.c.h.b16 %v1312
        %v4148 = vunpack.c.l.b16 %v1313
        %v4149 = vunpack.c.h.b16 %v1313
        %v4150 = vunpack.c.l.b16 %v1314
        %v4151 = vunpack.c.h.b16 %v1314
        %v4152 = vunpack.c.l.b16 %v1315
        %v4153 = vunpack.c.h.b16 %v1315
        %v4154 = vunpack.c.l.b16 %v1316
        %v4155 = vunpack.c.h.b16 %v1316
        %v4156 = vunpack.c.l.b16 %v1317
        %v4157 = vunpack.c.h.b16 %v1317
        %v4158 = vunpack.c.l.b16 %v1318
        %v4159 = vunpack.c.h.b16 %v1318
        %v4160 = vunpack.c.l.b16 %v1319
        %v4161 = vunpack.c.h.b16 %v1319
        %v4162 = vunpack.c.l.b16 %v1320
        %v4163 = vunpack.c.h.b16 %v1320
        %v4164 = vunpack.c.l.b16 %v1321
        %v4165 = vunpack.c.h.b16 %v1321
        %v4166 = vunpack.c.l.b16 %v1322
        %v4167 = vunpack.c.h.b16 %v1322
        %v4168 = vunpack.c.l.b16 %v1323
        %v4169 = vunpack.c.h.b16 %v1323
        %v4170 = vunpack.c.l.b16 %v1324
        %v4171 = vunpack.c.h.b16 %v1324
        %v4172 = vunpack.c.l.b16 %v1325
        %v4173 = vunpack.c.h.b16 %v1325
        %v4174 = vunpack.c.l.b16 %v1326
        %v4175 = vunpack.c.h.b16 %v1326
        %v4176 = vunpack.c.l.b16 %v1327
        %v4177 = vunpack.c.h.b16 %v1327
        %v4178 = vunpack.c.l.b16 %v1328
        %v4179 = vunpack.c.h.b16 %v1328
        %v4180 = vunpack.c.l.b16 %v1329
        %v4181 = vunpack.c.h.b16 %v1329
        %v4182 = vunpack.c.l.b16 %v1330
        %v4183 = vunpack.c.h.b16 %v1330
        %v4184 = vunpack.c.l.b16 %v1331
        %v4185 = vunpack.c.h.b16 %v1331
        %v4186 = vunpack.c.l.b16 %v1332
        %v4187 = vunpack.c.h.b16 %v1332
        %v4188 = vunpack.c.l.b16 %v1333
        %v4189 = vunpack.c.h.b16 %v1333
        %v4190 = vunpack.c.l.b16 %v1334
        %v4191 = vunpack.c.h.b16 %v1334
        %v4192 = vunpack.c.l.b16 %v1335
        %v4193 = vunpack.c.h.b16 %v1335
        %v4194 = vunpack.c.l.b16 %v1336
        %v4195 = vunpack.c.h.b16 %v1336
        %v4196 = vunpack.c.l.b16 %v1337
        %v4197 = vunpack.c.h.b16 %v1337
        %v4198 = vunpack.c.l.b16 %v1338
        %v4199 = vunpack.c.h.b16 %v1338
        %v4200 = vunpack.c.l.b16 %v1339
        %v4201 = vunpack.c.h.b16 %v1339
        %v4202 = vunpack.c.l.b16 %v1340
        %v4203 = vunpack.c.h.b16 %v1340
        %v4204 = vunpack.c.l.b16 %v1341
        %v4205 = vunpack.c.h.b16 %v1341
        %v4206 = vunpack.c.l.b16 %v1342
        %v4207 = vunpack.c.h.b16 %v1342
        %v4208 = vunpack.c.l.b16 %v1343
        %v4209 = vunpack.c.h.b16 %v1343
        %v4210 = vunpack.c.l.b16 %v1344
        %v4211 = vunpack.c.h.b16 %v1344
        %v4212 = vunpack.c.l.b16 %v1345
        %v4213 = vunpack.c.h.b16 %v1345
        %v4214 = vunpack.c.l.b16 %v1346
        %v4215 = vunpack.c.h.b16 %v1346
        %v4216 = vunpack.c.l.b16 %v1347
        %v4217 = vunpack.c.h.b16 %v1347
        %v4218 = vunpack.c.l.b16 %v1348
        %v4219 = vunpack.c.h.b16 %v1348
        %v4220 = vunpack.c.l.b16 %v1349
        %v4221 = vunpack.c.h.b16 %v1349
        %v4222 = vunpack.c.l.b16 %v1350
        %v4223 = vunpack.c.h.b16 %v1350
        %v4224 = vunpack.c.l.b16 %v1351
        %v4225 = vunpack.c.h.b16 %v1351
        %v4226 = vunpack.c.l.b16 %v1352
        %v4227 = vunpack.c.h.b16 %v1352
        %v4228 = vunpack.c.l.b16 %v1353
        %v4229 = vunpack.c.h.b16 %v1353
        %v4230 = vunpack.c.l.b16 %v1354
        %v4231 = vunpack.c.h.b16 %v1354
        %v4232 = vunpack.c.l.b16 %v1355
        %v4233 = vunpack.c.h.b16 %v1355
        %v4234 = vunpack.c.l.b16 %v1356
        %v4235 = vunpack.c.h.b16 %v1356
        %v4236 = vunpack.c.l.b16 %v1357
        %v4237 = vunpack.c.h.b16 %v1357
        %v4238 = vunpack.c.l.b16 %v1358
        %v4239 = vunpack.c.h.b16 %v1358
        %v4240 = vunpack.c.l.b16 %v1359
        %v4241 = vunpack.c.h.b16 %v1359
        %v4242 = vunpack.c.l.b16 %v1360
        %v4243 = vunpack.c.h.b16 %v1360
        %v4244 = vunpack.c.l.b16 %v1361
        %v4245 = vunpack.c.h.b16 %v1361
        %v4246 = vunpack.c.l.b16 %v1362
        %v4247 = vunpack.c.h.b16 %v1362
        %v4248 = vunpack.c.l.b16 %v1363
        %v4249 = vunpack.c.h.b16 %v1363
        %v4250 = vunpack.c.l.b16 %v1364
        %v4251 = vunpack.c.h.b16 %v1364
        %v4252 = vunpack.c.l.b16 %v1365
        %v4253 = vunpack.c.h.b16 %v1365
        %v4254 = vunpack.c.l.b16 %v1366
        %v4255 = vunpack.c.h.b16 %v1366
        %v4256 = vunpack.c.l.b16 %v1367
        %v4257 = vunpack.c.h.b16 %v1367
        %v4258 = vunpack.c.l.b16 %v1368
        %v4259 = vunpack.c.h.b16 %v1368
        %v4260 = vunpack.c.l.b16 %v1369
        %v4261 = vunpack.c.h.b16 %v1369
        %v4262 = vunpack.c.l.b16 %v1370
        %v4263 = vunpack.c.h.b16 %v1370
        %v4264 = vunpack.c.l.b16 %v1371
        %v4265 = vunpack.c.h.b16 %v1371
        %v4266 = vunpack.c.l.b16 %v1372
        %v4267 = vunpack.c.h.b16 %v1372
        %v4268 = vunpack.c.l.b16 %v1373
        %v4269 = vunpack.c.h.b16 %v1373
        %v4270 = vunpack.c.l.b16 %v1374
        %v4271 = vunpack.c.h.b16 %v1374
        %v4272 = vunpack.c.l.b16 %v1375
        %v4273 = vunpack.c.h.b16 %v1375
        %v4274 = vunpack.c.l.b16 %v1376
        %v4275 = vunpack.c.h.b16 %v1376
        %v4276 = vunpack.c.l.b16 %v1377
        %v4277 = vunpack.c.h.b16 %v1377
        %v4278 = vunpack.c.l.b16 %v1378
        %v4279 = vunpack.c.h.b16 %v1378
        %v4280 = vunpack.c.l.b16 %v1379
        %v4281 = vunpack.c.h.b16 %v1379
        %v4282 = vunpack.c.l.b16 %v1380
        %v4283 = vunpack.c.h.b16 %v1380
        %v4284 = vunpack.c.l.b16 %v1381
        %v4285 = vunpack.c.h.b16 %v1381
        %v4286 = vunpack.c.l.b16 %v1382
        %v4287 = vunpack.c.h.b16 %v1382
        %v4288 = vunpack.c.l.b16 %v1383
        %v4289 = vunpack.c.h.b16 %v1383
        %v4290 = vunpack.c.l.b16 %v1384
        %v4291 = vunpack.c.h.b16 %v1384
        %v4292 = vunpack.c.l.b16 %v1385
        %v4293 = vunpack.c.h.b16 %v1385
        %v4294 = vunpack.c.l.b16 %v1386
        %v4295 = vunpack.c.h.b16 %v1386
        %v4296 = vunpack.c.l.b16 %v1387
        %v4297 = vunpack.c.h.b16 %v1387
        %v4298 = vunpack.c.l.b16 %v1388
        %v4299 = vunpack.c.h.b16 %v1388
        %v4300 = vunpack.c.l.b16 %v1389
        %v4301 = vunpack.c.h.b16 %v1389
        %v4302 = vunpack.c.l.b16 %v1390
        %v4303 = vunpack.c.h.b16 %v1390
        %v4304 = vunpack.c.l.b16 %v1391
        %v4305 = vunpack.c.h.b16 %v1391
        %v4306 = vunpack.c.l.b16 %v1392
        %v4307 = vunpack.c.h.b16 %v1392
        %v4308 = vunpack.c.l.b16 %v1393
        %v4309 = vunpack.c.h.b16 %v1393
        %v4310 = vunpack.c.l.b16 %v1394
        %v4311 = vunpack.c.h.b16 %v1394
        %v4312 = vunpack.c.l.b16 %v1395
        %v4313 = vunpack.c.h.b16 %v1395
        %v4314 = vunpack.c.l.b16 %v1396
        %v4315 = vunpack.c.h.b16 %v1396
        %v4316 = vunpack.c.l.b16 %v1397
        %v4317 = vunpack.c.h.b16 %v1397
        %v4318 = vunpack.c.l.b16 %v1398
        %v4319 = vunpack.c.h.b16 %v1398
        %v4320 = vunpack.c.l.b16 %v1399
        %v4321 = vunpack.c.h.b16 %v1399
        %v4322 = vunpack.c.l.b16 %v1400
        %v4323 = vunpack.c.h.b16 %v1400
        %v4324 = vunpack.c.l.b16 %v1401
        %v4325 = vunpack.c.h.b16 %v1401
        %v4326 = vunpack.c.l.b16 %v1402
        %v4327 = vunpack.c.h.b16 %v1402
        %v4328 = vunpack.c.l.b16 %v1403
        %v4329 = vunpack.c.h.b16 %v1403
        %v4330 = vunpack.c.l.b16 %v1404
        %v4331 = vunpack.c.h.b16 %v1404
        %v4332 = vunpack.c.l.b16 %v1405
        %v4333 = vunpack.c.h.b16 %v1405
        %v4334 = vunpack.c.l.b16 %v1406
        %v4335 = vunpack.c.h.b16 %v1406
        %v4336 = vunpack.c.l.b16 %v1407
        %v4337 = vunpack.c.h.b16 %v1407
        %v4338 = vunpack.c.l.b16 %v1408
        %v4339 = vunpack.c.h.b16 %v1408
        %v4340 = vunpack.c.l.b16 %v1409
        %v4341 = vunpack.c.h.b16 %v1409
        %v4342 = vunpack.c.l.b16 %v1410
        %v4343 = vunpack.c.h.b16 %v1410
        %v4344 = vunpack.c.l.b16 %v1411
        %v4345 = vunpack.c.h.b16 %v1411
        %v4346 = vunpack.c.l.b16 %v1412
        %v4347 = vunpack.c.h.b16 %v1412
        %v4348 = vunpack.c.l.b16 %v1413
        %v4349 = vunpack.c.h.b16 %v1413
        %v4350 = vunpack.c.l.b16 %v1414
        %v4351 = vunpack.c.h.b16 %v1414
        %v4352 = vunpack.c.l.b16 %v1415
        %v4353 = vunpack.c.h.b16 %v1415
        %v4354 = vunpack.c.l.b16 %v1416
        %v4355 = vunpack.c.h.b16 %v1416
        %v4356 = vunpack.c.l.b16 %v1417
        %v4357 = vunpack.c.h.b16 %v1417
        %v4358 = vunpack.c.l.b16 %v1418
        %v4359 = vunpack.c.h.b16 %v1418
        %v4360 = vunpack.c.l.b16 %v1419
        %v4361 = vunpack.c.h.b16 %v1419
        %v4362 = vunpack.c.l.b16 %v1420
        %v4363 = vunpack.c.h.b16 %v1420
        %v4364 = vunpack.c.l.b16 %v1421
        %v4365 = vunpack.c.h.b16 %v1421
        %v4366 = vunpack.c.l.b16 %v1422
        %v4367 = vunpack.c.h.b16 %v1422
        %v4368 = vunpack.c.l.b16 %v1423
        %v4369 = vunpack.c.h.b16 %v1423
        %v4370 = vunpack.c.l.b16 %v1424
        %v4371 = vunpack.c.h.b16 %v1424
        %v4372 = vunpack.c.l.b16 %v1425
        %v4373 = vunpack.c.h.b16 %v1425
        %v4374 = vunpack.c.l.b16 %v1426
        %v4375 = vunpack.c.h.b16 %v1426
        %v4376 = vunpack.c.l.b16 %v1427
        %v4377 = vunpack.c.h.b16 %v1427
        %v4378 = vunpack.c.l.b16 %v1428
        %v4379 = vunpack.c.h.b16 %v1428
        %v4380 = vunpack.c.l.b16 %v1429
        %v4381 = vunpack.c.h.b16 %v1429
        %v4382 = vunpack.c.l.b16 %v1430
        %v4383 = vunpack.c.h.b16 %v1430
        %v4384 = vunpack.c.l.b16 %v1431
        %v4385 = vunpack.c.h.b16 %v1431
        %v4386 = vunpack.c.l.b16 %v1432
        %v4387 = vunpack.c.h.b16 %v1432
        %v4388 = vunpack.c.l.b16 %v1433
        %v4389 = vunpack.c.h.b16 %v1433
        %v4390 = vunpack.c.l.b16 %v1434
        %v4391 = vunpack.c.h.b16 %v1434
        %v4392 = vunpack.c.l.b16 %v1435
        %v4393 = vunpack.c.h.b16 %v1435
        %v4394 = vunpack.c.l.b16 %v1436
        %v4395 = vunpack.c.h.b16 %v1436
        %v4396 = vunpack.c.l.b16 %v1437
        %v4397 = vunpack.c.h.b16 %v1437
        %v4398 = vunpack.c.l.b16 %v1438
        %v4399 = vunpack.c.h.b16 %v1438
        %v4400 = vunpack.c.l.b16 %v1439
        %v4401 = vunpack.c.h.b16 %v1439
        %v4402 = vunpack.c.l.b16 %v1440
        %v4403 = vunpack.c.h.b16 %v1440
        %v4404 = vunpack.c.l.b16 %v1441
        %v4405 = vunpack.c.h.b16 %v1441
        %v4406 = vunpack.c.l.b16 %v1442
        %v4407 = vunpack.c.h.b16 %v1442
        %v4408 = vunpack.c.l.b16 %v1443
        %v4409 = vunpack.c.h.b16 %v1443
        %v4410 = vunpack.c.l.b16 %v1444
        %v4411 = vunpack.c.h.b16 %v1444
        %v4412 = vunpack.c.l.b16 %v1445
        %v4413 = vunpack.c.h.b16 %v1445
        %v4414 = vunpack.c.l.b16 %v1446
        %v4415 = vunpack.c.h.b16 %v1446
        %v4416 = vunpack.c.l.b16 %v1447
        %v4417 = vunpack.c.h.b16 %v1447
        %v4418 = vunpack.c.l.b16 %v1448
        %v4419 = vunpack.c.h.b16 %v1448
        %v4420 = vunpack.c.l.b16 %v1449
        %v4421 = vunpack.c.h.b16 %v1449
        %v4422 = vunpack.c.l.b16 %v1450
        %v4423 = vunpack.c.h.b16 %v1450
        %v4424 = vunpack.c.l.b16 %v1451
        %v4425 = vunpack.c.h.b16 %v1451
        %v4426 = vunpack.c.l.b16 %v1452
        %v4427 = vunpack.c.h.b16 %v1452
        %v4428 = vunpack.c.l.b16 %v1453
        %v4429 = vunpack.c.h.b16 %v1453
        %v4430 = vunpack.c.l.b16 %v1454
        %v4431 = vunpack.c.h.b16 %v1454
        %v4432 = vunpack.c.l.b16 %v1455
        %v4433 = vunpack.c.h.b16 %v1455
        %v4434 = vunpack.c.l.b16 %v1456
        %v4435 = vunpack.c.h.b16 %v1456
        %v4436 = vunpack.c.l.b16 %v1457
        %v4437 = vunpack.c.h.b16 %v1457
        %v4438 = vunpack.c.l.b16 %v1458
        %v4439 = vunpack.c.h.b16 %v1458
        %v4440 = vunpack.c.l.b16 %v1459
        %v4441 = vunpack.c.h.b16 %v1459
        %v4442 = vunpack.c.l.b16 %v1460
        %v4443 = vunpack.c.h.b16 %v1460
        %v4444 = vunpack.c.l.b16 %v1461
        %v4445 = vunpack.c.h.b16 %v1461
        %v4446 = vunpack.c.l.b16 %v1462
        %v4447 = vunpack.c.h.b16 %v1462
        %v4448 = vunpack.c.l.b16 %v1463
        %v4449 = vunpack.c.h.b16 %v1463
        %v4450 = vunpack.c.l.b16 %v1464
        %v4451 = vunpack.c.h.b16 %v1464
        %v4452 = vunpack.c.l.b16 %v1465
        %v4453 = vunpack.c.h.b16 %v1465
        %v4454 = vunpack.c.l.b16 %v1466
        %v4455 = vunpack.c.h.b16 %v1466
        %v4456 = vunpack.c.l.b16 %v1467
        %v4457 = vunpack.c.h.b16 %v1467
        %v4458 = vunpack.c.l.b16 %v1468
        %v4459 = vunpack.c.h.b16 %v1468
        %v4460 = vunpack.c.l.b16 %v1469
        %v4461 = vunpack.c.h.b16 %v1469
        %v4462 = vunpack.c.l.b16 %v1470
        %v4463 = vunpack.c.h.b16 %v1470
        %v4464 = vunpack.c.l.b16 %v1471
        %v4465 = vunpack.c.h.b16 %v1471
        %v4466 = vunpack.c.l.b16 %v1472
        %v4467 = vunpack.c.h.b16 %v1472
        %v4468 = vunpack.c.l.b16 %v1473
        %v4469 = vunpack.c.h.b16 %v1473
        %v4470 = vunpack.c.l.b16 %v1474
        %v4471 = vunpack.c.h.b16 %v1474
        %v4472 = vunpack.c.l.b16 %v1475
        %v4473 = vunpack.c.h.b16 %v1475
        %v4474 = vunpack.c.l.b16 %v1476
        %v4475 = vunpack.c.h.b16 %v1476
        %v4476 = vunpack.c.l.b16 %v1477
        %v4477 = vunpack.c.h.b16 %v1477
        %v4478 = vunpack.c.l.b16 %v1478
        %v4479 = vunpack.c.h.b16 %v1478
        %v4480 = vunpack.c.l.b16 %v1479
        %v4481 = vunpack.c.h.b16 %v1479
        %v4482 = vunpack.c.l.b16 %v1480
        %v4483 = vunpack.c.h.b16 %v1480
        %v4484 = vunpack.c.l.b16 %v1481
        %v4485 = vunpack.c.h.b16 %v1481
        %v4486 = vunpack.c.l.b16 %v1482
        %v4487 = vunpack.c.h.b16 %v1482
        %v4488 = vunpack.c.l.b16 %v1483
        %v4489 = vunpack.c.h.b16 %v1483
        %v4490 = vunpack.c.l.b16 %v1484
        %v4491 = vunpack.c.h.b16 %v1484
        %v4492 = vunpack.c.l.b16 %v1485
        %v4493 = vunpack.c.h.b16 %v1485
        %v4494 = vunpack.c.l.b16 %v1486
        %v4495 = vunpack.c.h.b16 %v1486
        %v4496 = vunpack.c.l.b16 %v1487
        %v4497 = vunpack.c.h.b16 %v1487
        %v4498 = vunpack.c.l.b16 %v1488
        %v4499 = vunpack.c.h.b16 %v1488
        %v4500 = vunpack.c.l.b16 %v1489
        %v4501 = vunpack.c.h.b16 %v1489
        %v4502 = vunpack.c.l.b16 %v1490
        %v4503 = vunpack.c.h.b16 %v1490
        %v4504 = vunpack.c.l.b16 %v1491
        %v4505 = vunpack.c.h.b16 %v1491
        %v4506 = vunpack.c.l.b16 %v1492
        %v4507 = vunpack.c.h.b16 %v1492
        %v4508 = vunpack.c.l.b16 %v1493
        %v4509 = vunpack.c.h.b16 %v1493
        %v4510 = vunpack.c.l.b16 %v1494
        %v4511 = vunpack.c.h.b16 %v1494
        %v4512 = vunpack.c.l.b16 %v1495
        %v4513 = vunpack.c.h.b16 %v1495
        %v4514 = vunpack.c.l.b16 %v1496
        %v4515 = vunpack.c.h.b16 %v1496
        %v4516 = vunpack.c.l.b16 %v1497
        %v4517 = vunpack.c.h.b16 %v1497
        %v4518 = vunpack.c.l.b16 %v1498
        %v4519 = vunpack.c.h.b16 %v1498
        %v4520 = vunpack.c.l.b16 %v1499
        %v4521 = vunpack.c.h.b16 %v1499
        %v4522 = vunpack.c.l.b16 %v1500
        %v4523 = vunpack.c.h.b16 %v1500
        %v4524 = vunpack.c.l.b16 %v1501
        %v4525 = vunpack.c.h.b16 %v1501
        %v4526 = vunpack.c.l.b16 %v1502
        %v4527 = vunpack.c.h.b16 %v1502
        %v4528 = vunpack.c.l.b16 %v1503
        %v4529 = vunpack.c.h.b16 %v1503
        %v4530 = vunpack.c.l.b16 %v1504
        %v4531 = vunpack.c.h.b16 %v1504
        %v4532 = vunpack.c.l.b16 %v1505
        %v4533 = vunpack.c.h.b16 %v1505
        %v4534 = vunpack.c.l.b16 %v1506
        %v4535 = vunpack.c.h.b16 %v1506
        %v4536 = vunpack.c.l.b16 %v1507
        %v4537 = vunpack.c.h.b16 %v1507
        %v4538 = vunpack.c.l.b16 %v1508
        %v4539 = vunpack.c.h.b16 %v1508
        %v4540 = vunpack.c.l.b16 %v1509
        %v4541 = vunpack.c.h.b16 %v1509
        %v4542 = vunpack.c.l.b16 %v1510
        %v4543 = vunpack.c.h.b16 %v1510
        %v4544 = vunpack.c.l.b16 %v1511
        %v4545 = vunpack.c.h.b16 %v1511
        %v4546 = vunpack.c.l.b16 %v1512
        %v4547 = vunpack.c.h.b16 %v1512
        %v4548 = vunpack.c.l.b16 %v1513
        %v4549 = vunpack.c.h.b16 %v1513
        %v4550 = vunpack.c.l.b16 %v1514
        %v4551 = vunpack.c.h.b16 %v1514
        %v4552 = vunpack.c.l.b16 %v1515
        %v4553 = vunpack.c.h.b16 %v1515
        %v4554 = vunpack.c.l.b16 %v1516
        %v4555 = vunpack.c.h.b16 %v1516
        %v4556 = vunpack.c.l.b16 %v1517
        %v4557 = vunpack.c.h.b16 %v1517
        %v4558 = vunpack.c.l.b16 %v1518
        %v4559 = vunpack.c.h.b16 %v1518
        %v4560 = vunpack.c.l.b16 %v1519
        %v4561 = vunpack.c.h.b16 %v1519
        %v4562 = vunpack.c.l.b16 %v1520
        %v4563 = vunpack.c.h.b16 %v1520
        %v4564 = vunpack.c.l.b16 %v1521
        %v4565 = vunpack.c.h.b16 %v1521
        %v4566 = vunpack.c.l.b16 %v1522
        %v4567 = vunpack.c.h.b16 %v1522
        %v4568 = vunpack.c.l.b16 %v1523
        %v4569 = vunpack.c.h.b16 %v1523
        %v4570 = vunpack.c.l.b16 %v1524
        %v4571 = vunpack.c.h.b16 %v1524
        %v4572 = vunpack.c.l.b16 %v1525
        %v4573 = vunpack.c.h.b16 %v1525
        %v4574 = vunpack.c.l.b16 %v1526
        %v4575 = vunpack.c.h.b16 %v1526
        %v4576 = vunpack.c.l.b16 %v1527
        %v4577 = vunpack.c.h.b16 %v1527
        %v4578 = vunpack.c.l.b16 %v1528
        %v4579 = vunpack.c.h.b16 %v1528
        %v4580 = vunpack.c.l.b16 %v1529
        %v4581 = vunpack.c.h.b16 %v1529
        %v4582 = vunpack.c.l.b16 %v1530
        %v4583 = vunpack.c.h.b16 %v1530
        %v4584 = vunpack.c.l.b16 %v1531
        %v4585 = vunpack.c.h.b16 %v1531
        %v4586 = vunpack.c.l.b16 %v1532
        %v4587 = vunpack.c.h.b16 %v1532
        %v4588 = vunpack.c.l.b16 %v1533
        %v4589 = vunpack.c.h.b16 %v1533
        %v4590 = vunpack.c.l.b16 %v1534
        %v4591 = vunpack.c.h.b16 %v1534
        %v4592 = vunpack.c.l.b16 %v1535
        %v4593 = vunpack.c.h.b16 %v1535
        %v4594 = vunpack.c.l.b16 %v1536
        %v4595 = vunpack.c.h.b16 %v1536
        %v4596 = vunpack.c.l.b16 %v1537
        %v4597 = vunpack.c.h.b16 %v1537
        %v4598 = vunpack.c.l.b16 %v1538
        %v4599 = vunpack.c.h.b16 %v1538
        %v4600 = vunpack.c.l.b16 %v1539
        %v4601 = vunpack.c.h.b16 %v1539
        %v4602 = vunpack.c.l.b16 %v1540
        %v4603 = vunpack.c.h.b16 %v1540
        %v4604 = vunpack.c.l.b16 %v1541
        %v4605 = vunpack.c.h.b16 %v1541
        %v4606 = vunpack.c.l.b16 %v1542
        %v4607 = vunpack.c.h.b16 %v1542
        %v4608 = vunpack.c.l.b16 %v1543
        %v4609 = vunpack.c.h.b16 %v1543
        %v4610 = vunpack.c.l.b16 %v1544
        %v4611 = vunpack.c.h.b16 %v1544
        %v4612 = vunpack.c.l.b16 %v1545
        %v4613 = vunpack.c.h.b16 %v1545
        %v4614 = vunpack.c.l.b16 %v1546
        %v4615 = vunpack.c.h.b16 %v1546
        %v4616 = vunpack.c.l.b16 %v1547
        %v4617 = vunpack.c.h.b16 %v1547
        %v4618 = vunpack.c.l.b16 %v1548
        %v4619 = vunpack.c.h.b16 %v1548
        %v4620 = vunpack.c.l.b16 %v1549
        %v4621 = vunpack.c.h.b16 %v1549
        %v4622 = vpack.c.b16 %v2582, %v2574
        %v4623 = vpack.c.b16 %v2583, %v2575
        %v4624 = vpack.c.b16 %v2584, %v2576
        %v4625 = vpack.c.b16 %v2585, %v2577
        %v4626 = vpack.c.b16 %v2586, %v2578
        %v4627 = vpack.c.b16 %v2587, %v2579
        %v4628 = vpack.c.b16 %v2588, %v2580
        %v4629 = vpack.c.b16 %v2589, %v2581
        %v4630 = vpack.c.b16 %v2598, %v2590
        %v4631 = vpack.c.b16 %v2599, %v2591
        %v4632 = vpack.c.b16 %v2600, %v2592
        %v4633 = vpack.c.b16 %v2601, %v2593
        %v4634 = vpack.c.b16 %v2602, %v2594
        %v4635 = vpack.c.b16 %v2603, %v2595
        %v4636 = vpack.c.b16 %v2604, %v2596
        %v4637 = vpack.c.b16 %v2605, %v2597
        %v4638 = vpack.c.b16 %v2614, %v2606
        %v4639 = vpack.c.b16 %v2615, %v2607
        %v4640 = vpack.c.b16 %v2616, %v2608
        %v4641 = vpack.c.b16 %v2617, %v2609
        %v4642 = vpack.c.b16 %v2618, %v2610
        %v4643 = vpack.c.b16 %v2619, %v2611
        %v4644 = vpack.c.b16 %v2620, %v2612
        %v4645 = vpack.c.b16 %v2621, %v2613
        %v4646 = vpack.c.b16 %v2630, %v2622
        %v4647 = vpack.c.b16 %v2631, %v2623
        %v4648 = vpack.c.b16 %v2632, %v2624
        %v4649 = vpack.c.b16 %v2633, %v2625
        %v4650 = vpack.c.b16 %v2634, %v2626
        %v4651 = vpack.c.b16 %v2635, %v2627
        %v4652 = vpack.c.b16 %v2636, %v2628
        %v4653 = vpack.c.b16 %v2637, %v2629
        %v4654 = vpack.c.b16 %v2646, %v2638
        %v4655 = vpack.c.b16 %v2647, %v2639
        %v4656 = vpack.c.b16 %v2648, %v2640
        %v4657 = vpack.c.b16 %v2649, %v2641
        %v4658 = vpack.c.b16 %v2650, %v2642
        %v4659 = vpack.c.b16 %v2651, %v2643
        %v4660 = vpack.c.b16 %v2652, %v2644
        %v4661 = vpack.c.b16 %v2653, %v2645
        %v4662 = vpack.c.b16 %v2662, %v2654
        %v4663 = vpack.c.b16 %v2663, %v2655
        %v4664 = vpack.c.b16 %v2664, %v2656
        %v4665 = vpack.c.b16 %v2665, %v2657
        %v4666 = vpack.c.b16 %v2666, %v2658
        %v4667 = vpack.c.b16 %v2667, %v2659
        %v4668 = vpack.c.b16 %v2668, %v2660
        %v4669 = vpack.c.b16 %v2669, %v2661
        %v4670 = vpack.c.b16 %v2678, %v2670
        %v4671 = vpack.c.b16 %v2679, %v2671
        %v4672 = vpack.c.b16 %v2680, %v2672
        %v4673 = vpack.c.b16 %v2681, %v2673
        %v4674 = vpack.c.b16 %v2682, %v2674
        %v4675 = vpack.c.b16 %v2683, %v2675
        %v4676 = vpack.c.b16 %v2684, %v2676
        %v4677 = vpack.c.b16 %v2685, %v2677
        %v4678 = vpack.c.b16 %v2694, %v2686
        %v4679 = vpack.c.b16 %v2695, %v2687
        %v4680 = vpack.c.b16 %v2696, %v2688
        %v4681 = vpack.c.b16 %v2697, %v2689
        %v4682 = vpack.c.b16 %v2698, %v2690
        %v4683 = vpack.c.b16 %v2699, %v2691
        %v4684 = vpack.c.b16 %v2700, %v2692
        %v4685 = vpack.c.b16 %v2701, %v2693
        %v4686 = vpack.c.b16 %v2710, %v2702
        %v4687 = vpack.c.b16 %v2711, %v2703
        %v4688 = vpack.c.b16 %v2712, %v2704
        %v4689 = vpack.c.b16 %v2713, %v2705
        %v4690 = vpack.c.b16 %v2714, %v2706
        %v4691 = vpack.c.b16 %v2715, %v2707
        %v4692 = vpack.c.b16 %v2716, %v2708
        %v4693 = vpack.c.b16 %v2717, %v2709
        %v4694 = vpack.c.b16 %v2726, %v2718
        %v4695 = vpack.c.b16 %v2727, %v2719
        %v4696 = vpack.c.b16 %v2728, %v2720
        %v4697 = vpack.c.b16 %v2729, %v2721
        %v4698 = vpack.c.b16 %v2730, %v2722
        %v4699 = vpack.c.b16 %v2731, %v2723
        %v4700 = vpack.c.b16 %v2732, %v2724
        %v4701 = vpack.c.b16 %v2733, %v2725
        %v4702 = vpack.c.b16 %v2742, %v2734
        %v4703 = vpack.c.b16 %v2743, %v2735
        %v4704 = vpack.c.b16 %v2744, %v2736
        %v4705 = vpack.c.b16 %v2745, %v2737
        %v4706 = vpack.c.b16 %v2746, %v2738
        %v4707 = vpack.c.b16 %v2747, %v2739
        %v4708 = vpack.c.b16 %v2748, %v2740
        %v4709 = vpack.c.b16 %v2749, %v2741
        %v4710 = vpack.c.b16 %v2758, %v2750
        %v4711 = vpack.c.b16 %v2759, %v2751
        %v4712 = vpack.c.b16 %v2760, %v2752
        %v4713 = vpack.c.b16 %v2761, %v2753
        %v4714 = vpack.c.b16 %v2762, %v2754
        %v4715 = vpack.c.b16 %v2763, %v2755
        %v4716 = vpack.c.b16 %v2764, %v2756
        %v4717 = vpack.c.b16 %v2765, %v2757
        %v4718 = vpack.c.b16 %v2774, %v2766
        %v4719 = vpack.c.b16 %v2775, %v2767
        %v4720 = vpack.c.b16 %v2776, %v2768
        %v4721 = vpack.c.b16 %v2777, %v2769
        %v4722 = vpack.c.b16 %v2778, %v2770
        %v4723 = vpack.c.b16 %v2779, %v2771
        %v4724 = vpack.c.b16 %v2780, %v2772
        %v4725 = vpack.c.b16 %v2781, %v2773
        %v4726 = vpack.c.b16 %v2790, %v2782
        %v4727 = vpack.c.b16 %v2791, %v2783
        %v4728 = vpack.c.b16 %v2792, %v2784
        %v4729 = vpack.c.b16 %v2793, %v2785
        %v4730 = vpack.c.b16 %v2794, %v2786
        %v4731 = vpack.c.b16 %v2795, %v2787
        %v4732 = vpack.c.b16 %v2796, %v2788
        %v4733 = vpack.c.b16 %v2797, %v2789
        %v4734 = vpack.c.b16 %v2806, %v2798
        %v4735 = vpack.c.b16 %v2807, %v2799
        %v4736 = vpack.c.b16 %v2808, %v2800
        %v4737 = vpack.c.b16 %v2809, %v2801
        %v4738 = vpack.c.b16 %v2810, %v2802
        %v4739 = vpack.c.b16 %v2811, %v2803
        %v4740 = vpack.c.b16 %v2812, %v2804
        %v4741 = vpack.c.b16 %v2813, %v2805
        %v4742 = vpack.c.b16 %v2822, %v2814
        %v4743 = vpack.c.b16 %v2823, %v2815
        %v4744 = vpack.c.b16 %v2824, %v2816
        %v4745 = vpack.c.b16 %v2825, %v2817
        %v4746 = vpack.c.b16 %v2826, %v2818
        %v4747 = vpack.c.b16 %v2827, %v2819
        %v4748 = vpack.c.b16 %v2828, %v2820
        %v4749 = vpack.c.b16 %v2829, %v2821
        %v4750 = vpack.c.b16 %v2838, %v2830
        %v4751 = vpack.c.b16 %v2839, %v2831
        %v4752 = vpack.c.b16 %v2840, %v2832
        %v4753 = vpack.c.b16 %v2841, %v2833
        %v4754 = vpack.c.b16 %v2842, %v2834
        %v4755 = vpack.c.b16 %v2843, %v2835
        %v4756 = vpack.c.b16 %v2844, %v2836
        %v4757 = vpack.c.b16 %v2845, %v2837
        %v4758 = vpack.c.b16 %v2854, %v2846
        %v4759 = vpack.c.b16 %v2855, %v2847
        %v4760 = vpack.c.b16 %v2856, %v2848
        %v4761 = vpack.c.b16 %v2857, %v2849
        %v4762 = vpack.c.b16 %v2858, %v2850
        %v4763 = vpack.c.b16 %v2859, %v2851
        %v4764 = vpack.c.b16 %v2860, %v2852
        %v4765 = vpack.c.b16 %v2861, %v2853
        %v4766 = vpack.c.b16 %v2870, %v2862
        %v4767 = vpack.c.b16 %v2871, %v2863
        %v4768 = vpack.c.b16 %v2872, %v2864
        %v4769 = vpack.c.b16 %v2873, %v2865
        %v4770 = vpack.c.b16 %v2874, %v2866
        %v4771 = vpack.c.b16 %v2875, %v2867
        %v4772 = vpack.c.b16 %v2876, %v2868
        %v4773 = vpack.c.b16 %v2877, %v2869
        %v4774 = vpack.c.b16 %v2886, %v2878
        %v4775 = vpack.c.b16 %v2887, %v2879
        %v4776 = vpack.c.b16 %v2888, %v2880
        %v4777 = vpack.c.b16 %v2889, %v2881
        %v4778 = vpack.c.b16 %v2890, %v2882
        %v4779 = vpack.c.b16 %v2891, %v2883
        %v4780 = vpack.c.b16 %v2892, %v2884
        %v4781 = vpack.c.b16 %v2893, %v2885
        %v4782 = vpack.c.b16 %v2902, %v2894
        %v4783 = vpack.c.b16 %v2903, %v2895
        %v4784 = vpack.c.b16 %v2904, %v2896
        %v4785 = vpack.c.b16 %v2905, %v2897
        %v4786 = vpack.c.b16 %v2906, %v2898
        %v4787 = vpack.c.b16 %v2907, %v2899
        %v4788 = vpack.c.b16 %v2908, %v2900
        %v4789 = vpack.c.b16 %v2909, %v2901
        %v4790 = vpack.c.b16 %v2918, %v2910
        %v4791 = vpack.c.b16 %v2919, %v2911
        %v4792 = vpack.c.b16 %v2920, %v2912
        %v4793 = vpack.c.b16 %v2921, %v2913
        %v4794 = vpack.c.b16 %v2922, %v2914
        %v4795 = vpack.c.b16 %v2923, %v2915
        %v4796 = vpack.c.b16 %v2924, %v2916
        %v4797 = vpack.c.b16 %v2925, %v2917
        %v4798 = vpack.c.b16 %v2934, %v2926
        %v4799 = vpack.c.b16 %v2935, %v2927
        %v4800 = vpack.c.b16 %v2936, %v2928
        %v4801 = vpack.c.b16 %v2937, %v2929
        %v4802 = vpack.c.b16 %v2938, %v2930
        %v4803 = vpack.c.b16 %v2939, %v2931
        %v4804 = vpack.c.b16 %v2940, %v2932
        %v4805 = vpack.c.b16 %v2941, %v2933
        %v4806 = vpack.c.b16 %v2950, %v2942
        %v4807 = vpack.c.b16 %v2951, %v2943
        %v4808 = vpack.c.b16 %v2952, %v2944
        %v4809 = vpack.c.b16 %v2953, %v2945
        %v4810 = vpack.c.b16 %v2954, %v2946
        %v4811 = vpack.c.b16 %v2955, %v2947
        %v4812 = vpack.c.b16 %v2956, %v2948
        %v4813 = vpack.c.b16 %v2957, %v2949
        %v4814 = vpack.c.b16 %v2966, %v2958
        %v4815 = vpack.c.b16 %v2967, %v2959
        %v4816 = vpack.c.b16 %v2968, %v2960
        %v4817 = vpack.c.b16 %v2969, %v2961
        %v4818 = vpack.c.b16 %v2970, %v2962
        %v4819 = vpack.c.b16 %v2971, %v2963
        %v4820 = vpack.c.b16 %v2972, %v2964
        %v4821 = vpack.c.b16 %v2973, %v2965
        %v4822 = vpack.c.b16 %v2982, %v2974
        %v4823 = vpack.c.b16 %v2983, %v2975
        %v4824 = vpack.c.b16 %v2984, %v2976
        %v4825 = vpack.c.b16 %v2985, %v2977
        %v4826 = vpack.c.b16 %v2986, %v2978
        %v4827 = vpack.c.b16 %v2987, %v2979
        %v4828 = vpack.c.b16 %v2988, %v2980
        %v4829 = vpack.c.b16 %v2989, %v2981
        %v4830 = vpack.c.b16 %v2998, %v2990
        %v4831 = vpack.c.b16 %v2999, %v2991
        %v4832 = vpack.c.b16 %v3000, %v2992
        %v4833 = vpack.c.b16 %v3001, %v2993
        %v4834 = vpack.c.b16 %v3002, %v2994
        %v4835 = vpack.c.b16 %v3003, %v2995
        %v4836 = vpack.c.b16 %v3004, %v2996
        %v4837 = vpack.c.b16 %v3005, %v2997
        %v4838 = vpack.c.b16 %v3014, %v3006
        %v4839 = vpack.c.b16 %v3015, %v3007
        %v4840 = vpack.c.b16 %v3016, %v3008
        %v4841 = vpack.c.b16 %v3017, %v3009
        %v4842 = vpack.c.b16 %v3018, %v3010
        %v4843 = vpack.c.b16 %v3019, %v3011
        %v4844 = vpack.c.b16 %v3020, %v3012
        %v4845 = vpack.c.b16 %v3021, %v3013
        %v4846 = vpack.c.b16 %v3030, %v3022
        %v4847 = vpack.c.b16 %v3031, %v3023
        %v4848 = vpack.c.b16 %v3032, %v3024
        %v4849 = vpack.c.b16 %v3033, %v3025
        %v4850 = vpack.c.b16 %v3034, %v3026
        %v4851 = vpack.c.b16 %v3035, %v3027
        %v4852 = vpack.c.b16 %v3036, %v3028
        %v4853 = vpack.c.b16 %v3037, %v3029
        %v4854 = vpack.c.b16 %v3046, %v3038
        %v4855 = vpack.c.b16 %v3047, %v3039
        %v4856 = vpack.c.b16 %v3048, %v3040
        %v4857 = vpack.c.b16 %v3049, %v3041
        %v4858 = vpack.c.b16 %v3050, %v3042
        %v4859 = vpack.c.b16 %v3051, %v3043
        %v4860 = vpack.c.b16 %v3052, %v3044
        %v4861 = vpack.c.b16 %v3053, %v3045
        %v4862 = vpack.c.b16 %v3062, %v3054
        %v4863 = vpack.c.b16 %v3063, %v3055
        %v4864 = vpack.c.b16 %v3064, %v3056
        %v4865 = vpack.c.b16 %v3065, %v3057
        %v4866 = vpack.c.b16 %v3066, %v3058
        %v4867 = vpack.c.b16 %v3067, %v3059
        %v4868 = vpack.c.b16 %v3068, %v3060
        %v4869 = vpack.c.b16 %v3069, %v3061
        %v4870 = vpack.c.b16 %v3078, %v3070
        %v4871 = vpack.c.b16 %v3079, %v3071
        %v4872 = vpack.c.b16 %v3080, %v3072
        %v4873 = vpack.c.b16 %v3081, %v3073
        %v4874 = vpack.c.b16 %v3082, %v3074
        %v4875 = vpack.c.b16 %v3083, %v3075
        %v4876 = vpack.c.b16 %v3084, %v3076
        %v4877 = vpack.c.b16 %v3085, %v3077
        %v4878 = vpack.c.b16 %v3094, %v3086
        %v4879 = vpack.c.b16 %v3095, %v3087
        %v4880 = vpack.c.b16 %v3096, %v3088
        %v4881 = vpack.c.b16 %v3097, %v3089
        %v4882 = vpack.c.b16 %v3098, %v3090
        %v4883 = vpack.c.b16 %v3099, %v3091
        %v4884 = vpack.c.b16 %v3100, %v3092
        %v4885 = vpack.c.b16 %v3101, %v3093
        %v4886 = vpack.c.b16 %v3110, %v3102
        %v4887 = vpack.c.b16 %v3111, %v3103
        %v4888 = vpack.c.b16 %v3112, %v3104
        %v4889 = vpack.c.b16 %v3113, %v3105
        %v4890 = vpack.c.b16 %v3114, %v3106
        %v4891 = vpack.c.b16 %v3115, %v3107
        %v4892 = vpack.c.b16 %v3116, %v3108
        %v4893 = vpack.c.b16 %v3117, %v3109
        %v4894 = vpack.c.b16 %v3126, %v3118
        %v4895 = vpack.c.b16 %v3127, %v3119
        %v4896 = vpack.c.b16 %v3128, %v3120
        %v4897 = vpack.c.b16 %v3129, %v3121
        %v4898 = vpack.c.b16 %v3130, %v3122
        %v4899 = vpack.c.b16 %v3131, %v3123
        %v4900 = vpack.c.b16 %v3132, %v3124
        %v4901 = vpack.c.b16 %v3133, %v3125
        %v4902 = vpack.c.b16 %v3142, %v3134
        %v4903 = vpack.c.b16 %v3143, %v3135
        %v4904 = vpack.c.b16 %v3144, %v3136
        %v4905 = vpack.c.b16 %v3145, %v3137
        %v4906 = vpack.c.b16 %v3146, %v3138
        %v4907 = vpack.c.b16 %v3147, %v3139
        %v4908 = vpack.c.b16 %v3148, %v3140
        %v4909 = vpack.c.b16 %v3149, %v3141
        %v4910 = vpack.c.b16 %v3158, %v3150
        %v4911 = vpack.c.b16 %v3159, %v3151
        %v4912 = vpack.c.b16 %v3160, %v3152
        %v4913 = vpack.c.b16 %v3161, %v3153
        %v4914 = vpack.c.b16 %v3162, %v3154
        %v4915 = vpack.c.b16 %v3163, %v3155
        %v4916 = vpack.c.b16 %v3164, %v3156
        %v4917 = vpack.c.b16 %v3165, %v3157
        %v4918 = vpack.c.b16 %v3174, %v3166
        %v4919 = vpack.c.b16 %v3175, %v3167
        %v4920 = vpack.c.b16 %v3176, %v3168
        %v4921 = vpack.c.b16 %v3177, %v3169
        %v4922 = vpack.c.b16 %v3178, %v3170
        %v4923 = vpack.c.b16 %v3179, %v3171
        %v4924 = vpack.c.b16 %v3180, %v3172
        %v4925 = vpack.c.b16 %v3181, %v3173
        %v4926 = vpack.c.b16 %v3190, %v3182
        %v4927 = vpack.c.b16 %v3191, %v3183
        %v4928 = vpack.c.b16 %v3192, %v3184
        %v4929 = vpack.c.b16 %v3193, %v3185
        %v4930 = vpack.c.b16 %v3194, %v3186
        %v4931 = vpack.c.b16 %v3195, %v3187
        %v4932 = vpack.c.b16 %v3196, %v3188
        %v4933 = vpack.c.b16 %v3197, %v3189
        %v4934 = vpack.c.b16 %v3206, %v3198
        %v4935 = vpack.c.b16 %v3207, %v3199
        %v4936 = vpack.c.b16 %v3208, %v3200
        %v4937 = vpack.c.b16 %v3209, %v3201
        %v4938 = vpack.c.b16 %v3210, %v3202
        %v4939 = vpack.c.b16 %v3211, %v3203
        %v4940 = vpack.c.b16 %v3212, %v3204
        %v4941 = vpack.c.b16 %v3213, %v3205
        %v4942 = vpack.c.b16 %v3222, %v3214
        %v4943 = vpack.c.b16 %v3223, %v3215
        %v4944 = vpack.c.b16 %v3224, %v3216
        %v4945 = vpack.c.b16 %v3225, %v3217
        %v4946 = vpack.c.b16 %v3226, %v3218
        %v4947 = vpack.c.b16 %v3227, %v3219
        %v4948 = vpack.c.b16 %v3228, %v3220
        %v4949 = vpack.c.b16 %v3229, %v3221
        %v4950 = vpack.c.b16 %v3238, %v3230
        %v4951 = vpack.c.b16 %v3239, %v3231
        %v4952 = vpack.c.b16 %v3240, %v3232
        %v4953 = vpack.c.b16 %v3241, %v3233
        %v4954 = vpack.c.b16 %v3242, %v3234
        %v4955 = vpack.c.b16 %v3243, %v3235
        %v4956 = vpack.c.b16 %v3244, %v3236
        %v4957 = vpack.c.b16 %v3245, %v3237
        %v4958 = vpack.c.b16 %v3254, %v3246
        %v4959 = vpack.c.b16 %v3255, %v3247
        %v4960 = vpack.c.b16 %v3256, %v3248
        %v4961 = vpack.c.b16 %v3257, %v3249
        %v4962 = vpack.c.b16 %v3258, %v3250
        %v4963 = vpack.c.b16 %v3259, %v3251
        %v4964 = vpack.c.b16 %v3260, %v3252
        %v4965 = vpack.c.b16 %v3261, %v3253
        %v4966 = vpack.c.b16 %v3270, %v3262
        %v4967 = vpack.c.b16 %v3271, %v3263
        %v4968 = vpack.c.b16 %v3272, %v3264
        %v4969 = vpack.c.b16 %v3273, %v3265
        %v4970 = vpack.c.b16 %v3274, %v3266
        %v4971 = vpack.c.b16 %v3275, %v3267
        %v4972 = vpack.c.b16 %v3276, %v3268
        %v4973 = vpack.c.b16 %v3277, %v3269
        %v4974 = vpack.c.b16 %v3286, %v3278
        %v4975 = vpack.c.b16 %v3287, %v3279
        %v4976 = vpack.c.b16 %v3288, %v3280
        %v4977 = vpack.c.b16 %v3289, %v3281
        %v4978 = vpack.c.b16 %v3290, %v3282
        %v4979 = vpack.c.b16 %v3291, %v3283
        %v4980 = vpack.c.b16 %v3292, %v3284
        %v4981 = vpack.c.b16 %v3293, %v3285
        %v4982 = vpack.c.b16 %v3302, %v3294
        %v4983 = vpack.c.b16 %v3303, %v3295
        %v4984 = vpack.c.b16 %v3304, %v3296
        %v4985 = vpack.c.b16 %v3305, %v3297
        %v4986 = vpack.c.b16 %v3306, %v3298
        %v4987 = vpack.c.b16 %v3307, %v3299
        %v4988 = vpack.c.b16 %v3308, %v3300
        %v4989 = vpack.c.b16 %v3309, %v3301
        %v4990 = vpack.c.b16 %v3318, %v3310
        %v4991 = vpack.c.b16 %v3319, %v3311
        %v4992 = vpack.c.b16 %v3320, %v3312
        %v4993 = vpack.c.b16 %v3321, %v3313
        %v4994 = vpack.c.b16 %v3322, %v3314
        %v4995 = vpack.c.b16 %v3323, %v3315
        %v4996 = vpack.c.b16 %v3324, %v3316
        %v4997 = vpack.c.b16 %v3325, %v3317
        %v4998 = vpack.c.b16 %v3334, %v3326
        %v4999 = vpack.c.b16 %v3335, %v3327
        %v5000 = vpack.c.b16 %v3336, %v3328
        %v5001 = vpack.c.b16 %v3337, %v3329
        %v5002 = vpack.c.b16 %v3338, %v3330
        %v5003 = vpack.c.b16 %v3339, %v3331
        %v5004 = vpack.c.b16 %v3340, %v3332
        %v5005 = vpack.c.b16 %v3341, %v3333
        %v5006 = vpack.c.b16 %v3350, %v3342
        %v5007 = vpack.c.b16 %v3351, %v3343
        %v5008 = vpack.c.b16 %v3352, %v3344
        %v5009 = vpack.c.b16 %v3353, %v3345
        %v5010 = vpack.c.b16 %v3354, %v3346
        %v5011 = vpack.c.b16 %v3355, %v3347
        %v5012 = vpack.c.b16 %v3356, %v3348
        %v5013 = vpack.c.b16 %v3357, %v3349
        %v5014 = vpack.c.b16 %v3366, %v3358
        %v5015 = vpack.c.b16 %v3367, %v3359
        %v5016 = vpack.c.b16 %v3368, %v3360
        %v5017 = vpack.c.b16 %v3369, %v3361
        %v5018 = vpack.c.b16 %v3370, %v3362
        %v5019 = vpack.c.b16 %v3371, %v3363
        %v5020 = vpack.c.b16 %v3372, %v3364
        %v5021 = vpack.c.b16 %v3373, %v3365
        %v5022 = vpack.c.b16 %v3382, %v3374
        %v5023 = vpack.c.b16 %v3383, %v3375
        %v5024 = vpack.c.b16 %v3384, %v3376
        %v5025 = vpack.c.b16 %v3385, %v3377
        %v5026 = vpack.c.b16 %v3386, %v3378
        %v5027 = vpack.c.b16 %v3387, %v3379
        %v5028 = vpack.c.b16 %v3388, %v3380
        %v5029 = vpack.c.b16 %v3389, %v3381
        %v5030 = vpack.c.b16 %v3398, %v3390
        %v5031 = vpack.c.b16 %v3399, %v3391
        %v5032 = vpack.c.b16 %v3400, %v3392
        %v5033 = vpack.c.b16 %v3401, %v3393
        %v5034 = vpack.c.b16 %v3402, %v3394
        %v5035 = vpack.c.b16 %v3403, %v3395
        %v5036 = vpack.c.b16 %v3404, %v3396
        %v5037 = vpack.c.b16 %v3405, %v3397
        %v5038 = vpack.c.b16 %v3414, %v3406
        %v5039 = vpack.c.b16 %v3415, %v3407
        %v5040 = vpack.c.b16 %v3416, %v3408
        %v5041 = vpack.c.b16 %v3417, %v3409
        %v5042 = vpack.c.b16 %v3418, %v3410
        %v5043 = vpack.c.b16 %v3419, %v3411
        %v5044 = vpack.c.b16 %v3420, %v3412
        %v5045 = vpack.c.b16 %v3421, %v3413
        %v5046 = vpack.c.b16 %v3430, %v3422
        %v5047 = vpack.c.b16 %v3431, %v3423
        %v5048 = vpack.c.b16 %v3432, %v3424
        %v5049 = vpack.c.b16 %v3433, %v3425
        %v5050 = vpack.c.b16 %v3434, %v3426
        %v5051 = vpack.c.b16 %v3435, %v3427
        %v5052 = vpack.c.b16 %v3436, %v3428
        %v5053 = vpack.c.b16 %v3437, %v3429
        %v5054 = vpack.c.b16 %v3446, %v3438
        %v5055 = vpack.c.b16 %v3447, %v3439
        %v5056 = vpack.c.b16 %v3448, %v3440
        %v5057 = vpack.c.b16 %v3449, %v3441
        %v5058 = vpack.c.b16 %v3450, %v3442
        %v5059 = vpack.c.b16 %v3451, %v3443
        %v5060 = vpack.c.b16 %v3452, %v3444
        %v5061 = vpack.c.b16 %v3453, %v3445
        %v5062 = vpack.c.b16 %v3462, %v3454
        %v5063 = vpack.c.b16 %v3463, %v3455
        %v5064 = vpack.c.b16 %v3464, %v3456
        %v5065 = vpack.c.b16 %v3465, %v3457
        %v5066 = vpack.c.b16 %v3466, %v3458
        %v5067 = vpack.c.b16 %v3467, %v3459
        %v5068 = vpack.c.b16 %v3468, %v3460
        %v5069 = vpack.c.b16 %v3469, %v3461
        %v5070 = vpack.c.b16 %v3478, %v3470
        %v5071 = vpack.c.b16 %v3479, %v3471
        %v5072 = vpack.c.b16 %v3480, %v3472
        %v5073 = vpack.c.b16 %v3481, %v3473
        %v5074 = vpack.c.b16 %v3482, %v3474
        %v5075 = vpack.c.b16 %v3483, %v3475
        %v5076 = vpack.c.b16 %v3484, %v3476
        %v5077 = vpack.c.b16 %v3485, %v3477
        %v5078 = vpack.c.b16 %v3494, %v3486
        %v5079 = vpack.c.b16 %v3495, %v3487
        %v5080 = vpack.c.b16 %v3496, %v3488
        %v5081 = vpack.c.b16 %v3497, %v3489
        %v5082 = vpack.c.b16 %v3498, %v3490
        %v5083 = vpack.c.b16 %v3499, %v3491
        %v5084 = vpack.c.b16 %v3500, %v3492
        %v5085 = vpack.c.b16 %v3501, %v3493
        %v5086 = vpack.c.b16 %v3510, %v3502
        %v5087 = vpack.c.b16 %v3511, %v3503
        %v5088 = vpack.c.b16 %v3512, %v3504
        %v5089 = vpack.c.b16 %v3513, %v3505
        %v5090 = vpack.c.b16 %v3514, %v3506
        %v5091 = vpack.c.b16 %v3515, %v3507
        %v5092 = vpack.c.b16 %v3516, %v3508
        %v5093 = vpack.c.b16 %v3517, %v3509
        %v5094 = vpack.c.b16 %v3526, %v3518
        %v5095 = vpack.c.b16 %v3527, %v3519
        %v5096 = vpack.c.b16 %v3528, %v3520
        %v5097 = vpack.c.b16 %v3529, %v3521
        %v5098 = vpack.c.b16 %v3530, %v3522
        %v5099 = vpack.c.b16 %v3531, %v3523
        %v5100 = vpack.c.b16 %v3532, %v3524
        %v5101 = vpack.c.b16 %v3533, %v3525
        %v5102 = vpack.c.b16 %v3542, %v3534
        %v5103 = vpack.c.b16 %v3543, %v3535
        %v5104 = vpack.c.b16 %v3544, %v3536
        %v5105 = vpack.c.b16 %v3545, %v3537
        %v5106 = vpack.c.b16 %v3546, %v3538
        %v5107 = vpack.c.b16 %v3547, %v3539
        %v5108 = vpack.c.b16 %v3548, %v3540
        %v5109 = vpack.c.b16 %v3549, %v3541
        %v5110 = vpack.c.b16 %v3558, %v3550
        %v5111 = vpack.c.b16 %v3559, %v3551
        %v5112 = vpack.c.b16 %v3560, %v3552
        %v5113 = vpack.c.b16 %v3561, %v3553
        %v5114 = vpack.c.b16 %v3562, %v3554
        %v5115 = vpack.c.b16 %v3563, %v3555
        %v5116 = vpack.c.b16 %v3564, %v3556
        %v5117 = vpack.c.b16 %v3565, %v3557
        %v5118 = vpack.c.b16 %v3574, %v3566
        %v5119 = vpack.c.b16 %v3575, %v3567
        %v5120 = vpack.c.b16 %v3576, %v3568
        %v5121 = vpack.c.b16 %v3577, %v3569
        %v5122 = vpack.c.b16 %v3578, %v3570
        %v5123 = vpack.c.b16 %v3579, %v3571
        %v5124 = vpack.c.b16 %v3580, %v3572
        %v5125 = vpack.c.b16 %v3581, %v3573
        %v5126 = vpack.c.b16 %v3590, %v3582
        %v5127 = vpack.c.b16 %v3591, %v3583
        %v5128 = vpack.c.b16 %v3592, %v3584
        %v5129 = vpack.c.b16 %v3593, %v3585
        %v5130 = vpack.c.b16 %v3594, %v3586
        %v5131 = vpack.c.b16 %v3595, %v3587
        %v5132 = vpack.c.b16 %v3596, %v3588
        %v5133 = vpack.c.b16 %v3597, %v3589
        %v5134 = vpack.c.b16 %v3606, %v3598
        %v5135 = vpack.c.b16 %v3607, %v3599
        %v5136 = vpack.c.b16 %v3608, %v3600
        %v5137 = vpack.c.b16 %v3609, %v3601
        %v5138 = vpack.c.b16 %v3610, %v3602
        %v5139 = vpack.c.b16 %v3611, %v3603
        %v5140 = vpack.c.b16 %v3612, %v3604
        %v5141 = vpack.c.b16 %v3613, %v3605
        %v5142 = vpack.c.b16 %v3622, %v3614
        %v5143 = vpack.c.b16 %v3623, %v3615
        %v5144 = vpack.c.b16 %v3624, %v3616
        %v5145 = vpack.c.b16 %v3625, %v3617
        %v5146 = vpack.c.b16 %v3626, %v3618
        %v5147 = vpack.c.b16 %v3627, %v3619
        %v5148 = vpack.c.b16 %v3628, %v3620
        %v5149 = vpack.c.b16 %v3629, %v3621
        %v5150 = vpack.c.b16 %v3638, %v3630
        %v5151 = vpack.c.b16 %v3639, %v3631
        %v5152 = vpack.c.b16 %v3640, %v3632
        %v5153 = vpack.c.b16 %v3641, %v3633
        %v5154 = vpack.c.b16 %v3642, %v3634
        %v5155 = vpack.c.b16 %v3643, %v3635
        %v5156 = vpack.c.b16 %v3644, %v3636
        %v5157 = vpack.c.b16 %v3645, %v3637
        %v5158 = vpack.c.b16 %v3654, %v3646
        %v5159 = vpack.c.b16 %v3655, %v3647
        %v5160 = vpack.c.b16 %v3656, %v3648
        %v5161 = vpack.c.b16 %v3657, %v3649
        %v5162 = vpack.c.b16 %v3658, %v3650
        %v5163 = vpack.c.b16 %v3659, %v3651
        %v5164 = vpack.c.b16 %v3660, %v3652
        %v5165 = vpack.c.b16 %v3661, %v3653
        %v5166 = vpack.c.b16 %v3670, %v3662
        %v5167 = vpack.c.b16 %v3671, %v3663
        %v5168 = vpack.c.b16 %v3672, %v3664
        %v5169 = vpack.c.b16 %v3673, %v3665
        %v5170 = vpack.c.b16 %v3674, %v3666
        %v5171 = vpack.c.b16 %v3675, %v3667
        %v5172 = vpack.c.b16 %v3676, %v3668
        %v5173 = vpack.c.b16 %v3677, %v3669
        %v5174 = vpack.c.b16 %v3686, %v3678
        %v5175 = vpack.c.b16 %v3687, %v3679
        %v5176 = vpack.c.b16 %v3688, %v3680
        %v5177 = vpack.c.b16 %v3689, %v3681
        %v5178 = vpack.c.b16 %v3690, %v3682
        %v5179 = vpack.c.b16 %v3691, %v3683
        %v5180 = vpack.c.b16 %v3692, %v3684
        %v5181 = vpack.c.b16 %v3693, %v3685
        %v5182 = vpack.c.b16 %v3702, %v3694
        %v5183 = vpack.c.b16 %v3703, %v3695
        %v5184 = vpack.c.b16 %v3704, %v3696
        %v5185 = vpack.c.b16 %v3705, %v3697
        %v5186 = vpack.c.b16 %v3706, %v3698
        %v5187 = vpack.c.b16 %v3707, %v3699
        %v5188 = vpack.c.b16 %v3708, %v3700
        %v5189 = vpack.c.b16 %v3709, %v3701
        %v5190 = vpack.c.b16 %v3718, %v3710
        %v5191 = vpack.c.b16 %v3719, %v3711
        %v5192 = vpack.c.b16 %v3720, %v3712
        %v5193 = vpack.c.b16 %v3721, %v3713
        %v5194 = vpack.c.b16 %v3722, %v3714
        %v5195 = vpack.c.b16 %v3723, %v3715
        %v5196 = vpack.c.b16 %v3724, %v3716
        %v5197 = vpack.c.b16 %v3725, %v3717
        %v5198 = vpack.c.b16 %v3734, %v3726
        %v5199 = vpack.c.b16 %v3735, %v3727
        %v5200 = vpack.c.b16 %v3736, %v3728
        %v5201 = vpack.c.b16 %v3737, %v3729
        %v5202 = vpack.c.b16 %v3738, %v3730
        %v5203 = vpack.c.b16 %v3739, %v3731
        %v5204 = vpack.c.b16 %v3740, %v3732
        %v5205 = vpack.c.b16 %v3741, %v3733
        %v5206 = vpack.c.b16 %v3750, %v3742
        %v5207 = vpack.c.b16 %v3751, %v3743
        %v5208 = vpack.c.b16 %v3752, %v3744
        %v5209 = vpack.c.b16 %v3753, %v3745
        %v5210 = vpack.c.b16 %v3754, %v3746
        %v5211 = vpack.c.b16 %v3755, %v3747
        %v5212 = vpack.c.b16 %v3756, %v3748
        %v5213 = vpack.c.b16 %v3757, %v3749
        %v5214 = vpack.c.b16 %v3766, %v3758
        %v5215 = vpack.c.b16 %v3767, %v3759
        %v5216 = vpack.c.b16 %v3768, %v3760
        %v5217 = vpack.c.b16 %v3769, %v3761
        %v5218 = vpack.c.b16 %v3770, %v3762
        %v5219 = vpack.c.b16 %v3771, %v3763
        %v5220 = vpack.c.b16 %v3772, %v3764
        %v5221 = vpack.c.b16 %v3773, %v3765
        %v5222 = vpack.c.b16 %v3782, %v3774
        %v5223 = vpack.c.b16 %v3783, %v3775
        %v5224 = vpack.c.b16 %v3784, %v3776
        %v5225 = vpack.c.b16 %v3785, %v3777
        %v5226 = vpack.c.b16 %v3786, %v3778
        %v5227 = vpack.c.b16 %v3787, %v3779
        %v5228 = vpack.c.b16 %v3788, %v3780
        %v5229 = vpack.c.b16 %v3789, %v3781
        %v5230 = vpack.c.b16 %v3798, %v3790
        %v5231 = vpack.c.b16 %v3799, %v3791
        %v5232 = vpack.c.b16 %v3800, %v3792
        %v5233 = vpack.c.b16 %v3801, %v3793
        %v5234 = vpack.c.b16 %v3802, %v3794
        %v5235 = vpack.c.b16 %v3803, %v3795
        %v5236 = vpack.c.b16 %v3804, %v3796
        %v5237 = vpack.c.b16 %v3805, %v3797
        %v5238 = vpack.c.b16 %v3814, %v3806
        %v5239 = vpack.c.b16 %v3815, %v3807
        %v5240 = vpack.c.b16 %v3816, %v3808
        %v5241 = vpack.c.b16 %v3817, %v3809
        %v5242 = vpack.c.b16 %v3818, %v3810
        %v5243 = vpack.c.b16 %v3819, %v3811
        %v5244 = vpack.c.b16 %v3820, %v3812
        %v5245 = vpack.c.b16 %v3821, %v3813
        %v5246 = vpack.c.b16 %v3830, %v3822
        %v5247 = vpack.c.b16 %v3831, %v3823
        %v5248 = vpack.c.b16 %v3832, %v3824
        %v5249 = vpack.c.b16 %v3833, %v3825
        %v5250 = vpack.c.b16 %v3834, %v3826
        %v5251 = vpack.c.b16 %v3835, %v3827
        %v5252 = vpack.c.b16 %v3836, %v3828
        %v5253 = vpack.c.b16 %v3837, %v3829
        %v5254 = vpack.c.b16 %v3846, %v3838
        %v5255 = vpack.c.b16 %v3847, %v3839
        %v5256 = vpack.c.b16 %v3848, %v3840
        %v5257 = vpack.c.b16 %v3849, %v3841
        %v5258 = vpack.c.b16 %v3850, %v3842
        %v5259 = vpack.c.b16 %v3851, %v3843
        %v5260 = vpack.c.b16 %v3852, %v3844
        %v5261 = vpack.c.b16 %v3853, %v3845
        %v5262 = vpack.c.b16 %v3862, %v3854
        %v5263 = vpack.c.b16 %v3863, %v3855
        %v5264 = vpack.c.b16 %v3864, %v3856
        %v5265 = vpack.c.b16 %v3865, %v3857
        %v5266 = vpack.c.b16 %v3866, %v3858
        %v5267 = vpack.c.b16 %v3867, %v3859
        %v5268 = vpack.c.b16 %v3868, %v3860
        %v5269 = vpack.c.b16 %v3869, %v3861
        %v5270 = vpack.c.b16 %v3878, %v3870
        %v5271 = vpack.c.b16 %v3879, %v3871
        %v5272 = vpack.c.b16 %v3880, %v3872
        %v5273 = vpack.c.b16 %v3881, %v3873
        %v5274 = vpack.c.b16 %v3882, %v3874
        %v5275 = vpack.c.b16 %v3883, %v3875
        %v5276 = vpack.c.b16 %v3884, %v3876
        %v5277 = vpack.c.b16 %v3885, %v3877
        %v5278 = vpack.c.b16 %v3894, %v3886
        %v5279 = vpack.c.b16 %v3895, %v3887
        %v5280 = vpack.c.b16 %v3896, %v3888
        %v5281 = vpack.c.b16 %v3897, %v3889
        %v5282 = vpack.c.b16 %v3898, %v3890
        %v5283 = vpack.c.b16 %v3899, %v3891
        %v5284 = vpack.c.b16 %v3900, %v3892
        %v5285 = vpack.c.b16 %v3901, %v3893
        %v5286 = vpack.c.b16 %v3910, %v3902
        %v5287 = vpack.c.b16 %v3911, %v3903
        %v5288 = vpack.c.b16 %v3912, %v3904
        %v5289 = vpack.c.b16 %v3913, %v3905
        %v5290 = vpack.c.b16 %v3914, %v3906
        %v5291 = vpack.c.b16 %v3915, %v3907
        %v5292 = vpack.c.b16 %v3916, %v3908
        %v5293 = vpack.c.b16 %v3917, %v3909
        %v5294 = vpack.c.b16 %v3926, %v3918
        %v5295 = vpack.c.b16 %v3927, %v3919
        %v5296 = vpack.c.b16 %v3928, %v3920
        %v5297 = vpack.c.b16 %v3929, %v3921
        %v5298 = vpack.c.b16 %v3930, %v3922
        %v5299 = vpack.c.b16 %v3931, %v3923
        %v5300 = vpack.c.b16 %v3932, %v3924
        %v5301 = vpack.c.b16 %v3933, %v3925
        %v5302 = vpack.c.b16 %v3942, %v3934
        %v5303 = vpack.c.b16 %v3943, %v3935
        %v5304 = vpack.c.b16 %v3944, %v3936
        %v5305 = vpack.c.b16 %v3945, %v3937
        %v5306 = vpack.c.b16 %v3946, %v3938
        %v5307 = vpack.c.b16 %v3947, %v3939
        %v5308 = vpack.c.b16 %v3948, %v3940
        %v5309 = vpack.c.b16 %v3949, %v3941
        %v5310 = vpack.c.b16 %v3958, %v3950
        %v5311 = vpack.c.b16 %v3959, %v3951
        %v5312 = vpack.c.b16 %v3960, %v3952
        %v5313 = vpack.c.b16 %v3961, %v3953
        %v5314 = vpack.c.b16 %v3962, %v3954
        %v5315 = vpack.c.b16 %v3963, %v3955
        %v5316 = vpack.c.b16 %v3964, %v3956
        %v5317 = vpack.c.b16 %v3965, %v3957
        %v5318 = vpack.c.b16 %v3974, %v3966
        %v5319 = vpack.c.b16 %v3975, %v3967
        %v5320 = vpack.c.b16 %v3976, %v3968
        %v5321 = vpack.c.b16 %v3977, %v3969
        %v5322 = vpack.c.b16 %v3978, %v3970
        %v5323 = vpack.c.b16 %v3979, %v3971
        %v5324 = vpack.c.b16 %v3980, %v3972
        %v5325 = vpack.c.b16 %v3981, %v3973
        %v5326 = vpack.c.b16 %v3990, %v3982
        %v5327 = vpack.c.b16 %v3991, %v3983
        %v5328 = vpack.c.b16 %v3992, %v3984
        %v5329 = vpack.c.b16 %v3993, %v3985
        %v5330 = vpack.c.b16 %v3994, %v3986
        %v5331 = vpack.c.b16 %v3995, %v3987
        %v5332 = vpack.c.b16 %v3996, %v3988
        %v5333 = vpack.c.b16 %v3997, %v3989
        %v5334 = vpack.c.b16 %v4006, %v3998
        %v5335 = vpack.c.b16 %v4007, %v3999
        %v5336 = vpack.c.b16 %v4008, %v4000
        %v5337 = vpack.c.b16 %v4009, %v4001
        %v5338 = vpack.c.b16 %v4010, %v4002
        %v5339 = vpack.c.b16 %v4011, %v4003
        %v5340 = vpack.c.b16 %v4012, %v4004
        %v5341 = vpack.c.b16 %v4013, %v4005
        %v5342 = vpack.c.b16 %v4022, %v4014
        %v5343 = vpack.c.b16 %v4023, %v4015
        %v5344 = vpack.c.b16 %v4024, %v4016
        %v5345 = vpack.c.b16 %v4025, %v4017
        %v5346 = vpack.c.b16 %v4026, %v4018
        %v5347 = vpack.c.b16 %v4027, %v4019
        %v5348 = vpack.c.b16 %v4028, %v4020
        %v5349 = vpack.c.b16 %v4029, %v4021
        %v5350 = vpack.c.b16 %v4038, %v4030
        %v5351 = vpack.c.b16 %v4039, %v4031
        %v5352 = vpack.c.b16 %v4040, %v4032
        %v5353 = vpack.c.b16 %v4041, %v4033
        %v5354 = vpack.c.b16 %v4042, %v4034
        %v5355 = vpack.c.b16 %v4043, %v4035
        %v5356 = vpack.c.b16 %v4044, %v4036
        %v5357 = vpack.c.b16 %v4045, %v4037
        %v5358 = vpack.c.b16 %v4054, %v4046
        %v5359 = vpack.c.b16 %v4055, %v4047
        %v5360 = vpack.c.b16 %v4056, %v4048
        %v5361 = vpack.c.b16 %v4057, %v4049
        %v5362 = vpack.c.b16 %v4058, %v4050
        %v5363 = vpack.c.b16 %v4059, %v4051
        %v5364 = vpack.c.b16 %v4060, %v4052
        %v5365 = vpack.c.b16 %v4061, %v4053
        %v5366 = vpack.c.b16 %v4070, %v4062
        %v5367 = vpack.c.b16 %v4071, %v4063
        %v5368 = vpack.c.b16 %v4072, %v4064
        %v5369 = vpack.c.b16 %v4073, %v4065
        %v5370 = vpack.c.b16 %v4074, %v4066
        %v5371 = vpack.c.b16 %v4075, %v4067
        %v5372 = vpack.c.b16 %v4076, %v4068
        %v5373 = vpack.c.b16 %v4077, %v4069
        %v5374 = vpack.c.b16 %v4086, %v4078
        %v5375 = vpack.c.b16 %v4087, %v4079
        %v5376 = vpack.c.b16 %v4088, %v4080
        %v5377 = vpack.c.b16 %v4089, %v4081
        %v5378 = vpack.c.b16 %v4090, %v4082
        %v5379 = vpack.c.b16 %v4091, %v4083
        %v5380 = vpack.c.b16 %v4092, %v4084
        %v5381 = vpack.c.b16 %v4093, %v4085
        %v5382 = vpack.c.b16 %v4102, %v4094
        %v5383 = vpack.c.b16 %v4103, %v4095
        %v5384 = vpack.c.b16 %v4104, %v4096
        %v5385 = vpack.c.b16 %v4105, %v4097
        %v5386 = vpack.c.b16 %v4106, %v4098
        %v5387 = vpack.c.b16 %v4107, %v4099
        %v5388 = vpack.c.b16 %v4108, %v4100
        %v5389 = vpack.c.b16 %v4109, %v4101
        %v5390 = vpack.c.b16 %v4118, %v4110
        %v5391 = vpack.c.b16 %v4119, %v4111
        %v5392 = vpack.c.b16 %v4120, %v4112
        %v5393 = vpack.c.b16 %v4121, %v4113
        %v5394 = vpack.c.b16 %v4122, %v4114
        %v5395 = vpack.c.b16 %v4123, %v4115
        %v5396 = vpack.c.b16 %v4124, %v4116
        %v5397 = vpack.c.b16 %v4125, %v4117
        %v5398 = vpack.c.b16 %v4134, %v4126
        %v5399 = vpack.c.b16 %v4135, %v4127
        %v5400 = vpack.c.b16 %v4136, %v4128
        %v5401 = vpack.c.b16 %v4137, %v4129
        %v5402 = vpack.c.b16 %v4138, %v4130
        %v5403 = vpack.c.b16 %v4139, %v4131
        %v5404 = vpack.c.b16 %v4140, %v4132
        %v5405 = vpack.c.b16 %v4141, %v4133
        %v5406 = vpack.c.b16 %v4150, %v4142
        %v5407 = vpack.c.b16 %v4151, %v4143
        %v5408 = vpack.c.b16 %v4152, %v4144
        %v5409 = vpack.c.b16 %v4153, %v4145
        %v5410 = vpack.c.b16 %v4154, %v4146
        %v5411 = vpack.c.b16 %v4155, %v4147
        %v5412 = vpack.c.b16 %v4156, %v4148
        %v5413 = vpack.c.b16 %v4157, %v4149
        %v5414 = vpack.c.b16 %v4166, %v4158
        %v5415 = vpack.c.b16 %v4167, %v4159
        %v5416 = vpack.c.b16 %v4168, %v4160
        %v5417 = vpack.c.b16 %v4169, %v4161
        %v5418 = vpack.c.b16 %v4170, %v4162
        %v5419 = vpack.c.b16 %v4171, %v4163
        %v5420 = vpack.c.b16 %v4172, %v4164
        %v5421 = vpack.c.b16 %v4173, %v4165
        %v5422 = vpack.c.b16 %v4182, %v4174
        %v5423 = vpack.c.b16 %v4183, %v4175
        %v5424 = vpack.c.b16 %v4184, %v4176
        %v5425 = vpack.c.b16 %v4185, %v4177
        %v5426 = vpack.c.b16 %v4186, %v4178
        %v5427 = vpack.c.b16 %v4187, %v4179
        %v5428 = vpack.c.b16 %v4188, %v4180
        %v5429 = vpack.c.b16 %v4189, %v4181
        %v5430 = vpack.c.b16 %v4198, %v4190
        %v5431 = vpack.c.b16 %v4199, %v4191
        %v5432 = vpack.c.b16 %v4200, %v4192
        %v5433 = vpack.c.b16 %v4201, %v4193
        %v5434 = vpack.c.b16 %v4202, %v4194
        %v5435 = vpack.c.b16 %v4203, %v4195
        %v5436 = vpack.c.b16 %v4204, %v4196
        %v5437 = vpack.c.b16 %v4205, %v4197
        %v5438 = vpack.c.b16 %v4214, %v4206
        %v5439 = vpack.c.b16 %v4215, %v4207
        %v5440 = vpack.c.b16 %v4216, %v4208
        %v5441 = vpack.c.b16 %v4217, %v4209
        %v5442 = vpack.c.b16 %v4218, %v4210
        %v5443 = vpack.c.b16 %v4219, %v4211
        %v5444 = vpack.c.b16 %v4220, %v4212
        %v5445 = vpack.c.b16 %v4221, %v4213
        %v5446 = vpack.c.b16 %v4230, %v4222
        %v5447 = vpack.c.b16 %v4231, %v4223
        %v5448 = vpack.c.b16 %v4232, %v4224
        %v5449 = vpack.c.b16 %v4233, %v4225
        %v5450 = vpack.c.b16 %v4234, %v4226
        %v5451 = vpack.c.b16 %v4235, %v4227
        %v5452 = vpack.c.b16 %v4236, %v4228
        %v5453 = vpack.c.b16 %v4237, %v4229
        %v5454 = vpack.c.b16 %v4246, %v4238
        %v5455 = vpack.c.b16 %v4247, %v4239
        %v5456 = vpack.c.b16 %v4248, %v4240
        %v5457 = vpack.c.b16 %v4249, %v4241
        %v5458 = vpack.c.b16 %v4250, %v4242
        %v5459 = vpack.c.b16 %v4251, %v4243
        %v5460 = vpack.c.b16 %v4252, %v4244
        %v5461 = vpack.c.b16 %v4253, %v4245
        %v5462 = vpack.c.b16 %v4262, %v4254
        %v5463 = vpack.c.b16 %v4263, %v4255
        %v5464 = vpack.c.b16 %v4264, %v4256
        %v5465 = vpack.c.b16 %v4265, %v4257
        %v5466 = vpack.c.b16 %v4266, %v4258
        %v5467 = vpack.c.b16 %v4267, %v4259
        %v5468 = vpack.c.b16 %v4268, %v4260
        %v5469 = vpack.c.b16 %v4269, %v4261
        %v5470 = vpack.c.b16 %v4278, %v4270
        %v5471 = vpack.c.b16 %v4279, %v4271
        %v5472 = vpack.c.b16 %v4280, %v4272
        %v5473 = vpack.c.b16 %v4281, %v4273
        %v5474 = vpack.c.b16 %v4282, %v4274
        %v5475 = vpack.c.b16 %v4283, %v4275
        %v5476 = vpack.c.b16 %v4284, %v4276
        %v5477 = vpack.c.b16 %v4285, %v4277
        %v5478 = vpack.c.b16 %v4294, %v4286
        %v5479 = vpack.c.b16 %v4295, %v4287
        %v5480 = vpack.c.b16 %v4296, %v4288
        %v5481 = vpack.c.b16 %v4297, %v4289
        %v5482 = vpack.c.b16 %v4298, %v4290
        %v5483 = vpack.c.b16 %v4299, %v4291
        %v5484 = vpack.c.b16 %v4300, %v4292
        %v5485 = vpack.c.b16 %v4301, %v4293
        %v5486 = vpack.c.b16 %v4310, %v4302
        %v5487 = vpack.c.b16 %v4311, %v4303
        %v5488 = vpack.c.b16 %v4312, %v4304
        %v5489 = vpack.c.b16 %v4313, %v4305
        %v5490 = vpack.c.b16 %v4314, %v4306
        %v5491 = vpack.c.b16 %v4315, %v4307
        %v5492 = vpack.c.b16 %v4316, %v4308
        %v5493 = vpack.c.b16 %v4317, %v4309
        %v5494 = vpack.c.b16 %v4326, %v4318
        %v5495 = vpack.c.b16 %v4327, %v4319
        %v5496 = vpack.c.b16 %v4328, %v4320
        %v5497 = vpack.c.b16 %v4329, %v4321
        %v5498 = vpack.c.b16 %v4330, %v4322
        %v5499 = vpack.c.b16 %v4331, %v4323
        %v5500 = vpack.c.b16 %v4332, %v4324
        %v5501 = vpack.c.b16 %v4333, %v4325
        %v5502 = vpack.c.b16 %v4342, %v4334
        %v5503 = vpack.c.b16 %v4343, %v4335
        %v5504 = vpack.c.b16 %v4344, %v4336
        %v5505 = vpack.c.b16 %v4345, %v4337
        %v5506 = vpack.c.b16 %v4346, %v4338
        %v5507 = vpack.c.b16 %v4347, %v4339
        %v5508 = vpack.c.b16 %v4348, %v4340
        %v5509 = vpack.c.b16 %v4349, %v4341
        %v5510 = vpack.c.b16 %v4358, %v4350
        %v5511 = vpack.c.b16 %v4359, %v4351
        %v5512 = vpack.c.b16 %v4360, %v4352
        %v5513 = vpack.c.b16 %v4361, %v4353
        %v5514 = vpack.c.b16 %v4362, %v4354
        %v5515 = vpack.c.b16 %v4363, %v4355
        %v5516 = vpack.c.b16 %v4364, %v4356
        %v5517 = vpack.c.b16 %v4365, %v4357
        %v5518 = vpack.c.b16 %v4374, %v4366
        %v5519 = vpack.c.b16 %v4375, %v4367
        %v5520 = vpack.c.b16 %v4376, %v4368
        %v5521 = vpack.c.b16 %v4377, %v4369
        %v5522 = vpack.c.b16 %v4378, %v4370
        %v5523 = vpack.c.b16 %v4379, %v4371
        %v5524 = vpack.c.b16 %v4380, %v4372
        %v5525 = vpack.c.b16 %v4381, %v4373
        %v5526 = vpack.c.b16 %v4390, %v4382
        %v5527 = vpack.c.b16 %v4391, %v4383
        %v5528 = vpack.c.b16 %v4392, %v4384
        %v5529 = vpack.c.b16 %v4393, %v4385
        %v5530 = vpack.c.b16 %v4394, %v4386
        %v5531 = vpack.c.b16 %v4395, %v4387
        %v5532 = vpack.c.b16 %v4396, %v4388
        %v5533 = vpack.c.b16 %v4397, %v4389
        %v5534 = vpack.c.b16 %v4406, %v4398
        %v5535 = vpack.c.b16 %v4407, %v4399
        %v5536 = vpack.c.b16 %v4408, %v4400
        %v5537 = vpack.c.b16 %v4409, %v4401
        %v5538 = vpack.c.b16 %v4410, %v4402
        %v5539 = vpack.c.b16 %v4411, %v4403
        %v5540 = vpack.c.b16 %v4412, %v4404
        %v5541 = vpack.c.b16 %v4413, %v4405
        %v5542 = vpack.c.b16 %v4422, %v4414
        %v5543 = vpack.c.b16 %v4423, %v4415
        %v5544 = vpack.c.b16 %v4424, %v4416
        %v5545 = vpack.c.b16 %v4425, %v4417
        %v5546 = vpack.c.b16 %v4426, %v4418
        %v5547 = vpack.c.b16 %v4427, %v4419
        %v5548 = vpack.c.b16 %v4428, %v4420
        %v5549 = vpack.c.b16 %v4429, %v4421
        %v5550 = vpack.c.b16 %v4438, %v4430
        %v5551 = vpack.c.b16 %v4439, %v4431
        %v5552 = vpack.c.b16 %v4440, %v4432
        %v5553 = vpack.c.b16 %v4441, %v4433
        %v5554 = vpack.c.b16 %v4442, %v4434
        %v5555 = vpack.c.b16 %v4443, %v4435
        %v5556 = vpack.c.b16 %v4444, %v4436
        %v5557 = vpack.c.b16 %v4445, %v4437
        %v5558 = vpack.c.b16 %v4454, %v4446
        %v5559 = vpack.c.b16 %v4455, %v4447
        %v5560 = vpack.c.b16 %v4456, %v4448
        %v5561 = vpack.c.b16 %v4457, %v4449
        %v5562 = vpack.c.b16 %v4458, %v4450
        %v5563 = vpack.c.b16 %v4459, %v4451
        %v5564 = vpack.c.b16 %v4460, %v4452
        %v5565 = vpack.c.b16 %v4461, %v4453
        %v5566 = vpack.c.b16 %v4470, %v4462
        %v5567 = vpack.c.b16 %v4471, %v4463
        %v5568 = vpack.c.b16 %v4472, %v4464
        %v5569 = vpack.c.b16 %v4473, %v4465
        %v5570 = vpack.c.b16 %v4474, %v4466
        %v5571 = vpack.c.b16 %v4475, %v4467
        %v5572 = vpack.c.b16 %v4476, %v4468
        %v5573 = vpack.c.b16 %v4477, %v4469
        %v5574 = vpack.c.b16 %v4486, %v4478
        %v5575 = vpack.c.b16 %v4487, %v4479
        %v5576 = vpack.c.b16 %v4488, %v4480
        %v5577 = vpack.c.b16 %v4489, %v4481
        %v5578 = vpack.c.b16 %v4490, %v4482
        %v5579 = vpack.c.b16 %v4491, %v4483
        %v5580 = vpack.c.b16 %v4492, %v4484
        %v5581 = vpack.c.b16 %v4493, %v4485
        %v5582 = vpack.c.b16 %v4502, %v4494
        %v5583 = vpack.c.b16 %v4503, %v4495
        %v5584 = vpack.c.b16 %v4504, %v4496
        %v5585 = vpack.c.b16 %v4505, %v4497
        %v5586 = vpack.c.b16 %v4506, %v4498
        %v5587 = vpack.c.b16 %v4507, %v4499
        %v5588 = vpack.c.b16 %v4508, %v4500
        %v5589 = vpack.c.b16 %v4509, %v4501
        %v5590 = vpack.c.b16 %v4518, %v4510
        %v5591 = vpack.c.b16 %v4519, %v4511
        %v5592 = vpack.c.b16 %v4520, %v4512
        %v5593 = vpack.c.b16 %v4521, %v4513
        %v5594 = vpack.c.b16 %v4522, %v4514
        %v5595 = vpack.c.b16 %v4523, %v4515
        %v5596 = vpack.c.b16 %v4524, %v4516
        %v5597 = vpack.c.b16 %v4525, %v4517
        %v5598 = vpack.c.b16 %v4534, %v4526
        %v5599 = vpack.c.b16 %v4535, %v4527
        %v5600 = vpack.c.b16 %v4536, %v4528
        %v5601 = vpack.c.b16 %v4537, %v4529
        %v5602 = vpack.c.b16 %v4538, %v4530
        %v5603 = vpack.c.b16 %v4539, %v4531
        %v5604 = vpack.c.b16 %v4540, %v4532
        %v5605 = vpack.c.b16 %v4541, %v4533
        %v5606 = vpack.c.b16 %v4550, %v4542
        %v5607 = vpack.c.b16 %v4551, %v4543
        %v5608 = vpack.c.b16 %v4552, %v4544
        %v5609 = vpack.c.b16 %v4553, %v4545
        %v5610 = vpack.c.b16 %v4554, %v4546
        %v5611 = vpack.c.b16 %v4555, %v4547
        %v5612 = vpack.c.b16 %v4556, %v4548
        %v5613 = vpack.c.b16 %v4557, %v4549
        %v5614 = vpack.c.b16 %v4566, %v4558
        %v5615 = vpack.c.b16 %v4567, %v4559
        %v5616 = vpack.c.b16 %v4568, %v4560
        %v5617 = vpack.c.b16 %v4569, %v4561
        %v5618 = vpack.c.b16 %v4570, %v4562
        %v5619 = vpack.c.b16 %v4571, %v4563
        %v5620 = vpack.c.b16 %v4572, %v4564
        %v5621 = vpack.c.b16 %v4573, %v4565
        %v5622 = vpack.c.b16 %v4582, %v4574
        %v5623 = vpack.c.b16 %v4583, %v4575
        %v5624 = vpack.c.b16 %v4584, %v4576
        %v5625 = vpack.c.b16 %v4585, %v4577
        %v5626 = vpack.c.b16 %v4586, %v4578
        %v5627 = vpack.c.b16 %v4587, %v4579
        %v5628 = vpack.c.b16 %v4588, %v4580
        %v5629 = vpack.c.b16 %v4589, %v4581
        %v5630 = vpack.c.b16 %v4598, %v4590
        %v5631 = vpack.c.b16 %v4599, %v4591
        %v5632 = vpack.c.b16 %v4600, %v4592
        %v5633 = vpack.c.b16 %v4601, %v4593
        %v5634 = vpack.c.b16 %v4602, %v4594
        %v5635 = vpack.c.b16 %v4603, %v4595
        %v5636 = vpack.c.b16 %v4604, %v4596
        %v5637 = vpack.c.b16 %v4605, %v4597
        %v5638 = vpack.c.b16 %v4614, %v4606
        %v5639 = vpack.c.b16 %v4615, %v4607
        %v5640 = vpack.c.b16 %v4616, %v4608
        %v5641 = vpack.c.b16 %v4617, %v4609
        %v5642 = vpack.c.b16 %v4618, %v4610
        %v5643 = vpack.c.b16 %v4619, %v4611
        %v5644 = vpack.c.b16 %v4620, %v4612
        %v5645 = vpack.c.b16 %v4621, %v4613
        %6670 = vmatprep.subr.bf16.mxu0 %v4623
        %6671 = vmatpush1.bf16.msra.mxu0 %v4622
        %6672 = vmatprep.subr.bf16.mxu0 %v4631
        %6673 = vmatpush1.bf16.msra.mxu0 %v4630
        %6674 = vmatprep.subr.bf16.mxu0 %v4639
        %6675 = vmatpush1.bf16.msra.mxu0 %v4638
        %6676 = vmatprep.subr.bf16.mxu0 %v4647
        %6677 = vmatpush1.bf16.msra.mxu0 %v4646
        %6678 = vmatprep.subr.bf16.mxu0 %v4655
        %6679 = vmatpush1.bf16.msra.mxu0 %v4654
        %6680 = vmatprep.subr.bf16.mxu0 %v4663
        %6681 = vmatpush1.bf16.msra.mxu0 %v4662
        %6682 = vmatprep.subr.bf16.mxu0 %v4671
        %6683 = vmatpush1.bf16.msra.mxu0 %v4670
        %6684 = vmatprep.subr.bf16.mxu0 %v4679
        %6685 = vmatpush1.bf16.msra.mxu0 %v4678
        %6686 = vmatprep.subr.bf16.mxu0 %v4687
        %6687 = vmatpush1.bf16.msra.mxu0 %v4686
        %6688 = vmatprep.subr.bf16.mxu0 %v4695
        %6689 = vmatpush1.bf16.msra.mxu0 %v4694
        %6690 = vmatprep.subr.bf16.mxu0 %v4703
        %6691 = vmatpush1.bf16.msra.mxu0 %v4702
        %6692 = vmatprep.subr.bf16.mxu0 %v4711
        %6693 = vmatpush1.bf16.msra.mxu0 %v4710
        %6694 = vmatprep.subr.bf16.mxu0 %v4719
        %6695 = vmatpush1.bf16.msra.mxu0 %v4718
        %6696 = vmatprep.subr.bf16.mxu0 %v4727
        %6697 = vmatpush1.bf16.msra.mxu0 %v4726
        %6698 = vmatprep.subr.bf16.mxu0 %v4735
        %6699 = vmatpush1.bf16.msra.mxu0 %v4734
        %6700 = vmatprep.subr.bf16.mxu0 %v4743
        %6701 = vmatpush1.bf16.msra.mxu0 %v4742
        %6702 = vmatprep.mubr.bf16.mxu0 %v511
        %6703 = vmatmul.mubr.bf16.gmra.mrb[0].mxu0 %v510
        %v6704 = vpop.f32.mrb[0].mxu0
        %v6705 = vadd.f32 0.0, %v6704
        %v6706 = vpop.f32.mrb[0].mxu0
        %v6707 = vadd.f32 0.0, %v6706
        %v6708 = vpop.f32.mrb[0].mxu0
        %v6709 = vpop.f32.mrb[0].mxu0
        %6710 = vdwg.mxu0
        %6711 = vmatprep.subr.bf16.mxu0 %v4751
        %6712 = vmatpush1.bf16.msra.mxu0 %v4750
        %6713 = vmatprep.subr.bf16.mxu0 %v4759
        %6714 = vmatpush1.bf16.msra.mxu0 %v4758
        %6715 = vmatprep.subr.bf16.mxu0 %v4767
        %6716 = vmatpush1.bf16.msra.mxu0 %v4766
        %6717 = vmatprep.subr.bf16.mxu0 %v4775
        %6718 = vmatpush1.bf16.msra.mxu0 %v4774
        %6719 = vmatprep.subr.bf16.mxu0 %v4783
        %6720 = vmatpush1.bf16.msra.mxu0 %v4782
        %6721 = vmatprep.subr.bf16.mxu0 %v4791
        %6722 = vmatpush1.bf16.msra.mxu0 %v4790
        %6723 = vmatprep.subr.bf16.mxu0 %v4799
        %6724 = vmatpush1.bf16.msra.mxu0 %v4798
        %6725 = vmatprep.subr.bf16.mxu0 %v4807
        %6726 = vmatpush1.bf16.msra.mxu0 %v4806
        %6727 = vmatprep.subr.bf16.mxu0 %v4815
        %6728 = vmatpush1.bf16.msra.mxu0 %v4814
        %6729 = vmatprep.subr.bf16.mxu0 %v4823
        %6730 = vmatpush1.bf16.msra.mxu0 %v4822
        %6731 = vmatprep.subr.bf16.mxu0 %v4831
        %6732 = vmatpush1.bf16.msra.mxu0 %v4830
        %6733 = vmatprep.subr.bf16.mxu0 %v4839
        %6734 = vmatpush1.bf16.msra.mxu0 %v4838
        %6735 = vmatprep.subr.bf16.mxu0 %v4847
        %6736 = vmatpush1.bf16.msra.mxu0 %v4846
        %6737 = vmatprep.subr.bf16.mxu0 %v4855
        %6738 = vmatpush1.bf16.msra.mxu0 %v4854
        %6739 = vmatprep.subr.bf16.mxu0 %v4863
        %6740 = vmatpush1.bf16.msra.mxu0 %v4862
        %6741 = vmatprep.subr.bf16.mxu0 %v4871
        %6742 = vmatpush1.bf16.msra.mxu0 %v4870
        %6743 = vmatprep.mubr.bf16.mxu0 %v513
        %6744 = vmatmul.mubr.bf16.gmra.mrb[0].mxu0 %v512
        %v6745 = vpop.f32.mrb[0].mxu0
        %v6746 = vadd.f32 %v6705, %v6745
        %v6747 = vpop.f32.mrb[0].mxu0
        %v6748 = vadd.f32 %v6707, %v6747
        %v6749 = vpop.f32.mrb[0].mxu0
        %v6750 = vpop.f32.mrb[0].mxu0
        %6751 = vdwg.mxu0
        %6752 = vmatprep.subr.bf16.mxu0 %v4879
        %6753 = vmatpush1.bf16.msra.mxu0 %v4878
        %6754 = vmatprep.subr.bf16.mxu0 %v4887
        %6755 = vmatpush1.bf16.msra.mxu0 %v4886
        %6756 = vmatprep.subr.bf16.mxu0 %v4895
        %6757 = vmatpush1.bf16.msra.mxu0 %v4894
        %6758 = vmatprep.subr.bf16.mxu0 %v4903
        %6759 = vmatpush1.bf16.msra.mxu0 %v4902
        %6760 = vmatprep.subr.bf16.mxu0 %v4911
        %6761 = vmatpush1.bf16.msra.mxu0 %v4910
        %6762 = vmatprep.subr.bf16.mxu0 %v4919
        %6763 = vmatpush1.bf16.msra.mxu0 %v4918
        %6764 = vmatprep.subr.bf16.mxu0 %v4927
        %6765 = vmatpush1.bf16.msra.mxu0 %v4926
        %6766 = vmatprep.subr.bf16.mxu0 %v4935
        %6767 = vmatpush1.bf16.msra.mxu0 %v4934
        %6768 = vmatprep.subr.bf16.mxu0 %v4943
        %6769 = vmatpush1.bf16.msra.mxu0 %v4942
        %6770 = vmatprep.subr.bf16.mxu0 %v4951
        %6771 = vmatpush1.bf16.msra.mxu0 %v4950
        %6772 = vmatprep.subr.bf16.mxu0 %v4959
        %6773 = vmatpush1.bf16.msra.mxu0 %v4958
        %6774 = vmatprep.subr.bf16.mxu0 %v4967
        %6775 = vmatpush1.bf16.msra.mxu0 %v4966
        %6776 = vmatprep.subr.bf16.mxu0 %v4975
        %6777 = vmatpush1.bf16.msra.mxu0 %v4974
        %6778 = vmatprep.subr.bf16.mxu0 %v4983
        %6779 = vmatpush1.bf16.msra.mxu0 %v4982
        %6780 = vmatprep.subr.bf16.mxu0 %v4991
        %6781 = vmatpush1.bf16.msra.mxu0 %v4990
        %6782 = vmatprep.subr.bf16.mxu0 %v4999
        %6783 = vmatpush1.bf16.msra.mxu0 %v4998
        %6784 = vmatprep.mubr.bf16.mxu0 %v515
        %6785 = vmatmul.mubr.bf16.gmra.mrb[0].mxu0 %v514
        %v6786 = vpop.f32.mrb[0].mxu0
        %v6787 = vadd.f32 %v6746, %v6786
        %v6788 = vpop.f32.mrb[0].mxu0
        %v6789 = vadd.f32 %v6748, %v6788
        %v6790 = vpop.f32.mrb[0].mxu0
        %v6791 = vpop.f32.mrb[0].mxu0
        %6792 = vdwg.mxu0
        %6793 = vmatprep.subr.bf16.mxu0 %v5007
        %6794 = vmatpush1.bf16.msra.mxu0 %v5006
        %6795 = vmatprep.subr.bf16.mxu0 %v5015
        %6796 = vmatpush1.bf16.msra.mxu0 %v5014
        %6797 = vmatprep.subr.bf16.mxu0 %v5023
        %6798 = vmatpush1.bf16.msra.mxu0 %v5022
        %6799 = vmatprep.subr.bf16.mxu0 %v5031
        %6800 = vmatpush1.bf16.msra.mxu0 %v5030
        %6801 = vmatprep.subr.bf16.mxu0 %v5039
        %6802 = vmatpush1.bf16.msra.mxu0 %v5038
        %6803 = vmatprep.subr.bf16.mxu0 %v5047
        %6804 = vmatpush1.bf16.msra.mxu0 %v5046
        %6805 = vmatprep.subr.bf16.mxu0 %v5055
        %6806 = vmatpush1.bf16.msra.mxu0 %v5054
        %6807 = vmatprep.subr.bf16.mxu0 %v5063
        %6808 = vmatpush1.bf16.msra.mxu0 %v5062
        %6809 = vmatprep.subr.bf16.mxu0 %v5071
        %6810 = vmatpush1.bf16.msra.mxu0 %v5070
        %6811 = vmatprep.subr.bf16.mxu0 %v5079
        %6812 = vmatpush1.bf16.msra.mxu0 %v5078
        %6813 = vmatprep.subr.bf16.mxu0 %v5087
        %6814 = vmatpush1.bf16.msra.mxu0 %v5086
        %6815 = vmatprep.subr.bf16.mxu0 %v5095
        %6816 = vmatpush1.bf16.msra.mxu0 %v5094
        %6817 = vmatprep.subr.bf16.mxu0 %v5103
        %6818 = vmatpush1.bf16.msra.mxu0 %v5102
        %6819 = vmatprep.subr.bf16.mxu0 %v5111
        %6820 = vmatpush1.bf16.msra.mxu0 %v5110
        %6821 = vmatprep.subr.bf16.mxu0 %v5119
        %6822 = vmatpush1.bf16.msra.mxu0 %v5118
        %6823 = vmatprep.subr.bf16.mxu0 %v5127
        %6824 = vmatpush1.bf16.msra.mxu0 %v5126
        %6825 = vmatprep.mubr.bf16.mxu0 %v517
        %6826 = vmatmul.mubr.bf16.gmra.mrb[0].mxu0 %v516
        %v6827 = vpop.f32.mrb[0].mxu0
        %v6828 = vadd.f32 %v6787, %v6827
        %v6829 = vpop.f32.mrb[0].mxu0
        %v6830 = vadd.f32 %v6789, %v6829
        %v6831 = vpop.f32.mrb[0].mxu0
        %v6832 = vpop.f32.mrb[0].mxu0
        %6833 = vdwg.mxu0
        %6834 = vmatprep.subr.bf16.mxu0 %v5135
        %6835 = vmatpush1.bf16.msra.mxu0 %v5134
        %6836 = vmatprep.subr.bf16.mxu0 %v5143
        %6837 = vmatpush1.bf16.msra.mxu0 %v5142
        %6838 = vmatprep.subr.bf16.mxu0 %v5151
        %6839 = vmatpush1.bf16.msra.mxu0 %v5150
        %6840 = vmatprep.subr.bf16.mxu0 %v5159
        %6841 = vmatpush1.bf16.msra.mxu0 %v5158
        %6842 = vmatprep.subr.bf16.mxu0 %v5167
        %6843 = vmatpush1.bf16.msra.mxu0 %v5166
        %6844 = vmatprep.subr.bf16.mxu0 %v5175
        %6845 = vmatpush1.bf16.msra.mxu0 %v5174
        %6846 = vmatprep.subr.bf16.mxu0 %v5183
        %6847 = vmatpush1.bf16.msra.mxu0 %v5182
        %6848 = vmatprep.subr.bf16.mxu0 %v5191
        %6849 = vmatpush1.bf16.msra.mxu0 %v5190
        %6850 = vmatprep.subr.bf16.mxu0 %v5199
        %6851 = vmatpush1.bf16.msra.mxu0 %v5198
        %6852 = vmatprep.subr.bf16.mxu0 %v5207
        %6853 = vmatpush1.bf16.msra.mxu0 %v5206
        %6854 = vmatprep.subr.bf16.mxu0 %v5215
        %6855 = vmatpush1.bf16.msra.mxu0 %v5214
        %6856 = vmatprep.subr.bf16.mxu0 %v5223
        %6857 = vmatpush1.bf16.msra.mxu0 %v5222
        %6858 = vmatprep.subr.bf16.mxu0 %v5231
        %6859 = vmatpush1.bf16.msra.mxu0 %v5230
        %6860 = vmatprep.subr.bf16.mxu0 %v5239
        %6861 = vmatpush1.bf16.msra.mxu0 %v5238
        %6862 = vmatprep.subr.bf16.mxu0 %v5247
        %6863 = vmatpush1.bf16.msra.mxu0 %v5246
        %6864 = vmatprep.subr.bf16.mxu0 %v5255
        %6865 = vmatpush1.bf16.msra.mxu0 %v5254
        %6866 = vmatprep.mubr.bf16.mxu0 %v519
        %6867 = vmatmul.mubr.bf16.gmra.mrb[0].mxu0 %v518
        %v6868 = vpop.f32.mrb[0].mxu0
        %v6869 = vadd.f32 %v6828, %v6868
        %v6870 = vpop.f32.mrb[0].mxu0
        %v6871 = vadd.f32 %v6830, %v6870
        %v6872 = vpop.f32.mrb[0].mxu0
        %v6873 = vpop.f32.mrb[0].mxu0
        %6874 = vdwg.mxu0
        %6875 = vmatprep.subr.bf16.mxu0 %v5263
        %6876 = vmatpush1.bf16.msra.mxu0 %v5262
        %6877 = vmatprep.subr.bf16.mxu0 %v5271
        %6878 = vmatpush1.bf16.msra.mxu0 %v5270
        %6879 = vmatprep.subr.bf16.mxu0 %v5279
        %6880 = vmatpush1.bf16.msra.mxu0 %v5278
        %6881 = vmatprep.subr.bf16.mxu0 %v5287
        %6882 = vmatpush1.bf16.msra.mxu0 %v5286
        %6883 = vmatprep.subr.bf16.mxu0 %v5295
        %6884 = vmatpush1.bf16.msra.mxu0 %v5294
        %6885 = vmatprep.subr.bf16.mxu0 %v5303
        %6886 = vmatpush1.bf16.msra.mxu0 %v5302
        %6887 = vmatprep.subr.bf16.mxu0 %v5311
        %6888 = vmatpush1.bf16.msra.mxu0 %v5310
        %6889 = vmatprep.subr.bf16.mxu0 %v5319
        %6890 = vmatpush1.bf16.msra.mxu0 %v5318
        %6891 = vmatprep.subr.bf16.mxu0 %v5327
        %6892 = vmatpush1.bf16.msra.mxu0 %v5326
        %6893 = vmatprep.subr.bf16.mxu0 %v5335
        %6894 = vmatpush1.bf16.msra.mxu0 %v5334
        %6895 = vmatprep.subr.bf16.mxu0 %v5343
        %6896 = vmatpush1.bf16.msra.mxu0 %v5342
        %6897 = vmatprep.subr.bf16.mxu0 %v5351
        %6898 = vmatpush1.bf16.msra.mxu0 %v5350
        %6899 = vmatprep.subr.bf16.mxu0 %v5359
        %6900 = vmatpush1.bf16.msra.mxu0 %v5358
        %6901 = vmatprep.subr.bf16.mxu0 %v5367
        %6902 = vmatpush1.bf16.msra.mxu0 %v5366
        %6903 = vmatprep.subr.bf16.mxu0 %v5375
        %6904 = vmatpush1.bf16.msra.mxu0 %v5374
        %6905 = vmatprep.subr.bf16.mxu0 %v5383
        %6906 = vmatpush1.bf16.msra.mxu0 %v5382
        %6907 = vmatprep.mubr.bf16.mxu0 %v521
        %6908 = vmatmul.mubr.bf16.gmra.mrb[0].mxu0 %v520
        %v6909 = vpop.f32.mrb[0].mxu0
        %v6910 = vadd.f32 %v6869, %v6909
        %v6911 = vpop.f32.mrb[0].mxu0
        %v6912 = vadd.f32 %v6871, %v6911
        %v6913 = vpop.f32.mrb[0].mxu0
        %v6914 = vpop.f32.mrb[0].mxu0
        %6915 = vdwg.mxu0
        %6916 = vmatprep.subr.bf16.mxu0 %v5391
        %6917 = vmatpush1.bf16.msra.mxu0 %v5390
        %6918 = vmatprep.subr.bf16.mxu0 %v5399
        %6919 = vmatpush1.bf16.msra.mxu0 %v5398
        %6920 = vmatprep.subr.bf16.mxu0 %v5407
        %6921 = vmatpush1.bf16.msra.mxu0 %v5406
        %6922 = vmatprep.subr.bf16.mxu0 %v5415
        %6923 = vmatpush1.bf16.msra.mxu0 %v5414
        %6924 = vmatprep.subr.bf16.mxu0 %v5423
        %6925 = vmatpush1.bf16.msra.mxu0 %v5422
        %6926 = vmatprep.subr.bf16.mxu0 %v5431
        %6927 = vmatpush1.bf16.msra.mxu0 %v5430
        %6928 = vmatprep.subr.bf16.mxu0 %v5439
        %6929 = vmatpush1.bf16.msra.mxu0 %v5438
        %6930 = vmatprep.subr.bf16.mxu0 %v5447
        %6931 = vmatpush1.bf16.msra.mxu0 %v5446
        %6932 = vmatprep.subr.bf16.mxu0 %v5455
        %6933 = vmatpush1.bf16.msra.mxu0 %v5454
        %6934 = vmatprep.subr.bf16.mxu0 %v5463
        %6935 = vmatpush1.bf16.msra.mxu0 %v5462
        %6936 = vmatprep.subr.bf16.mxu0 %v5471
        %6937 = vmatpush1.bf16.msra.mxu0 %v5470
        %6938 = vmatprep.subr.bf16.mxu0 %v5479
        %6939 = vmatpush1.bf16.msra.mxu0 %v5478
        %6940 = vmatprep.subr.bf16.mxu0 %v5487
        %6941 = vmatpush1.bf16.msra.mxu0 %v5486
        %6942 = vmatprep.subr.bf16.mxu0 %v5495
        %6943 = vmatpush1.bf16.msra.mxu0 %v5494
        %6944 = vmatprep.subr.bf16.mxu0 %v5503
        %6945 = vmatpush1.bf16.msra.mxu0 %v5502
        %6946 = vmatprep.subr.bf16.mxu0 %v5511
        %6947 = vmatpush1.bf16.msra.mxu0 %v5510
        %6948 = vmatprep.mubr.bf16.mxu0 %v523
        %6949 = vmatmul.mubr.bf16.gmra.mrb[0].mxu0 %v522
        %v6950 = vpop.f32.mrb[0].mxu0
        %v6951 = vadd.f32 %v6910, %v6950
        %v6952 = vpop.f32.mrb[0].mxu0
        %v6953 = vadd.f32 %v6912, %v6952
        %v6954 = vpop.f32.mrb[0].mxu0
        %v6955 = vpop.f32.mrb[0].mxu0
        %6956 = vdwg.mxu0
        %6957 = vmatprep.subr.bf16.mxu0 %v5519
        %6958 = vmatpush1.bf16.msra.mxu0 %v5518
        %6959 = vmatprep.subr.bf16.mxu0 %v5527
        %6960 = vmatpush1.bf16.msra.mxu0 %v5526
        %6961 = vmatprep.subr.bf16.mxu0 %v5535
        %6962 = vmatpush1.bf16.msra.mxu0 %v5534
        %6963 = vmatprep.subr.bf16.mxu0 %v5543
        %6964 = vmatpush1.bf16.msra.mxu0 %v5542
        %6965 = vmatprep.subr.bf16.mxu0 %v5551
        %6966 = vmatpush1.bf16.msra.mxu0 %v5550
        %6967 = vmatprep.subr.bf16.mxu0 %v5559
        %6968 = vmatpush1.bf16.msra.mxu0 %v5558
        %6969 = vmatprep.subr.bf16.mxu0 %v5567
        %6970 = vmatpush1.bf16.msra.mxu0 %v5566
        %6971 = vmatprep.subr.bf16.mxu0 %v5575
        %6972 = vmatpush1.bf16.msra.mxu0 %v5574
        %6973 = vmatprep.subr.bf16.mxu0 %v5583
        %6974 = vmatpush1.bf16.msra.mxu0 %v5582
        %6975 = vmatprep.subr.bf16.mxu0 %v5591
        %6976 = vmatpush1.bf16.msra.mxu0 %v5590
        %6977 = vmatprep.subr.bf16.mxu0 %v5599
        %6978 = vmatpush1.bf16.msra.mxu0 %v5598
        %6979 = vmatprep.subr.bf16.mxu0 %v5607
        %6980 = vmatpush1.bf16.msra.mxu0 %v5606
        %6981 = vmatprep.subr.bf16.mxu0 %v5615
        %6982 = vmatpush1.bf16.msra.mxu0 %v5614
        %6983 = vmatprep.subr.bf16.mxu0 %v5623
        %6984 = vmatpush1.bf16.msra.mxu0 %v5622
        %6985 = vmatprep.subr.bf16.mxu0 %v5631
        %6986 = vmatpush1.bf16.msra.mxu0 %v5630
        %6987 = vmatprep.subr.bf16.mxu0 %v5639
        %6988 = vmatpush1.bf16.msra.mxu0 %v5638
        %6989 = vmatprep.mubr.bf16.mxu0 %v525
        %6990 = vmatmul.mubr.bf16.gmra.mrb[0].mxu0 %v524
        %v6991 = vpop.f32.mrb[0].mxu0
        %v6992 = vadd.f32 %v6951, %v6991
        %v6993 = vpop.f32.mrb[0].mxu0
        %v6994 = vadd.f32 %v6953, %v6993
        %v6995 = vpop.f32.mrb[0].mxu0
        %v6996 = vpop.f32.mrb[0].mxu0
        %6997 = vdwg.mxu0
        %6998 = vmatprep.subr.bf16.mxu0 %v4625
        %6999 = vmatpush1.bf16.msra.mxu0 %v4624
        %7000 = vmatprep.subr.bf16.mxu0 %v4633
        %7001 = vmatpush1.bf16.msra.mxu0 %v4632
        %7002 = vmatprep.subr.bf16.mxu0 %v4641
        %7003 = vmatpush1.bf16.msra.mxu0 %v4640
        %7004 = vmatprep.subr.bf16.mxu0 %v4649
        %7005 = vmatpush1.bf16.msra.mxu0 %v4648
        %7006 = vmatprep.subr.bf16.mxu0 %v4657
        %7007 = vmatpush1.bf16.msra.mxu0 %v4656
        %7008 = vmatprep.subr.bf16.mxu0 %v4665
        %7009 = vmatpush1.bf16.msra.mxu0 %v4664
        %7010 = vmatprep.subr.bf16.mxu0 %v4673
        %7011 = vmatpush1.bf16.msra.mxu0 %v4672
        %7012 = vmatprep.subr.bf16.mxu0 %v4681
        %7013 = vmatpush1.bf16.msra.mxu0 %v4680
        %7014 = vmatprep.subr.bf16.mxu0 %v4689
        %7015 = vmatpush1.bf16.msra.mxu0 %v4688
        %7016 = vmatprep.subr.bf16.mxu0 %v4697
        %7017 = vmatpush1.bf16.msra.mxu0 %v4696
        %7018 = vmatprep.subr.bf16.mxu0 %v4705
        %7019 = vmatpush1.bf16.msra.mxu0 %v4704
        %7020 = vmatprep.subr.bf16.mxu0 %v4713
        %7021 = vmatpush1.bf16.msra.mxu0 %v4712
        %7022 = vmatprep.subr.bf16.mxu0 %v4721
        %7023 = vmatpush1.bf16.msra.mxu0 %v4720
        %7024 = vmatprep.subr.bf16.mxu0 %v4729
        %7025 = vmatpush1.bf16.msra.mxu0 %v4728
        %7026 = vmatprep.subr.bf16.mxu0 %v4737
        %7027 = vmatpush1.bf16.msra.mxu0 %v4736
        %7028 = vmatprep.subr.bf16.mxu0 %v4745
        %7029 = vmatpush1.bf16.msra.mxu0 %v4744
        %7030 = vmatprep.mubr.bf16.mxu0 %v511
        %7031 = vmatmul.mubr.bf16.gmra.mrb[0].mxu0 %v510
        %v7032 = vpop.f32.mrb[0].mxu0
        %v7033 = vadd.f32 0.0, %v7032
        %v7034 = vpop.f32.mrb[0].mxu0
        %v7035 = vadd.f32 0.0, %v7034
        %v7036 = vpop.f32.mrb[0].mxu0
        %v7037 = vpop.f32.mrb[0].mxu0
        %7038 = vdwg.mxu0
        %7039 = vmatprep.subr.bf16.mxu0 %v4753
        %7040 = vmatpush1.bf16.msra.mxu0 %v4752
        %7041 = vmatprep.subr.bf16.mxu0 %v4761
        %7042 = vmatpush1.bf16.msra.mxu0 %v4760
        %7043 = vmatprep.subr.bf16.mxu0 %v4769
        %7044 = vmatpush1.bf16.msra.mxu0 %v4768
        %7045 = vmatprep.subr.bf16.mxu0 %v4777
        %7046 = vmatpush1.bf16.msra.mxu0 %v4776
        %7047 = vmatprep.subr.bf16.mxu0 %v4785
        %7048 = vmatpush1.bf16.msra.mxu0 %v4784
        %7049 = vmatprep.subr.bf16.mxu0 %v4793
        %7050 = vmatpush1.bf16.msra.mxu0 %v4792
        %7051 = vmatprep.subr.bf16.mxu0 %v4801
        %7052 = vmatpush1.bf16.msra.mxu0 %v4800
        %7053 = vmatprep.subr.bf16.mxu0 %v4809
        %7054 = vmatpush1.bf16.msra.mxu0 %v4808
        %7055 = vmatprep.subr.bf16.mxu0 %v4817
        %7056 = vmatpush1.bf16.msra.mxu0 %v4816
        %7057 = vmatprep.subr.bf16.mxu0 %v4825
        %7058 = vmatpush1.bf16.msra.mxu0 %v4824
        %7059 = vmatprep.subr.bf16.mxu0 %v4833
        %7060 = vmatpush1.bf16.msra.mxu0 %v4832
        %7061 = vmatprep.subr.bf16.mxu0 %v4841
        %7062 = vmatpush1.bf16.msra.mxu0 %v4840
        %7063 = vmatprep.subr.bf16.mxu0 %v4849
        %7064 = vmatpush1.bf16.msra.mxu0 %v4848
        %7065 = vmatprep.subr.bf16.mxu0 %v4857
        %7066 = vmatpush1.bf16.msra.mxu0 %v4856
        %7067 = vmatprep.subr.bf16.mxu0 %v4865
        %7068 = vmatpush1.bf16.msra.mxu0 %v4864
        %7069 = vmatprep.subr.bf16.mxu0 %v4873
        %7070 = vmatpush1.bf16.msra.mxu0 %v4872
        %7071 = vmatprep.mubr.bf16.mxu0 %v513
        %7072 = vmatmul.mubr.bf16.gmra.mrb[0].mxu0 %v512
        %v7073 = vpop.f32.mrb[0].mxu0
        %v7074 = vadd.f32 %v7033, %v7073
        %v7075 = vpop.f32.mrb[0].mxu0
        %v7076 = vadd.f32 %v7035, %v7075
        %v7077 = vpop.f32.mrb[0].mxu0
        %v7078 = vpop.f32.mrb[0].mxu0
        %7079 = vdwg.mxu0
        %7080 = vmatprep.subr.bf16.mxu0 %v4881
        %7081 = vmatpush1.bf16.msra.mxu0 %v4880
        %7082 = vmatprep.subr.bf16.mxu0 %v4889
        %7083 = vmatpush1.bf16.msra.mxu0 %v4888
        %7084 = vmatprep.subr.bf16.mxu0 %v4897
        %7085 = vmatpush1.bf16.msra.mxu0 %v4896
        %7086 = vmatprep.subr.bf16.mxu0 %v4905
        %7087 = vmatpush1.bf16.msra.mxu0 %v4904
        %7088 = vmatprep.subr.bf16.mxu0 %v4913
        %7089 = vmatpush1.bf16.msra.mxu0 %v4912
        %7090 = vmatprep.subr.bf16.mxu0 %v4921
        %7091 = vmatpush1.bf16.msra.mxu0 %v4920
        %7092 = vmatprep.subr.bf16.mxu0 %v4929
        %7093 = vmatpush1.bf16.msra.mxu0 %v4928
        %7094 = vmatprep.subr.bf16.mxu0 %v4937
        %7095 = vmatpush1.bf16.msra.mxu0 %v4936
        %7096 = vmatprep.subr.bf16.mxu0 %v4945
        %7097 = vmatpush1.bf16.msra.mxu0 %v4944
        %7098 = vmatprep.subr.bf16.mxu0 %v4953
        %7099 = vmatpush1.bf16.msra.mxu0 %v4952
        %7100 = vmatprep.subr.bf16.mxu0 %v4961
        %7101 = vmatpush1.bf16.msra.mxu0 %v4960
        %7102 = vmatprep.subr.bf16.mxu0 %v4969
        %7103 = vmatpush1.bf16.msra.mxu0 %v4968
        %7104 = vmatprep.subr.bf16.mxu0 %v4977
        %7105 = vmatpush1.bf16.msra.mxu0 %v4976
        %7106 = vmatprep.subr.bf16.mxu0 %v4985
        %7107 = vmatpush1.bf16.msra.mxu0 %v4984
        %7108 = vmatprep.subr.bf16.mxu0 %v4993
        %7109 = vmatpush1.bf16.msra.mxu0 %v4992
        %7110 = vmatprep.subr.bf16.mxu0 %v5001
        %7111 = vmatpush1.bf16.msra.mxu0 %v5000
        %7112 = vmatprep.mubr.bf16.mxu0 %v515
        %7113 = vmatmul.mubr.bf16.gmra.mrb[0].mxu0 %v514
        %v7114 = vpop.f32.mrb[0].mxu0
        %v7115 = vadd.f32 %v7074, %v7114
        %v7116 = vpop.f32.mrb[0].mxu0
        %v7117 = vadd.f32 %v7076, %v7116
        %v7118 = vpop.f32.mrb[0].mxu0
        %v7119 = vpop.f32.mrb[0].mxu0
        %7120 = vdwg.mxu0
        %7121 = vmatprep.subr.bf16.mxu0 %v5009
        %7122 = vmatpush1.bf16.msra.mxu0 %v5008
        %7123 = vmatprep.subr.bf16.mxu0 %v5017
        %7124 = vmatpush1.bf16.msra.mxu0 %v5016
        %7125 = vmatprep.subr.bf16.mxu0 %v5025
        %7126 = vmatpush1.bf16.msra.mxu0 %v5024
        %7127 = vmatprep.subr.bf16.mxu0 %v5033
        %7128 = vmatpush1.bf16.msra.mxu0 %v5032
        %7129 = vmatprep.subr.bf16.mxu0 %v5041
        %7130 = vmatpush1.bf16.msra.mxu0 %v5040
        %7131 = vmatprep.subr.bf16.mxu0 %v5049
        %7132 = vmatpush1.bf16.msra.mxu0 %v5048
        %7133 = vmatprep.subr.bf16.mxu0 %v5057
        %7134 = vmatpush1.bf16.msra.mxu0 %v5056
        %7135 = vmatprep.subr.bf16.mxu0 %v5065
        %7136 = vmatpush1.bf16.msra.mxu0 %v5064
        %7137 = vmatprep.subr.bf16.mxu0 %v5073
        %7138 = vmatpush1.bf16.msra.mxu0 %v5072
        %7139 = vmatprep.subr.bf16.mxu0 %v5081
        %7140 = vmatpush1.bf16.msra.mxu0 %v5080
        %7141 = vmatprep.subr.bf16.mxu0 %v5089
        %7142 = vmatpush1.bf16.msra.mxu0 %v5088
        %7143 = vmatprep.subr.bf16.mxu0 %v5097
        %7144 = vmatpush1.bf16.msra.mxu0 %v5096
        %7145 = vmatprep.subr.bf16.mxu0 %v5105
        %7146 = vmatpush1.bf16.msra.mxu0 %v5104
        %7147 = vmatprep.subr.bf16.mxu0 %v5113
        %7148 = vmatpush1.bf16.msra.mxu0 %v5112
        %7149 = vmatprep.subr.bf16.mxu0 %v5121
        %7150 = vmatpush1.bf16.msra.mxu0 %v5120
        %7151 = vmatprep.subr.bf16.mxu0 %v5129
        %7152 = vmatpush1.bf16.msra.mxu0 %v5128
        %7153 = vmatprep.mubr.bf16.mxu0 %v517
        %7154 = vmatmul.mubr.bf16.gmra.mrb[0].mxu0 %v516
        %v7155 = vpop.f32.mrb[0].mxu0
        %v7156 = vadd.f32 %v7115, %v7155
        %v7157 = vpop.f32.mrb[0].mxu0
        %v7158 = vadd.f32 %v7117, %v7157
        %v7159 = vpop.f32.mrb[0].mxu0
        %v7160 = vpop.f32.mrb[0].mxu0
        %7161 = vdwg.mxu0
        %7162 = vmatprep.subr.bf16.mxu0 %v5137
        %7163 = vmatpush1.bf16.msra.mxu0 %v5136
        %7164 = vmatprep.subr.bf16.mxu0 %v5145
        %7165 = vmatpush1.bf16.msra.mxu0 %v5144
        %7166 = vmatprep.subr.bf16.mxu0 %v5153
        %7167 = vmatpush1.bf16.msra.mxu0 %v5152
        %7168 = vmatprep.subr.bf16.mxu0 %v5161
        %7169 = vmatpush1.bf16.msra.mxu0 %v5160
        %7170 = vmatprep.subr.bf16.mxu0 %v5169
        %7171 = vmatpush1.bf16.msra.mxu0 %v5168
        %7172 = vmatprep.subr.bf16.mxu0 %v5177
        %7173 = vmatpush1.bf16.msra.mxu0 %v5176
        %7174 = vmatprep.subr.bf16.mxu0 %v5185
        %7175 = vmatpush1.bf16.msra.mxu0 %v5184
        %7176 = vmatprep.subr.bf16.mxu0 %v5193
        %7177 = vmatpush1.bf16.msra.mxu0 %v5192
        %7178 = vmatprep.subr.bf16.mxu0 %v5201
        %7179 = vmatpush1.bf16.msra.mxu0 %v5200
        %7180 = vmatprep.subr.bf16.mxu0 %v5209
        %7181 = vmatpush1.bf16.msra.mxu0 %v5208
        %7182 = vmatprep.subr.bf16.mxu0 %v5217
        %7183 = vmatpush1.bf16.msra.mxu0 %v5216
        %7184 = vmatprep.subr.bf16.mxu0 %v5225
        %7185 = vmatpush1.bf16.msra.mxu0 %v5224
        %7186 = vmatprep.subr.bf16.mxu0 %v5233
        %7187 = vmatpush1.bf16.msra.mxu0 %v5232
        %7188 = vmatprep.subr.bf16.mxu0 %v5241
        %7189 = vmatpush1.bf16.msra.mxu0 %v5240
        %7190 = vmatprep.subr.bf16.mxu0 %v5249
        %7191 = vmatpush1.bf16.msra.mxu0 %v5248
        %7192 = vmatprep.subr.bf16.mxu0 %v5257
        %7193 = vmatpush1.bf16.msra.mxu0 %v5256
        %7194 = vmatprep.mubr.bf16.mxu0 %v519
        %7195 = vmatmul.mubr.bf16.gmra.mrb[0].mxu0 %v518
        %v7196 = vpop.f32.mrb[0].mxu0
        %v7197 = vadd.f32 %v7156, %v7196
        %v7198 = vpop.f32.mrb[0].mxu0
        %v7199 = vadd.f32 %v7158, %v7198
        %v7200 = vpop.f32.mrb[0].mxu0
        %v7201 = vpop.f32.mrb[0].mxu0
        %7202 = vdwg.mxu0
        %7203 = vmatprep.subr.bf16.mxu0 %v5265
        %7204 = vmatpush1.bf16.msra.mxu0 %v5264
        %7205 = vmatprep.subr.bf16.mxu0 %v5273
        %7206 = vmatpush1.bf16.msra.mxu0 %v5272
        %7207 = vmatprep.subr.bf16.mxu0 %v5281
        %7208 = vmatpush1.bf16.msra.mxu0 %v5280
        %7209 = vmatprep.subr.bf16.mxu0 %v5289
        %7210 = vmatpush1.bf16.msra.mxu0 %v5288
        %7211 = vmatprep.subr.bf16.mxu0 %v5297
        %7212 = vmatpush1.bf16.msra.mxu0 %v5296
        %7213 = vmatprep.subr.bf16.mxu0 %v5305
        %7214 = vmatpush1.bf16.msra.mxu0 %v5304
        %7215 = vmatprep.subr.bf16.mxu0 %v5313
        %7216 = vmatpush1.bf16.msra.mxu0 %v5312
        %7217 = vmatprep.subr.bf16.mxu0 %v5321
        %7218 = vmatpush1.bf16.msra.mxu0 %v5320
        %7219 = vmatprep.subr.bf16.mxu0 %v5329
        %7220 = vmatpush1.bf16.msra.mxu0 %v5328
        %7221 = vmatprep.subr.bf16.mxu0 %v5337
        %7222 = vmatpush1.bf16.msra.mxu0 %v5336
        %7223 = vmatprep.subr.bf16.mxu0 %v5345
        %7224 = vmatpush1.bf16.msra.mxu0 %v5344
        %7225 = vmatprep.subr.bf16.mxu0 %v5353
        %7226 = vmatpush1.bf16.msra.mxu0 %v5352
        %7227 = vmatprep.subr.bf16.mxu0 %v5361
        %7228 = vmatpush1.bf16.msra.mxu0 %v5360
        %7229 = vmatprep.subr.bf16.mxu0 %v5369
        %7230 = vmatpush1.bf16.msra.mxu0 %v5368
        %7231 = vmatprep.subr.bf16.mxu0 %v5377
        %7232 = vmatpush1.bf16.msra.mxu0 %v5376
        %7233 = vmatprep.subr.bf16.mxu0 %v5385
        %7234 = vmatpush1.bf16.msra.mxu0 %v5384
        %7235 = vmatprep.mubr.bf16.mxu0 %v521
        %7236 = vmatmul.mubr.bf16.gmra.mrb[0].mxu0 %v520
        %v7237 = vpop.f32.mrb[0].mxu0
        %v7238 = vadd.f32 %v7197, %v7237
        %v7239 = vpop.f32.mrb[0].mxu0
        %v7240 = vadd.f32 %v7199, %v7239
        %v7241 = vpop.f32.mrb[0].mxu0
        %v7242 = vpop.f32.mrb[0].mxu0
        %7243 = vdwg.mxu0
        %7244 = vmatprep.subr.bf16.mxu0 %v5393
        %7245 = vmatpush1.bf16.msra.mxu0 %v5392
        %7246 = vmatprep.subr.bf16.mxu0 %v5401
        %7247 = vmatpush1.bf16.msra.mxu0 %v5400
        %7248 = vmatprep.subr.bf16.mxu0 %v5409
        %7249 = vmatpush1.bf16.msra.mxu0 %v5408
        %7250 = vmatprep.subr.bf16.mxu0 %v5417
        %7251 = vmatpush1.bf16.msra.mxu0 %v5416
        %7252 = vmatprep.subr.bf16.mxu0 %v5425
        %7253 = vmatpush1.bf16.msra.mxu0 %v5424
        %7254 = vmatprep.subr.bf16.mxu0 %v5433
        %7255 = vmatpush1.bf16.msra.mxu0 %v5432
        %7256 = vmatprep.subr.bf16.mxu0 %v5441
        %7257 = vmatpush1.bf16.msra.mxu0 %v5440
        %7258 = vmatprep.subr.bf16.mxu0 %v5449
        %7259 = vmatpush1.bf16.msra.mxu0 %v5448
        %7260 = vmatprep.subr.bf16.mxu0 %v5457
        %7261 = vmatpush1.bf16.msra.mxu0 %v5456
        %7262 = vmatprep.subr.bf16.mxu0 %v5465
        %7263 = vmatpush1.bf16.msra.mxu0 %v5464
        %7264 = vmatprep.subr.bf16.mxu0 %v5473
        %7265 = vmatpush1.bf16.msra.mxu0 %v5472
        %7266 = vmatprep.subr.bf16.mxu0 %v5481
        %7267 = vmatpush1.bf16.msra.mxu0 %v5480
        %7268 = vmatprep.subr.bf16.mxu0 %v5489
        %7269 = vmatpush1.bf16.msra.mxu0 %v5488
        %7270 = vmatprep.subr.bf16.mxu0 %v5497
        %7271 = vmatpush1.bf16.msra.mxu0 %v5496
        %7272 = vmatprep.subr.bf16.mxu0 %v5505
        %7273 = vmatpush1.bf16.msra.mxu0 %v5504
        %7274 = vmatprep.subr.bf16.mxu0 %v5513
        %7275 = vmatpush1.bf16.msra.mxu0 %v5512
        %7276 = vmatprep.mubr.bf16.mxu0 %v523
        %7277 = vmatmul.mubr.bf16.gmra.mrb[0].mxu0 %v522
        %v7278 = vpop.f32.mrb[0].mxu0
        %v7279 = vadd.f32 %v7238, %v7278
        %v7280 = vpop.f32.mrb[0].mxu0
        %v7281 = vadd.f32 %v7240, %v7280
        %v7282 = vpop.f32.mrb[0].mxu0
        %v7283 = vpop.f32.mrb[0].mxu0
        %7284 = vdwg.mxu0
        %7285 = vmatprep.subr.bf16.mxu0 %v5521
        %7286 = vmatpush1.bf16.msra.mxu0 %v5520
        %7287 = vmatprep.subr.bf16.mxu0 %v5529
        %7288 = vmatpush1.bf16.msra.mxu0 %v5528
        %7289 = vmatprep.subr.bf16.mxu0 %v5537
        %7290 = vmatpush1.bf16.msra.mxu0 %v5536
        %7291 = vmatprep.subr.bf16.mxu0 %v5545
        %7292 = vmatpush1.bf16.msra.mxu0 %v5544
        %7293 = vmatprep.subr.bf16.mxu0 %v5553
        %7294 = vmatpush1.bf16.msra.mxu0 %v5552
        %7295 = vmatprep.subr.bf16.mxu0 %v5561
        %7296 = vmatpush1.bf16.msra.mxu0 %v5560
        %7297 = vmatprep.subr.bf16.mxu0 %v5569
        %7298 = vmatpush1.bf16.msra.mxu0 %v5568
        %7299 = vmatprep.subr.bf16.mxu0 %v5577
        %7300 = vmatpush1.bf16.msra.mxu0 %v5576
        %7301 = vmatprep.subr.bf16.mxu0 %v5585
        %7302 = vmatpush1.bf16.msra.mxu0 %v5584
        %7303 = vmatprep.subr.bf16.mxu0 %v5593
        %7304 = vmatpush1.bf16.msra.mxu0 %v5592
        %7305 = vmatprep.subr.bf16.mxu0 %v5601
        %7306 = vmatpush1.bf16.msra.mxu0 %v5600
        %7307 = vmatprep.subr.bf16.mxu0 %v5609
        %7308 = vmatpush1.bf16.msra.mxu0 %v5608
        %7309 = vmatprep.subr.bf16.mxu0 %v5617
        %7310 = vmatpush1.bf16.msra.mxu0 %v5616
        %7311 = vmatprep.subr.bf16.mxu0 %v5625
        %7312 = vmatpush1.bf16.msra.mxu0 %v5624
        %7313 = vmatprep.subr.bf16.mxu0 %v5633
        %7314 = vmatpush1.bf16.msra.mxu0 %v5632
        %7315 = vmatprep.subr.bf16.mxu0 %v5641
        %7316 = vmatpush1.bf16.msra.mxu0 %v5640
        %7317 = vmatprep.mubr.bf16.mxu0 %v525
        %7318 = vmatmul.mubr.bf16.gmra.mrb[0].mxu0 %v524
        %v7319 = vpop.f32.mrb[0].mxu0
        %v7320 = vadd.f32 %v7279, %v7319
        %v7321 = vpop.f32.mrb[0].mxu0
        %v7322 = vadd.f32 %v7281, %v7321
        %v7323 = vpop.f32.mrb[0].mxu0
        %v7324 = vpop.f32.mrb[0].mxu0
        %7325 = vdwg.mxu0
        %7326 = vmatprep.subr.bf16.mxu0 %v4627
        %7327 = vmatpush1.bf16.msra.mxu0 %v4626
        %7328 = vmatprep.subr.bf16.mxu0 %v4635
        %7329 = vmatpush1.bf16.msra.mxu0 %v4634
        %7330 = vmatprep.subr.bf16.mxu0 %v4643
        %7331 = vmatpush1.bf16.msra.mxu0 %v4642
        %7332 = vmatprep.subr.bf16.mxu0 %v4651
        %7333 = vmatpush1.bf16.msra.mxu0 %v4650
        %7334 = vmatprep.subr.bf16.mxu0 %v4659
        %7335 = vmatpush1.bf16.msra.mxu0 %v4658
        %7336 = vmatprep.subr.bf16.mxu0 %v4667
        %7337 = vmatpush1.bf16.msra.mxu0 %v4666
        %7338 = vmatprep.subr.bf16.mxu0 %v4675
        %7339 = vmatpush1.bf16.msra.mxu0 %v4674
        %7340 = vmatprep.subr.bf16.mxu0 %v4683
        %7341 = vmatpush1.bf16.msra.mxu0 %v4682
        %7342 = vmatprep.subr.bf16.mxu0 %v4691
        %7343 = vmatpush1.bf16.msra.mxu0 %v4690
        %7344 = vmatprep.subr.bf16.mxu0 %v4699
        %7345 = vmatpush1.bf16.msra.mxu0 %v4698
        %7346 = vmatprep.subr.bf16.mxu0 %v4707
        %7347 = vmatpush1.bf16.msra.mxu0 %v4706
        %7348 = vmatprep.subr.bf16.mxu0 %v4715
        %7349 = vmatpush1.bf16.msra.mxu0 %v4714
        %7350 = vmatprep.subr.bf16.mxu0 %v4723
        %7351 = vmatpush1.bf16.msra.mxu0 %v4722
        %7352 = vmatprep.subr.bf16.mxu0 %v4731
        %7353 = vmatpush1.bf16.msra.mxu0 %v4730
        %7354 = vmatprep.subr.bf16.mxu0 %v4739
        %7355 = vmatpush1.bf16.msra.mxu0 %v4738
        %7356 = vmatprep.subr.bf16.mxu0 %v4747
        %7357 = vmatpush1.bf16.msra.mxu0 %v4746
        %7358 = vmatprep.mubr.bf16.mxu0 %v511
        %7359 = vmatmul.mubr.bf16.gmra.mrb[0].mxu0 %v510
        %v7360 = vpop.f32.mrb[0].mxu0
        %v7361 = vadd.f32 0.0, %v7360
        %v7362 = vpop.f32.mrb[0].mxu0
        %v7363 = vadd.f32 0.0, %v7362
        %v7364 = vpop.f32.mrb[0].mxu0
        %v7365 = vpop.f32.mrb[0].mxu0
        %7366 = vdwg.mxu0
        %7367 = vmatprep.subr.bf16.mxu0 %v4755
        %7368 = vmatpush1.bf16.msra.mxu0 %v4754
        %7369 = vmatprep.subr.bf16.mxu0 %v4763
        %7370 = vmatpush1.bf16.msra.mxu0 %v4762
        %7371 = vmatprep.subr.bf16.mxu0 %v4771
        %7372 = vmatpush1.bf16.msra.mxu0 %v4770
        %7373 = vmatprep.subr.bf16.mxu0 %v4779
        %7374 = vmatpush1.bf16.msra.mxu0 %v4778
        %7375 = vmatprep.subr.bf16.mxu0 %v4787
        %7376 = vmatpush1.bf16.msra.mxu0 %v4786
        %7377 = vmatprep.subr.bf16.mxu0 %v4795
        %7378 = vmatpush1.bf16.msra.mxu0 %v4794
        %7379 = vmatprep.subr.bf16.mxu0 %v4803
        %7380 = vmatpush1.bf16.msra.mxu0 %v4802
        %7381 = vmatprep.subr.bf16.mxu0 %v4811
        %7382 = vmatpush1.bf16.msra.mxu0 %v4810
        %7383 = vmatprep.subr.bf16.mxu0 %v4819
        %7384 = vmatpush1.bf16.msra.mxu0 %v4818
        %7385 = vmatprep.subr.bf16.mxu0 %v4827
        %7386 = vmatpush1.bf16.msra.mxu0 %v4826
        %7387 = vmatprep.subr.bf16.mxu0 %v4835
        %7388 = vmatpush1.bf16.msra.mxu0 %v4834
        %7389 = vmatprep.subr.bf16.mxu0 %v4843
        %7390 = vmatpush1.bf16.msra.mxu0 %v4842
        %7391 = vmatprep.subr.bf16.mxu0 %v4851
        %7392 = vmatpush1.bf16.msra.mxu0 %v4850
        %7393 = vmatprep.subr.bf16.mxu0 %v4859
        %7394 = vmatpush1.bf16.msra.mxu0 %v4858
        %7395 = vmatprep.subr.bf16.mxu0 %v4867
        %7396 = vmatpush1.bf16.msra.mxu0 %v4866
        %7397 = vmatprep.subr.bf16.mxu0 %v4875
        %7398 = vmatpush1.bf16.msra.mxu0 %v4874
        %7399 = vmatprep.mubr.bf16.mxu0 %v513
        %7400 = vmatmul.mubr.bf16.gmra.mrb[0].mxu0 %v512
        %v7401 = vpop.f32.mrb[0].mxu0
        %v7402 = vadd.f32 %v7361, %v7401
        %v7403 = vpop.f32.mrb[0].mxu0
        %v7404 = vadd.f32 %v7363, %v7403
        %v7405 = vpop.f32.mrb[0].mxu0
        %v7406 = vpop.f32.mrb[0].mxu0
        %7407 = vdwg.mxu0
        %7408 = vmatprep.subr.bf16.mxu0 %v4883
        %7409 = vmatpush1.bf16.msra.mxu0 %v4882
        %7410 = vmatprep.subr.bf16.mxu0 %v4891
        %7411 = vmatpush1.bf16.msra.mxu0 %v4890
        %7412 = vmatprep.subr.bf16.mxu0 %v4899
        %7413 = vmatpush1.bf16.msra.mxu0 %v4898
        %7414 = vmatprep.subr.bf16.mxu0 %v4907
        %7415 = vmatpush1.bf16.msra.mxu0 %v4906
        %7416 = vmatprep.subr.bf16.mxu0 %v4915
        %7417 = vmatpush1.bf16.msra.mxu0 %v4914
        %7418 = vmatprep.subr.bf16.mxu0 %v4923
        %7419 = vmatpush1.bf16.msra.mxu0 %v4922
        %7420 = vmatprep.subr.bf16.mxu0 %v4931
        %7421 = vmatpush1.bf16.msra.mxu0 %v4930
        %7422 = vmatprep.subr.bf16.mxu0 %v4939
        %7423 = vmatpush1.bf16.msra.mxu0 %v4938
        %7424 = vmatprep.subr.bf16.mxu0 %v4947
        %7425 = vmatpush1.bf16.msra.mxu0 %v4946
        %7426 = vmatprep.subr.bf16.mxu0 %v4955
        %7427 = vmatpush1.bf16.msra.mxu0 %v4954
        %7428 = vmatprep.subr.bf16.mxu0 %v4963
        %7429 = vmatpush1.bf16.msra.mxu0 %v4962
        %7430 = vmatprep.subr.bf16.mxu0 %v4971
        %7431 = vmatpush1.bf16.msra.mxu0 %v4970
        %7432 = vmatprep.subr.bf16.mxu0 %v4979
        %7433 = vmatpush1.bf16.msra.mxu0 %v4978
        %7434 = vmatprep.subr.bf16.mxu0 %v4987
        %7435 = vmatpush1.bf16.msra.mxu0 %v4986
        %7436 = vmatprep.subr.bf16.mxu0 %v4995
        %7437 = vmatpush1.bf16.msra.mxu0 %v4994
        %7438 = vmatprep.subr.bf16.mxu0 %v5003
        %7439 = vmatpush1.bf16.msra.mxu0 %v5002
        %7440 = vmatprep.mubr.bf16.mxu0 %v515
        %7441 = vmatmul.mubr.bf16.gmra.mrb[0].mxu0 %v514
        %v7442 = vpop.f32.mrb[0].mxu0
        %v7443 = vadd.f32 %v7402, %v7442
        %v7444 = vpop.f32.mrb[0].mxu0
        %v7445 = vadd.f32 %v7404, %v7444
        %v7446 = vpop.f32.mrb[0].mxu0
        %v7447 = vpop.f32.mrb[0].mxu0
        %7448 = vdwg.mxu0
        %7449 = vmatprep.subr.bf16.mxu0 %v5011
        %7450 = vmatpush1.bf16.msra.mxu0 %v5010
        %7451 = vmatprep.subr.bf16.mxu0 %v5019
        %7452 = vmatpush1.bf16.msra.mxu0 %v5018
        %7453 = vmatprep.subr.bf16.mxu0 %v5027
        %7454 = vmatpush1.bf16.msra.mxu0 %v5026
        %7455 = vmatprep.subr.bf16.mxu0 %v5035
        %7456 = vmatpush1.bf16.msra.mxu0 %v5034
        %7457 = vmatprep.subr.bf16.mxu0 %v5043
        %7458 = vmatpush1.bf16.msra.mxu0 %v5042
        %7459 = vmatprep.subr.bf16.mxu0 %v5051
        %7460 = vmatpush1.bf16.msra.mxu0 %v5050
        %7461 = vmatprep.subr.bf16.mxu0 %v5059
        %7462 = vmatpush1.bf16.msra.mxu0 %v5058
        %7463 = vmatprep.subr.bf16.mxu0 %v5067
        %7464 = vmatpush1.bf16.msra.mxu0 %v5066
        %7465 = vmatprep.subr.bf16.mxu0 %v5075
        %7466 = vmatpush1.bf16.msra.mxu0 %v5074
        %7467 = vmatprep.subr.bf16.mxu0 %v5083
        %7468 = vmatpush1.bf16.msra.mxu0 %v5082
        %7469 = vmatprep.subr.bf16.mxu0 %v5091
        %7470 = vmatpush1.bf16.msra.mxu0 %v5090
        %7471 = vmatprep.subr.bf16.mxu0 %v5099
        %7472 = vmatpush1.bf16.msra.mxu0 %v5098
        %7473 = vmatprep.subr.bf16.mxu0 %v5107
        %7474 = vmatpush1.bf16.msra.mxu0 %v5106
        %7475 = vmatprep.subr.bf16.mxu0 %v5115
        %7476 = vmatpush1.bf16.msra.mxu0 %v5114
        %7477 = vmatprep.subr.bf16.mxu0 %v5123
        %7478 = vmatpush1.bf16.msra.mxu0 %v5122
        %7479 = vmatprep.subr.bf16.mxu0 %v5131
        %7480 = vmatpush1.bf16.msra.mxu0 %v5130
        %7481 = vmatprep.mubr.bf16.mxu0 %v517
        %7482 = vmatmul.mubr.bf16.gmra.mrb[0].mxu0 %v516
        %v7483 = vpop.f32.mrb[0].mxu0
        %v7484 = vadd.f32 %v7443, %v7483
        %v7485 = vpop.f32.mrb[0].mxu0
        %v7486 = vadd.f32 %v7445, %v7485
        %v7487 = vpop.f32.mrb[0].mxu0
        %v7488 = vpop.f32.mrb[0].mxu0
        %7489 = vdwg.mxu0
        %7490 = vmatprep.subr.bf16.mxu0 %v5139
        %7491 = vmatpush1.bf16.msra.mxu0 %v5138
        %7492 = vmatprep.subr.bf16.mxu0 %v5147
        %7493 = vmatpush1.bf16.msra.mxu0 %v5146
        %7494 = vmatprep.subr.bf16.mxu0 %v5155
        %7495 = vmatpush1.bf16.msra.mxu0 %v5154
        %7496 = vmatprep.subr.bf16.mxu0 %v5163
        %7497 = vmatpush1.bf16.msra.mxu0 %v5162
        %7498 = vmatprep.subr.bf16.mxu0 %v5171
        %7499 = vmatpush1.bf16.msra.mxu0 %v5170
        %7500 = vmatprep.subr.bf16.mxu0 %v5179
        %7501 = vmatpush1.bf16.msra.mxu0 %v5178
        %7502 = vmatprep.subr.bf16.mxu0 %v5187
        %7503 = vmatpush1.bf16.msra.mxu0 %v5186
        %7504 = vmatprep.subr.bf16.mxu0 %v5195
        %7505 = vmatpush1.bf16.msra.mxu0 %v5194
        %7506 = vmatprep.subr.bf16.mxu0 %v5203
        %7507 = vmatpush1.bf16.msra.mxu0 %v5202
        %7508 = vmatprep.subr.bf16.mxu0 %v5211
        %7509 = vmatpush1.bf16.msra.mxu0 %v5210
        %7510 = vmatprep.subr.bf16.mxu0 %v5219
        %7511 = vmatpush1.bf16.msra.mxu0 %v5218
        %7512 = vmatprep.subr.bf16.mxu0 %v5227
        %7513 = vmatpush1.bf16.msra.mxu0 %v5226
        %7514 = vmatprep.subr.bf16.mxu0 %v5235
        %7515 = vmatpush1.bf16.msra.mxu0 %v5234
        %7516 = vmatprep.subr.bf16.mxu0 %v5243
        %7517 = vmatpush1.bf16.msra.mxu0 %v5242
        %7518 = vmatprep.subr.bf16.mxu0 %v5251
        %7519 = vmatpush1.bf16.msra.mxu0 %v5250
        %7520 = vmatprep.subr.bf16.mxu0 %v5259
        %7521 = vmatpush1.bf16.msra.mxu0 %v5258
        %7522 = vmatprep.mubr.bf16.mxu0 %v519
        %7523 = vmatmul.mubr.bf16.gmra.mrb[0].mxu0 %v518
        %v7524 = vpop.f32.mrb[0].mxu0
        %v7525 = vadd.f32 %v7484, %v7524
        %v7526 = vpop.f32.mrb[0].mxu0
        %v7527 = vadd.f32 %v7486, %v7526
        %v7528 = vpop.f32.mrb[0].mxu0
        %v7529 = vpop.f32.mrb[0].mxu0
        %7530 = vdwg.mxu0
        %7531 = vmatprep.subr.bf16.mxu0 %v5267
        %7532 = vmatpush1.bf16.msra.mxu0 %v5266
        %7533 = vmatprep.subr.bf16.mxu0 %v5275
        %7534 = vmatpush1.bf16.msra.mxu0 %v5274
        %7535 = vmatprep.subr.bf16.mxu0 %v5283
        %7536 = vmatpush1.bf16.msra.mxu0 %v5282
        %7537 = vmatprep.subr.bf16.mxu0 %v5291
        %7538 = vmatpush1.bf16.msra.mxu0 %v5290
        %7539 = vmatprep.subr.bf16.mxu0 %v5299
        %7540 = vmatpush1.bf16.msra.mxu0 %v5298
        %7541 = vmatprep.subr.bf16.mxu0 %v5307
        %7542 = vmatpush1.bf16.msra.mxu0 %v5306
        %7543 = vmatprep.subr.bf16.mxu0 %v5315
        %7544 = vmatpush1.bf16.msra.mxu0 %v5314
        %7545 = vmatprep.subr.bf16.mxu0 %v5323
        %7546 = vmatpush1.bf16.msra.mxu0 %v5322
        %7547 = vmatprep.subr.bf16.mxu0 %v5331
        %7548 = vmatpush1.bf16.msra.mxu0 %v5330
        %7549 = vmatprep.subr.bf16.mxu0 %v5339
        %7550 = vmatpush1.bf16.msra.mxu0 %v5338
        %7551 = vmatprep.subr.bf16.mxu0 %v5347
        %7552 = vmatpush1.bf16.msra.mxu0 %v5346
        %7553 = vmatprep.subr.bf16.mxu0 %v5355
        %7554 = vmatpush1.bf16.msra.mxu0 %v5354
        %7555 = vmatprep.subr.bf16.mxu0 %v5363
        %7556 = vmatpush1.bf16.msra.mxu0 %v5362
        %7557 = vmatprep.subr.bf16.mxu0 %v5371
        %7558 = vmatpush1.bf16.msra.mxu0 %v5370
        %7559 = vmatprep.subr.bf16.mxu0 %v5379
        %7560 = vmatpush1.bf16.msra.mxu0 %v5378
        %7561 = vmatprep.subr.bf16.mxu0 %v5387
        %7562 = vmatpush1.bf16.msra.mxu0 %v5386
        %7563 = vmatprep.mubr.bf16.mxu0 %v521
        %7564 = vmatmul.mubr.bf16.gmra.mrb[0].mxu0 %v520
        %v7565 = vpop.f32.mrb[0].mxu0
        %v7566 = vadd.f32 %v7525, %v7565
        %v7567 = vpop.f32.mrb[0].mxu0
        %v7568 = vadd.f32 %v7527, %v7567
        %v7569 = vpop.f32.mrb[0].mxu0
        %v7570 = vpop.f32.mrb[0].mxu0
        %7571 = vdwg.mxu0
        %7572 = vmatprep.subr.bf16.mxu0 %v5395
        %7573 = vmatpush1.bf16.msra.mxu0 %v5394
        %7574 = vmatprep.subr.bf16.mxu0 %v5403
        %7575 = vmatpush1.bf16.msra.mxu0 %v5402
        %7576 = vmatprep.subr.bf16.mxu0 %v5411
        %7577 = vmatpush1.bf16.msra.mxu0 %v5410
        %7578 = vmatprep.subr.bf16.mxu0 %v5419
        %7579 = vmatpush1.bf16.msra.mxu0 %v5418
        %7580 = vmatprep.subr.bf16.mxu0 %v5427
        %7581 = vmatpush1.bf16.msra.mxu0 %v5426
        %7582 = vmatprep.subr.bf16.mxu0 %v5435
        %7583 = vmatpush1.bf16.msra.mxu0 %v5434
        %7584 = vmatprep.subr.bf16.mxu0 %v5443
        %7585 = vmatpush1.bf16.msra.mxu0 %v5442
        %7586 = vmatprep.subr.bf16.mxu0 %v5451
        %7587 = vmatpush1.bf16.msra.mxu0 %v5450
        %7588 = vmatprep.subr.bf16.mxu0 %v5459
        %7589 = vmatpush1.bf16.msra.mxu0 %v5458
        %7590 = vmatprep.subr.bf16.mxu0 %v5467
        %7591 = vmatpush1.bf16.msra.mxu0 %v5466
        %7592 = vmatprep.subr.bf16.mxu0 %v5475
        %7593 = vmatpush1.bf16.msra.mxu0 %v5474
        %7594 = vmatprep.subr.bf16.mxu0 %v5483
        %7595 = vmatpush1.bf16.msra.mxu0 %v5482
        %7596 = vmatprep.subr.bf16.mxu0 %v5491
        %7597 = vmatpush1.bf16.msra.mxu0 %v5490
        %7598 = vmatprep.subr.bf16.mxu0 %v5499
        %7599 = vmatpush1.bf16.msra.mxu0 %v5498
        %7600 = vmatprep.subr.bf16.mxu0 %v5507
        %7601 = vmatpush1.bf16.msra.mxu0 %v5506
        %7602 = vmatprep.subr.bf16.mxu0 %v5515
        %7603 = vmatpush1.bf16.msra.mxu0 %v5514
        %7604 = vmatprep.mubr.bf16.mxu0 %v523
        %7605 = vmatmul.mubr.bf16.gmra.mrb[0].mxu0 %v522
        %v7606 = vpop.f32.mrb[0].mxu0
        %v7607 = vadd.f32 %v7566, %v7606
        %v7608 = vpop.f32.mrb[0].mxu0
        %v7609 = vadd.f32 %v7568, %v7608
        %v7610 = vpop.f32.mrb[0].mxu0
        %v7611 = vpop.f32.mrb[0].mxu0
        %7612 = vdwg.mxu0
        %7613 = vmatprep.subr.bf16.mxu0 %v5523
        %7614 = vmatpush1.bf16.msra.mxu0 %v5522
        %7615 = vmatprep.subr.bf16.mxu0 %v5531
        %7616 = vmatpush1.bf16.msra.mxu0 %v5530
        %7617 = vmatprep.subr.bf16.mxu0 %v5539
        %7618 = vmatpush1.bf16.msra.mxu0 %v5538
        %7619 = vmatprep.subr.bf16.mxu0 %v5547
        %7620 = vmatpush1.bf16.msra.mxu0 %v5546
        %7621 = vmatprep.subr.bf16.mxu0 %v5555
        %7622 = vmatpush1.bf16.msra.mxu0 %v5554
        %7623 = vmatprep.subr.bf16.mxu0 %v5563
        %7624 = vmatpush1.bf16.msra.mxu0 %v5562
        %7625 = vmatprep.subr.bf16.mxu0 %v5571
        %7626 = vmatpush1.bf16.msra.mxu0 %v5570
        %7627 = vmatprep.subr.bf16.mxu0 %v5579
        %7628 = vmatpush1.bf16.msra.mxu0 %v5578
        %7629 = vmatprep.subr.bf16.mxu0 %v5587
        %7630 = vmatpush1.bf16.msra.mxu0 %v5586
        %7631 = vmatprep.subr.bf16.mxu0 %v5595
        %7632 = vmatpush1.bf16.msra.mxu0 %v5594
        %7633 = vmatprep.subr.bf16.mxu0 %v5603
        %7634 = vmatpush1.bf16.msra.mxu0 %v5602
        %7635 = vmatprep.subr.bf16.mxu0 %v5611
        %7636 = vmatpush1.bf16.msra.mxu0 %v5610
        %7637 = vmatprep.subr.bf16.mxu0 %v5619
        %7638 = vmatpush1.bf16.msra.mxu0 %v5618
        %7639 = vmatprep.subr.bf16.mxu0 %v5627
        %7640 = vmatpush1.bf16.msra.mxu0 %v5626
        %7641 = vmatprep.subr.bf16.mxu0 %v5635
        %7642 = vmatpush1.bf16.msra.mxu0 %v5634
        %7643 = vmatprep.subr.bf16.mxu0 %v5643
        %7644 = vmatpush1.bf16.msra.mxu0 %v5642
        %7645 = vmatprep.mubr.bf16.mxu0 %v525
        %7646 = vmatmul.mubr.bf16.gmra.mrb[0].mxu0 %v524
        %v7647 = vpop.f32.mrb[0].mxu0
        %v7648 = vadd.f32 %v7607, %v7647
        %v7649 = vpop.f32.mrb[0].mxu0
        %v7650 = vadd.f32 %v7609, %v7649
        %v7651 = vpop.f32.mrb[0].mxu0
        %v7652 = vpop.f32.mrb[0].mxu0
        %7653 = vdwg.mxu0
        %7654 = vmatprep.subr.bf16.mxu0 %v4629
        %7655 = vmatpush1.bf16.msra.mxu0 %v4628
        %7656 = vmatprep.subr.bf16.mxu0 %v4637
        %7657 = vmatpush1.bf16.msra.mxu0 %v4636
        %7658 = vmatprep.subr.bf16.mxu0 %v4645
        %7659 = vmatpush1.bf16.msra.mxu0 %v4644
        %7660 = vmatprep.subr.bf16.mxu0 %v4653
        %7661 = vmatpush1.bf16.msra.mxu0 %v4652
        %7662 = vmatprep.subr.bf16.mxu0 %v4661
        %7663 = vmatpush1.bf16.msra.mxu0 %v4660
        %7664 = vmatprep.subr.bf16.mxu0 %v4669
        %7665 = vmatpush1.bf16.msra.mxu0 %v4668
        %7666 = vmatprep.subr.bf16.mxu0 %v4677
        %7667 = vmatpush1.bf16.msra.mxu0 %v4676
        %7668 = vmatprep.subr.bf16.mxu0 %v4685
        %7669 = vmatpush1.bf16.msra.mxu0 %v4684
        %7670 = vmatprep.subr.bf16.mxu0 %v4693
        %7671 = vmatpush1.bf16.msra.mxu0 %v4692
        %7672 = vmatprep.subr.bf16.mxu0 %v4701
        %7673 = vmatpush1.bf16.msra.mxu0 %v4700
        %7674 = vmatprep.subr.bf16.mxu0 %v4709
        %7675 = vmatpush1.bf16.msra.mxu0 %v4708
        %7676 = vmatprep.subr.bf16.mxu0 %v4717
        %7677 = vmatpush1.bf16.msra.mxu0 %v4716
        %7678 = vmatprep.subr.bf16.mxu0 %v4725
        %7679 = vmatpush1.bf16.msra.mxu0 %v4724
        %7680 = vmatprep.subr.bf16.mxu0 %v4733
        %7681 = vmatpush1.bf16.msra.mxu0 %v4732
        %7682 = vmatprep.subr.bf16.mxu0 %v4741
        %7683 = vmatpush1.bf16.msra.mxu0 %v4740
        %7684 = vmatprep.subr.bf16.mxu0 %v4749
        %7685 = vmatpush1.bf16.msra.mxu0 %v4748
        %7686 = vmatprep.mubr.bf16.mxu0 %v511
        %7687 = vmatmul.mubr.bf16.gmra.mrb[0].mxu0 %v510
        %v7688 = vpop.f32.mrb[0].mxu0
        %v7689 = vadd.f32 0.0, %v7688
        %v7690 = vpop.f32.mrb[0].mxu0
        %v7691 = vadd.f32 0.0, %v7690
        %v7692 = vpop.f32.mrb[0].mxu0
        %v7693 = vpop.f32.mrb[0].mxu0
        %7694 = vdwg.mxu0
        %7695 = vmatprep.subr.bf16.mxu0 %v4757
        %7696 = vmatpush1.bf16.msra.mxu0 %v4756
        %7697 = vmatprep.subr.bf16.mxu0 %v4765
        %7698 = vmatpush1.bf16.msra.mxu0 %v4764
        %7699 = vmatprep.subr.bf16.mxu0 %v4773
        %7700 = vmatpush1.bf16.msra.mxu0 %v4772
        %7701 = vmatprep.subr.bf16.mxu0 %v4781
        %7702 = vmatpush1.bf16.msra.mxu0 %v4780
        %7703 = vmatprep.subr.bf16.mxu0 %v4789
        %7704 = vmatpush1.bf16.msra.mxu0 %v4788
        %7705 = vmatprep.subr.bf16.mxu0 %v4797
        %7706 = vmatpush1.bf16.msra.mxu0 %v4796
        %7707 = vmatprep.subr.bf16.mxu0 %v4805
        %7708 = vmatpush1.bf16.msra.mxu0 %v4804
        %7709 = vmatprep.subr.bf16.mxu0 %v4813
        %7710 = vmatpush1.bf16.msra.mxu0 %v4812
        %7711 = vmatprep.subr.bf16.mxu0 %v4821
        %7712 = vmatpush1.bf16.msra.mxu0 %v4820
        %7713 = vmatprep.subr.bf16.mxu0 %v4829
        %7714 = vmatpush1.bf16.msra.mxu0 %v4828
        %7715 = vmatprep.subr.bf16.mxu0 %v4837
        %7716 = vmatpush1.bf16.msra.mxu0 %v4836
        %7717 = vmatprep.subr.bf16.mxu0 %v4845
        %7718 = vmatpush1.bf16.msra.mxu0 %v4844
        %7719 = vmatprep.subr.bf16.mxu0 %v4853
        %7720 = vmatpush1.bf16.msra.mxu0 %v4852
        %7721 = vmatprep.subr.bf16.mxu0 %v4861
        %7722 = vmatpush1.bf16.msra.mxu0 %v4860
        %7723 = vmatprep.subr.bf16.mxu0 %v4869
        %7724 = vmatpush1.bf16.msra.mxu0 %v4868
        %7725 = vmatprep.subr.bf16.mxu0 %v4877
        %7726 = vmatpush1.bf16.msra.mxu0 %v4876
        %7727 = vmatprep.mubr.bf16.mxu0 %v513
        %7728 = vmatmul.mubr.bf16.gmra.mrb[0].mxu0 %v512
        %v7729 = vpop.f32.mrb[0].mxu0
        %v7730 = vadd.f32 %v7689, %v7729
        %v7731 = vpop.f32.mrb[0].mxu0
        %v7732 = vadd.f32 %v7691, %v7731
        %v7733 = vpop.f32.mrb[0].mxu0
        %v7734 = vpop.f32.mrb[0].mxu0
        %7735 = vdwg.mxu0
        %7736 = vmatprep.subr.bf16.mxu0 %v4885
        %7737 = vmatpush1.bf16.msra.mxu0 %v4884
        %7738 = vmatprep.subr.bf16.mxu0 %v4893
        %7739 = vmatpush1.bf16.msra.mxu0 %v4892
        %7740 = vmatprep.subr.bf16.mxu0 %v4901
        %7741 = vmatpush1.bf16.msra.mxu0 %v4900
        %7742 = vmatprep.subr.bf16.mxu0 %v4909
        %7743 = vmatpush1.bf16.msra.mxu0 %v4908
        %7744 = vmatprep.subr.bf16.mxu0 %v4917
        %7745 = vmatpush1.bf16.msra.mxu0 %v4916
        %7746 = vmatprep.subr.bf16.mxu0 %v4925
        %7747 = vmatpush1.bf16.msra.mxu0 %v4924
        %7748 = vmatprep.subr.bf16.mxu0 %v4933
        %7749 = vmatpush1.bf16.msra.mxu0 %v4932
        %7750 = vmatprep.subr.bf16.mxu0 %v4941
        %7751 = vmatpush1.bf16.msra.mxu0 %v4940
        %7752 = vmatprep.subr.bf16.mxu0 %v4949
        %7753 = vmatpush1.bf16.msra.mxu0 %v4948
        %7754 = vmatprep.subr.bf16.mxu0 %v4957
        %7755 = vmatpush1.bf16.msra.mxu0 %v4956
        %7756 = vmatprep.subr.bf16.mxu0 %v4965
        %7757 = vmatpush1.bf16.msra.mxu0 %v4964
        %7758 = vmatprep.subr.bf16.mxu0 %v4973
        %7759 = vmatpush1.bf16.msra.mxu0 %v4972
        %7760 = vmatprep.subr.bf16.mxu0 %v4981
        %7761 = vmatpush1.bf16.msra.mxu0 %v4980
        %7762 = vmatprep.subr.bf16.mxu0 %v4989
        %7763 = vmatpush1.bf16.msra.mxu0 %v4988
        %7764 = vmatprep.subr.bf16.mxu0 %v4997
        %7765 = vmatpush1.bf16.msra.mxu0 %v4996
        %7766 = vmatprep.subr.bf16.mxu0 %v5005
        %7767 = vmatpush1.bf16.msra.mxu0 %v5004
        %7768 = vmatprep.mubr.bf16.mxu0 %v515
        %7769 = vmatmul.mubr.bf16.gmra.mrb[0].mxu0 %v514
        %v7770 = vpop.f32.mrb[0].mxu0
        %v7771 = vadd.f32 %v7730, %v7770
        %v7772 = vpop.f32.mrb[0].mxu0
        %v7773 = vadd.f32 %v7732, %v7772
        %v7774 = vpop.f32.mrb[0].mxu0
        %v7775 = vpop.f32.mrb[0].mxu0
        %7776 = vdwg.mxu0
        %7777 = vmatprep.subr.bf16.mxu0 %v5013
        %7778 = vmatpush1.bf16.msra.mxu0 %v5012
        %7779 = vmatprep.subr.bf16.mxu0 %v5021
        %7780 = vmatpush1.bf16.msra.mxu0 %v5020
        %7781 = vmatprep.subr.bf16.mxu0 %v5029
        %7782 = vmatpush1.bf16.msra.mxu0 %v5028
        %7783 = vmatprep.subr.bf16.mxu0 %v5037
        %7784 = vmatpush1.bf16.msra.mxu0 %v5036
        %7785 = vmatprep.subr.bf16.mxu0 %v5045
        %7786 = vmatpush1.bf16.msra.mxu0 %v5044
        %7787 = vmatprep.subr.bf16.mxu0 %v5053
        %7788 = vmatpush1.bf16.msra.mxu0 %v5052
        %7789 = vmatprep.subr.bf16.mxu0 %v5061
        %7790 = vmatpush1.bf16.msra.mxu0 %v5060
        %7791 = vmatprep.subr.bf16.mxu0 %v5069
        %7792 = vmatpush1.bf16.msra.mxu0 %v5068
        %7793 = vmatprep.subr.bf16.mxu0 %v5077
        %7794 = vmatpush1.bf16.msra.mxu0 %v5076
        %7795 = vmatprep.subr.bf16.mxu0 %v5085
        %7796 = vmatpush1.bf16.msra.mxu0 %v5084
        %7797 = vmatprep.subr.bf16.mxu0 %v5093
        %7798 = vmatpush1.bf16.msra.mxu0 %v5092
        %7799 = vmatprep.subr.bf16.mxu0 %v5101
        %7800 = vmatpush1.bf16.msra.mxu0 %v5100
        %7801 = vmatprep.subr.bf16.mxu0 %v5109
        %7802 = vmatpush1.bf16.msra.mxu0 %v5108
        %7803 = vmatprep.subr.bf16.mxu0 %v5117
        %7804 = vmatpush1.bf16.msra.mxu0 %v5116
        %7805 = vmatprep.subr.bf16.mxu0 %v5125
        %7806 = vmatpush1.bf16.msra.mxu0 %v5124
        %7807 = vmatprep.subr.bf16.mxu0 %v5133
        %7808 = vmatpush1.bf16.msra.mxu0 %v5132
        %7809 = vmatprep.mubr.bf16.mxu0 %v517
        %7810 = vmatmul.mubr.bf16.gmra.mrb[0].mxu0 %v516
        %v7811 = vpop.f32.mrb[0].mxu0
        %v7812 = vadd.f32 %v7771, %v7811
        %v7813 = vpop.f32.mrb[0].mxu0
        %v7814 = vadd.f32 %v7773, %v7813
        %v7815 = vpop.f32.mrb[0].mxu0
        %v7816 = vpop.f32.mrb[0].mxu0
        %7817 = vdwg.mxu0
        %7818 = vmatprep.subr.bf16.mxu0 %v5141
        %7819 = vmatpush1.bf16.msra.mxu0 %v5140
        %7820 = vmatprep.subr.bf16.mxu0 %v5149
        %7821 = vmatpush1.bf16.msra.mxu0 %v5148
        %7822 = vmatprep.subr.bf16.mxu0 %v5157
        %7823 = vmatpush1.bf16.msra.mxu0 %v5156
        %7824 = vmatprep.subr.bf16.mxu0 %v5165
        %7825 = vmatpush1.bf16.msra.mxu0 %v5164
        %7826 = vmatprep.subr.bf16.mxu0 %v5173
        %7827 = vmatpush1.bf16.msra.mxu0 %v5172
        %7828 = vmatprep.subr.bf16.mxu0 %v5181
        %7829 = vmatpush1.bf16.msra.mxu0 %v5180
        %7830 = vmatprep.subr.bf16.mxu0 %v5189
        %7831 = vmatpush1.bf16.msra.mxu0 %v5188
        %7832 = vmatprep.subr.bf16.mxu0 %v5197
        %7833 = vmatpush1.bf16.msra.mxu0 %v5196
        %7834 = vmatprep.subr.bf16.mxu0 %v5205
        %7835 = vmatpush1.bf16.msra.mxu0 %v5204
        %7836 = vmatprep.subr.bf16.mxu0 %v5213
        %7837 = vmatpush1.bf16.msra.mxu0 %v5212
        %7838 = vmatprep.subr.bf16.mxu0 %v5221
        %7839 = vmatpush1.bf16.msra.mxu0 %v5220
        %7840 = vmatprep.subr.bf16.mxu0 %v5229
        %7841 = vmatpush1.bf16.msra.mxu0 %v5228
        %7842 = vmatprep.subr.bf16.mxu0 %v5237
        %7843 = vmatpush1.bf16.msra.mxu0 %v5236
        %7844 = vmatprep.subr.bf16.mxu0 %v5245
        %7845 = vmatpush1.bf16.msra.mxu0 %v5244
        %7846 = vmatprep.subr.bf16.mxu0 %v5253
        %7847 = vmatpush1.bf16.msra.mxu0 %v5252
        %7848 = vmatprep.subr.bf16.mxu0 %v5261
        %7849 = vmatpush1.bf16.msra.mxu0 %v5260
        %7850 = vmatprep.mubr.bf16.mxu0 %v519
        %7851 = vmatmul.mubr.bf16.gmra.mrb[0].mxu0 %v518
        %v7852 = vpop.f32.mrb[0].mxu0
        %v7853 = vadd.f32 %v7812, %v7852
        %v7854 = vpop.f32.mrb[0].mxu0
        %v7855 = vadd.f32 %v7814, %v7854
        %v7856 = vpop.f32.mrb[0].mxu0
        %v7857 = vpop.f32.mrb[0].mxu0
        %7858 = vdwg.mxu0
        %7859 = vmatprep.subr.bf16.mxu0 %v5269
        %7860 = vmatpush1.bf16.msra.mxu0 %v5268
        %7861 = vmatprep.subr.bf16.mxu0 %v5277
        %7862 = vmatpush1.bf16.msra.mxu0 %v5276
        %7863 = vmatprep.subr.bf16.mxu0 %v5285
        %7864 = vmatpush1.bf16.msra.mxu0 %v5284
        %7865 = vmatprep.subr.bf16.mxu0 %v5293
        %7866 = vmatpush1.bf16.msra.mxu0 %v5292
        %7867 = vmatprep.subr.bf16.mxu0 %v5301
        %7868 = vmatpush1.bf16.msra.mxu0 %v5300
        %7869 = vmatprep.subr.bf16.mxu0 %v5309
        %7870 = vmatpush1.bf16.msra.mxu0 %v5308
        %7871 = vmatprep.subr.bf16.mxu0 %v5317
        %7872 = vmatpush1.bf16.msra.mxu0 %v5316
        %7873 = vmatprep.subr.bf16.mxu0 %v5325
        %7874 = vmatpush1.bf16.msra.mxu0 %v5324
        %7875 = vmatprep.subr.bf16.mxu0 %v5333
        %7876 = vmatpush1.bf16.msra.mxu0 %v5332
        %7877 = vmatprep.subr.bf16.mxu0 %v5341
        %7878 = vmatpush1.bf16.msra.mxu0 %v5340
        %7879 = vmatprep.subr.bf16.mxu0 %v5349
        %7880 = vmatpush1.bf16.msra.mxu0 %v5348
        %7881 = vmatprep.subr.bf16.mxu0 %v5357
        %7882 = vmatpush1.bf16.msra.mxu0 %v5356
        %7883 = vmatprep.subr.bf16.mxu0 %v5365
        %7884 = vmatpush1.bf16.msra.mxu0 %v5364
        %7885 = vmatprep.subr.bf16.mxu0 %v5373
        %7886 = vmatpush1.bf16.msra.mxu0 %v5372
        %7887 = vmatprep.subr.bf16.mxu0 %v5381
        %7888 = vmatpush1.bf16.msra.mxu0 %v5380
        %7889 = vmatprep.subr.bf16.mxu0 %v5389
        %7890 = vmatpush1.bf16.msra.mxu0 %v5388
        %7891 = vmatprep.mubr.bf16.mxu0 %v521
        %7892 = vmatmul.mubr.bf16.gmra.mrb[0].mxu0 %v520
        %v7893 = vpop.f32.mrb[0].mxu0
        %v7894 = vadd.f32 %v7853, %v7893
        %v7895 = vpop.f32.mrb[0].mxu0
        %v7896 = vadd.f32 %v7855, %v7895
        %v7897 = vpop.f32.mrb[0].mxu0
        %v7898 = vpop.f32.mrb[0].mxu0
        %7899 = vdwg.mxu0
        %7900 = vmatprep.subr.bf16.mxu0 %v5397
        %7901 = vmatpush1.bf16.msra.mxu0 %v5396
        %7902 = vmatprep.subr.bf16.mxu0 %v5405
        %7903 = vmatpush1.bf16.msra.mxu0 %v5404
        %7904 = vmatprep.subr.bf16.mxu0 %v5413
        %7905 = vmatpush1.bf16.msra.mxu0 %v5412
        %7906 = vmatprep.subr.bf16.mxu0 %v5421
        %7907 = vmatpush1.bf16.msra.mxu0 %v5420
        %7908 = vmatprep.subr.bf16.mxu0 %v5429
        %7909 = vmatpush1.bf16.msra.mxu0 %v5428
        %7910 = vmatprep.subr.bf16.mxu0 %v5437
        %7911 = vmatpush1.bf16.msra.mxu0 %v5436
        %7912 = vmatprep.subr.bf16.mxu0 %v5445
        %7913 = vmatpush1.bf16.msra.mxu0 %v5444
        %7914 = vmatprep.subr.bf16.mxu0 %v5453
        %7915 = vmatpush1.bf16.msra.mxu0 %v5452
        %7916 = vmatprep.subr.bf16.mxu0 %v5461
        %7917 = vmatpush1.bf16.msra.mxu0 %v5460
        %7918 = vmatprep.subr.bf16.mxu0 %v5469
        %7919 = vmatpush1.bf16.msra.mxu0 %v5468
        %7920 = vmatprep.subr.bf16.mxu0 %v5477
        %7921 = vmatpush1.bf16.msra.mxu0 %v5476
        %7922 = vmatprep.subr.bf16.mxu0 %v5485
        %7923 = vmatpush1.bf16.msra.mxu0 %v5484
        %7924 = vmatprep.subr.bf16.mxu0 %v5493
        %7925 = vmatpush1.bf16.msra.mxu0 %v5492
        %7926 = vmatprep.subr.bf16.mxu0 %v5501
        %7927 = vmatpush1.bf16.msra.mxu0 %v5500
        %7928 = vmatprep.subr.bf16.mxu0 %v5509
        %7929 = vmatpush1.bf16.msra.mxu0 %v5508
        %7930 = vmatprep.subr.bf16.mxu0 %v5517
        %7931 = vmatpush1.bf16.msra.mxu0 %v5516
        %7932 = vmatprep.mubr.bf16.mxu0 %v523
        %7933 = vmatmul.mubr.bf16.gmra.mrb[0].mxu0 %v522
        %v7934 = vpop.f32.mrb[0].mxu0
        %v7935 = vadd.f32 %v7894, %v7934
        %v7936 = vpop.f32.mrb[0].mxu0
        %v7937 = vadd.f32 %v7896, %v7936
        %v7938 = vpop.f32.mrb[0].mxu0
        %v7939 = vpop.f32.mrb[0].mxu0
        %7940 = vdwg.mxu0
        %7941 = vmatprep.subr.bf16.mxu0 %v5525
        %7942 = vmatpush1.bf16.msra.mxu0 %v5524
        %7943 = vmatprep.subr.bf16.mxu0 %v5533
        %7944 = vmatpush1.bf16.msra.mxu0 %v5532
        %7945 = vmatprep.subr.bf16.mxu0 %v5541
        %7946 = vmatpush1.bf16.msra.mxu0 %v5540
        %7947 = vmatprep.subr.bf16.mxu0 %v5549
        %7948 = vmatpush1.bf16.msra.mxu0 %v5548
        %7949 = vmatprep.subr.bf16.mxu0 %v5557
        %7950 = vmatpush1.bf16.msra.mxu0 %v5556
        %7951 = vmatprep.subr.bf16.mxu0 %v5565
        %7952 = vmatpush1.bf16.msra.mxu0 %v5564
        %7953 = vmatprep.subr.bf16.mxu0 %v5573
        %7954 = vmatpush1.bf16.msra.mxu0 %v5572
        %7955 = vmatprep.subr.bf16.mxu0 %v5581
        %7956 = vmatpush1.bf16.msra.mxu0 %v5580
        %7957 = vmatprep.subr.bf16.mxu0 %v5589
        %7958 = vmatpush1.bf16.msra.mxu0 %v5588
        %7959 = vmatprep.subr.bf16.mxu0 %v5597
        %7960 = vmatpush1.bf16.msra.mxu0 %v5596
        %7961 = vmatprep.subr.bf16.mxu0 %v5605
        %7962 = vmatpush1.bf16.msra.mxu0 %v5604
        %7963 = vmatprep.subr.bf16.mxu0 %v5613
        %7964 = vmatpush1.bf16.msra.mxu0 %v5612
        %7965 = vmatprep.subr.bf16.mxu0 %v5621
        %7966 = vmatpush1.bf16.msra.mxu0 %v5620
        %7967 = vmatprep.subr.bf16.mxu0 %v5629
        %7968 = vmatpush1.bf16.msra.mxu0 %v5628
        %7969 = vmatprep.subr.bf16.mxu0 %v5637
        %7970 = vmatpush1.bf16.msra.mxu0 %v5636
        %7971 = vmatprep.subr.bf16.mxu0 %v5645
        %7972 = vmatpush1.bf16.msra.mxu0 %v5644
        %7973 = vmatprep.mubr.bf16.mxu0 %v525
        %7974 = vmatmul.mubr.bf16.gmra.mrb[0].mxu0 %v524
        %v7975 = vpop.f32.mrb[0].mxu0
        %v7976 = vadd.f32 %v7935, %v7975
        %v7977 = vpop.f32.mrb[0].mxu0
        %v7978 = vadd.f32 %v7937, %v7977
        %v7979 = vpop.f32.mrb[0].mxu0
        %v7980 = vpop.f32.mrb[0].mxu0
        %7981 = vdwg.mxu0
        %v7982 = vadd.f32 %v486, %v6992
        %v7983 = vadd.f32 %v487, %v6994
        %v7984 = vadd.f32 %v488, %v7320
        %v7985 = vadd.f32 %v489, %v7322
        %v7986 = vadd.f32 %v490, %v7648
        %v7987 = vadd.f32 %v491, %v7650
        %v7988 = vadd.f32 %v492, %v7976
        %v7989 = vadd.f32 %v493, %v7978
        %7990 = vst [vmem:[#allocation2] sm:$0xff] %v7982
        %7991 = vst [vmem:[#allocation2 + $0x8] sm:$0xff] %v7983
        %7992 = vst [vmem:[#allocation2 + $0x10] sm:$0xff] %v7984
        %7993 = vst [vmem:[#allocation2 + $0x18] sm:$0xff] %v7985
        %7994 = vst [vmem:[#allocation2 + $0x20] sm:$0xff] %v7986
        %7995 = vst [vmem:[#allocation2 + $0x28] sm:$0xff] %v7987
        %7996 = vst [vmem:[#allocation2 + $0x30] sm:$0xff] %v7988
        %7997 = vst [vmem:[#allocation2 + $0x38] sm:$0xff] %v7989
        %p7998 = scmp.eq.s32.totalorder %s28, 1
        // Predicated region
        $region85: #{net_forward.1} parent=55 // pred_check
          %p7999 = pneg %p7998
        $region86: #{net_forward.1} parent=55 // pred_check_branch
          %8001 = sbr.rel (%p7999) target = $region88
        $region87: #{net_forward.1} parent=55 // pred_region
          %v8002 = vld [vmem:[#allocation2] sm:$0xff]
          %v8003 = vld [vmem:[#allocation2 + $0x8] sm:$0xff]
          %v8004 = vld [vmem:[#allocation2 + $0x10] sm:$0xff]
          %v8005 = vld [vmem:[#allocation2 + $0x18] sm:$0xff]
          %v8006 = vld [vmem:[#allocation2 + $0x20] sm:$0xff]
          %v8007 = vld [vmem:[#allocation2 + $0x28] sm:$0xff]
          %v8008 = vld [vmem:[#allocation2 + $0x30] sm:$0xff]
          %v8009 = vld [vmem:[#allocation2 + $0x38] sm:$0xff]
          %v8010 = vmax.f32 %v8002, 0.0
          %v8011 = vmax.f32 %v8003, 0.0
          %v8012 = vmax.f32 %v8004, 0.0
          %v8013 = vmax.f32 %v8005, 0.0
          %v8014 = vmax.f32 %v8006, 0.0
          %v8015 = vmax.f32 %v8007, 0.0
          %v8016 = vmax.f32 %v8008, 0.0
          %v8017 = vmax.f32 %v8009, 0.0
          %v8018 = vpack.c.bf16 %v8010, %v8010
          %v8019 = vpack.c.bf16 %v8011, %v8011
          %v8020 = vpack.c.bf16 %v8012, %v8012
          %v8021 = vpack.c.bf16 %v8013, %v8013
          %v8022 = vpack.c.bf16 %v8014, %v8014
          %v8023 = vpack.c.bf16 %v8015, %v8015
          %v8024 = vpack.c.bf16 %v8016, %v8016
          %v8025 = vpack.c.bf16 %v8017, %v8017
          %v8026 = vld [vmem:[#allocation8] sm:$0xff]
          %v8027 = vld [vmem:[#allocation8 + $0x8] sm:$0xff]
          %v8028 = vld [vmem:[#allocation8 + $0x10] sm:$0xff]
          %v8029 = vld [vmem:[#allocation8 + $0x18] sm:$0xff]
          %v8030 = vld [vmem:[#allocation8 + $0x20] sm:$0xff]
          %v8031 = vld [vmem:[#allocation8 + $0x28] sm:$0xff]
          %v8032 = vld [vmem:[#allocation8 + $0x30] sm:$0xff]
          %v8033 = vld [vmem:[#allocation8 + $0x38] sm:$0xff]
          %v8034 = vld [vmem:[#allocation8 + $0x40] sm:$0xff]
          %v8035 = vld [vmem:[#allocation8 + $0x48] sm:$0xff]
          %v8036 = vld [vmem:[#allocation8 + $0x50] sm:$0xff]
          %v8037 = vld [vmem:[#allocation8 + $0x58] sm:$0xff]
          %v8038 = vld [vmem:[#allocation8 + $0x60] sm:$0xff]
          %v8039 = vld [vmem:[#allocation8 + $0x68] sm:$0xff]
          %v8040 = vld [vmem:[#allocation8 + $0x70] sm:$0xff]
          %v8041 = vld [vmem:[#allocation8 + $0x78] sm:$0xff]
          %v8042 = vld [vmem:[#allocation8 + $0x80] sm:$0xff]
          %v8043 = vld [vmem:[#allocation8 + $0x88] sm:$0xff]
          %v8044 = vld [vmem:[#allocation8 + $0x90] sm:$0xff]
          %v8045 = vld [vmem:[#allocation8 + $0x98] sm:$0xff]
          %v8046 = vld [vmem:[#allocation8 + $0xa0] sm:$0xff]
          %v8047 = vld [vmem:[#allocation8 + $0xa8] sm:$0xff]
          %v8048 = vld [vmem:[#allocation8 + $0xb0] sm:$0xff]
          %v8049 = vld [vmem:[#allocation8 + $0xb8] sm:$0xff]
          %v8050 = vld [vmem:[#allocation8 + $0xc0] sm:$0xff]
          %v8051 = vld [vmem:[#allocation8 + $0xc8] sm:$0xff]
          %v8052 = vld [vmem:[#allocation8 + $0xd0] sm:$0xff]
          %v8053 = vld [vmem:[#allocation8 + $0xd8] sm:$0xff]
          %v8054 = vld [vmem:[#allocation8 + $0xe0] sm:$0xff]
          %v8055 = vld [vmem:[#allocation8 + $0xe8] sm:$0xff]
          %v8056 = vld [vmem:[#allocation8 + $0xf0] sm:$0xff]
          %v8057 = vld [vmem:[#allocation8 + $0xf8] sm:$0xff]
          %v8058 = vld [vmem:[#allocation8 + $0x100] sm:$0xff]
          %v8059 = vld [vmem:[#allocation8 + $0x108] sm:$0xff]
          %v8060 = vld [vmem:[#allocation8 + $0x110] sm:$0xff]
          %v8061 = vld [vmem:[#allocation8 + $0x118] sm:$0xff]
          %v8062 = vld [vmem:[#allocation8 + $0x120] sm:$0xff]
          %v8063 = vld [vmem:[#allocation8 + $0x128] sm:$0xff]
          %v8064 = vld [vmem:[#allocation8 + $0x130] sm:$0xff]
          %v8065 = vld [vmem:[#allocation8 + $0x138] sm:$0xff]
          %v8066 = vld [vmem:[#allocation8 + $0x140] sm:$0xff]
          %v8067 = vld [vmem:[#allocation8 + $0x148] sm:$0xff]
          %v8068 = vld [vmem:[#allocation8 + $0x150] sm:$0xff]
          %v8069 = vld [vmem:[#allocation8 + $0x158] sm:$0xff]
          %v8070 = vld [vmem:[#allocation8 + $0x160] sm:$0xff]
          %v8071 = vld [vmem:[#allocation8 + $0x168] sm:$0xff]
          %v8072 = vld [vmem:[#allocation8 + $0x170] sm:$0xff]
          %v8073 = vld [vmem:[#allocation8 + $0x178] sm:$0xff]
          %v8074 = vld [vmem:[#allocation8 + $0x180] sm:$0xff]
          %v8075 = vld [vmem:[#allocation8 + $0x188] sm:$0xff]
          %v8076 = vld [vmem:[#allocation8 + $0x190] sm:$0xff]
          %v8077 = vld [vmem:[#allocation8 + $0x198] sm:$0xff]
          %v8078 = vld [vmem:[#allocation8 + $0x1a0] sm:$0xff]
          %v8079 = vld [vmem:[#allocation8 + $0x1a8] sm:$0xff]
          %v8080 = vld [vmem:[#allocation8 + $0x1b0] sm:$0xff]
          %v8081 = vld [vmem:[#allocation8 + $0x1b8] sm:$0xff]
          %v8082 = vld [vmem:[#allocation8 + $0x1c0] sm:$0xff]
          %v8083 = vld [vmem:[#allocation8 + $0x1c8] sm:$0xff]
          %v8084 = vld [vmem:[#allocation8 + $0x1d0] sm:$0xff]
          %v8085 = vld [vmem:[#allocation8 + $0x1d8] sm:$0xff]
          %v8086 = vld [vmem:[#allocation8 + $0x1e0] sm:$0xff]
          %v8087 = vld [vmem:[#allocation8 + $0x1e8] sm:$0xff]
          %v8088 = vld [vmem:[#allocation8 + $0x1f0] sm:$0xff]
          %v8089 = vld [vmem:[#allocation8 + $0x1f8] sm:$0xff]
          %v8090 = vld [vmem:[#allocation8 + $0x200] sm:$0xff]
          %v8091 = vld [vmem:[#allocation8 + $0x208] sm:$0xff]
          %v8092 = vld [vmem:[#allocation8 + $0x210] sm:$0xff]
          %v8093 = vld [vmem:[#allocation8 + $0x218] sm:$0xff]
          %v8094 = vld [vmem:[#allocation8 + $0x220] sm:$0xff]
          %v8095 = vld [vmem:[#allocation8 + $0x228] sm:$0xff]
          %v8096 = vld [vmem:[#allocation8 + $0x230] sm:$0xff]
          %v8097 = vld [vmem:[#allocation8 + $0x238] sm:$0xff]
          %v8098 = vld [vmem:[#allocation8 + $0x240] sm:$0xff]
          %v8099 = vld [vmem:[#allocation8 + $0x248] sm:$0xff]
          %v8100 = vld [vmem:[#allocation8 + $0x250] sm:$0xff]
          %v8101 = vld [vmem:[#allocation8 + $0x258] sm:$0xff]
          %v8102 = vld [vmem:[#allocation8 + $0x260] sm:$0xff]
          %v8103 = vld [vmem:[#allocation8 + $0x268] sm:$0xff]
          %v8104 = vld [vmem:[#allocation8 + $0x270] sm:$0xff]
          %v8105 = vld [vmem:[#allocation8 + $0x278] sm:$0xff]
          %v8106 = vld [vmem:[#allocation8 + $0x280] sm:$0xff]
          %v8107 = vld [vmem:[#allocation8 + $0x288] sm:$0xff]
          %v8108 = vld [vmem:[#allocation8 + $0x290] sm:$0xff]
          %v8109 = vld [vmem:[#allocation8 + $0x298] sm:$0xff]
          %v8110 = vld [vmem:[#allocation8 + $0x2a0] sm:$0xff]
          %v8111 = vld [vmem:[#allocation8 + $0x2a8] sm:$0xff]
          %v8112 = vld [vmem:[#allocation8 + $0x2b0] sm:$0xff]
          %v8113 = vld [vmem:[#allocation8 + $0x2b8] sm:$0xff]
          %v8114 = vld [vmem:[#allocation8 + $0x2c0] sm:$0xff]
          %v8115 = vld [vmem:[#allocation8 + $0x2c8] sm:$0xff]
          %v8116 = vld [vmem:[#allocation8 + $0x2d0] sm:$0xff]
          %v8117 = vld [vmem:[#allocation8 + $0x2d8] sm:$0xff]
          %v8118 = vld [vmem:[#allocation8 + $0x2e0] sm:$0xff]
          %v8119 = vld [vmem:[#allocation8 + $0x2e8] sm:$0xff]
          %v8120 = vld [vmem:[#allocation8 + $0x2f0] sm:$0xff]
          %v8121 = vld [vmem:[#allocation8 + $0x2f8] sm:$0xff]
          %v8122 = vld [vmem:[#allocation8 + $0x300] sm:$0xff]
          %v8123 = vld [vmem:[#allocation8 + $0x308] sm:$0xff]
          %v8124 = vld [vmem:[#allocation8 + $0x310] sm:$0xff]
          %v8125 = vld [vmem:[#allocation8 + $0x318] sm:$0xff]
          %v8126 = vld [vmem:[#allocation8 + $0x320] sm:$0xff]
          %v8127 = vld [vmem:[#allocation8 + $0x328] sm:$0xff]
          %v8128 = vld [vmem:[#allocation8 + $0x330] sm:$0xff]
          %v8129 = vld [vmem:[#allocation8 + $0x338] sm:$0xff]
          %v8130 = vld [vmem:[#allocation8 + $0x340] sm:$0xff]
          %v8131 = vld [vmem:[#allocation8 + $0x348] sm:$0xff]
          %v8132 = vld [vmem:[#allocation8 + $0x350] sm:$0xff]
          %v8133 = vld [vmem:[#allocation8 + $0x358] sm:$0xff]
          %v8134 = vld [vmem:[#allocation8 + $0x360] sm:$0xff]
          %v8135 = vld [vmem:[#allocation8 + $0x368] sm:$0xff]
          %v8136 = vld [vmem:[#allocation8 + $0x370] sm:$0xff]
          %v8137 = vld [vmem:[#allocation8 + $0x378] sm:$0xff]
          %v8138 = vld [vmem:[#allocation8 + $0x380] sm:$0xff]
          %v8139 = vld [vmem:[#allocation8 + $0x388] sm:$0xff]
          %v8140 = vld [vmem:[#allocation8 + $0x390] sm:$0xff]
          %v8141 = vld [vmem:[#allocation8 + $0x398] sm:$0xff]
          %v8142 = vld [vmem:[#allocation8 + $0x3a0] sm:$0xff]
          %v8143 = vld [vmem:[#allocation8 + $0x3a8] sm:$0xff]
          %v8144 = vld [vmem:[#allocation8 + $0x3b0] sm:$0xff]
          %v8145 = vld [vmem:[#allocation8 + $0x3b8] sm:$0xff]
          %v8146 = vld [vmem:[#allocation8 + $0x3c0] sm:$0xff]
          %v8147 = vld [vmem:[#allocation8 + $0x3c8] sm:$0xff]
          %v8148 = vld [vmem:[#allocation8 + $0x3d0] sm:$0xff]
          %v8149 = vld [vmem:[#allocation8 + $0x3d8] sm:$0xff]
          %v8150 = vld [vmem:[#allocation8 + $0x3e0] sm:$0xff]
          %v8151 = vld [vmem:[#allocation8 + $0x3e8] sm:$0xff]
          %v8152 = vld [vmem:[#allocation8 + $0x3f0] sm:$0xff]
          %v8153 = vld [vmem:[#allocation8 + $0x3f8] sm:$0xff]
          %v8154 = vld [vmem:[#allocation10] sm:$0x3]
          %v8156 = vlaneseq
          %v8157 = vshrl.u32 %v8156, 7
          %v8158 = vsub.s32 0, %v8157
          %v8159 = vrot.slane %v8154, %v8158
          %v8160 = vlaneseq
          %v8161 = vshrl.u32 %v8160, 7
          %v8162 = vsub.s32 1, %v8161
          %v8163 = vrot.slane %v8154, %v8162
          %v8294 = vunpack.c.l.b16 %v8026
          %v8295 = vunpack.c.h.b16 %v8026
          %v8296 = vunpack.c.l.b16 %v8027
          %v8297 = vunpack.c.h.b16 %v8027
          %v8298 = vunpack.c.l.b16 %v8028
          %v8299 = vunpack.c.h.b16 %v8028
          %v8300 = vunpack.c.l.b16 %v8029
          %v8301 = vunpack.c.h.b16 %v8029
          %v8302 = vunpack.c.l.b16 %v8030
          %v8303 = vunpack.c.h.b16 %v8030
          %v8304 = vunpack.c.l.b16 %v8031
          %v8305 = vunpack.c.h.b16 %v8031
          %v8306 = vunpack.c.l.b16 %v8032
          %v8307 = vunpack.c.h.b16 %v8032
          %v8308 = vunpack.c.l.b16 %v8033
          %v8309 = vunpack.c.h.b16 %v8033
          %v8310 = vunpack.c.l.b16 %v8034
          %v8311 = vunpack.c.h.b16 %v8034
          %v8312 = vunpack.c.l.b16 %v8035
          %v8313 = vunpack.c.h.b16 %v8035
          %v8314 = vunpack.c.l.b16 %v8036
          %v8315 = vunpack.c.h.b16 %v8036
          %v8316 = vunpack.c.l.b16 %v8037
          %v8317 = vunpack.c.h.b16 %v8037
          %v8318 = vunpack.c.l.b16 %v8038
          %v8319 = vunpack.c.h.b16 %v8038
          %v8320 = vunpack.c.l.b16 %v8039
          %v8321 = vunpack.c.h.b16 %v8039
          %v8322 = vunpack.c.l.b16 %v8040
          %v8323 = vunpack.c.h.b16 %v8040
          %v8324 = vunpack.c.l.b16 %v8041
          %v8325 = vunpack.c.h.b16 %v8041
          %v8326 = vunpack.c.l.b16 %v8042
          %v8327 = vunpack.c.h.b16 %v8042
          %v8328 = vunpack.c.l.b16 %v8043
          %v8329 = vunpack.c.h.b16 %v8043
          %v8330 = vunpack.c.l.b16 %v8044
          %v8331 = vunpack.c.h.b16 %v8044
          %v8332 = vunpack.c.l.b16 %v8045
          %v8333 = vunpack.c.h.b16 %v8045
          %v8334 = vunpack.c.l.b16 %v8046
          %v8335 = vunpack.c.h.b16 %v8046
          %v8336 = vunpack.c.l.b16 %v8047
          %v8337 = vunpack.c.h.b16 %v8047
          %v8338 = vunpack.c.l.b16 %v8048
          %v8339 = vunpack.c.h.b16 %v8048
          %v8340 = vunpack.c.l.b16 %v8049
          %v8341 = vunpack.c.h.b16 %v8049
          %v8342 = vunpack.c.l.b16 %v8050
          %v8343 = vunpack.c.h.b16 %v8050
          %v8344 = vunpack.c.l.b16 %v8051
          %v8345 = vunpack.c.h.b16 %v8051
          %v8346 = vunpack.c.l.b16 %v8052
          %v8347 = vunpack.c.h.b16 %v8052
          %v8348 = vunpack.c.l.b16 %v8053
          %v8349 = vunpack.c.h.b16 %v8053
          %v8350 = vunpack.c.l.b16 %v8054
          %v8351 = vunpack.c.h.b16 %v8054
          %v8352 = vunpack.c.l.b16 %v8055
          %v8353 = vunpack.c.h.b16 %v8055
          %v8354 = vunpack.c.l.b16 %v8056
          %v8355 = vunpack.c.h.b16 %v8056
          %v8356 = vunpack.c.l.b16 %v8057
          %v8357 = vunpack.c.h.b16 %v8057
          %v8358 = vunpack.c.l.b16 %v8058
          %v8359 = vunpack.c.h.b16 %v8058
          %v8360 = vunpack.c.l.b16 %v8059
          %v8361 = vunpack.c.h.b16 %v8059
          %v8362 = vunpack.c.l.b16 %v8060
          %v8363 = vunpack.c.h.b16 %v8060
          %v8364 = vunpack.c.l.b16 %v8061
          %v8365 = vunpack.c.h.b16 %v8061
          %v8366 = vunpack.c.l.b16 %v8062
          %v8367 = vunpack.c.h.b16 %v8062
          %v8368 = vunpack.c.l.b16 %v8063
          %v8369 = vunpack.c.h.b16 %v8063
          %v8370 = vunpack.c.l.b16 %v8064
          %v8371 = vunpack.c.h.b16 %v8064
          %v8372 = vunpack.c.l.b16 %v8065
          %v8373 = vunpack.c.h.b16 %v8065
          %v8374 = vunpack.c.l.b16 %v8066
          %v8375 = vunpack.c.h.b16 %v8066
          %v8376 = vunpack.c.l.b16 %v8067
          %v8377 = vunpack.c.h.b16 %v8067
          %v8378 = vunpack.c.l.b16 %v8068
          %v8379 = vunpack.c.h.b16 %v8068
          %v8380 = vunpack.c.l.b16 %v8069
          %v8381 = vunpack.c.h.b16 %v8069
          %v8382 = vunpack.c.l.b16 %v8070
          %v8383 = vunpack.c.h.b16 %v8070
          %v8384 = vunpack.c.l.b16 %v8071
          %v8385 = vunpack.c.h.b16 %v8071
          %v8386 = vunpack.c.l.b16 %v8072
          %v8387 = vunpack.c.h.b16 %v8072
          %v8388 = vunpack.c.l.b16 %v8073
          %v8389 = vunpack.c.h.b16 %v8073
          %v8390 = vunpack.c.l.b16 %v8074
          %v8391 = vunpack.c.h.b16 %v8074
          %v8392 = vunpack.c.l.b16 %v8075
          %v8393 = vunpack.c.h.b16 %v8075
          %v8394 = vunpack.c.l.b16 %v8076
          %v8395 = vunpack.c.h.b16 %v8076
          %v8396 = vunpack.c.l.b16 %v8077
          %v8397 = vunpack.c.h.b16 %v8077
          %v8398 = vunpack.c.l.b16 %v8078
          %v8399 = vunpack.c.h.b16 %v8078
          %v8400 = vunpack.c.l.b16 %v8079
          %v8401 = vunpack.c.h.b16 %v8079
          %v8402 = vunpack.c.l.b16 %v8080
          %v8403 = vunpack.c.h.b16 %v8080
          %v8404 = vunpack.c.l.b16 %v8081
          %v8405 = vunpack.c.h.b16 %v8081
          %v8406 = vunpack.c.l.b16 %v8082
          %v8407 = vunpack.c.h.b16 %v8082
          %v8408 = vunpack.c.l.b16 %v8083
          %v8409 = vunpack.c.h.b16 %v8083
          %v8410 = vunpack.c.l.b16 %v8084
          %v8411 = vunpack.c.h.b16 %v8084
          %v8412 = vunpack.c.l.b16 %v8085
          %v8413 = vunpack.c.h.b16 %v8085
          %v8414 = vunpack.c.l.b16 %v8086
          %v8415 = vunpack.c.h.b16 %v8086
          %v8416 = vunpack.c.l.b16 %v8087
          %v8417 = vunpack.c.h.b16 %v8087
          %v8418 = vunpack.c.l.b16 %v8088
          %v8419 = vunpack.c.h.b16 %v8088
          %v8420 = vunpack.c.l.b16 %v8089
          %v8421 = vunpack.c.h.b16 %v8089
          %v8422 = vunpack.c.l.b16 %v8090
          %v8423 = vunpack.c.h.b16 %v8090
          %v8424 = vunpack.c.l.b16 %v8091
          %v8425 = vunpack.c.h.b16 %v8091
          %v8426 = vunpack.c.l.b16 %v8092
          %v8427 = vunpack.c.h.b16 %v8092
          %v8428 = vunpack.c.l.b16 %v8093
          %v8429 = vunpack.c.h.b16 %v8093
          %v8430 = vunpack.c.l.b16 %v8094
          %v8431 = vunpack.c.h.b16 %v8094
          %v8432 = vunpack.c.l.b16 %v8095
          %v8433 = vunpack.c.h.b16 %v8095
          %v8434 = vunpack.c.l.b16 %v8096
          %v8435 = vunpack.c.h.b16 %v8096
          %v8436 = vunpack.c.l.b16 %v8097
          %v8437 = vunpack.c.h.b16 %v8097
          %v8438 = vunpack.c.l.b16 %v8098
          %v8439 = vunpack.c.h.b16 %v8098
          %v8440 = vunpack.c.l.b16 %v8099
          %v8441 = vunpack.c.h.b16 %v8099
          %v8442 = vunpack.c.l.b16 %v8100
          %v8443 = vunpack.c.h.b16 %v8100
          %v8444 = vunpack.c.l.b16 %v8101
          %v8445 = vunpack.c.h.b16 %v8101
          %v8446 = vunpack.c.l.b16 %v8102
          %v8447 = vunpack.c.h.b16 %v8102
          %v8448 = vunpack.c.l.b16 %v8103
          %v8449 = vunpack.c.h.b16 %v8103
          %v8450 = vunpack.c.l.b16 %v8104
          %v8451 = vunpack.c.h.b16 %v8104
          %v8452 = vunpack.c.l.b16 %v8105
          %v8453 = vunpack.c.h.b16 %v8105
          %v8454 = vunpack.c.l.b16 %v8106
          %v8455 = vunpack.c.h.b16 %v8106
          %v8456 = vunpack.c.l.b16 %v8107
          %v8457 = vunpack.c.h.b16 %v8107
          %v8458 = vunpack.c.l.b16 %v8108
          %v8459 = vunpack.c.h.b16 %v8108
          %v8460 = vunpack.c.l.b16 %v8109
          %v8461 = vunpack.c.h.b16 %v8109
          %v8462 = vunpack.c.l.b16 %v8110
          %v8463 = vunpack.c.h.b16 %v8110
          %v8464 = vunpack.c.l.b16 %v8111
          %v8465 = vunpack.c.h.b16 %v8111
          %v8466 = vunpack.c.l.b16 %v8112
          %v8467 = vunpack.c.h.b16 %v8112
          %v8468 = vunpack.c.l.b16 %v8113
          %v8469 = vunpack.c.h.b16 %v8113
          %v8470 = vunpack.c.l.b16 %v8114
          %v8471 = vunpack.c.h.b16 %v8114
          %v8472 = vunpack.c.l.b16 %v8115
          %v8473 = vunpack.c.h.b16 %v8115
          %v8474 = vunpack.c.l.b16 %v8116
          %v8475 = vunpack.c.h.b16 %v8116
          %v8476 = vunpack.c.l.b16 %v8117
          %v8477 = vunpack.c.h.b16 %v8117
          %v8478 = vunpack.c.l.b16 %v8118
          %v8479 = vunpack.c.h.b16 %v8118
          %v8480 = vunpack.c.l.b16 %v8119
          %v8481 = vunpack.c.h.b16 %v8119
          %v8482 = vunpack.c.l.b16 %v8120
          %v8483 = vunpack.c.h.b16 %v8120
          %v8484 = vunpack.c.l.b16 %v8121
          %v8485 = vunpack.c.h.b16 %v8121
          %v8486 = vunpack.c.l.b16 %v8122
          %v8487 = vunpack.c.h.b16 %v8122
          %v8488 = vunpack.c.l.b16 %v8123
          %v8489 = vunpack.c.h.b16 %v8123
          %v8490 = vunpack.c.l.b16 %v8124
          %v8491 = vunpack.c.h.b16 %v8124
          %v8492 = vunpack.c.l.b16 %v8125
          %v8493 = vunpack.c.h.b16 %v8125
          %v8494 = vunpack.c.l.b16 %v8126
          %v8495 = vunpack.c.h.b16 %v8126
          %v8496 = vunpack.c.l.b16 %v8127
          %v8497 = vunpack.c.h.b16 %v8127
          %v8498 = vunpack.c.l.b16 %v8128
          %v8499 = vunpack.c.h.b16 %v8128
          %v8500 = vunpack.c.l.b16 %v8129
          %v8501 = vunpack.c.h.b16 %v8129
          %v8502 = vunpack.c.l.b16 %v8130
          %v8503 = vunpack.c.h.b16 %v8130
          %v8504 = vunpack.c.l.b16 %v8131
          %v8505 = vunpack.c.h.b16 %v8131
          %v8506 = vunpack.c.l.b16 %v8132
          %v8507 = vunpack.c.h.b16 %v8132
          %v8508 = vunpack.c.l.b16 %v8133
          %v8509 = vunpack.c.h.b16 %v8133
          %v8510 = vunpack.c.l.b16 %v8134
          %v8511 = vunpack.c.h.b16 %v8134
          %v8512 = vunpack.c.l.b16 %v8135
          %v8513 = vunpack.c.h.b16 %v8135
          %v8514 = vunpack.c.l.b16 %v8136
          %v8515 = vunpack.c.h.b16 %v8136
          %v8516 = vunpack.c.l.b16 %v8137
          %v8517 = vunpack.c.h.b16 %v8137
          %v8518 = vunpack.c.l.b16 %v8138
          %v8519 = vunpack.c.h.b16 %v8138
          %v8520 = vunpack.c.l.b16 %v8139
          %v8521 = vunpack.c.h.b16 %v8139
          %v8522 = vunpack.c.l.b16 %v8140
          %v8523 = vunpack.c.h.b16 %v8140
          %v8524 = vunpack.c.l.b16 %v8141
          %v8525 = vunpack.c.h.b16 %v8141
          %v8526 = vunpack.c.l.b16 %v8142
          %v8527 = vunpack.c.h.b16 %v8142
          %v8528 = vunpack.c.l.b16 %v8143
          %v8529 = vunpack.c.h.b16 %v8143
          %v8530 = vunpack.c.l.b16 %v8144
          %v8531 = vunpack.c.h.b16 %v8144
          %v8532 = vunpack.c.l.b16 %v8145
          %v8533 = vunpack.c.h.b16 %v8145
          %v8534 = vunpack.c.l.b16 %v8146
          %v8535 = vunpack.c.h.b16 %v8146
          %v8536 = vunpack.c.l.b16 %v8147
          %v8537 = vunpack.c.h.b16 %v8147
          %v8538 = vunpack.c.l.b16 %v8148
          %v8539 = vunpack.c.h.b16 %v8148
          %v8540 = vunpack.c.l.b16 %v8149
          %v8541 = vunpack.c.h.b16 %v8149
          %v8542 = vunpack.c.l.b16 %v8150
          %v8543 = vunpack.c.h.b16 %v8150
          %v8544 = vunpack.c.l.b16 %v8151
          %v8545 = vunpack.c.h.b16 %v8151
          %v8546 = vunpack.c.l.b16 %v8152
          %v8547 = vunpack.c.h.b16 %v8152
          %v8548 = vunpack.c.l.b16 %v8153
          %v8549 = vunpack.c.h.b16 %v8153
          %v8550 = vpack.c.b16 %v8296, %v8294
          %v8551 = vpack.c.b16 %v8297, %v8295
          %v8552 = vpack.c.b16 %v8300, %v8298
          %v8553 = vpack.c.b16 %v8301, %v8299
          %v8554 = vpack.c.b16 %v8304, %v8302
          %v8555 = vpack.c.b16 %v8305, %v8303
          %v8556 = vpack.c.b16 %v8308, %v8306
          %v8557 = vpack.c.b16 %v8309, %v8307
          %v8558 = vpack.c.b16 %v8312, %v8310
          %v8559 = vpack.c.b16 %v8313, %v8311
          %v8560 = vpack.c.b16 %v8316, %v8314
          %v8561 = vpack.c.b16 %v8317, %v8315
          %v8562 = vpack.c.b16 %v8320, %v8318
          %v8563 = vpack.c.b16 %v8321, %v8319
          %v8564 = vpack.c.b16 %v8324, %v8322
          %v8565 = vpack.c.b16 %v8325, %v8323
          %v8566 = vpack.c.b16 %v8328, %v8326
          %v8567 = vpack.c.b16 %v8329, %v8327
          %v8568 = vpack.c.b16 %v8332, %v8330
          %v8569 = vpack.c.b16 %v8333, %v8331
          %v8570 = vpack.c.b16 %v8336, %v8334
          %v8571 = vpack.c.b16 %v8337, %v8335
          %v8572 = vpack.c.b16 %v8340, %v8338
          %v8573 = vpack.c.b16 %v8341, %v8339
          %v8574 = vpack.c.b16 %v8344, %v8342
          %v8575 = vpack.c.b16 %v8345, %v8343
          %v8576 = vpack.c.b16 %v8348, %v8346
          %v8577 = vpack.c.b16 %v8349, %v8347
          %v8578 = vpack.c.b16 %v8352, %v8350
          %v8579 = vpack.c.b16 %v8353, %v8351
          %v8580 = vpack.c.b16 %v8356, %v8354
          %v8581 = vpack.c.b16 %v8357, %v8355
          %v8582 = vpack.c.b16 %v8360, %v8358
          %v8583 = vpack.c.b16 %v8361, %v8359
          %v8584 = vpack.c.b16 %v8364, %v8362
          %v8585 = vpack.c.b16 %v8365, %v8363
          %v8586 = vpack.c.b16 %v8368, %v8366
          %v8587 = vpack.c.b16 %v8369, %v8367
          %v8588 = vpack.c.b16 %v8372, %v8370
          %v8589 = vpack.c.b16 %v8373, %v8371
          %v8590 = vpack.c.b16 %v8376, %v8374
          %v8591 = vpack.c.b16 %v8377, %v8375
          %v8592 = vpack.c.b16 %v8380, %v8378
          %v8593 = vpack.c.b16 %v8381, %v8379
          %v8594 = vpack.c.b16 %v8384, %v8382
          %v8595 = vpack.c.b16 %v8385, %v8383
          %v8596 = vpack.c.b16 %v8388, %v8386
          %v8597 = vpack.c.b16 %v8389, %v8387
          %v8598 = vpack.c.b16 %v8392, %v8390
          %v8599 = vpack.c.b16 %v8393, %v8391
          %v8600 = vpack.c.b16 %v8396, %v8394
          %v8601 = vpack.c.b16 %v8397, %v8395
          %v8602 = vpack.c.b16 %v8400, %v8398
          %v8603 = vpack.c.b16 %v8401, %v8399
          %v8604 = vpack.c.b16 %v8404, %v8402
          %v8605 = vpack.c.b16 %v8405, %v8403
          %v8606 = vpack.c.b16 %v8408, %v8406
          %v8607 = vpack.c.b16 %v8409, %v8407
          %v8608 = vpack.c.b16 %v8412, %v8410
          %v8609 = vpack.c.b16 %v8413, %v8411
          %v8610 = vpack.c.b16 %v8416, %v8414
          %v8611 = vpack.c.b16 %v8417, %v8415
          %v8612 = vpack.c.b16 %v8420, %v8418
          %v8613 = vpack.c.b16 %v8421, %v8419
          %v8614 = vpack.c.b16 %v8424, %v8422
          %v8615 = vpack.c.b16 %v8425, %v8423
          %v8616 = vpack.c.b16 %v8428, %v8426
          %v8617 = vpack.c.b16 %v8429, %v8427
          %v8618 = vpack.c.b16 %v8432, %v8430
          %v8619 = vpack.c.b16 %v8433, %v8431
          %v8620 = vpack.c.b16 %v8436, %v8434
          %v8621 = vpack.c.b16 %v8437, %v8435
          %v8622 = vpack.c.b16 %v8440, %v8438
          %v8623 = vpack.c.b16 %v8441, %v8439
          %v8624 = vpack.c.b16 %v8444, %v8442
          %v8625 = vpack.c.b16 %v8445, %v8443
          %v8626 = vpack.c.b16 %v8448, %v8446
          %v8627 = vpack.c.b16 %v8449, %v8447
          %v8628 = vpack.c.b16 %v8452, %v8450
          %v8629 = vpack.c.b16 %v8453, %v8451
          %v8630 = vpack.c.b16 %v8456, %v8454
          %v8631 = vpack.c.b16 %v8457, %v8455
          %v8632 = vpack.c.b16 %v8460, %v8458
          %v8633 = vpack.c.b16 %v8461, %v8459
          %v8634 = vpack.c.b16 %v8464, %v8462
          %v8635 = vpack.c.b16 %v8465, %v8463
          %v8636 = vpack.c.b16 %v8468, %v8466
          %v8637 = vpack.c.b16 %v8469, %v8467
          %v8638 = vpack.c.b16 %v8472, %v8470
          %v8639 = vpack.c.b16 %v8473, %v8471
          %v8640 = vpack.c.b16 %v8476, %v8474
          %v8641 = vpack.c.b16 %v8477, %v8475
          %v8642 = vpack.c.b16 %v8480, %v8478
          %v8643 = vpack.c.b16 %v8481, %v8479
          %v8644 = vpack.c.b16 %v8484, %v8482
          %v8645 = vpack.c.b16 %v8485, %v8483
          %v8646 = vpack.c.b16 %v8488, %v8486
          %v8647 = vpack.c.b16 %v8489, %v8487
          %v8648 = vpack.c.b16 %v8492, %v8490
          %v8649 = vpack.c.b16 %v8493, %v8491
          %v8650 = vpack.c.b16 %v8496, %v8494
          %v8651 = vpack.c.b16 %v8497, %v8495
          %v8652 = vpack.c.b16 %v8500, %v8498
          %v8653 = vpack.c.b16 %v8501, %v8499
          %v8654 = vpack.c.b16 %v8504, %v8502
          %v8655 = vpack.c.b16 %v8505, %v8503
          %v8656 = vpack.c.b16 %v8508, %v8506
          %v8657 = vpack.c.b16 %v8509, %v8507
          %v8658 = vpack.c.b16 %v8512, %v8510
          %v8659 = vpack.c.b16 %v8513, %v8511
          %v8660 = vpack.c.b16 %v8516, %v8514
          %v8661 = vpack.c.b16 %v8517, %v8515
          %v8662 = vpack.c.b16 %v8520, %v8518
          %v8663 = vpack.c.b16 %v8521, %v8519
          %v8664 = vpack.c.b16 %v8524, %v8522
          %v8665 = vpack.c.b16 %v8525, %v8523
          %v8666 = vpack.c.b16 %v8528, %v8526
          %v8667 = vpack.c.b16 %v8529, %v8527
          %v8668 = vpack.c.b16 %v8532, %v8530
          %v8669 = vpack.c.b16 %v8533, %v8531
          %v8670 = vpack.c.b16 %v8536, %v8534
          %v8671 = vpack.c.b16 %v8537, %v8535
          %v8672 = vpack.c.b16 %v8540, %v8538
          %v8673 = vpack.c.b16 %v8541, %v8539
          %v8674 = vpack.c.b16 %v8544, %v8542
          %v8675 = vpack.c.b16 %v8545, %v8543
          %v8676 = vpack.c.b16 %v8548, %v8546
          %v8677 = vpack.c.b16 %v8549, %v8547
          %8806 = vmatprep.subr.bf16.mxu0 %v8551
          %8807 = vmatpush1.bf16.msra.mxu0 %v8550
          %8808 = vmatprep.subr.bf16.mxu0 %v8553
          %8809 = vmatpush1.bf16.msra.mxu0 %v8552
          %8810 = vmatprep.subr.bf16.mxu0 %v8555
          %8811 = vmatpush1.bf16.msra.mxu0 %v8554
          %8812 = vmatprep.subr.bf16.mxu0 %v8557
          %8813 = vmatpush1.bf16.msra.mxu0 %v8556
          %8814 = vmatprep.subr.bf16.mxu0 %v8559
          %8815 = vmatpush1.bf16.msra.mxu0 %v8558
          %8816 = vmatprep.subr.bf16.mxu0 %v8561
          %8817 = vmatpush1.bf16.msra.mxu0 %v8560
          %8818 = vmatprep.subr.bf16.mxu0 %v8563
          %8819 = vmatpush1.bf16.msra.mxu0 %v8562
          %8820 = vmatprep.subr.bf16.mxu0 %v8565
          %8821 = vmatpush1.bf16.msra.mxu0 %v8564
          %8822 = vmatprep.subr.bf16.mxu0 %v8567
          %8823 = vmatpush1.bf16.msra.mxu0 %v8566
          %8824 = vmatprep.subr.bf16.mxu0 %v8569
          %8825 = vmatpush1.bf16.msra.mxu0 %v8568
          %8826 = vmatprep.subr.bf16.mxu0 %v8571
          %8827 = vmatpush1.bf16.msra.mxu0 %v8570
          %8828 = vmatprep.subr.bf16.mxu0 %v8573
          %8829 = vmatpush1.bf16.msra.mxu0 %v8572
          %8830 = vmatprep.subr.bf16.mxu0 %v8575
          %8831 = vmatpush1.bf16.msra.mxu0 %v8574
          %8832 = vmatprep.subr.bf16.mxu0 %v8577
          %8833 = vmatpush1.bf16.msra.mxu0 %v8576
          %8834 = vmatprep.subr.bf16.mxu0 %v8579
          %8835 = vmatpush1.bf16.msra.mxu0 %v8578
          %8836 = vmatprep.subr.bf16.mxu0 %v8581
          %8837 = vmatpush1.bf16.msra.mxu0 %v8580
          %8838 = vmatprep.mubr.bf16.mxu0 %v8019
          %8839 = vmatmul.mubr.bf16.gmra.mrb[0].mxu0 %v8018
          %v8840 = vpop.f32.mrb[0].mxu0
          %v8841 = vadd.f32 %v8159, %v8840
          %v8842 = vpop.f32.mrb[0].mxu0
          %v8843 = vadd.f32 %v8163, %v8842
          %v8844 = vpop.f32.mrb[0].mxu0
          %v8845 = vpop.f32.mrb[0].mxu0
          %8846 = vdwg.mxu0
          %8847 = vmatprep.subr.bf16.mxu0 %v8583
          %8848 = vmatpush1.bf16.msra.mxu0 %v8582
          %8849 = vmatprep.subr.bf16.mxu0 %v8585
          %8850 = vmatpush1.bf16.msra.mxu0 %v8584
          %8851 = vmatprep.subr.bf16.mxu0 %v8587
          %8852 = vmatpush1.bf16.msra.mxu0 %v8586
          %8853 = vmatprep.subr.bf16.mxu0 %v8589
          %8854 = vmatpush1.bf16.msra.mxu0 %v8588
          %8855 = vmatprep.subr.bf16.mxu0 %v8591
          %8856 = vmatpush1.bf16.msra.mxu0 %v8590
          %8857 = vmatprep.subr.bf16.mxu0 %v8593
          %8858 = vmatpush1.bf16.msra.mxu0 %v8592
          %8859 = vmatprep.subr.bf16.mxu0 %v8595
          %8860 = vmatpush1.bf16.msra.mxu0 %v8594
          %8861 = vmatprep.subr.bf16.mxu0 %v8597
          %8862 = vmatpush1.bf16.msra.mxu0 %v8596
          %8863 = vmatprep.subr.bf16.mxu0 %v8599
          %8864 = vmatpush1.bf16.msra.mxu0 %v8598
          %8865 = vmatprep.subr.bf16.mxu0 %v8601
          %8866 = vmatpush1.bf16.msra.mxu0 %v8600
          %8867 = vmatprep.subr.bf16.mxu0 %v8603
          %8868 = vmatpush1.bf16.msra.mxu0 %v8602
          %8869 = vmatprep.subr.bf16.mxu0 %v8605
          %8870 = vmatpush1.bf16.msra.mxu0 %v8604
          %8871 = vmatprep.subr.bf16.mxu0 %v8607
          %8872 = vmatpush1.bf16.msra.mxu0 %v8606
          %8873 = vmatprep.subr.bf16.mxu0 %v8609
          %8874 = vmatpush1.bf16.msra.mxu0 %v8608
          %8875 = vmatprep.subr.bf16.mxu0 %v8611
          %8876 = vmatpush1.bf16.msra.mxu0 %v8610
          %8877 = vmatprep.subr.bf16.mxu0 %v8613
          %8878 = vmatpush1.bf16.msra.mxu0 %v8612
          %8879 = vmatprep.mubr.bf16.mxu0 %v8021
          %8880 = vmatmul.mubr.bf16.gmra.mrb[0].mxu0 %v8020
          %v8881 = vpop.f32.mrb[0].mxu0
          %v8882 = vadd.f32 %v8841, %v8881
          %v8883 = vpop.f32.mrb[0].mxu0
          %v8884 = vadd.f32 %v8843, %v8883
          %v8885 = vpop.f32.mrb[0].mxu0
          %v8886 = vpop.f32.mrb[0].mxu0
          %8887 = vdwg.mxu0
          %8888 = vmatprep.subr.bf16.mxu0 %v8615
          %8889 = vmatpush1.bf16.msra.mxu0 %v8614
          %8890 = vmatprep.subr.bf16.mxu0 %v8617
          %8891 = vmatpush1.bf16.msra.mxu0 %v8616
          %8892 = vmatprep.subr.bf16.mxu0 %v8619
          %8893 = vmatpush1.bf16.msra.mxu0 %v8618
          %8894 = vmatprep.subr.bf16.mxu0 %v8621
          %8895 = vmatpush1.bf16.msra.mxu0 %v8620
          %8896 = vmatprep.subr.bf16.mxu0 %v8623
          %8897 = vmatpush1.bf16.msra.mxu0 %v8622
          %8898 = vmatprep.subr.bf16.mxu0 %v8625
          %8899 = vmatpush1.bf16.msra.mxu0 %v8624
          %8900 = vmatprep.subr.bf16.mxu0 %v8627
          %8901 = vmatpush1.bf16.msra.mxu0 %v8626
          %8902 = vmatprep.subr.bf16.mxu0 %v8629
          %8903 = vmatpush1.bf16.msra.mxu0 %v8628
          %8904 = vmatprep.subr.bf16.mxu0 %v8631
          %8905 = vmatpush1.bf16.msra.mxu0 %v8630
          %8906 = vmatprep.subr.bf16.mxu0 %v8633
          %8907 = vmatpush1.bf16.msra.mxu0 %v8632
          %8908 = vmatprep.subr.bf16.mxu0 %v8635
          %8909 = vmatpush1.bf16.msra.mxu0 %v8634
          %8910 = vmatprep.subr.bf16.mxu0 %v8637
          %8911 = vmatpush1.bf16.msra.mxu0 %v8636
          %8912 = vmatprep.subr.bf16.mxu0 %v8639
          %8913 = vmatpush1.bf16.msra.mxu0 %v8638
          %8914 = vmatprep.subr.bf16.mxu0 %v8641
          %8915 = vmatpush1.bf16.msra.mxu0 %v8640
          %8916 = vmatprep.subr.bf16.mxu0 %v8643
          %8917 = vmatpush1.bf16.msra.mxu0 %v8642
          %8918 = vmatprep.subr.bf16.mxu0 %v8645
          %8919 = vmatpush1.bf16.msra.mxu0 %v8644
          %8920 = vmatprep.mubr.bf16.mxu0 %v8023
          %8921 = vmatmul.mubr.bf16.gmra.mrb[0].mxu0 %v8022
          %v8922 = vpop.f32.mrb[0].mxu0
          %v8923 = vadd.f32 %v8882, %v8922
          %v8924 = vpop.f32.mrb[0].mxu0
          %v8925 = vadd.f32 %v8884, %v8924
          %v8926 = vpop.f32.mrb[0].mxu0
          %v8927 = vpop.f32.mrb[0].mxu0
          %8928 = vdwg.mxu0
          %8929 = vmatprep.subr.bf16.mxu0 %v8647
          %8930 = vmatpush1.bf16.msra.mxu0 %v8646
          %8931 = vmatprep.subr.bf16.mxu0 %v8649
          %8932 = vmatpush1.bf16.msra.mxu0 %v8648
          %8933 = vmatprep.subr.bf16.mxu0 %v8651
          %8934 = vmatpush1.bf16.msra.mxu0 %v8650
          %8935 = vmatprep.subr.bf16.mxu0 %v8653
          %8936 = vmatpush1.bf16.msra.mxu0 %v8652
          %8937 = vmatprep.subr.bf16.mxu0 %v8655
          %8938 = vmatpush1.bf16.msra.mxu0 %v8654
          %8939 = vmatprep.subr.bf16.mxu0 %v8657
          %8940 = vmatpush1.bf16.msra.mxu0 %v8656
          %8941 = vmatprep.subr.bf16.mxu0 %v8659
          %8942 = vmatpush1.bf16.msra.mxu0 %v8658
          %8943 = vmatprep.subr.bf16.mxu0 %v8661
          %8944 = vmatpush1.bf16.msra.mxu0 %v8660
          %8945 = vmatprep.subr.bf16.mxu0 %v8663
          %8946 = vmatpush1.bf16.msra.mxu0 %v8662
          %8947 = vmatprep.subr.bf16.mxu0 %v8665
          %8948 = vmatpush1.bf16.msra.mxu0 %v8664
          %8949 = vmatprep.subr.bf16.mxu0 %v8667
          %8950 = vmatpush1.bf16.msra.mxu0 %v8666
          %8951 = vmatprep.subr.bf16.mxu0 %v8669
          %8952 = vmatpush1.bf16.msra.mxu0 %v8668
          %8953 = vmatprep.subr.bf16.mxu0 %v8671
          %8954 = vmatpush1.bf16.msra.mxu0 %v8670
          %8955 = vmatprep.subr.bf16.mxu0 %v8673
          %8956 = vmatpush1.bf16.msra.mxu0 %v8672
          %8957 = vmatprep.subr.bf16.mxu0 %v8675
          %8958 = vmatpush1.bf16.msra.mxu0 %v8674
          %8959 = vmatprep.subr.bf16.mxu0 %v8677
          %8960 = vmatpush1.bf16.msra.mxu0 %v8676
          %8961 = vmatprep.mubr.bf16.mxu0 %v8025
          %8962 = vmatmul.mubr.bf16.gmra.mrb[0].mxu0 %v8024
          %v8963 = vpop.f32.mrb[0].mxu0
          %v8964 = vadd.f32 %v8923, %v8963
          %v8965 = vpop.f32.mrb[0].mxu0
          %v8966 = vadd.f32 %v8925, %v8965
          %v8967 = vpop.f32.mrb[0].mxu0
          %v8968 = vpop.f32.mrb[0].mxu0
          %8969 = vdwg.mxu0
          %v8970 = vmax.f32 %v8964, 0.0
          %v8971 = vmax.f32 %v8966, 0.0
          %v8972 = vpack.c.bf16 %v8970, %v8970
          %v8973 = vpack.c.bf16 %v8971, %v8971
          %v8974 = vld [vmem:[%s5] sm:$0xf]
          %v8975 = vld [vmem:[%s5 + $0x4] sm:$0xf]
          %v8976 = vld [vmem:[%s5 + $0x8] sm:$0xf]
          %v8977 = vld [vmem:[%s5 + $0xc] sm:$0xf]
          %v8978 = vld [vmem:[%s5 + $0x10] sm:$0xf]
          %v8979 = vld [vmem:[%s5 + $0x14] sm:$0xf]
          %v8980 = vld [vmem:[%s5 + $0x18] sm:$0xf]
          %v8981 = vld [vmem:[%s5 + $0x1c] sm:$0xf]
          %v8982 = vld [vmem:[%s5 + $0x20] sm:$0xf]
          %v8983 = vld [vmem:[%s5 + $0x24] sm:$0xf]
          %v8984 = vld [vmem:[%s5 + $0x28] sm:$0xf]
          %v8985 = vld [vmem:[%s5 + $0x2c] sm:$0xf]
          %v8986 = vld [vmem:[%s5 + $0x30] sm:$0xf]
          %v8987 = vld [vmem:[%s5 + $0x34] sm:$0xf]
          %v8988 = vld [vmem:[%s5 + $0x38] sm:$0xf]
          %v8989 = vld [vmem:[%s5 + $0x3c] sm:$0xf]
          %v8990 = vld [vmem:[%s5 + $0x40] sm:$0xf]
          %v8991 = vld [vmem:[%s5 + $0x44] sm:$0xf]
          %v8992 = vld [vmem:[%s5 + $0x48] sm:$0xf]
          %v8993 = vld [vmem:[%s5 + $0x4c] sm:$0xf]
          %v8994 = vld [vmem:[%s5 + $0x50] sm:$0xf]
          %v8995 = vld [vmem:[%s5 + $0x54] sm:$0xf]
          %v8996 = vld [vmem:[%s5 + $0x58] sm:$0xf]
          %v8997 = vld [vmem:[%s5 + $0x5c] sm:$0xf]
          %v8998 = vld [vmem:[%s5 + $0x60] sm:$0xf]
          %v8999 = vld [vmem:[%s5 + $0x64] sm:$0xf]
          %v9000 = vld [vmem:[%s5 + $0x68] sm:$0xf]
          %v9001 = vld [vmem:[%s5 + $0x6c] sm:$0xf]
          %v9002 = vld [vmem:[%s5 + $0x70] sm:$0xf]
          %v9003 = vld [vmem:[%s5 + $0x74] sm:$0xf]
          %v9004 = vld [vmem:[%s5 + $0x78] sm:$0xf]
          %v9005 = vld [vmem:[%s5 + $0x7c] sm:$0xf]
          %v9006 = vld [vmem:[#allocation11] sm:$0x1]
          %v9008 = vlaneseq
          %v9009 = vshrl.u32 %v9008, 7
          %v9010 = vsub.s32 0, %v9009
          %v9011 = vrot.slane %v9006, %v9010
          %v9045 = vunpack.c.l.b16 %v8974
          %v9046 = vunpack.c.l.b16 %v8975
          %v9047 = vunpack.c.l.b16 %v8976
          %v9048 = vunpack.c.l.b16 %v8977
          %v9049 = vunpack.c.l.b16 %v8978
          %v9050 = vunpack.c.l.b16 %v8979
          %v9051 = vunpack.c.l.b16 %v8980
          %v9052 = vunpack.c.l.b16 %v8981
          %v9053 = vunpack.c.l.b16 %v8982
          %v9054 = vunpack.c.l.b16 %v8983
          %v9055 = vunpack.c.l.b16 %v8984
          %v9056 = vunpack.c.l.b16 %v8985
          %v9057 = vunpack.c.l.b16 %v8986
          %v9058 = vunpack.c.l.b16 %v8987
          %v9059 = vunpack.c.l.b16 %v8988
          %v9060 = vunpack.c.l.b16 %v8989
          %v9061 = vunpack.c.l.b16 %v8990
          %v9062 = vunpack.c.l.b16 %v8991
          %v9063 = vunpack.c.l.b16 %v8992
          %v9064 = vunpack.c.l.b16 %v8993
          %v9065 = vunpack.c.l.b16 %v8994
          %v9066 = vunpack.c.l.b16 %v8995
          %v9067 = vunpack.c.l.b16 %v8996
          %v9068 = vunpack.c.l.b16 %v8997
          %v9069 = vunpack.c.l.b16 %v8998
          %v9070 = vunpack.c.l.b16 %v8999
          %v9071 = vunpack.c.l.b16 %v9000
          %v9072 = vunpack.c.l.b16 %v9001
          %v9073 = vunpack.c.l.b16 %v9002
          %v9074 = vunpack.c.l.b16 %v9003
          %v9075 = vunpack.c.l.b16 %v9004
          %v9076 = vunpack.c.l.b16 %v9005
          %v9077 = vpack.c.b16 %v9046, %v9045
          %v9078 = vpack.c.b16 %v9048, %v9047
          %v9079 = vpack.c.b16 %v9050, %v9049
          %v9080 = vpack.c.b16 %v9052, %v9051
          %v9081 = vpack.c.b16 %v9054, %v9053
          %v9082 = vpack.c.b16 %v9056, %v9055
          %v9083 = vpack.c.b16 %v9058, %v9057
          %v9084 = vpack.c.b16 %v9060, %v9059
          %v9085 = vpack.c.b16 %v9062, %v9061
          %v9086 = vpack.c.b16 %v9064, %v9063
          %v9087 = vpack.c.b16 %v9066, %v9065
          %v9088 = vpack.c.b16 %v9068, %v9067
          %v9089 = vpack.c.b16 %v9070, %v9069
          %v9090 = vpack.c.b16 %v9072, %v9071
          %v9091 = vpack.c.b16 %v9074, %v9073
          %v9092 = vpack.c.b16 %v9076, %v9075
          %9109 = vmatprep.subr.bf16.mxu0 0
          %9110 = vmatpush1.bf16.msra.mxu0 %v9077
          %9111 = vmatprep.subr.bf16.mxu0 0
          %9112 = vmatpush1.bf16.msra.mxu0 %v9078
          %9113 = vmatprep.subr.bf16.mxu0 0
          %9114 = vmatpush1.bf16.msra.mxu0 %v9079
          %9115 = vmatprep.subr.bf16.mxu0 0
          %9116 = vmatpush1.bf16.msra.mxu0 %v9080
          %9117 = vmatprep.subr.bf16.mxu0 0
          %9118 = vmatpush1.bf16.msra.mxu0 %v9081
          %9119 = vmatprep.subr.bf16.mxu0 0
          %9120 = vmatpush1.bf16.msra.mxu0 %v9082
          %9121 = vmatprep.subr.bf16.mxu0 0
          %9122 = vmatpush1.bf16.msra.mxu0 %v9083
          %9123 = vmatprep.subr.bf16.mxu0 0
          %9124 = vmatpush1.bf16.msra.mxu0 %v9084
          %9125 = vmatprep.subr.bf16.mxu0 0
          %9126 = vmatpush1.bf16.msra.mxu0 %v9085
          %9127 = vmatprep.subr.bf16.mxu0 0
          %9128 = vmatpush1.bf16.msra.mxu0 %v9086
          %9129 = vmatprep.subr.bf16.mxu0 0
          %9130 = vmatpush1.bf16.msra.mxu0 %v9087
          %9131 = vmatprep.subr.bf16.mxu0 0
          %9132 = vmatpush1.bf16.msra.mxu0 %v9088
          %9133 = vmatprep.subr.bf16.mxu0 0
          %9134 = vmatpush1.bf16.msra.mxu0 %v9089
          %9135 = vmatprep.subr.bf16.mxu0 0
          %9136 = vmatpush1.bf16.msra.mxu0 %v9090
          %9137 = vmatprep.subr.bf16.mxu0 0
          %9138 = vmatpush1.bf16.msra.mxu0 %v9091
          %9139 = vmatprep.subr.bf16.mxu0 0
          %9140 = vmatpush1.bf16.msra.mxu0 %v9092
          %9141 = vmatprep.mubr.bf16.mxu0 %v8973
          %9142 = vmatmul.mubr.bf16.gmra.mrb[0].mxu0 %v8972
          %v9143 = vpop.f32.mrb[0].mxu0
          %v9144 = vadd.f32 %v9011, %v9143
          %v9145 = vpop.f32.mrb[0].mxu0
          %v9146 = vpop.f32.mrb[0].mxu0
          %v9147 = vpop.f32.mrb[0].mxu0
          %9148 = vdwg.mxu0
          %v9149 = vmax.f32 %v9144, 0.0
          %v9150 = vpack.c.bf16 %v9149, %v9149
          %v9151 = vld [vmem:[%s7] sm:$0xf]
          %v9152 = vld [vmem:[%s7 + $0x4] sm:$0xf]
          %v9153 = vld [vmem:[%s7 + $0x8] sm:$0xf]
          %v9154 = vld [vmem:[%s7 + $0xc] sm:$0xf]
          %v9155 = vld [vmem:[%s7 + $0x10] sm:$0xf]
          %v9156 = vld [vmem:[%s7 + $0x14] sm:$0xf]
          %v9157 = vld [vmem:[%s7 + $0x18] sm:$0xf]
          %v9158 = vld [vmem:[%s7 + $0x1c] sm:$0xf]
          %v9159 = vld [vmem:[%s8] sm:$0x1]
          %v9161 = vlaneseq
          %v9162 = vshrl.u32 %v9161, 7
          %v9163 = vsub.s32 0, %v9162
          %v9164 = vrot.slane %v9159, %v9163
          %v9174 = vunpack.c.l.b16 %v9151
          %v9175 = vunpack.c.l.b16 %v9152
          %v9176 = vunpack.c.l.b16 %v9153
          %v9177 = vunpack.c.l.b16 %v9154
          %v9178 = vunpack.c.l.b16 %v9155
          %v9179 = vunpack.c.l.b16 %v9156
          %v9180 = vunpack.c.l.b16 %v9157
          %v9181 = vunpack.c.l.b16 %v9158
          %v9182 = vpack.c.b16 %v9175, %v9174
          %v9183 = vpack.c.b16 %v9177, %v9176
          %v9184 = vpack.c.b16 %v9179, %v9178
          %v9185 = vpack.c.b16 %v9181, %v9180
          %vm9190 = vcmask 523264
          %v9192 = vsel %vm9190, %v9150, 0
          %9194 = vmatprep.subr.bf16.mxu0 0
          %9195 = vmatpush1.bf16.msra.mxu0 %v9182
          %9196 = vmatprep.subr.bf16.mxu0 0
          %9197 = vmatpush1.bf16.msra.mxu0 %v9183
          %9198 = vmatprep.subr.bf16.mxu0 0
          %9199 = vmatpush1.bf16.msra.mxu0 %v9184
          %9200 = vmatprep.subr.bf16.mxu0 0
          %9201 = vmatpush1.bf16.msra.mxu0 %v9185
          %9202 = vmatprep.subr.bf16.mxu0 0
          %9203 = vmatpush1.bf16.msra.mxu0 0
          %9204 = vmatprep.subr.bf16.mxu0 0
          %9205 = vmatpush1.bf16.msra.mxu0 0
          %9206 = vmatprep.subr.bf16.mxu0 0
          %9207 = vmatpush1.bf16.msra.mxu0 0
          %9208 = vmatprep.subr.bf16.mxu0 0
          %9209 = vmatpush1.bf16.msra.mxu0 0
          %9210 = vmatprep.subr.bf16.mxu0 0
          %9211 = vmatpush1.bf16.msra.mxu0 0
          %9212 = vmatprep.subr.bf16.mxu0 0
          %9213 = vmatpush1.bf16.msra.mxu0 0
          %9214 = vmatprep.subr.bf16.mxu0 0
          %9215 = vmatpush1.bf16.msra.mxu0 0
          %9216 = vmatprep.subr.bf16.mxu0 0
          %9217 = vmatpush1.bf16.msra.mxu0 0
          %9218 = vmatprep.subr.bf16.mxu0 0
          %9219 = vmatpush1.bf16.msra.mxu0 0
          %9220 = vmatprep.subr.bf16.mxu0 0
          %9221 = vmatpush1.bf16.msra.mxu0 0
          %9222 = vmatprep.subr.bf16.mxu0 0
          %9223 = vmatpush1.bf16.msra.mxu0 0
          %9224 = vmatprep.subr.bf16.mxu0 0
          %9225 = vmatpush1.bf16.msra.mxu0 0
          %9226 = vmatprep.mubr.bf16.mxu0 0
          %9227 = vmatmul.mubr.bf16.gmra.mrb[0].mxu0 %v9192
          %v9228 = vpop.f32.mrb[0].mxu0
          %v9229 = vadd.f32 %v9164, %v9228
          %v9230 = vpop.f32.mrb[0].mxu0
          %v9231 = vpop.f32.mrb[0].mxu0
          %v9232 = vpop.f32.mrb[0].mxu0
          %9233 = vdwg.mxu0
          %9234 = vst [vmem:[%s9] sm:$0xff] %v9229
        $region88: #{net_forward.1} parent=55 // pred_fallthru
          _
        // Predicated region
        $region89: #{net_forward.1} parent=55 // pred_check
          %p9235 = pneg %p240
        $region90: #{net_forward.1} parent=55 // pred_check_branch
          %9237 = sbr.rel (%p9235) target = $region92
        $region91: #{net_forward.1} parent=55 // pred_region
          _
        $region92: #{net_forward.1} parent=55 // pred_fallthru
          _
        // Predicated region
        $region93: #{net_forward.1} parent=55 // pred_check
          %p9238 = pneg %p240
        $region94: #{net_forward.1} parent=55 // pred_check_branch
          %9240 = sbr.rel (%p9238) target = $region96
        $region95: #{net_forward.1} parent=55 // pred_region
          _
        $region96: #{net_forward.1} parent=55 // pred_fallthru
          _
      $region56: #{net_forward.1} parent=5 // pred_fallthru
        _
      %p9241 = scmp.le.s32.totalorder 2, %s23
      // Predicated region
      $region97: #{net_forward.1} parent=5 // pred_check
        %p9242 = pneg %p9241
      $region98: #{net_forward.1} parent=5 // pred_check_branch
        %9244 = sbr.rel (%p9242) target = $region100
      $region99: #{net_forward.1} parent=5 // pred_region
        %s9245 = ssub.s32 %s23, 2
      $region100: #{net_forward.1} parent=5 // pred_fallthru
        _
    $region6: #{net_forward.1} parent=1 // loop_footer
      %s27 = sadd.s32 1, %s23
    $region7: #{net_forward.1} parent=1 // loop_footer_branch
      %22 = sbr.rel target = $region3
    $region8: #{net_forward.1} parent=1 // loop_exit
      _
    %9246 = vsyncpa [#allocation4], 1
    %s9247 = scalar_lea.sflag [#allocation4], 1
    %9248 = vsyncpa %s9247, 1
    %9249 = vsyncpa [#allocation6], 1
    %s9250 = scalar_lea.sflag [#allocation6], 1
    %9251 = vsyncpa %s9250, 1
    %9252 = vsyncpa [#allocation9], 1
    %9253 = vsyncpa [#allocation12], 1

</llo_original>
